<compile_context>
chip_gen: v6e
topology: v6e:2x2x1
jax: 0.10.0
libtpu: 0.0.40
codegen_flags: <defaults>
</compile_context>

<pallas_src>
import numpy as np
import jax
import jax.numpy as jnp
from jax.experimental import pallas as pl
from jax.experimental.pallas import tpu as pltpu

SOURCES = 2
AUDIO_CHANNELS = 2
CHANNELS = 8
DEPTH = 2
GROWTH = 2
KERNEL = 8
STRIDE = 4
CONTEXT = 3
LSTM_LAYERS = 2

_CIN0_PAD = 8           # first-conv input rows lifted to a sublane multiple


def _ceil(a, b):
    return -(-a // b) * b


def _output_length(t):
    """Static output time-length of Demucs for an input of length t."""
    for _ in range(DEPTH):
        t = (t - KERNEL) // STRIDE + 1
    for _ in range(DEPTH):
        t = t - CONTEXT + 1                 # context conv (stride 1)
        t = STRIDE * (t - 1) + KERNEL       # transposed conv
    return t


def _time_trace(t0):
    enc, t = [], t0
    for _ in range(DEPTH):
        t_full = t - KERNEL + 1
        t_out = (t - KERNEL) // STRIDE + 1
        enc.append((t, t_full, t_out))
        t = t_out
    dec = []
    for _ in range(DEPTH):
        t_ctx = t - CONTEXT + 1
        l_out = STRIDE * (t_ctx - 1) + KERNEL
        dec.append((t, t_ctx, l_out))
        t = l_out
    return enc, dec


# ----------------------------- deterministic params -----------------------------

def init_params(key):
    """Synthetic params in PyTorch-style layouts (no checkpoint)."""
    keys = iter(jax.random.split(key, 256))

    def p(shape, scale=0.1):
        return scale * jax.random.normal(next(keys), shape, jnp.float32)

    params = {"encoder": [], "decoder": [], "lstm": {}}
    in_ch, ch = AUDIO_CHANNELS, CHANNELS
    dec_rev = []
    for index in range(DEPTH):
        params["encoder"].append({
            "w1": p((ch, in_ch, KERNEL)), "b1": p((ch,)),
            "w2": p((2 * ch, ch)),        "b2": p((2 * ch,)),
        })
        out_ch = in_ch if index > 0 else SOURCES * AUDIO_CHANNELS
        dec_rev.append({
            "wr": p((2 * ch, ch, CONTEXT)), "br": p((2 * ch,)),
            "wt": p((ch, out_ch, KERNEL)),  "bt": p((out_ch,)),
        })
        in_ch, ch = ch, int(GROWTH * ch)
    params["decoder"] = dec_rev[::-1]

    dim = in_ch                                                      # bottleneck channels
    layers, cin = [], dim
    for _ in range(LSTM_LAYERS):
        layer = {}
        for d in ("fwd", "bwd"):
            # torch.nn.LSTM gate order (i, f, g, o); b_ih + b_hh folded into one bias.
            # TODO(synk): loading a real checkpoint needs the exact torch gate split.
            layer[d] = (p((4, cin, dim)), p((4, dim, dim)), p((4, 1, dim)))
        layers.append(layer)
        cin = 2 * dim
    params["lstm"] = {"layers": layers, "lin_w": p((dim, 2 * dim)), "lin_b": p((dim,))}
    return params


# ----------------------------- host-side packing -----------------------------

def _pack_conv(w, cin_pad):
    """(Cout, Cin, K) -> (Cout, K*cin_pad) with layout [cout, k*cin_pad + cin]."""
    w = np.asarray(w, np.float32)
    cout, cin, k = w.shape
    out = np.zeros((cout, k, cin_pad), np.float32)
    out[:, :, :cin] = np.transpose(w, (0, 2, 1))
    return out.reshape(cout, k * cin_pad)


def _sel_matrix(t_full, t_out):
    """One-hot down-sample matrix: sel[t, q] = (t == STRIDE*q)."""
    m = np.zeros((t_full, t_out), np.float32)
    m[np.arange(t_out) * STRIDE, np.arange(t_out)] = 1.0
    return m


def _up_matrix(t_in):
    """Dilate+pad matrix for ConvTranspose1d: up[m, STRIDE*m + KERNEL-1] = 1."""
    width = STRIDE * (t_in - 1) + 2 * KERNEL - 1
    m = np.zeros((t_in, width), np.float32)
    m[np.arange(t_in), STRIDE * np.arange(t_in) + KERNEL - 1] = 1.0
    return m


def _pack_params(params, t0):
    """Pack every weight/bias and every static one-hot matrix into one f32 slab."""
    enc_t, dec_t = _time_trace(t0)
    items = []

    def add(name, arr):
        a = np.asarray(arr, np.float32)
        assert a.ndim == 2
        items.append((name, a))

    # sum-over-sources + lift the 2-row mix to 8 sublane-aligned rows.
    lift = np.zeros((_CIN0_PAD, SOURCES * AUDIO_CHANNELS), np.float32)
    for s in range(SOURCES):
        for c in range(AUDIO_CHANNELS):
            lift[c, s * AUDIO_CHANNELS + c] = 1.0
    add("mix_lift", lift)

    for i, enc in enumerate(params["encoder"]):
        w1 = np.asarray(enc["w1"], np.float32)
        cin_pad = _CIN0_PAD if i == 0 else w1.shape[1]
        add(f"enc{i}_w1", _pack_conv(w1, cin_pad))
        add(f"enc{i}_b1", np.asarray(enc["b1"], np.float32).reshape(-1, 1))
        _, t_full, t_out = enc_t[i]
        add(f"enc{i}_sel", _sel_matrix(t_full, t_out))
        add(f"enc{i}_w2", np.asarray(enc["w2"], np.float32))
        add(f"enc{i}_b2", np.asarray(enc["b2"], np.float32).reshape(-1, 1))

    perm = [0, 1, 3, 2]       # gate order (i,f,g,o) -> (i,f,o,g): fused sigmoid over [:3H]
    for l, layer in enumerate(params["lstm"]["layers"]):
        for d in ("fwd", "bwd"):
            wih, whh, b = layer[d]
            wih = np.asarray(wih, np.float32)[perm]     # (4, Cin, H)
            whh = np.asarray(whh, np.float32)[perm]     # (4, H, H)
            b = np.asarray(b, np.float32)[perm]         # (4, 1, H)
            hid = whh.shape[-1]
            add(f"lstm{l}_{d}_wih", np.transpose(wih, (1, 0, 2)).reshape(wih.shape[1], 4 * hid))
            add(f"lstm{l}_{d}_whh", np.transpose(whh, (1, 0, 2)).reshape(hid, 4 * hid))
            add(f"lstm{l}_{d}_b", np.transpose(b, (1, 0, 2)).reshape(1, 4 * hid))
    add("lin_w", np.asarray(params["lstm"]["lin_w"], np.float32).T)          # (2H, H)
    add("lin_b", np.asarray(params["lstm"]["lin_b"], np.float32).reshape(1, -1))

    for j, dec in enumerate(params["decoder"]):
        wr = np.asarray(dec["wr"], np.float32)          # (2ch, ch, context)
        add(f"dec{j}_wr", _pack_conv(wr, wr.shape[1]))
        add(f"dec{j}_br", np.asarray(dec["br"], np.float32).reshape(-1, 1))
        _, t_ctx, _ = dec_t[j]
        add(f"dec{j}_up", _up_matrix(t_ctx))
        wt = np.asarray(dec["wt"], np.float32)          # torch layout (Cin, Cout, K)
        wt_c = np.transpose(wt[:, :, ::-1], (1, 0, 2))  # flipped taps -> (Cout, Cin, K)
        add(f"dec{j}_wt", _pack_conv(wt_c, wt_c.shape[1]))
        add(f"dec{j}_bt", np.asarray(dec["bt"], np.float32).reshape(-1, 1))

    width = _ceil(max(a.shape[1] for _, a in items), 128)
    meta, row = {}, 0
    for name, a in items:
        meta[name] = (row, a.shape[0], a.shape[1])
        row += _ceil(a.shape[0], 8)
    slab = np.zeros((row, width), np.float32)
    for name, a in items:
        off, r, c = meta[name]
        slab[off:off + r, :c] = a
    return jnp.asarray(slab), meta


# ----------------------------- fused Pallas kernel -----------------------------

def _make_kernel(meta):
    f32 = jnp.float32

    def kernel(src_ref, slab_ref, o_ref, gx_ref, hbuf_ref):
        def get(name):
            off, r, c = meta[name]
            return slab_ref[pl.ds(off, r), pl.ds(0, c)]

        def conv_im2col(x, w, k_taps):
            """Stride-1 valid conv: x:(Cin,T) (Cin multiple of 8), w:(Cout,K*Cin)."""
            t_out = x.shape[1] - k_taps + 1
            cols = jnp.concatenate([x[:, k:k + t_out] for k in range(k_taps)], axis=0)
            return jnp.dot(w, cols, preferred_element_type=f32)

        def glu(y):
            half = y.shape[0] // 2
            return y[:half] * jax.nn.sigmoid(y[half:])

        def lstm_dir(whh_t, col_off, reverse):
            """One LSTM direction over gx_ref (T,4H); writes hbuf_ref[:, col_off:+H]."""
            hidden = whh_t.shape[0]
            t_len = gx_ref.shape[0]

            def step(t, carry):
                h, c = carry
                idx = (t_len - 1 - t) if reverse else t
                g = gx_ref[pl.ds(idx, 1), :] + jnp.dot(h, whh_t, preferred_element_type=f32)
                sig = jax.nn.sigmoid(g[:, 0:3 * hidden])          # fused i/f/o gates
                i_g = sig[:, 0:hidden]
                f_g = sig[:, hidden:2 * hidden]
                o_g = sig[:, 2 * hidden:3 * hidden]
                g_g = jnp.tanh(g[:, 3 * hidden:4 * hidden])
                c = f_g * c + i_g * g_g
                h = o_g * jnp.tanh(c)
                hbuf_ref[pl.ds(idx, 1), pl.ds(col_off, hidden)] = h
                return (h, c)

            init = (jnp.zeros((1, hidden), f32), jnp.zeros((1, hidden), f32))
            jax.lax.fori_loop(0, t_len, step, init, unroll=True)

        # ---- mix = sources.sum(dim=1), lifted to 8 sublane-aligned rows ----
        x = jnp.dot(get("mix_lift"), src_ref[0], preferred_element_type=f32)

        # ---- encoder ----
        skips = []
        for i in range(DEPTH):
            y = conv_im2col(x, get(f"enc{i}_w1"), KERNEL)
            y = jnp.dot(y, get(f"enc{i}_sel"), preferred_element_type=f32) + get(f"enc{i}_b1")
            x = jnp.maximum(y, 0.0)                                   # Conv1d + ReLU
            x = glu(jnp.dot(get(f"enc{i}_w2"), x, preferred_element_type=f32)
                    + get(f"enc{i}_b2"))                              # 1x1 + GLU
            skips.append(x)

        # ---- BLSTM (row layout) + Linear ----
        h_in = x.T                                                    # (T, C)
        for l in range(LSTM_LAYERS):
            for col, (d, rev) in enumerate((("fwd", False), ("bwd", True))):
                whh_t = get(f"lstm{l}_{d}_whh")
                gx_ref[...] = (jnp.dot(h_in, get(f"lstm{l}_{d}_wih"),
                                       preferred_element_type=f32)
                               + get(f"lstm{l}_{d}_b"))
                lstm_dir(whh_t, col * whh_t.shape[0], rev)
            h_in = hbuf_ref[...]                                      # (T, 2H)
        x = (jnp.dot(h_in, get("lin_w"), preferred_element_type=f32) + get("lin_b")).T

        # ---- decoder (skip add fused) ----
        for j in range(DEPTH):
            skip = skips.pop()
            delta = skip.shape[1] - x.shape[1]
            lo = delta // 2
            skip = skip[:, lo: skip.shape[1] - (delta - lo)]          # center_trim
            x = x + skip
            x = glu(conv_im2col(x, get(f"dec{j}_wr"), CONTEXT) + get(f"dec{j}_br"))
            xpad = jnp.dot(x, get(f"dec{j}_up"), preferred_element_type=f32)   # dilate+pad
            x = conv_im2col(xpad, get(f"dec{j}_wt"), KERNEL) + get(f"dec{j}_bt")
            if j != DEPTH - 1:
                x = jnp.maximum(x, 0.0)

        # ---- lane-dense store: pad to the 128-aligned block and store unmasked ----
        pad = o_ref.shape[-1] - x.shape[1]
        if pad:
            x = jnp.concatenate([x, jnp.zeros((x.shape[0], pad), f32)], axis=1)
        o_ref[0] = x.astype(o_ref.dtype)

    return kernel


# ----------------------------- wrapper -----------------------------

def make_demucs_forward(meta, t0):
    enc_t, dec_t = _time_trace(t0)
    t_bottleneck = enc_t[-1][2]
    dim = CHANNELS * GROWTH ** (DEPTH - 1)
    c_out = SOURCES * AUDIO_CHANNELS
    t_final = dec_t[-1][2]
    t_pad = _ceil(t_final, 128)
    kernel = _make_kernel(meta)

    def demucs_wrapper_forward(streams, slab):
        assert streams.shape[-1] == t0, "packed one-hot matrices were built for a fixed T0"
        sources = streams[:, 1:]
        # TODO(synk): augment (FlipSign/FlipChannels/Shift/Remix/Scale) is stochastic data
        # augmentation with no deterministic semantics; applied as identity here.
        b = streams.shape[0]
        src_flat = sources.reshape(b, SOURCES * AUDIO_CHANNELS, t0)   # stream 0 never DMA'd

        cost = pl.CostEstimate(
            flops=3_000_000 * b,
            transcendentals=30_000 * b,
            bytes_accessed=4 * (src_flat.size + slab.size + b * c_out * t_pad),
        )
        out = pl.pallas_call(
            kernel,
            out_shape=jax.ShapeDtypeStruct((b, c_out, t_pad), jnp.float32),
            grid_spec=pltpu.PrefetchScalarGridSpec(
                num_scalar_prefetch=0,
                grid=(b,),
                in_specs=[
                    pl.BlockSpec((1, SOURCES * AUDIO_CHANNELS, t0), lambda i: (i, 0, 0)),
                    pl.BlockSpec(slab.shape, lambda i: (0, 0)),       # weight slab, 1 DMA
                ],
                out_specs=pl.BlockSpec((1, c_out, t_pad), lambda i: (i, 0, 0)),
                scratch_shapes=[
                    pltpu.VMEM((t_bottleneck, 4 * dim), jnp.float32),  # LSTM gate projections
                    pltpu.VMEM((t_bottleneck, 2 * dim), jnp.float32),  # bidirectional hidden
                ],
            ),
            compiler_params=pltpu.CompilerParams(dimension_semantics=("parallel",)),
            cost_estimate=cost,
        )(src_flat, slab)

        est = out[:, :, :t_final].reshape(b, SOURCES, AUDIO_CHANNELS, t_final)
        return sources, est

    return demucs_wrapper_forward


if __name__ == "__main__":
    key = jax.random.PRNGKey(0)
    pkey, dkey = jax.random.split(key)
    params = init_params(pkey)

    B, T0 = 2, 148                                                    # valid length for depth=2
    slab, meta = _pack_params(params, T0)
    forward = jax.jit(make_demucs_forward(meta, T0))

    streams = jax.random.normal(dkey, (B, SOURCES + 1, AUDIO_CHANNELS, T0), jnp.float32)
    sources, est = forward(streams, slab)
    jax.block_until_ready((sources, est))

    assert sources.shape == (B, SOURCES, AUDIO_CHANNELS, T0)
    assert est.shape == (B, SOURCES, AUDIO_CHANNELS, _output_length(T0))
    assert bool(jnp.all(jnp.isfinite(est)))
    print("KERNEL_OK")
</pallas_src>

<mosaic_0001>
module attributes {stable_mosaic.version = 11 : i64} {
  func.func @kernel(%arg0: i32, %arg1: memref<1x4x148xf32, #tpu.memory_space<vmem>>, %arg2: memref<728x128xf32, #tpu.memory_space<vmem>>, %arg3: memref<1x4x128xf32, #tpu.memory_space<vmem>>, %arg4: memref<8x64xf32, #tpu.memory_space<vmem>>, %arg5: memref<8x32xf32, #tpu.memory_space<vmem>>) attributes {dimension_semantics = [#tpu.dimension_semantics<parallel>], iteration_bounds = array<i64: 2>, scalar_prefetch = 0 : i64, scratch_operands = 2 : i64, tpu.core_type = #tpu.core_type<tc>, window_params = [{transform_indices = @transform_0, window_bounds = array<i64: 1, 4, 148>}, {pipeline_mode = #tpu.pipeline_mode<synchronous>, transform_indices = @transform_1, window_bounds = array<i64: 728, 128>}, {transform_indices = @transform_2, window_bounds = array<i64: 1, 4, 128>}]} {
    %c0 = arith.constant 0 : index
    %c0_0 = arith.constant 0 : index
    %0 = vector.load %arg2[%c0, %c0_0] : memref<728x128xf32, #tpu.memory_space<vmem>>, vector<8x4xf32>
    %c0_1 = arith.constant 0 : index
    %c0_2 = arith.constant 0 : index
    %c0_3 = arith.constant 0 : index
    %1 = vector.load %arg1[%c0_1, %c0_2, %c0_3] : memref<1x4x148xf32, #tpu.memory_space<vmem>>, vector<1x4x148xf32>
    %2 = vector.shape_cast %1 : vector<1x4x148xf32> to vector<4x148xf32>
    %cst = arith.constant dense<0.000000e+00> : vector<8x148xf32>
    %3 = tpu.matmul %0, %2, %cst {dimension_numbers = #tpu.dot_dimension_numbers<[1], [0], [0], [1], [0, 0, 1, 1], [], []>} : vector<8x4xf32>, vector<4x148xf32>, vector<8x148xf32> -> vector<8x148xf32>
    %c8 = arith.constant 8 : index
    %c0_4 = arith.constant 0 : index
    %4 = vector.load %arg2[%c8, %c0_4] : memref<728x128xf32, #tpu.memory_space<vmem>>, vector<8x64xf32>
    %5 = vector.extract_strided_slice %3 {offsets = [0, 0], sizes = [8, 141], strides = [1, 1]} : vector<8x148xf32> to vector<8x141xf32>
    %6 = vector.extract_strided_slice %3 {offsets = [0, 1], sizes = [8, 141], strides = [1, 1]} : vector<8x148xf32> to vector<8x141xf32>
    %7 = vector.extract_strided_slice %3 {offsets = [0, 2], sizes = [8, 141], strides = [1, 1]} : vector<8x148xf32> to vector<8x141xf32>
    %8 = vector.extract_strided_slice %3 {offsets = [0, 3], sizes = [8, 141], strides = [1, 1]} : vector<8x148xf32> to vector<8x141xf32>
    %9 = vector.extract_strided_slice %3 {offsets = [0, 4], sizes = [8, 141], strides = [1, 1]} : vector<8x148xf32> to vector<8x141xf32>
    %10 = vector.extract_strided_slice %3 {offsets = [0, 5], sizes = [8, 141], strides = [1, 1]} : vector<8x148xf32> to vector<8x141xf32>
    %11 = vector.extract_strided_slice %3 {offsets = [0, 6], sizes = [8, 141], strides = [1, 1]} : vector<8x148xf32> to vector<8x141xf32>
    %12 = vector.extract_strided_slice %3 {offsets = [0, 7], sizes = [8, 141], strides = [1, 1]} : vector<8x148xf32> to vector<8x141xf32>
    %13 = tpu.concatenate %5, %6, %7, %8, %9, %10, %11, %12 in 0 : vector<8x141xf32>, vector<8x141xf32>, vector<8x141xf32>, vector<8x141xf32>, vector<8x141xf32>, vector<8x141xf32>, vector<8x141xf32>, vector<8x141xf32> -> vector<64x141xf32>
    %cst_5 = arith.constant dense<0.000000e+00> : vector<8x141xf32>
    %14 = tpu.matmul %4, %13, %cst_5 {dimension_numbers = #tpu.dot_dimension_numbers<[1], [0], [0], [1], [0, 0, 1, 1], [], []>} : vector<8x64xf32>, vector<64x141xf32>, vector<8x141xf32> -> vector<8x141xf32>
    %c24 = arith.constant 24 : index
    %c0_6 = arith.constant 0 : index
    %15 = vector.load %arg2[%c24, %c0_6] : memref<728x128xf32, #tpu.memory_space<vmem>>, vector<141x36xf32>
    %cst_7 = arith.constant dense<0.000000e+00> : vector<8x36xf32>
    %16 = tpu.matmul %14, %15, %cst_7 {dimension_numbers = #tpu.dot_dimension_numbers<[1], [0], [0], [1], [0, 0, 1, 1], [], []>} : vector<8x141xf32>, vector<141x36xf32>, vector<8x36xf32> -> vector<8x36xf32>
    %c16 = arith.constant 16 : index
    %c0_8 = arith.constant 0 : index
    %17 = vector.load %arg2[%c16, %c0_8] : memref<728x128xf32, #tpu.memory_space<vmem>>, vector<8x1xf32>
    %18 = vector.broadcast %17 : vector<8x1xf32> to vector<8x36xf32>
    %19 = arith.addf %16, %18 : vector<8x36xf32>
    %cst_9 = arith.constant 0.000000e+00 : f32
    %20 = vector.broadcast %cst_9 : f32 to vector<8x36xf32>
    %21 = arith.maximumf %19, %20 : vector<8x36xf32>
    %c168 = arith.constant 168 : index
    %c0_10 = arith.constant 0 : index
    %22 = vector.load %arg2[%c168, %c0_10] : memref<728x128xf32, #tpu.memory_space<vmem>>, vector<16x8xf32>
    %cst_11 = arith.constant dense<0.000000e+00> : vector<16x36xf32>
    %23 = tpu.matmul %22, %21, %cst_11 {dimension_numbers = #tpu.dot_dimension_numbers<[1], [0], [0], [1], [0, 0, 1, 1], [], []>} : vector<16x8xf32>, vector<8x36xf32>, vector<16x36xf32> -> vector<16x36xf32>
    %c184 = arith.constant 184 : index
    %c0_12 = arith.constant 0 : index
    %24 = vector.load %arg2[%c184, %c0_12] : memref<728x128xf32, #tpu.memory_space<vmem>>, vector<16x1xf32>
    %25 = vector.broadcast %24 : vector<16x1xf32> to vector<16x36xf32>
    %26 = arith.addf %23, %25 : vector<16x36xf32>
    %27 = vector.extract_strided_slice %26 {offsets = [0, 0], sizes = [8, 36], strides = [1, 1]} : vector<16x36xf32> to vector<8x36xf32>
    %28 = vector.extract_strided_slice %26 {offsets = [8, 0], sizes = [8, 36], strides = [1, 1]} : vector<16x36xf32> to vector<8x36xf32>
    %29 = arith.negf %28 : vector<8x36xf32>
    %30 = math.exp %29 : vector<8x36xf32>
    %cst_13 = arith.constant 1.000000e+00 : f32
    %31 = vector.broadcast %cst_13 : f32 to vector<8x36xf32>
    %32 = arith.addf %31, %30 : vector<8x36xf32>
    %33 = arith.divf %31, %32 : vector<8x36xf32>
    %34 = arith.mulf %27, %33 : vector<8x36xf32>
    %c200 = arith.constant 200 : index
    %c0_14 = arith.constant 0 : index
    %35 = vector.load %arg2[%c200, %c0_14] : memref<728x128xf32, #tpu.memory_space<vmem>>, vector<16x64xf32>
    %36 = vector.extract_strided_slice %34 {offsets = [0, 0], sizes = [8, 29], strides = [1, 1]} : vector<8x36xf32> to vector<8x29xf32>
    %37 = vector.extract_strided_slice %34 {offsets = [0, 1], sizes = [8, 29], strides = [1, 1]} : vector<8x36xf32> to vector<8x29xf32>
    %38 = vector.extract_strided_slice %34 {offsets = [0, 2], sizes = [8, 29], strides = [1, 1]} : vector<8x36xf32> to vector<8x29xf32>
    %39 = vector.extract_strided_slice %34 {offsets = [0, 3], sizes = [8, 29], strides = [1, 1]} : vector<8x36xf32> to vector<8x29xf32>
    %40 = vector.extract_strided_slice %34 {offsets = [0, 4], sizes = [8, 29], strides = [1, 1]} : vector<8x36xf32> to vector<8x29xf32>
    %41 = vector.extract_strided_slice %34 {offsets = [0, 5], sizes = [8, 29], strides = [1, 1]} : vector<8x36xf32> to vector<8x29xf32>
    %42 = vector.extract_strided_slice %34 {offsets = [0, 6], sizes = [8, 29], strides = [1, 1]} : vector<8x36xf32> to vector<8x29xf32>
    %43 = vector.extract_strided_slice %34 {offsets = [0, 7], sizes = [8, 29], strides = [1, 1]} : vector<8x36xf32> to vector<8x29xf32>
    %44 = tpu.concatenate %36, %37, %38, %39, %40, %41, %42, %43 in 0 : vector<8x29xf32>, vector<8x29xf32>, vector<8x29xf32>, vector<8x29xf32>, vector<8x29xf32>, vector<8x29xf32>, vector<8x29xf32>, vector<8x29xf32> -> vector<64x29xf32>
    %cst_15 = arith.constant dense<0.000000e+00> : vector<16x29xf32>
    %45 = tpu.matmul %35, %44, %cst_15 {dimension_numbers = #tpu.dot_dimension_numbers<[1], [0], [0], [1], [0, 0, 1, 1], [], []>} : vector<16x64xf32>, vector<64x29xf32>, vector<16x29xf32> -> vector<16x29xf32>
    %c232 = arith.constant 232 : index
    %c0_16 = arith.constant 0 : index
    %46 = vector.load %arg2[%c232, %c0_16] : memref<728x128xf32, #tpu.memory_space<vmem>>, vector<29x8xf32>
    %cst_17 = arith.constant dense<0.000000e+00> : vector<16x8xf32>
    %47 = tpu.matmul %45, %46, %cst_17 {dimension_numbers = #tpu.dot_dimension_numbers<[1], [0], [0], [1], [0, 0, 1, 1], [], []>} : vector<16x29xf32>, vector<29x8xf32>, vector<16x8xf32> -> vector<16x8xf32>
    %c216 = arith.constant 216 : index
    %c0_18 = arith.constant 0 : index
    %48 = vector.load %arg2[%c216, %c0_18] : memref<728x128xf32, #tpu.memory_space<vmem>>, vector<16x1xf32>
    %49 = vector.broadcast %48 : vector<16x1xf32> to vector<16x8xf32>
    %50 = arith.addf %47, %49 : vector<16x8xf32>
    %cst_19 = arith.constant 0.000000e+00 : f32
    %51 = vector.broadcast %cst_19 : f32 to vector<16x8xf32>
    %52 = arith.maximumf %50, %51 : vector<16x8xf32>
    %c264 = arith.constant 264 : index
    %c0_20 = arith.constant 0 : index
    %53 = vector.load %arg2[%c264, %c0_20] : memref<728x128xf32, #tpu.memory_space<vmem>>, vector<32x16xf32>
    %cst_21 = arith.constant dense<0.000000e+00> : vector<32x8xf32>
    %54 = tpu.matmul %53, %52, %cst_21 {dimension_numbers = #tpu.dot_dimension_numbers<[1], [0], [0], [1], [0, 0, 1, 1], [], []>} : vector<32x16xf32>, vector<16x8xf32>, vector<32x8xf32> -> vector<32x8xf32>
    %c296 = arith.constant 296 : index
    %c0_22 = arith.constant 0 : index
    %55 = vector.load %arg2[%c296, %c0_22] : memref<728x128xf32, #tpu.memory_space<vmem>>, vector<32x1xf32>
    %56 = vector.broadcast %55 : vector<32x1xf32> to vector<32x8xf32>
    %57 = arith.addf %54, %56 : vector<32x8xf32>
    %58 = vector.extract_strided_slice %57 {offsets = [0, 0], sizes = [16, 8], strides = [1, 1]} : vector<32x8xf32> to vector<16x8xf32>
    %59 = vector.extract_strided_slice %57 {offsets = [16, 0], sizes = [16, 8], strides = [1, 1]} : vector<32x8xf32> to vector<16x8xf32>
    %60 = arith.negf %59 : vector<16x8xf32>
    %61 = math.exp %60 : vector<16x8xf32>
    %cst_23 = arith.constant 1.000000e+00 : f32
    %62 = vector.broadcast %cst_23 : f32 to vector<16x8xf32>
    %63 = arith.addf %62, %61 : vector<16x8xf32>
    %64 = arith.divf %62, %63 : vector<16x8xf32>
    %65 = arith.mulf %58, %64 : vector<16x8xf32>
    %66 = tpu.transpose %65, [1, 0] : vector<16x8xf32> -> vector<8x16xf32>
    %c344 = arith.constant 344 : index
    %c0_24 = arith.constant 0 : index
    %67 = vector.load %arg2[%c344, %c0_24] : memref<728x128xf32, #tpu.memory_space<vmem>>, vector<16x64xf32>
    %c328 = arith.constant 328 : index
    %c0_25 = arith.constant 0 : index
    %68 = vector.load %arg2[%c328, %c0_25] : memref<728x128xf32, #tpu.memory_space<vmem>>, vector<16x64xf32>
    %cst_26 = arith.constant dense<0.000000e+00> : vector<8x64xf32>
    %69 = tpu.matmul %66, %68, %cst_26 {dimension_numbers = #tpu.dot_dimension_numbers<[1], [0], [0], [1], [0, 0, 1, 1], [], []>} : vector<8x16xf32>, vector<16x64xf32>, vector<8x64xf32> -> vector<8x64xf32>
    %c360 = arith.constant 360 : index
    %c0_27 = arith.constant 0 : index
    %70 = vector.load %arg2[%c360, %c0_27] : memref<728x128xf32, #tpu.memory_space<vmem>>, vector<1x64xf32>
    %71 = vector.broadcast %70 : vector<1x64xf32> to vector<8x64xf32>
    %72 = arith.addf %69, %71 : vector<8x64xf32>
    %c0_28 = arith.constant 0 : index
    %c0_29 = arith.constant 0 : index
    %73 = vector.load %arg4[%c0_28, %c0_29] : memref<8x64xf32, #tpu.memory_space<vmem>>, vector<8x64xf32>
    tpu.vector_store %arg4[%c0_28, %c0_29], %72 {strides = array<i32>} : memref<8x64xf32, #tpu.memory_space<vmem>>, vector<8x64xf32>,
    %cst_30 = arith.constant 0.000000e+00 : f32
    %74 = vector.broadcast %cst_30 : f32 to vector<1x16xf32>
    %cst_31 = arith.constant 0.000000e+00 : f32
    %75 = vector.broadcast %cst_31 : f32 to vector<1x16xf32>
    %c0_i32 = arith.constant 0 : i32
    %76 = arith.index_cast %c0_i32 : i32 to index
    %c0_32 = arith.constant 0 : index
    %77 = vector.load %arg4[%76, %c0_32] : memref<8x64xf32, #tpu.memory_space<vmem>>, vector<1x64xf32>
    %cst_33 = arith.constant dense<0.000000e+00> : vector<1x64xf32>
    %78 = tpu.matmul %74, %67, %cst_33 {dimension_numbers = #tpu.dot_dimension_numbers<[1], [0], [0], [1], [0, 0, 1, 1], [], []>} : vector<1x16xf32>, vector<16x64xf32>, vector<1x64xf32> -> vector<1x64xf32>
    %79 = arith.addf %77, %78 : vector<1x64xf32>
    %80 = vector.extract_strided_slice %79 {offsets = [0, 0], sizes = [1, 48], strides = [1, 1]} : vector<1x64xf32> to vector<1x48xf32>
    %81 = arith.negf %80 : vector<1x48xf32>
    %82 = math.exp %81 : vector<1x48xf32>
    %cst_34 = arith.constant 1.000000e+00 : f32
    %83 = vector.broadcast %cst_34 : f32 to vector<1x48xf32>
    %84 = arith.addf %83, %82 : vector<1x48xf32>
    %85 = arith.divf %83, %84 : vector<1x48xf32>
    %86 = vector.extract_strided_slice %85 {offsets = [0, 0], sizes = [1, 16], strides = [1, 1]} : vector<1x48xf32> to vector<1x16xf32>
    %87 = vector.extract_strided_slice %85 {offsets = [0, 16], sizes = [1, 16], strides = [1, 1]} : vector<1x48xf32> to vector<1x16xf32>
    %88 = vector.extract_strided_slice %85 {offsets = [0, 32], sizes = [1, 16], strides = [1, 1]} : vector<1x48xf32> to vector<1x16xf32>
    %89 = vector.extract_strided_slice %79 {offsets = [0, 48], sizes = [1, 16], strides = [1, 1]} : vector<1x64xf32> to vector<1x16xf32>
    %90 = math.tanh %89 : vector<1x16xf32>
    %91 = arith.mulf %87, %75 : vector<1x16xf32>
    %92 = arith.mulf %86, %90 : vector<1x16xf32>
    %93 = arith.addf %91, %92 : vector<1x16xf32>
    %94 = math.tanh %93 : vector<1x16xf32>
    %95 = arith.mulf %88, %94 : vector<1x16xf32>
    %96 = arith.index_cast %c0_i32 : i32 to index
    %c0_35 = arith.constant 0 : index
    %97 = vector.load %arg5[%96, %c0_35] : memref<8x32xf32, #tpu.memory_space<vmem>>, vector<1x16xf32>
    tpu.vector_store %arg5[%96, %c0_35], %95 {strides = array<i32>} : memref<8x32xf32, #tpu.memory_space<vmem>>, vector<1x16xf32>,
    %c1_i32 = arith.constant 1 : i32
    %98 = arith.index_cast %c1_i32 : i32 to index
    %c0_36 = arith.constant 0 : index
    %99 = vector.load %arg4[%98, %c0_36] : memref<8x64xf32, #tpu.memory_space<vmem>>, vector<1x64xf32>
    %cst_37 = arith.constant dense<0.000000e+00> : vector<1x64xf32>
    %100 = tpu.matmul %95, %67, %cst_37 {dimension_numbers = #tpu.dot_dimension_numbers<[1], [0], [0], [1], [0, 0, 1, 1], [], []>} : vector<1x16xf32>, vector<16x64xf32>, vector<1x64xf32> -> vector<1x64xf32>
    %101 = arith.addf %99, %100 : vector<1x64xf32>
    %102 = vector.extract_strided_slice %101 {offsets = [0, 0], sizes = [1, 48], strides = [1, 1]} : vector<1x64xf32> to vector<1x48xf32>
    %103 = arith.negf %102 : vector<1x48xf32>
    %104 = math.exp %103 : vector<1x48xf32>
    %cst_38 = arith.constant 1.000000e+00 : f32
    %105 = vector.broadcast %cst_38 : f32 to vector<1x48xf32>
    %106 = arith.addf %105, %104 : vector<1x48xf32>
    %107 = arith.divf %105, %106 : vector<1x48xf32>
    %108 = vector.extract_strided_slice %107 {offsets = [0, 0], sizes = [1, 16], strides = [1, 1]} : vector<1x48xf32> to vector<1x16xf32>
    %109 = vector.extract_strided_slice %107 {offsets = [0, 16], sizes = [1, 16], strides = [1, 1]} : vector<1x48xf32> to vector<1x16xf32>
    %110 = vector.extract_strided_slice %107 {offsets = [0, 32], sizes = [1, 16], strides = [1, 1]} : vector<1x48xf32> to vector<1x16xf32>
    %111 = vector.extract_strided_slice %101 {offsets = [0, 48], sizes = [1, 16], strides = [1, 1]} : vector<1x64xf32> to vector<1x16xf32>
    %112 = math.tanh %111 : vector<1x16xf32>
    %113 = arith.mulf %109, %93 : vector<1x16xf32>
    %114 = arith.mulf %108, %112 : vector<1x16xf32>
    %115 = arith.addf %113, %114 : vector<1x16xf32>
    %116 = math.tanh %115 : vector<1x16xf32>
    %117 = arith.mulf %110, %116 : vector<1x16xf32>
    %118 = arith.index_cast %c1_i32 : i32 to index
    %c0_39 = arith.constant 0 : index
    %119 = vector.load %arg5[%118, %c0_39] : memref<8x32xf32, #tpu.memory_space<vmem>>, vector<1x16xf32>
    tpu.vector_store %arg5[%118, %c0_39], %117 {strides = array<i32>} : memref<8x32xf32, #tpu.memory_space<vmem>>, vector<1x16xf32>,
    %c2_i32 = arith.constant 2 : i32
    %120 = arith.index_cast %c2_i32 : i32 to index
    %c0_40 = arith.constant 0 : index
    %121 = vector.load %arg4[%120, %c0_40] : memref<8x64xf32, #tpu.memory_space<vmem>>, vector<1x64xf32>
    %cst_41 = arith.constant dense<0.000000e+00> : vector<1x64xf32>
    %122 = tpu.matmul %117, %67, %cst_41 {dimension_numbers = #tpu.dot_dimension_numbers<[1], [0], [0], [1], [0, 0, 1, 1], [], []>} : vector<1x16xf32>, vector<16x64xf32>, vector<1x64xf32> -> vector<1x64xf32>
    %123 = arith.addf %121, %122 : vector<1x64xf32>
    %124 = vector.extract_strided_slice %123 {offsets = [0, 0], sizes = [1, 48], strides = [1, 1]} : vector<1x64xf32> to vector<1x48xf32>
    %125 = arith.negf %124 : vector<1x48xf32>
    %126 = math.exp %125 : vector<1x48xf32>
    %cst_42 = arith.constant 1.000000e+00 : f32
    %127 = vector.broadcast %cst_42 : f32 to vector<1x48xf32>
    %128 = arith.addf %127, %126 : vector<1x48xf32>
    %129 = arith.divf %127, %128 : vector<1x48xf32>
    %130 = vector.extract_strided_slice %129 {offsets = [0, 0], sizes = [1, 16], strides = [1, 1]} : vector<1x48xf32> to vector<1x16xf32>
    %131 = vector.extract_strided_slice %129 {offsets = [0, 16], sizes = [1, 16], strides = [1, 1]} : vector<1x48xf32> to vector<1x16xf32>
    %132 = vector.extract_strided_slice %129 {offsets = [0, 32], sizes = [1, 16], strides = [1, 1]} : vector<1x48xf32> to vector<1x16xf32>
    %133 = vector.extract_strided_slice %123 {offsets = [0, 48], sizes = [1, 16], strides = [1, 1]} : vector<1x64xf32> to vector<1x16xf32>
    %134 = math.tanh %133 : vector<1x16xf32>
    %135 = arith.mulf %131, %115 : vector<1x16xf32>
    %136 = arith.mulf %130, %134 : vector<1x16xf32>
    %137 = arith.addf %135, %136 : vector<1x16xf32>
    %138 = math.tanh %137 : vector<1x16xf32>
    %139 = arith.mulf %132, %138 : vector<1x16xf32>
    %140 = arith.index_cast %c2_i32 : i32 to index
    %c0_43 = arith.constant 0 : index
    %141 = vector.load %arg5[%140, %c0_43] : memref<8x32xf32, #tpu.memory_space<vmem>>, vector<1x16xf32>
    tpu.vector_store %arg5[%140, %c0_43], %139 {strides = array<i32>} : memref<8x32xf32, #tpu.memory_space<vmem>>, vector<1x16xf32>,
    %c3_i32 = arith.constant 3 : i32
    %142 = arith.index_cast %c3_i32 : i32 to index
    %c0_44 = arith.constant 0 : index
    %143 = vector.load %arg4[%142, %c0_44] : memref<8x64xf32, #tpu.memory_space<vmem>>, vector<1x64xf32>
    %cst_45 = arith.constant dense<0.000000e+00> : vector<1x64xf32>
    %144 = tpu.matmul %139, %67, %cst_45 {dimension_numbers = #tpu.dot_dimension_numbers<[1], [0], [0], [1], [0, 0, 1, 1], [], []>} : vector<1x16xf32>, vector<16x64xf32>, vector<1x64xf32> -> vector<1x64xf32>
    %145 = arith.addf %143, %144 : vector<1x64xf32>
    %146 = vector.extract_strided_slice %145 {offsets = [0, 0], sizes = [1, 48], strides = [1, 1]} : vector<1x64xf32> to vector<1x48xf32>
    %147 = arith.negf %146 : vector<1x48xf32>
    %148 = math.exp %147 : vector<1x48xf32>
    %cst_46 = arith.constant 1.000000e+00 : f32
    %149 = vector.broadcast %cst_46 : f32 to vector<1x48xf32>
    %150 = arith.addf %149, %148 : vector<1x48xf32>
    %151 = arith.divf %149, %150 : vector<1x48xf32>
    %152 = vector.extract_strided_slice %151 {offsets = [0, 0], sizes = [1, 16], strides = [1, 1]} : vector<1x48xf32> to vector<1x16xf32>
    %153 = vector.extract_strided_slice %151 {offsets = [0, 16], sizes = [1, 16], strides = [1, 1]} : vector<1x48xf32> to vector<1x16xf32>
    %154 = vector.extract_strided_slice %151 {offsets = [0, 32], sizes = [1, 16], strides = [1, 1]} : vector<1x48xf32> to vector<1x16xf32>
    %155 = vector.extract_strided_slice %145 {offsets = [0, 48], sizes = [1, 16], strides = [1, 1]} : vector<1x64xf32> to vector<1x16xf32>
    %156 = math.tanh %155 : vector<1x16xf32>
    %157 = arith.mulf %153, %137 : vector<1x16xf32>
    %158 = arith.mulf %152, %156 : vector<1x16xf32>
    %159 = arith.addf %157, %158 : vector<1x16xf32>
    %160 = math.tanh %159 : vector<1x16xf32>
    %161 = arith.mulf %154, %160 : vector<1x16xf32>
    %162 = arith.index_cast %c3_i32 : i32 to index
    %c0_47 = arith.constant 0 : index
    %163 = vector.load %arg5[%162, %c0_47] : memref<8x32xf32, #tpu.memory_space<vmem>>, vector<1x16xf32>
    tpu.vector_store %arg5[%162, %c0_47], %161 {strides = array<i32>} : memref<8x32xf32, #tpu.memory_space<vmem>>, vector<1x16xf32>,
    %c4_i32 = arith.constant 4 : i32
    %164 = arith.index_cast %c4_i32 : i32 to index
    %c0_48 = arith.constant 0 : index
    %165 = vector.load %arg4[%164, %c0_48] : memref<8x64xf32, #tpu.memory_space<vmem>>, vector<1x64xf32>
    %cst_49 = arith.constant dense<0.000000e+00> : vector<1x64xf32>
    %166 = tpu.matmul %161, %67, %cst_49 {dimension_numbers = #tpu.dot_dimension_numbers<[1], [0], [0], [1], [0, 0, 1, 1], [], []>} : vector<1x16xf32>, vector<16x64xf32>, vector<1x64xf32> -> vector<1x64xf32>
    %167 = arith.addf %165, %166 : vector<1x64xf32>
    %168 = vector.extract_strided_slice %167 {offsets = [0, 0], sizes = [1, 48], strides = [1, 1]} : vector<1x64xf32> to vector<1x48xf32>
    %169 = arith.negf %168 : vector<1x48xf32>
    %170 = math.exp %169 : vector<1x48xf32>
    %cst_50 = arith.constant 1.000000e+00 : f32
    %171 = vector.broadcast %cst_50 : f32 to vector<1x48xf32>
    %172 = arith.addf %171, %170 : vector<1x48xf32>
    %173 = arith.divf %171, %172 : vector<1x48xf32>
    %174 = vector.extract_strided_slice %173 {offsets = [0, 0], sizes = [1, 16], strides = [1, 1]} : vector<1x48xf32> to vector<1x16xf32>
    %175 = vector.extract_strided_slice %173 {offsets = [0, 16], sizes = [1, 16], strides = [1, 1]} : vector<1x48xf32> to vector<1x16xf32>
    %176 = vector.extract_strided_slice %173 {offsets = [0, 32], sizes = [1, 16], strides = [1, 1]} : vector<1x48xf32> to vector<1x16xf32>
    %177 = vector.extract_strided_slice %167 {offsets = [0, 48], sizes = [1, 16], strides = [1, 1]} : vector<1x64xf32> to vector<1x16xf32>
    %178 = math.tanh %177 : vector<1x16xf32>
    %179 = arith.mulf %175, %159 : vector<1x16xf32>
    %180 = arith.mulf %174, %178 : vector<1x16xf32>
    %181 = arith.addf %179, %180 : vector<1x16xf32>
    %182 = math.tanh %181 : vector<1x16xf32>
    %183 = arith.mulf %176, %182 : vector<1x16xf32>
    %184 = arith.index_cast %c4_i32 : i32 to index
    %c0_51 = arith.constant 0 : index
    %185 = vector.load %arg5[%184, %c0_51] : memref<8x32xf32, #tpu.memory_space<vmem>>, vector<1x16xf32>
    tpu.vector_store %arg5[%184, %c0_51], %183 {strides = array<i32>} : memref<8x32xf32, #tpu.memory_space<vmem>>, vector<1x16xf32>,
    %c5_i32 = arith.constant 5 : i32
    %186 = arith.index_cast %c5_i32 : i32 to index
    %c0_52 = arith.constant 0 : index
    %187 = vector.load %arg4[%186, %c0_52] : memref<8x64xf32, #tpu.memory_space<vmem>>, vector<1x64xf32>
    %cst_53 = arith.constant dense<0.000000e+00> : vector<1x64xf32>
    %188 = tpu.matmul %183, %67, %cst_53 {dimension_numbers = #tpu.dot_dimension_numbers<[1], [0], [0], [1], [0, 0, 1, 1], [], []>} : vector<1x16xf32>, vector<16x64xf32>, vector<1x64xf32> -> vector<1x64xf32>
    %189 = arith.addf %187, %188 : vector<1x64xf32>
    %190 = vector.extract_strided_slice %189 {offsets = [0, 0], sizes = [1, 48], strides = [1, 1]} : vector<1x64xf32> to vector<1x48xf32>
    %191 = arith.negf %190 : vector<1x48xf32>
    %192 = math.exp %191 : vector<1x48xf32>
    %cst_54 = arith.constant 1.000000e+00 : f32
    %193 = vector.broadcast %cst_54 : f32 to vector<1x48xf32>
    %194 = arith.addf %193, %192 : vector<1x48xf32>
    %195 = arith.divf %193, %194 : vector<1x48xf32>
    %196 = vector.extract_strided_slice %195 {offsets = [0, 0], sizes = [1, 16], strides = [1, 1]} : vector<1x48xf32> to vector<1x16xf32>
    %197 = vector.extract_strided_slice %195 {offsets = [0, 16], sizes = [1, 16], strides = [1, 1]} : vector<1x48xf32> to vector<1x16xf32>
    %198 = vector.extract_strided_slice %195 {offsets = [0, 32], sizes = [1, 16], strides = [1, 1]} : vector<1x48xf32> to vector<1x16xf32>
    %199 = vector.extract_strided_slice %189 {offsets = [0, 48], sizes = [1, 16], strides = [1, 1]} : vector<1x64xf32> to vector<1x16xf32>
    %200 = math.tanh %199 : vector<1x16xf32>
    %201 = arith.mulf %197, %181 : vector<1x16xf32>
    %202 = arith.mulf %196, %200 : vector<1x16xf32>
    %203 = arith.addf %201, %202 : vector<1x16xf32>
    %204 = math.tanh %203 : vector<1x16xf32>
    %205 = arith.mulf %198, %204 : vector<1x16xf32>
    %206 = arith.index_cast %c5_i32 : i32 to index
    %c0_55 = arith.constant 0 : index
    %207 = vector.load %arg5[%206, %c0_55] : memref<8x32xf32, #tpu.memory_space<vmem>>, vector<1x16xf32>
    tpu.vector_store %arg5[%206, %c0_55], %205 {strides = array<i32>} : memref<8x32xf32, #tpu.memory_space<vmem>>, vector<1x16xf32>,
    %c6_i32 = arith.constant 6 : i32
    %208 = arith.index_cast %c6_i32 : i32 to index
    %c0_56 = arith.constant 0 : index
    %209 = vector.load %arg4[%208, %c0_56] : memref<8x64xf32, #tpu.memory_space<vmem>>, vector<1x64xf32>
    %cst_57 = arith.constant dense<0.000000e+00> : vector<1x64xf32>
    %210 = tpu.matmul %205, %67, %cst_57 {dimension_numbers = #tpu.dot_dimension_numbers<[1], [0], [0], [1], [0, 0, 1, 1], [], []>} : vector<1x16xf32>, vector<16x64xf32>, vector<1x64xf32> -> vector<1x64xf32>
    %211 = arith.addf %209, %210 : vector<1x64xf32>
    %212 = vector.extract_strided_slice %211 {offsets = [0, 0], sizes = [1, 48], strides = [1, 1]} : vector<1x64xf32> to vector<1x48xf32>
    %213 = arith.negf %212 : vector<1x48xf32>
    %214 = math.exp %213 : vector<1x48xf32>
    %cst_58 = arith.constant 1.000000e+00 : f32
    %215 = vector.broadcast %cst_58 : f32 to vector<1x48xf32>
    %216 = arith.addf %215, %214 : vector<1x48xf32>
    %217 = arith.divf %215, %216 : vector<1x48xf32>
    %218 = vector.extract_strided_slice %217 {offsets = [0, 0], sizes = [1, 16], strides = [1, 1]} : vector<1x48xf32> to vector<1x16xf32>
    %219 = vector.extract_strided_slice %217 {offsets = [0, 16], sizes = [1, 16], strides = [1, 1]} : vector<1x48xf32> to vector<1x16xf32>
    %220 = vector.extract_strided_slice %217 {offsets = [0, 32], sizes = [1, 16], strides = [1, 1]} : vector<1x48xf32> to vector<1x16xf32>
    %221 = vector.extract_strided_slice %211 {offsets = [0, 48], sizes = [1, 16], strides = [1, 1]} : vector<1x64xf32> to vector<1x16xf32>
    %222 = math.tanh %221 : vector<1x16xf32>
    %223 = arith.mulf %219, %203 : vector<1x16xf32>
    %224 = arith.mulf %218, %222 : vector<1x16xf32>
    %225 = arith.addf %223, %224 : vector<1x16xf32>
    %226 = math.tanh %225 : vector<1x16xf32>
    %227 = arith.mulf %220, %226 : vector<1x16xf32>
    %228 = arith.index_cast %c6_i32 : i32 to index
    %c0_59 = arith.constant 0 : index
    %229 = vector.load %arg5[%228, %c0_59] : memref<8x32xf32, #tpu.memory_space<vmem>>, vector<1x16xf32>
    tpu.vector_store %arg5[%228, %c0_59], %227 {strides = array<i32>} : memref<8x32xf32, #tpu.memory_space<vmem>>, vector<1x16xf32>,
    %c7_i32 = arith.constant 7 : i32
    %230 = arith.index_cast %c7_i32 : i32 to index
    %c0_60 = arith.constant 0 : index
    %231 = vector.load %arg4[%230, %c0_60] : memref<8x64xf32, #tpu.memory_space<vmem>>, vector<1x64xf32>
    %cst_61 = arith.constant dense<0.000000e+00> : vector<1x64xf32>
    %232 = tpu.matmul %227, %67, %cst_61 {dimension_numbers = #tpu.dot_dimension_numbers<[1], [0], [0], [1], [0, 0, 1, 1], [], []>} : vector<1x16xf32>, vector<16x64xf32>, vector<1x64xf32> -> vector<1x64xf32>
    %233 = arith.addf %231, %232 : vector<1x64xf32>
    %234 = vector.extract_strided_slice %233 {offsets = [0, 0], sizes = [1, 48], strides = [1, 1]} : vector<1x64xf32> to vector<1x48xf32>
    %235 = arith.negf %234 : vector<1x48xf32>
    %236 = math.exp %235 : vector<1x48xf32>
    %cst_62 = arith.constant 1.000000e+00 : f32
    %237 = vector.broadcast %cst_62 : f32 to vector<1x48xf32>
    %238 = arith.addf %237, %236 : vector<1x48xf32>
    %239 = arith.divf %237, %238 : vector<1x48xf32>
    %240 = vector.extract_strided_slice %239 {offsets = [0, 0], sizes = [1, 16], strides = [1, 1]} : vector<1x48xf32> to vector<1x16xf32>
    %241 = vector.extract_strided_slice %239 {offsets = [0, 16], sizes = [1, 16], strides = [1, 1]} : vector<1x48xf32> to vector<1x16xf32>
    %242 = vector.extract_strided_slice %239 {offsets = [0, 32], sizes = [1, 16], strides = [1, 1]} : vector<1x48xf32> to vector<1x16xf32>
    %243 = vector.extract_strided_slice %233 {offsets = [0, 48], sizes = [1, 16], strides = [1, 1]} : vector<1x64xf32> to vector<1x16xf32>
    %244 = math.tanh %243 : vector<1x16xf32>
    %245 = arith.mulf %241, %225 : vector<1x16xf32>
    %246 = arith.mulf %240, %244 : vector<1x16xf32>
    %247 = arith.addf %245, %246 : vector<1x16xf32>
    %248 = math.tanh %247 : vector<1x16xf32>
    %249 = arith.mulf %242, %248 : vector<1x16xf32>
    %250 = arith.index_cast %c7_i32 : i32 to index
    %c0_63 = arith.constant 0 : index
    %251 = vector.load %arg5[%250, %c0_63] : memref<8x32xf32, #tpu.memory_space<vmem>>, vector<1x16xf32>
    tpu.vector_store %arg5[%250, %c0_63], %249 {strides = array<i32>} : memref<8x32xf32, #tpu.memory_space<vmem>>, vector<1x16xf32>,
    %c8_i32 = arith.constant 8 : i32
    %c384 = arith.constant 384 : index
    %c0_64 = arith.constant 0 : index
    %252 = vector.load %arg2[%c384, %c0_64] : memref<728x128xf32, #tpu.memory_space<vmem>>, vector<16x64xf32>
    %c368 = arith.constant 368 : index
    %c0_65 = arith.constant 0 : index
    %253 = vector.load %arg2[%c368, %c0_65] : memref<728x128xf32, #tpu.memory_space<vmem>>, vector<16x64xf32>
    %cst_66 = arith.constant dense<0.000000e+00> : vector<8x64xf32>
    %254 = tpu.matmul %66, %253, %cst_66 {dimension_numbers = #tpu.dot_dimension_numbers<[1], [0], [0], [1], [0, 0, 1, 1], [], []>} : vector<8x16xf32>, vector<16x64xf32>, vector<8x64xf32> -> vector<8x64xf32>
    %c400 = arith.constant 400 : index
    %c0_67 = arith.constant 0 : index
    %255 = vector.load %arg2[%c400, %c0_67] : memref<728x128xf32, #tpu.memory_space<vmem>>, vector<1x64xf32>
    %256 = vector.broadcast %255 : vector<1x64xf32> to vector<8x64xf32>
    %257 = arith.addf %254, %256 : vector<8x64xf32>
    %c0_68 = arith.constant 0 : index
    %c0_69 = arith.constant 0 : index
    %258 = vector.load %arg4[%c0_68, %c0_69] : memref<8x64xf32, #tpu.memory_space<vmem>>, vector<8x64xf32>
    tpu.vector_store %arg4[%c0_68, %c0_69], %257 {strides = array<i32>} : memref<8x64xf32, #tpu.memory_space<vmem>>, vector<8x64xf32>,
    %cst_70 = arith.constant 0.000000e+00 : f32
    %259 = vector.broadcast %cst_70 : f32 to vector<1x16xf32>
    %cst_71 = arith.constant 0.000000e+00 : f32
    %260 = vector.broadcast %cst_71 : f32 to vector<1x16xf32>
    %c0_i32_72 = arith.constant 0 : i32
    %c7_i32_73 = arith.constant 7 : i32
    %261 = arith.subi %c7_i32_73, %c0_i32_72 : i32
    %262 = arith.index_cast %261 : i32 to index
    %c0_74 = arith.constant 0 : index
    %263 = vector.load %arg4[%262, %c0_74] : memref<8x64xf32, #tpu.memory_space<vmem>>, vector<1x64xf32>
    %cst_75 = arith.constant dense<0.000000e+00> : vector<1x64xf32>
    %264 = tpu.matmul %259, %252, %cst_75 {dimension_numbers = #tpu.dot_dimension_numbers<[1], [0], [0], [1], [0, 0, 1, 1], [], []>} : vector<1x16xf32>, vector<16x64xf32>, vector<1x64xf32> -> vector<1x64xf32>
    %265 = arith.addf %263, %264 : vector<1x64xf32>
    %266 = vector.extract_strided_slice %265 {offsets = [0, 0], sizes = [1, 48], strides = [1, 1]} : vector<1x64xf32> to vector<1x48xf32>
    %267 = arith.negf %266 : vector<1x48xf32>
    %268 = math.exp %267 : vector<1x48xf32>
    %cst_76 = arith.constant 1.000000e+00 : f32
    %269 = vector.broadcast %cst_76 : f32 to vector<1x48xf32>
    %270 = arith.addf %269, %268 : vector<1x48xf32>
    %271 = arith.divf %269, %270 : vector<1x48xf32>
    %272 = vector.extract_strided_slice %271 {offsets = [0, 0], sizes = [1, 16], strides = [1, 1]} : vector<1x48xf32> to vector<1x16xf32>
    %273 = vector.extract_strided_slice %271 {offsets = [0, 16], sizes = [1, 16], strides = [1, 1]} : vector<1x48xf32> to vector<1x16xf32>
    %274 = vector.extract_strided_slice %271 {offsets = [0, 32], sizes = [1, 16], strides = [1, 1]} : vector<1x48xf32> to vector<1x16xf32>
    %275 = vector.extract_strided_slice %265 {offsets = [0, 48], sizes = [1, 16], strides = [1, 1]} : vector<1x64xf32> to vector<1x16xf32>
    %276 = math.tanh %275 : vector<1x16xf32>
    %277 = arith.mulf %273, %260 : vector<1x16xf32>
    %278 = arith.mulf %272, %276 : vector<1x16xf32>
    %279 = arith.addf %277, %278 : vector<1x16xf32>
    %280 = math.tanh %279 : vector<1x16xf32>
    %281 = arith.mulf %274, %280 : vector<1x16xf32>
    %282 = arith.index_cast %261 : i32 to index
    %c16_77 = arith.constant 16 : index
    %283 = vector.load %arg5[%282, %c16_77] : memref<8x32xf32, #tpu.memory_space<vmem>>, vector<1x16xf32>
    tpu.vector_store %arg5[%282, %c16_77], %281 {strides = array<i32>} : memref<8x32xf32, #tpu.memory_space<vmem>>, vector<1x16xf32>,
    %c1_i32_78 = arith.constant 1 : i32
    %c7_i32_79 = arith.constant 7 : i32
    %284 = arith.subi %c7_i32_79, %c1_i32_78 : i32
    %285 = arith.index_cast %284 : i32 to index
    %c0_80 = arith.constant 0 : index
    %286 = vector.load %arg4[%285, %c0_80] : memref<8x64xf32, #tpu.memory_space<vmem>>, vector<1x64xf32>
    %cst_81 = arith.constant dense<0.000000e+00> : vector<1x64xf32>
    %287 = tpu.matmul %281, %252, %cst_81 {dimension_numbers = #tpu.dot_dimension_numbers<[1], [0], [0], [1], [0, 0, 1, 1], [], []>} : vector<1x16xf32>, vector<16x64xf32>, vector<1x64xf32> -> vector<1x64xf32>
    %288 = arith.addf %286, %287 : vector<1x64xf32>
    %289 = vector.extract_strided_slice %288 {offsets = [0, 0], sizes = [1, 48], strides = [1, 1]} : vector<1x64xf32> to vector<1x48xf32>
    %290 = arith.negf %289 : vector<1x48xf32>
    %291 = math.exp %290 : vector<1x48xf32>
    %cst_82 = arith.constant 1.000000e+00 : f32
    %292 = vector.broadcast %cst_82 : f32 to vector<1x48xf32>
    %293 = arith.addf %292, %291 : vector<1x48xf32>
    %294 = arith.divf %292, %293 : vector<1x48xf32>
    %295 = vector.extract_strided_slice %294 {offsets = [0, 0], sizes = [1, 16], strides = [1, 1]} : vector<1x48xf32> to vector<1x16xf32>
    %296 = vector.extract_strided_slice %294 {offsets = [0, 16], sizes = [1, 16], strides = [1, 1]} : vector<1x48xf32> to vector<1x16xf32>
    %297 = vector.extract_strided_slice %294 {offsets = [0, 32], sizes = [1, 16], strides = [1, 1]} : vector<1x48xf32> to vector<1x16xf32>
    %298 = vector.extract_strided_slice %288 {offsets = [0, 48], sizes = [1, 16], strides = [1, 1]} : vector<1x64xf32> to vector<1x16xf32>
    %299 = math.tanh %298 : vector<1x16xf32>
    %300 = arith.mulf %296, %279 : vector<1x16xf32>
    %301 = arith.mulf %295, %299 : vector<1x16xf32>
    %302 = arith.addf %300, %301 : vector<1x16xf32>
    %303 = math.tanh %302 : vector<1x16xf32>
    %304 = arith.mulf %297, %303 : vector<1x16xf32>
    %305 = arith.index_cast %284 : i32 to index
    %c16_83 = arith.constant 16 : index
    %306 = vector.load %arg5[%305, %c16_83] : memref<8x32xf32, #tpu.memory_space<vmem>>, vector<1x16xf32>
    tpu.vector_store %arg5[%305, %c16_83], %304 {strides = array<i32>} : memref<8x32xf32, #tpu.memory_space<vmem>>, vector<1x16xf32>,
    %c2_i32_84 = arith.constant 2 : i32
    %c7_i32_85 = arith.constant 7 : i32
    %307 = arith.subi %c7_i32_85, %c2_i32_84 : i32
    %308 = arith.index_cast %307 : i32 to index
    %c0_86 = arith.constant 0 : index
    %309 = vector.load %arg4[%308, %c0_86] : memref<8x64xf32, #tpu.memory_space<vmem>>, vector<1x64xf32>
    %cst_87 = arith.constant dense<0.000000e+00> : vector<1x64xf32>
    %310 = tpu.matmul %304, %252, %cst_87 {dimension_numbers = #tpu.dot_dimension_numbers<[1], [0], [0], [1], [0, 0, 1, 1], [], []>} : vector<1x16xf32>, vector<16x64xf32>, vector<1x64xf32> -> vector<1x64xf32>
    %311 = arith.addf %309, %310 : vector<1x64xf32>
    %312 = vector.extract_strided_slice %311 {offsets = [0, 0], sizes = [1, 48], strides = [1, 1]} : vector<1x64xf32> to vector<1x48xf32>
    %313 = arith.negf %312 : vector<1x48xf32>
    %314 = math.exp %313 : vector<1x48xf32>
    %cst_88 = arith.constant 1.000000e+00 : f32
    %315 = vector.broadcast %cst_88 : f32 to vector<1x48xf32>
    %316 = arith.addf %315, %314 : vector<1x48xf32>
    %317 = arith.divf %315, %316 : vector<1x48xf32>
    %318 = vector.extract_strided_slice %317 {offsets = [0, 0], sizes = [1, 16], strides = [1, 1]} : vector<1x48xf32> to vector<1x16xf32>
    %319 = vector.extract_strided_slice %317 {offsets = [0, 16], sizes = [1, 16], strides = [1, 1]} : vector<1x48xf32> to vector<1x16xf32>
    %320 = vector.extract_strided_slice %317 {offsets = [0, 32], sizes = [1, 16], strides = [1, 1]} : vector<1x48xf32> to vector<1x16xf32>
    %321 = vector.extract_strided_slice %311 {offsets = [0, 48], sizes = [1, 16], strides = [1, 1]} : vector<1x64xf32> to vector<1x16xf32>
    %322 = math.tanh %321 : vector<1x16xf32>
    %323 = arith.mulf %319, %302 : vector<1x16xf32>
    %324 = arith.mulf %318, %322 : vector<1x16xf32>
    %325 = arith.addf %323, %324 : vector<1x16xf32>
    %326 = math.tanh %325 : vector<1x16xf32>
    %327 = arith.mulf %320, %326 : vector<1x16xf32>
    %328 = arith.index_cast %307 : i32 to index
    %c16_89 = arith.constant 16 : index
    %329 = vector.load %arg5[%328, %c16_89] : memref<8x32xf32, #tpu.memory_space<vmem>>, vector<1x16xf32>
    tpu.vector_store %arg5[%328, %c16_89], %327 {strides = array<i32>} : memref<8x32xf32, #tpu.memory_space<vmem>>, vector<1x16xf32>,
    %c3_i32_90 = arith.constant 3 : i32
    %c7_i32_91 = arith.constant 7 : i32
    %330 = arith.subi %c7_i32_91, %c3_i32_90 : i32
    %331 = arith.index_cast %330 : i32 to index
    %c0_92 = arith.constant 0 : index
    %332 = vector.load %arg4[%331, %c0_92] : memref<8x64xf32, #tpu.memory_space<vmem>>, vector<1x64xf32>
    %cst_93 = arith.constant dense<0.000000e+00> : vector<1x64xf32>
    %333 = tpu.matmul %327, %252, %cst_93 {dimension_numbers = #tpu.dot_dimension_numbers<[1], [0], [0], [1], [0, 0, 1, 1], [], []>} : vector<1x16xf32>, vector<16x64xf32>, vector<1x64xf32> -> vector<1x64xf32>
    %334 = arith.addf %332, %333 : vector<1x64xf32>
    %335 = vector.extract_strided_slice %334 {offsets = [0, 0], sizes = [1, 48], strides = [1, 1]} : vector<1x64xf32> to vector<1x48xf32>
    %336 = arith.negf %335 : vector<1x48xf32>
    %337 = math.exp %336 : vector<1x48xf32>
    %cst_94 = arith.constant 1.000000e+00 : f32
    %338 = vector.broadcast %cst_94 : f32 to vector<1x48xf32>
    %339 = arith.addf %338, %337 : vector<1x48xf32>
    %340 = arith.divf %338, %339 : vector<1x48xf32>
    %341 = vector.extract_strided_slice %340 {offsets = [0, 0], sizes = [1, 16], strides = [1, 1]} : vector<1x48xf32> to vector<1x16xf32>
    %342 = vector.extract_strided_slice %340 {offsets = [0, 16], sizes = [1, 16], strides = [1, 1]} : vector<1x48xf32> to vector<1x16xf32>
    %343 = vector.extract_strided_slice %340 {offsets = [0, 32], sizes = [1, 16], strides = [1, 1]} : vector<1x48xf32> to vector<1x16xf32>
    %344 = vector.extract_strided_slice %334 {offsets = [0, 48], sizes = [1, 16], strides = [1, 1]} : vector<1x64xf32> to vector<1x16xf32>
    %345 = math.tanh %344 : vector<1x16xf32>
    %346 = arith.mulf %342, %325 : vector<1x16xf32>
    %347 = arith.mulf %341, %345 : vector<1x16xf32>
    %348 = arith.addf %346, %347 : vector<1x16xf32>
    %349 = math.tanh %348 : vector<1x16xf32>
    %350 = arith.mulf %343, %349 : vector<1x16xf32>
    %351 = arith.index_cast %330 : i32 to index
    %c16_95 = arith.constant 16 : index
    %352 = vector.load %arg5[%351, %c16_95] : memref<8x32xf32, #tpu.memory_space<vmem>>, vector<1x16xf32>
    tpu.vector_store %arg5[%351, %c16_95], %350 {strides = array<i32>} : memref<8x32xf32, #tpu.memory_space<vmem>>, vector<1x16xf32>,
    %c4_i32_96 = arith.constant 4 : i32
    %c7_i32_97 = arith.constant 7 : i32
    %353 = arith.subi %c7_i32_97, %c4_i32_96 : i32
    %354 = arith.index_cast %353 : i32 to index
    %c0_98 = arith.constant 0 : index
    %355 = vector.load %arg4[%354, %c0_98] : memref<8x64xf32, #tpu.memory_space<vmem>>, vector<1x64xf32>
    %cst_99 = arith.constant dense<0.000000e+00> : vector<1x64xf32>
    %356 = tpu.matmul %350, %252, %cst_99 {dimension_numbers = #tpu.dot_dimension_numbers<[1], [0], [0], [1], [0, 0, 1, 1], [], []>} : vector<1x16xf32>, vector<16x64xf32>, vector<1x64xf32> -> vector<1x64xf32>
    %357 = arith.addf %355, %356 : vector<1x64xf32>
    %358 = vector.extract_strided_slice %357 {offsets = [0, 0], sizes = [1, 48], strides = [1, 1]} : vector<1x64xf32> to vector<1x48xf32>
    %359 = arith.negf %358 : vector<1x48xf32>
    %360 = math.exp %359 : vector<1x48xf32>
    %cst_100 = arith.constant 1.000000e+00 : f32
    %361 = vector.broadcast %cst_100 : f32 to vector<1x48xf32>
    %362 = arith.addf %361, %360 : vector<1x48xf32>
    %363 = arith.divf %361, %362 : vector<1x48xf32>
    %364 = vector.extract_strided_slice %363 {offsets = [0, 0], sizes = [1, 16], strides = [1, 1]} : vector<1x48xf32> to vector<1x16xf32>
    %365 = vector.extract_strided_slice %363 {offsets = [0, 16], sizes = [1, 16], strides = [1, 1]} : vector<1x48xf32> to vector<1x16xf32>
    %366 = vector.extract_strided_slice %363 {offsets = [0, 32], sizes = [1, 16], strides = [1, 1]} : vector<1x48xf32> to vector<1x16xf32>
    %367 = vector.extract_strided_slice %357 {offsets = [0, 48], sizes = [1, 16], strides = [1, 1]} : vector<1x64xf32> to vector<1x16xf32>
    %368 = math.tanh %367 : vector<1x16xf32>
    %369 = arith.mulf %365, %348 : vector<1x16xf32>
    %370 = arith.mulf %364, %368 : vector<1x16xf32>
    %371 = arith.addf %369, %370 : vector<1x16xf32>
    %372 = math.tanh %371 : vector<1x16xf32>
    %373 = arith.mulf %366, %372 : vector<1x16xf32>
    %374 = arith.index_cast %353 : i32 to index
    %c16_101 = arith.constant 16 : index
    %375 = vector.load %arg5[%374, %c16_101] : memref<8x32xf32, #tpu.memory_space<vmem>>, vector<1x16xf32>
    tpu.vector_store %arg5[%374, %c16_101], %373 {strides = array<i32>} : memref<8x32xf32, #tpu.memory_space<vmem>>, vector<1x16xf32>,
    %c5_i32_102 = arith.constant 5 : i32
    %c7_i32_103 = arith.constant 7 : i32
    %376 = arith.subi %c7_i32_103, %c5_i32_102 : i32
    %377 = arith.index_cast %376 : i32 to index
    %c0_104 = arith.constant 0 : index
    %378 = vector.load %arg4[%377, %c0_104] : memref<8x64xf32, #tpu.memory_space<vmem>>, vector<1x64xf32>
    %cst_105 = arith.constant dense<0.000000e+00> : vector<1x64xf32>
    %379 = tpu.matmul %373, %252, %cst_105 {dimension_numbers = #tpu.dot_dimension_numbers<[1], [0], [0], [1], [0, 0, 1, 1], [], []>} : vector<1x16xf32>, vector<16x64xf32>, vector<1x64xf32> -> vector<1x64xf32>
    %380 = arith.addf %378, %379 : vector<1x64xf32>
    %381 = vector.extract_strided_slice %380 {offsets = [0, 0], sizes = [1, 48], strides = [1, 1]} : vector<1x64xf32> to vector<1x48xf32>
    %382 = arith.negf %381 : vector<1x48xf32>
    %383 = math.exp %382 : vector<1x48xf32>
    %cst_106 = arith.constant 1.000000e+00 : f32
    %384 = vector.broadcast %cst_106 : f32 to vector<1x48xf32>
    %385 = arith.addf %384, %383 : vector<1x48xf32>
    %386 = arith.divf %384, %385 : vector<1x48xf32>
    %387 = vector.extract_strided_slice %386 {offsets = [0, 0], sizes = [1, 16], strides = [1, 1]} : vector<1x48xf32> to vector<1x16xf32>
    %388 = vector.extract_strided_slice %386 {offsets = [0, 16], sizes = [1, 16], strides = [1, 1]} : vector<1x48xf32> to vector<1x16xf32>
    %389 = vector.extract_strided_slice %386 {offsets = [0, 32], sizes = [1, 16], strides = [1, 1]} : vector<1x48xf32> to vector<1x16xf32>
    %390 = vector.extract_strided_slice %380 {offsets = [0, 48], sizes = [1, 16], strides = [1, 1]} : vector<1x64xf32> to vector<1x16xf32>
    %391 = math.tanh %390 : vector<1x16xf32>
    %392 = arith.mulf %388, %371 : vector<1x16xf32>
    %393 = arith.mulf %387, %391 : vector<1x16xf32>
    %394 = arith.addf %392, %393 : vector<1x16xf32>
    %395 = math.tanh %394 : vector<1x16xf32>
    %396 = arith.mulf %389, %395 : vector<1x16xf32>
    %397 = arith.index_cast %376 : i32 to index
    %c16_107 = arith.constant 16 : index
    %398 = vector.load %arg5[%397, %c16_107] : memref<8x32xf32, #tpu.memory_space<vmem>>, vector<1x16xf32>
    tpu.vector_store %arg5[%397, %c16_107], %396 {strides = array<i32>} : memref<8x32xf32, #tpu.memory_space<vmem>>, vector<1x16xf32>,
    %c6_i32_108 = arith.constant 6 : i32
    %c7_i32_109 = arith.constant 7 : i32
    %399 = arith.subi %c7_i32_109, %c6_i32_108 : i32
    %400 = arith.index_cast %399 : i32 to index
    %c0_110 = arith.constant 0 : index
    %401 = vector.load %arg4[%400, %c0_110] : memref<8x64xf32, #tpu.memory_space<vmem>>, vector<1x64xf32>
    %cst_111 = arith.constant dense<0.000000e+00> : vector<1x64xf32>
    %402 = tpu.matmul %396, %252, %cst_111 {dimension_numbers = #tpu.dot_dimension_numbers<[1], [0], [0], [1], [0, 0, 1, 1], [], []>} : vector<1x16xf32>, vector<16x64xf32>, vector<1x64xf32> -> vector<1x64xf32>
    %403 = arith.addf %401, %402 : vector<1x64xf32>
    %404 = vector.extract_strided_slice %403 {offsets = [0, 0], sizes = [1, 48], strides = [1, 1]} : vector<1x64xf32> to vector<1x48xf32>
    %405 = arith.negf %404 : vector<1x48xf32>
    %406 = math.exp %405 : vector<1x48xf32>
    %cst_112 = arith.constant 1.000000e+00 : f32
    %407 = vector.broadcast %cst_112 : f32 to vector<1x48xf32>
    %408 = arith.addf %407, %406 : vector<1x48xf32>
    %409 = arith.divf %407, %408 : vector<1x48xf32>
    %410 = vector.extract_strided_slice %409 {offsets = [0, 0], sizes = [1, 16], strides = [1, 1]} : vector<1x48xf32> to vector<1x16xf32>
    %411 = vector.extract_strided_slice %409 {offsets = [0, 16], sizes = [1, 16], strides = [1, 1]} : vector<1x48xf32> to vector<1x16xf32>
    %412 = vector.extract_strided_slice %409 {offsets = [0, 32], sizes = [1, 16], strides = [1, 1]} : vector<1x48xf32> to vector<1x16xf32>
    %413 = vector.extract_strided_slice %403 {offsets = [0, 48], sizes = [1, 16], strides = [1, 1]} : vector<1x64xf32> to vector<1x16xf32>
    %414 = math.tanh %413 : vector<1x16xf32>
    %415 = arith.mulf %411, %394 : vector<1x16xf32>
    %416 = arith.mulf %410, %414 : vector<1x16xf32>
    %417 = arith.addf %415, %416 : vector<1x16xf32>
    %418 = math.tanh %417 : vector<1x16xf32>
    %419 = arith.mulf %412, %418 : vector<1x16xf32>
    %420 = arith.index_cast %399 : i32 to index
    %c16_113 = arith.constant 16 : index
    %421 = vector.load %arg5[%420, %c16_113] : memref<8x32xf32, #tpu.memory_space<vmem>>, vector<1x16xf32>
    tpu.vector_store %arg5[%420, %c16_113], %419 {strides = array<i32>} : memref<8x32xf32, #tpu.memory_space<vmem>>, vector<1x16xf32>,
    %c7_i32_114 = arith.constant 7 : i32
    %c7_i32_115 = arith.constant 7 : i32
    %422 = arith.subi %c7_i32_115, %c7_i32_114 : i32
    %423 = arith.index_cast %422 : i32 to index
    %c0_116 = arith.constant 0 : index
    %424 = vector.load %arg4[%423, %c0_116] : memref<8x64xf32, #tpu.memory_space<vmem>>, vector<1x64xf32>
    %cst_117 = arith.constant dense<0.000000e+00> : vector<1x64xf32>
    %425 = tpu.matmul %419, %252, %cst_117 {dimension_numbers = #tpu.dot_dimension_numbers<[1], [0], [0], [1], [0, 0, 1, 1], [], []>} : vector<1x16xf32>, vector<16x64xf32>, vector<1x64xf32> -> vector<1x64xf32>
    %426 = arith.addf %424, %425 : vector<1x64xf32>
    %427 = vector.extract_strided_slice %426 {offsets = [0, 0], sizes = [1, 48], strides = [1, 1]} : vector<1x64xf32> to vector<1x48xf32>
    %428 = arith.negf %427 : vector<1x48xf32>
    %429 = math.exp %428 : vector<1x48xf32>
    %cst_118 = arith.constant 1.000000e+00 : f32
    %430 = vector.broadcast %cst_118 : f32 to vector<1x48xf32>
    %431 = arith.addf %430, %429 : vector<1x48xf32>
    %432 = arith.divf %430, %431 : vector<1x48xf32>
    %433 = vector.extract_strided_slice %432 {offsets = [0, 0], sizes = [1, 16], strides = [1, 1]} : vector<1x48xf32> to vector<1x16xf32>
    %434 = vector.extract_strided_slice %432 {offsets = [0, 16], sizes = [1, 16], strides = [1, 1]} : vector<1x48xf32> to vector<1x16xf32>
    %435 = vector.extract_strided_slice %432 {offsets = [0, 32], sizes = [1, 16], strides = [1, 1]} : vector<1x48xf32> to vector<1x16xf32>
    %436 = vector.extract_strided_slice %426 {offsets = [0, 48], sizes = [1, 16], strides = [1, 1]} : vector<1x64xf32> to vector<1x16xf32>
    %437 = math.tanh %436 : vector<1x16xf32>
    %438 = arith.mulf %434, %417 : vector<1x16xf32>
    %439 = arith.mulf %433, %437 : vector<1x16xf32>
    %440 = arith.addf %438, %439 : vector<1x16xf32>
    %441 = math.tanh %440 : vector<1x16xf32>
    %442 = arith.mulf %435, %441 : vector<1x16xf32>
    %443 = arith.index_cast %422 : i32 to index
    %c16_119 = arith.constant 16 : index
    %444 = vector.load %arg5[%443, %c16_119] : memref<8x32xf32, #tpu.memory_space<vmem>>, vector<1x16xf32>
    tpu.vector_store %arg5[%443, %c16_119], %442 {strides = array<i32>} : memref<8x32xf32, #tpu.memory_space<vmem>>, vector<1x16xf32>,
    %c8_i32_120 = arith.constant 8 : i32
    %c0_121 = arith.constant 0 : index
    %c0_122 = arith.constant 0 : index
    %445 = vector.load %arg5[%c0_121, %c0_122] : memref<8x32xf32, #tpu.memory_space<vmem>>, vector<8x32xf32>
    %c440 = arith.constant 440 : index
    %c0_123 = arith.constant 0 : index
    %446 = vector.load %arg2[%c440, %c0_123] : memref<728x128xf32, #tpu.memory_space<vmem>>, vector<16x64xf32>
    %c408 = arith.constant 408 : index
    %c0_124 = arith.constant 0 : index
    %447 = vector.load %arg2[%c408, %c0_124] : memref<728x128xf32, #tpu.memory_space<vmem>>, vector<32x64xf32>
    %cst_125 = arith.constant dense<0.000000e+00> : vector<8x64xf32>
    %448 = tpu.matmul %445, %447, %cst_125 {dimension_numbers = #tpu.dot_dimension_numbers<[1], [0], [0], [1], [0, 0, 1, 1], [], []>} : vector<8x32xf32>, vector<32x64xf32>, vector<8x64xf32> -> vector<8x64xf32>
    %c456 = arith.constant 456 : index
    %c0_126 = arith.constant 0 : index
    %449 = vector.load %arg2[%c456, %c0_126] : memref<728x128xf32, #tpu.memory_space<vmem>>, vector<1x64xf32>
    %450 = vector.broadcast %449 : vector<1x64xf32> to vector<8x64xf32>
    %451 = arith.addf %448, %450 : vector<8x64xf32>
    %c0_127 = arith.constant 0 : index
    %c0_128 = arith.constant 0 : index
    %452 = vector.load %arg4[%c0_127, %c0_128] : memref<8x64xf32, #tpu.memory_space<vmem>>, vector<8x64xf32>
    tpu.vector_store %arg4[%c0_127, %c0_128], %451 {strides = array<i32>} : memref<8x64xf32, #tpu.memory_space<vmem>>, vector<8x64xf32>,
    %cst_129 = arith.constant 0.000000e+00 : f32
    %453 = vector.broadcast %cst_129 : f32 to vector<1x16xf32>
    %cst_130 = arith.constant 0.000000e+00 : f32
    %454 = vector.broadcast %cst_130 : f32 to vector<1x16xf32>
    %c0_i32_131 = arith.constant 0 : i32
    %455 = arith.index_cast %c0_i32_131 : i32 to index
    %c0_132 = arith.constant 0 : index
    %456 = vector.load %arg4[%455, %c0_132] : memref<8x64xf32, #tpu.memory_space<vmem>>, vector<1x64xf32>
    %cst_133 = arith.constant dense<0.000000e+00> : vector<1x64xf32>
    %457 = tpu.matmul %453, %446, %cst_133 {dimension_numbers = #tpu.dot_dimension_numbers<[1], [0], [0], [1], [0, 0, 1, 1], [], []>} : vector<1x16xf32>, vector<16x64xf32>, vector<1x64xf32> -> vector<1x64xf32>
    %458 = arith.addf %456, %457 : vector<1x64xf32>
    %459 = vector.extract_strided_slice %458 {offsets = [0, 0], sizes = [1, 48], strides = [1, 1]} : vector<1x64xf32> to vector<1x48xf32>
    %460 = arith.negf %459 : vector<1x48xf32>
    %461 = math.exp %460 : vector<1x48xf32>
    %cst_134 = arith.constant 1.000000e+00 : f32
    %462 = vector.broadcast %cst_134 : f32 to vector<1x48xf32>
    %463 = arith.addf %462, %461 : vector<1x48xf32>
    %464 = arith.divf %462, %463 : vector<1x48xf32>
    %465 = vector.extract_strided_slice %464 {offsets = [0, 0], sizes = [1, 16], strides = [1, 1]} : vector<1x48xf32> to vector<1x16xf32>
    %466 = vector.extract_strided_slice %464 {offsets = [0, 16], sizes = [1, 16], strides = [1, 1]} : vector<1x48xf32> to vector<1x16xf32>
    %467 = vector.extract_strided_slice %464 {offsets = [0, 32], sizes = [1, 16], strides = [1, 1]} : vector<1x48xf32> to vector<1x16xf32>
    %468 = vector.extract_strided_slice %458 {offsets = [0, 48], sizes = [1, 16], strides = [1, 1]} : vector<1x64xf32> to vector<1x16xf32>
    %469 = math.tanh %468 : vector<1x16xf32>
    %470 = arith.mulf %466, %454 : vector<1x16xf32>
    %471 = arith.mulf %465, %469 : vector<1x16xf32>
    %472 = arith.addf %470, %471 : vector<1x16xf32>
    %473 = math.tanh %472 : vector<1x16xf32>
    %474 = arith.mulf %467, %473 : vector<1x16xf32>
    %475 = arith.index_cast %c0_i32_131 : i32 to index
    %c0_135 = arith.constant 0 : index
    %476 = vector.load %arg5[%475, %c0_135] : memref<8x32xf32, #tpu.memory_space<vmem>>, vector<1x16xf32>
    tpu.vector_store %arg5[%475, %c0_135], %474 {strides = array<i32>} : memref<8x32xf32, #tpu.memory_space<vmem>>, vector<1x16xf32>,
    %c1_i32_136 = arith.constant 1 : i32
    %477 = arith.index_cast %c1_i32_136 : i32 to index
    %c0_137 = arith.constant 0 : index
    %478 = vector.load %arg4[%477, %c0_137] : memref<8x64xf32, #tpu.memory_space<vmem>>, vector<1x64xf32>
    %cst_138 = arith.constant dense<0.000000e+00> : vector<1x64xf32>
    %479 = tpu.matmul %474, %446, %cst_138 {dimension_numbers = #tpu.dot_dimension_numbers<[1], [0], [0], [1], [0, 0, 1, 1], [], []>} : vector<1x16xf32>, vector<16x64xf32>, vector<1x64xf32> -> vector<1x64xf32>
    %480 = arith.addf %478, %479 : vector<1x64xf32>
    %481 = vector.extract_strided_slice %480 {offsets = [0, 0], sizes = [1, 48], strides = [1, 1]} : vector<1x64xf32> to vector<1x48xf32>
    %482 = arith.negf %481 : vector<1x48xf32>
    %483 = math.exp %482 : vector<1x48xf32>
    %cst_139 = arith.constant 1.000000e+00 : f32
    %484 = vector.broadcast %cst_139 : f32 to vector<1x48xf32>
    %485 = arith.addf %484, %483 : vector<1x48xf32>
    %486 = arith.divf %484, %485 : vector<1x48xf32>
    %487 = vector.extract_strided_slice %486 {offsets = [0, 0], sizes = [1, 16], strides = [1, 1]} : vector<1x48xf32> to vector<1x16xf32>
    %488 = vector.extract_strided_slice %486 {offsets = [0, 16], sizes = [1, 16], strides = [1, 1]} : vector<1x48xf32> to vector<1x16xf32>
    %489 = vector.extract_strided_slice %486 {offsets = [0, 32], sizes = [1, 16], strides = [1, 1]} : vector<1x48xf32> to vector<1x16xf32>
    %490 = vector.extract_strided_slice %480 {offsets = [0, 48], sizes = [1, 16], strides = [1, 1]} : vector<1x64xf32> to vector<1x16xf32>
    %491 = math.tanh %490 : vector<1x16xf32>
    %492 = arith.mulf %488, %472 : vector<1x16xf32>
    %493 = arith.mulf %487, %491 : vector<1x16xf32>
    %494 = arith.addf %492, %493 : vector<1x16xf32>
    %495 = math.tanh %494 : vector<1x16xf32>
    %496 = arith.mulf %489, %495 : vector<1x16xf32>
    %497 = arith.index_cast %c1_i32_136 : i32 to index
    %c0_140 = arith.constant 0 : index
    %498 = vector.load %arg5[%497, %c0_140] : memref<8x32xf32, #tpu.memory_space<vmem>>, vector<1x16xf32>
    tpu.vector_store %arg5[%497, %c0_140], %496 {strides = array<i32>} : memref<8x32xf32, #tpu.memory_space<vmem>>, vector<1x16xf32>,
    %c2_i32_141 = arith.constant 2 : i32
    %499 = arith.index_cast %c2_i32_141 : i32 to index
    %c0_142 = arith.constant 0 : index
    %500 = vector.load %arg4[%499, %c0_142] : memref<8x64xf32, #tpu.memory_space<vmem>>, vector<1x64xf32>
    %cst_143 = arith.constant dense<0.000000e+00> : vector<1x64xf32>
    %501 = tpu.matmul %496, %446, %cst_143 {dimension_numbers = #tpu.dot_dimension_numbers<[1], [0], [0], [1], [0, 0, 1, 1], [], []>} : vector<1x16xf32>, vector<16x64xf32>, vector<1x64xf32> -> vector<1x64xf32>
    %502 = arith.addf %500, %501 : vector<1x64xf32>
    %503 = vector.extract_strided_slice %502 {offsets = [0, 0], sizes = [1, 48], strides = [1, 1]} : vector<1x64xf32> to vector<1x48xf32>
    %504 = arith.negf %503 : vector<1x48xf32>
    %505 = math.exp %504 : vector<1x48xf32>
    %cst_144 = arith.constant 1.000000e+00 : f32
    %506 = vector.broadcast %cst_144 : f32 to vector<1x48xf32>
    %507 = arith.addf %506, %505 : vector<1x48xf32>
    %508 = arith.divf %506, %507 : vector<1x48xf32>
    %509 = vector.extract_strided_slice %508 {offsets = [0, 0], sizes = [1, 16], strides = [1, 1]} : vector<1x48xf32> to vector<1x16xf32>
    %510 = vector.extract_strided_slice %508 {offsets = [0, 16], sizes = [1, 16], strides = [1, 1]} : vector<1x48xf32> to vector<1x16xf32>
    %511 = vector.extract_strided_slice %508 {offsets = [0, 32], sizes = [1, 16], strides = [1, 1]} : vector<1x48xf32> to vector<1x16xf32>
    %512 = vector.extract_strided_slice %502 {offsets = [0, 48], sizes = [1, 16], strides = [1, 1]} : vector<1x64xf32> to vector<1x16xf32>
    %513 = math.tanh %512 : vector<1x16xf32>
    %514 = arith.mulf %510, %494 : vector<1x16xf32>
    %515 = arith.mulf %509, %513 : vector<1x16xf32>
    %516 = arith.addf %514, %515 : vector<1x16xf32>
    %517 = math.tanh %516 : vector<1x16xf32>
    %518 = arith.mulf %511, %517 : vector<1x16xf32>
    %519 = arith.index_cast %c2_i32_141 : i32 to index
    %c0_145 = arith.constant 0 : index
    %520 = vector.load %arg5[%519, %c0_145] : memref<8x32xf32, #tpu.memory_space<vmem>>, vector<1x16xf32>
    tpu.vector_store %arg5[%519, %c0_145], %518 {strides = array<i32>} : memref<8x32xf32, #tpu.memory_space<vmem>>, vector<1x16xf32>,
    %c3_i32_146 = arith.constant 3 : i32
    %521 = arith.index_cast %c3_i32_146 : i32 to index
    %c0_147 = arith.constant 0 : index
    %522 = vector.load %arg4[%521, %c0_147] : memref<8x64xf32, #tpu.memory_space<vmem>>, vector<1x64xf32>
    %cst_148 = arith.constant dense<0.000000e+00> : vector<1x64xf32>
    %523 = tpu.matmul %518, %446, %cst_148 {dimension_numbers = #tpu.dot_dimension_numbers<[1], [0], [0], [1], [0, 0, 1, 1], [], []>} : vector<1x16xf32>, vector<16x64xf32>, vector<1x64xf32> -> vector<1x64xf32>
    %524 = arith.addf %522, %523 : vector<1x64xf32>
    %525 = vector.extract_strided_slice %524 {offsets = [0, 0], sizes = [1, 48], strides = [1, 1]} : vector<1x64xf32> to vector<1x48xf32>
    %526 = arith.negf %525 : vector<1x48xf32>
    %527 = math.exp %526 : vector<1x48xf32>
    %cst_149 = arith.constant 1.000000e+00 : f32
    %528 = vector.broadcast %cst_149 : f32 to vector<1x48xf32>
    %529 = arith.addf %528, %527 : vector<1x48xf32>
    %530 = arith.divf %528, %529 : vector<1x48xf32>
    %531 = vector.extract_strided_slice %530 {offsets = [0, 0], sizes = [1, 16], strides = [1, 1]} : vector<1x48xf32> to vector<1x16xf32>
    %532 = vector.extract_strided_slice %530 {offsets = [0, 16], sizes = [1, 16], strides = [1, 1]} : vector<1x48xf32> to vector<1x16xf32>
    %533 = vector.extract_strided_slice %530 {offsets = [0, 32], sizes = [1, 16], strides = [1, 1]} : vector<1x48xf32> to vector<1x16xf32>
    %534 = vector.extract_strided_slice %524 {offsets = [0, 48], sizes = [1, 16], strides = [1, 1]} : vector<1x64xf32> to vector<1x16xf32>
    %535 = math.tanh %534 : vector<1x16xf32>
    %536 = arith.mulf %532, %516 : vector<1x16xf32>
    %537 = arith.mulf %531, %535 : vector<1x16xf32>
    %538 = arith.addf %536, %537 : vector<1x16xf32>
    %539 = math.tanh %538 : vector<1x16xf32>
    %540 = arith.mulf %533, %539 : vector<1x16xf32>
    %541 = arith.index_cast %c3_i32_146 : i32 to index
    %c0_150 = arith.constant 0 : index
    %542 = vector.load %arg5[%541, %c0_150] : memref<8x32xf32, #tpu.memory_space<vmem>>, vector<1x16xf32>
    tpu.vector_store %arg5[%541, %c0_150], %540 {strides = array<i32>} : memref<8x32xf32, #tpu.memory_space<vmem>>, vector<1x16xf32>,
    %c4_i32_151 = arith.constant 4 : i32
    %543 = arith.index_cast %c4_i32_151 : i32 to index
    %c0_152 = arith.constant 0 : index
    %544 = vector.load %arg4[%543, %c0_152] : memref<8x64xf32, #tpu.memory_space<vmem>>, vector<1x64xf32>
    %cst_153 = arith.constant dense<0.000000e+00> : vector<1x64xf32>
    %545 = tpu.matmul %540, %446, %cst_153 {dimension_numbers = #tpu.dot_dimension_numbers<[1], [0], [0], [1], [0, 0, 1, 1], [], []>} : vector<1x16xf32>, vector<16x64xf32>, vector<1x64xf32> -> vector<1x64xf32>
    %546 = arith.addf %544, %545 : vector<1x64xf32>
    %547 = vector.extract_strided_slice %546 {offsets = [0, 0], sizes = [1, 48], strides = [1, 1]} : vector<1x64xf32> to vector<1x48xf32>
    %548 = arith.negf %547 : vector<1x48xf32>
    %549 = math.exp %548 : vector<1x48xf32>
    %cst_154 = arith.constant 1.000000e+00 : f32
    %550 = vector.broadcast %cst_154 : f32 to vector<1x48xf32>
    %551 = arith.addf %550, %549 : vector<1x48xf32>
    %552 = arith.divf %550, %551 : vector<1x48xf32>
    %553 = vector.extract_strided_slice %552 {offsets = [0, 0], sizes = [1, 16], strides = [1, 1]} : vector<1x48xf32> to vector<1x16xf32>
    %554 = vector.extract_strided_slice %552 {offsets = [0, 16], sizes = [1, 16], strides = [1, 1]} : vector<1x48xf32> to vector<1x16xf32>
    %555 = vector.extract_strided_slice %552 {offsets = [0, 32], sizes = [1, 16], strides = [1, 1]} : vector<1x48xf32> to vector<1x16xf32>
    %556 = vector.extract_strided_slice %546 {offsets = [0, 48], sizes = [1, 16], strides = [1, 1]} : vector<1x64xf32> to vector<1x16xf32>
    %557 = math.tanh %556 : vector<1x16xf32>
    %558 = arith.mulf %554, %538 : vector<1x16xf32>
    %559 = arith.mulf %553, %557 : vector<1x16xf32>
    %560 = arith.addf %558, %559 : vector<1x16xf32>
    %561 = math.tanh %560 : vector<1x16xf32>
    %562 = arith.mulf %555, %561 : vector<1x16xf32>
    %563 = arith.index_cast %c4_i32_151 : i32 to index
    %c0_155 = arith.constant 0 : index
    %564 = vector.load %arg5[%563, %c0_155] : memref<8x32xf32, #tpu.memory_space<vmem>>, vector<1x16xf32>
    tpu.vector_store %arg5[%563, %c0_155], %562 {strides = array<i32>} : memref<8x32xf32, #tpu.memory_space<vmem>>, vector<1x16xf32>,
    %c5_i32_156 = arith.constant 5 : i32
    %565 = arith.index_cast %c5_i32_156 : i32 to index
    %c0_157 = arith.constant 0 : index
    %566 = vector.load %arg4[%565, %c0_157] : memref<8x64xf32, #tpu.memory_space<vmem>>, vector<1x64xf32>
    %cst_158 = arith.constant dense<0.000000e+00> : vector<1x64xf32>
    %567 = tpu.matmul %562, %446, %cst_158 {dimension_numbers = #tpu.dot_dimension_numbers<[1], [0], [0], [1], [0, 0, 1, 1], [], []>} : vector<1x16xf32>, vector<16x64xf32>, vector<1x64xf32> -> vector<1x64xf32>
    %568 = arith.addf %566, %567 : vector<1x64xf32>
    %569 = vector.extract_strided_slice %568 {offsets = [0, 0], sizes = [1, 48], strides = [1, 1]} : vector<1x64xf32> to vector<1x48xf32>
    %570 = arith.negf %569 : vector<1x48xf32>
    %571 = math.exp %570 : vector<1x48xf32>
    %cst_159 = arith.constant 1.000000e+00 : f32
    %572 = vector.broadcast %cst_159 : f32 to vector<1x48xf32>
    %573 = arith.addf %572, %571 : vector<1x48xf32>
    %574 = arith.divf %572, %573 : vector<1x48xf32>
    %575 = vector.extract_strided_slice %574 {offsets = [0, 0], sizes = [1, 16], strides = [1, 1]} : vector<1x48xf32> to vector<1x16xf32>
    %576 = vector.extract_strided_slice %574 {offsets = [0, 16], sizes = [1, 16], strides = [1, 1]} : vector<1x48xf32> to vector<1x16xf32>
    %577 = vector.extract_strided_slice %574 {offsets = [0, 32], sizes = [1, 16], strides = [1, 1]} : vector<1x48xf32> to vector<1x16xf32>
    %578 = vector.extract_strided_slice %568 {offsets = [0, 48], sizes = [1, 16], strides = [1, 1]} : vector<1x64xf32> to vector<1x16xf32>
    %579 = math.tanh %578 : vector<1x16xf32>
    %580 = arith.mulf %576, %560 : vector<1x16xf32>
    %581 = arith.mulf %575, %579 : vector<1x16xf32>
    %582 = arith.addf %580, %581 : vector<1x16xf32>
    %583 = math.tanh %582 : vector<1x16xf32>
    %584 = arith.mulf %577, %583 : vector<1x16xf32>
    %585 = arith.index_cast %c5_i32_156 : i32 to index
    %c0_160 = arith.constant 0 : index
    %586 = vector.load %arg5[%585, %c0_160] : memref<8x32xf32, #tpu.memory_space<vmem>>, vector<1x16xf32>
    tpu.vector_store %arg5[%585, %c0_160], %584 {strides = array<i32>} : memref<8x32xf32, #tpu.memory_space<vmem>>, vector<1x16xf32>,
    %c6_i32_161 = arith.constant 6 : i32
    %587 = arith.index_cast %c6_i32_161 : i32 to index
    %c0_162 = arith.constant 0 : index
    %588 = vector.load %arg4[%587, %c0_162] : memref<8x64xf32, #tpu.memory_space<vmem>>, vector<1x64xf32>
    %cst_163 = arith.constant dense<0.000000e+00> : vector<1x64xf32>
    %589 = tpu.matmul %584, %446, %cst_163 {dimension_numbers = #tpu.dot_dimension_numbers<[1], [0], [0], [1], [0, 0, 1, 1], [], []>} : vector<1x16xf32>, vector<16x64xf32>, vector<1x64xf32> -> vector<1x64xf32>
    %590 = arith.addf %588, %589 : vector<1x64xf32>
    %591 = vector.extract_strided_slice %590 {offsets = [0, 0], sizes = [1, 48], strides = [1, 1]} : vector<1x64xf32> to vector<1x48xf32>
    %592 = arith.negf %591 : vector<1x48xf32>
    %593 = math.exp %592 : vector<1x48xf32>
    %cst_164 = arith.constant 1.000000e+00 : f32
    %594 = vector.broadcast %cst_164 : f32 to vector<1x48xf32>
    %595 = arith.addf %594, %593 : vector<1x48xf32>
    %596 = arith.divf %594, %595 : vector<1x48xf32>
    %597 = vector.extract_strided_slice %596 {offsets = [0, 0], sizes = [1, 16], strides = [1, 1]} : vector<1x48xf32> to vector<1x16xf32>
    %598 = vector.extract_strided_slice %596 {offsets = [0, 16], sizes = [1, 16], strides = [1, 1]} : vector<1x48xf32> to vector<1x16xf32>
    %599 = vector.extract_strided_slice %596 {offsets = [0, 32], sizes = [1, 16], strides = [1, 1]} : vector<1x48xf32> to vector<1x16xf32>
    %600 = vector.extract_strided_slice %590 {offsets = [0, 48], sizes = [1, 16], strides = [1, 1]} : vector<1x64xf32> to vector<1x16xf32>
    %601 = math.tanh %600 : vector<1x16xf32>
    %602 = arith.mulf %598, %582 : vector<1x16xf32>
    %603 = arith.mulf %597, %601 : vector<1x16xf32>
    %604 = arith.addf %602, %603 : vector<1x16xf32>
    %605 = math.tanh %604 : vector<1x16xf32>
    %606 = arith.mulf %599, %605 : vector<1x16xf32>
    %607 = arith.index_cast %c6_i32_161 : i32 to index
    %c0_165 = arith.constant 0 : index
    %608 = vector.load %arg5[%607, %c0_165] : memref<8x32xf32, #tpu.memory_space<vmem>>, vector<1x16xf32>
    tpu.vector_store %arg5[%607, %c0_165], %606 {strides = array<i32>} : memref<8x32xf32, #tpu.memory_space<vmem>>, vector<1x16xf32>,
    %c7_i32_166 = arith.constant 7 : i32
    %609 = arith.index_cast %c7_i32_166 : i32 to index
    %c0_167 = arith.constant 0 : index
    %610 = vector.load %arg4[%609, %c0_167] : memref<8x64xf32, #tpu.memory_space<vmem>>, vector<1x64xf32>
    %cst_168 = arith.constant dense<0.000000e+00> : vector<1x64xf32>
    %611 = tpu.matmul %606, %446, %cst_168 {dimension_numbers = #tpu.dot_dimension_numbers<[1], [0], [0], [1], [0, 0, 1, 1], [], []>} : vector<1x16xf32>, vector<16x64xf32>, vector<1x64xf32> -> vector<1x64xf32>
    %612 = arith.addf %610, %611 : vector<1x64xf32>
    %613 = vector.extract_strided_slice %612 {offsets = [0, 0], sizes = [1, 48], strides = [1, 1]} : vector<1x64xf32> to vector<1x48xf32>
    %614 = arith.negf %613 : vector<1x48xf32>
    %615 = math.exp %614 : vector<1x48xf32>
    %cst_169 = arith.constant 1.000000e+00 : f32
    %616 = vector.broadcast %cst_169 : f32 to vector<1x48xf32>
    %617 = arith.addf %616, %615 : vector<1x48xf32>
    %618 = arith.divf %616, %617 : vector<1x48xf32>
    %619 = vector.extract_strided_slice %618 {offsets = [0, 0], sizes = [1, 16], strides = [1, 1]} : vector<1x48xf32> to vector<1x16xf32>
    %620 = vector.extract_strided_slice %618 {offsets = [0, 16], sizes = [1, 16], strides = [1, 1]} : vector<1x48xf32> to vector<1x16xf32>
    %621 = vector.extract_strided_slice %618 {offsets = [0, 32], sizes = [1, 16], strides = [1, 1]} : vector<1x48xf32> to vector<1x16xf32>
    %622 = vector.extract_strided_slice %612 {offsets = [0, 48], sizes = [1, 16], strides = [1, 1]} : vector<1x64xf32> to vector<1x16xf32>
    %623 = math.tanh %622 : vector<1x16xf32>
    %624 = arith.mulf %620, %604 : vector<1x16xf32>
    %625 = arith.mulf %619, %623 : vector<1x16xf32>
    %626 = arith.addf %624, %625 : vector<1x16xf32>
    %627 = math.tanh %626 : vector<1x16xf32>
    %628 = arith.mulf %621, %627 : vector<1x16xf32>
    %629 = arith.index_cast %c7_i32_166 : i32 to index
    %c0_170 = arith.constant 0 : index
    %630 = vector.load %arg5[%629, %c0_170] : memref<8x32xf32, #tpu.memory_space<vmem>>, vector<1x16xf32>
    tpu.vector_store %arg5[%629, %c0_170], %628 {strides = array<i32>} : memref<8x32xf32, #tpu.memory_space<vmem>>, vector<1x16xf32>,
    %c8_i32_171 = arith.constant 8 : i32
    %c496 = arith.constant 496 : index
    %c0_172 = arith.constant 0 : index
    %631 = vector.load %arg2[%c496, %c0_172] : memref<728x128xf32, #tpu.memory_space<vmem>>, vector<16x64xf32>
    %c464 = arith.constant 464 : index
    %c0_173 = arith.constant 0 : index
    %632 = vector.load %arg2[%c464, %c0_173] : memref<728x128xf32, #tpu.memory_space<vmem>>, vector<32x64xf32>
    %cst_174 = arith.constant dense<0.000000e+00> : vector<8x64xf32>
    %633 = tpu.matmul %445, %632, %cst_174 {dimension_numbers = #tpu.dot_dimension_numbers<[1], [0], [0], [1], [0, 0, 1, 1], [], []>} : vector<8x32xf32>, vector<32x64xf32>, vector<8x64xf32> -> vector<8x64xf32>
    %c512 = arith.constant 512 : index
    %c0_175 = arith.constant 0 : index
    %634 = vector.load %arg2[%c512, %c0_175] : memref<728x128xf32, #tpu.memory_space<vmem>>, vector<1x64xf32>
    %635 = vector.broadcast %634 : vector<1x64xf32> to vector<8x64xf32>
    %636 = arith.addf %633, %635 : vector<8x64xf32>
    %c0_176 = arith.constant 0 : index
    %c0_177 = arith.constant 0 : index
    %637 = vector.load %arg4[%c0_176, %c0_177] : memref<8x64xf32, #tpu.memory_space<vmem>>, vector<8x64xf32>
    tpu.vector_store %arg4[%c0_176, %c0_177], %636 {strides = array<i32>} : memref<8x64xf32, #tpu.memory_space<vmem>>, vector<8x64xf32>,
    %cst_178 = arith.constant 0.000000e+00 : f32
    %638 = vector.broadcast %cst_178 : f32 to vector<1x16xf32>
    %cst_179 = arith.constant 0.000000e+00 : f32
    %639 = vector.broadcast %cst_179 : f32 to vector<1x16xf32>
    %c0_i32_180 = arith.constant 0 : i32
    %c7_i32_181 = arith.constant 7 : i32
    %640 = arith.subi %c7_i32_181, %c0_i32_180 : i32
    %641 = arith.index_cast %640 : i32 to index
    %c0_182 = arith.constant 0 : index
    %642 = vector.load %arg4[%641, %c0_182] : memref<8x64xf32, #tpu.memory_space<vmem>>, vector<1x64xf32>
    %cst_183 = arith.constant dense<0.000000e+00> : vector<1x64xf32>
    %643 = tpu.matmul %638, %631, %cst_183 {dimension_numbers = #tpu.dot_dimension_numbers<[1], [0], [0], [1], [0, 0, 1, 1], [], []>} : vector<1x16xf32>, vector<16x64xf32>, vector<1x64xf32> -> vector<1x64xf32>
    %644 = arith.addf %642, %643 : vector<1x64xf32>
    %645 = vector.extract_strided_slice %644 {offsets = [0, 0], sizes = [1, 48], strides = [1, 1]} : vector<1x64xf32> to vector<1x48xf32>
    %646 = arith.negf %645 : vector<1x48xf32>
    %647 = math.exp %646 : vector<1x48xf32>
    %cst_184 = arith.constant 1.000000e+00 : f32
    %648 = vector.broadcast %cst_184 : f32 to vector<1x48xf32>
    %649 = arith.addf %648, %647 : vector<1x48xf32>
    %650 = arith.divf %648, %649 : vector<1x48xf32>
    %651 = vector.extract_strided_slice %650 {offsets = [0, 0], sizes = [1, 16], strides = [1, 1]} : vector<1x48xf32> to vector<1x16xf32>
    %652 = vector.extract_strided_slice %650 {offsets = [0, 16], sizes = [1, 16], strides = [1, 1]} : vector<1x48xf32> to vector<1x16xf32>
    %653 = vector.extract_strided_slice %650 {offsets = [0, 32], sizes = [1, 16], strides = [1, 1]} : vector<1x48xf32> to vector<1x16xf32>
    %654 = vector.extract_strided_slice %644 {offsets = [0, 48], sizes = [1, 16], strides = [1, 1]} : vector<1x64xf32> to vector<1x16xf32>
    %655 = math.tanh %654 : vector<1x16xf32>
    %656 = arith.mulf %652, %639 : vector<1x16xf32>
    %657 = arith.mulf %651, %655 : vector<1x16xf32>
    %658 = arith.addf %656, %657 : vector<1x16xf32>
    %659 = math.tanh %658 : vector<1x16xf32>
    %660 = arith.mulf %653, %659 : vector<1x16xf32>
    %661 = arith.index_cast %640 : i32 to index
    %c16_185 = arith.constant 16 : index
    %662 = vector.load %arg5[%661, %c16_185] : memref<8x32xf32, #tpu.memory_space<vmem>>, vector<1x16xf32>
    tpu.vector_store %arg5[%661, %c16_185], %660 {strides = array<i32>} : memref<8x32xf32, #tpu.memory_space<vmem>>, vector<1x16xf32>,
    %c1_i32_186 = arith.constant 1 : i32
    %c7_i32_187 = arith.constant 7 : i32
    %663 = arith.subi %c7_i32_187, %c1_i32_186 : i32
    %664 = arith.index_cast %663 : i32 to index
    %c0_188 = arith.constant 0 : index
    %665 = vector.load %arg4[%664, %c0_188] : memref<8x64xf32, #tpu.memory_space<vmem>>, vector<1x64xf32>
    %cst_189 = arith.constant dense<0.000000e+00> : vector<1x64xf32>
    %666 = tpu.matmul %660, %631, %cst_189 {dimension_numbers = #tpu.dot_dimension_numbers<[1], [0], [0], [1], [0, 0, 1, 1], [], []>} : vector<1x16xf32>, vector<16x64xf32>, vector<1x64xf32> -> vector<1x64xf32>
    %667 = arith.addf %665, %666 : vector<1x64xf32>
    %668 = vector.extract_strided_slice %667 {offsets = [0, 0], sizes = [1, 48], strides = [1, 1]} : vector<1x64xf32> to vector<1x48xf32>
    %669 = arith.negf %668 : vector<1x48xf32>
    %670 = math.exp %669 : vector<1x48xf32>
    %cst_190 = arith.constant 1.000000e+00 : f32
    %671 = vector.broadcast %cst_190 : f32 to vector<1x48xf32>
    %672 = arith.addf %671, %670 : vector<1x48xf32>
    %673 = arith.divf %671, %672 : vector<1x48xf32>
    %674 = vector.extract_strided_slice %673 {offsets = [0, 0], sizes = [1, 16], strides = [1, 1]} : vector<1x48xf32> to vector<1x16xf32>
    %675 = vector.extract_strided_slice %673 {offsets = [0, 16], sizes = [1, 16], strides = [1, 1]} : vector<1x48xf32> to vector<1x16xf32>
    %676 = vector.extract_strided_slice %673 {offsets = [0, 32], sizes = [1, 16], strides = [1, 1]} : vector<1x48xf32> to vector<1x16xf32>
    %677 = vector.extract_strided_slice %667 {offsets = [0, 48], sizes = [1, 16], strides = [1, 1]} : vector<1x64xf32> to vector<1x16xf32>
    %678 = math.tanh %677 : vector<1x16xf32>
    %679 = arith.mulf %675, %658 : vector<1x16xf32>
    %680 = arith.mulf %674, %678 : vector<1x16xf32>
    %681 = arith.addf %679, %680 : vector<1x16xf32>
    %682 = math.tanh %681 : vector<1x16xf32>
    %683 = arith.mulf %676, %682 : vector<1x16xf32>
    %684 = arith.index_cast %663 : i32 to index
    %c16_191 = arith.constant 16 : index
    %685 = vector.load %arg5[%684, %c16_191] : memref<8x32xf32, #tpu.memory_space<vmem>>, vector<1x16xf32>
    tpu.vector_store %arg5[%684, %c16_191], %683 {strides = array<i32>} : memref<8x32xf32, #tpu.memory_space<vmem>>, vector<1x16xf32>,
    %c2_i32_192 = arith.constant 2 : i32
    %c7_i32_193 = arith.constant 7 : i32
    %686 = arith.subi %c7_i32_193, %c2_i32_192 : i32
    %687 = arith.index_cast %686 : i32 to index
    %c0_194 = arith.constant 0 : index
    %688 = vector.load %arg4[%687, %c0_194] : memref<8x64xf32, #tpu.memory_space<vmem>>, vector<1x64xf32>
    %cst_195 = arith.constant dense<0.000000e+00> : vector<1x64xf32>
    %689 = tpu.matmul %683, %631, %cst_195 {dimension_numbers = #tpu.dot_dimension_numbers<[1], [0], [0], [1], [0, 0, 1, 1], [], []>} : vector<1x16xf32>, vector<16x64xf32>, vector<1x64xf32> -> vector<1x64xf32>
    %690 = arith.addf %688, %689 : vector<1x64xf32>
    %691 = vector.extract_strided_slice %690 {offsets = [0, 0], sizes = [1, 48], strides = [1, 1]} : vector<1x64xf32> to vector<1x48xf32>
    %692 = arith.negf %691 : vector<1x48xf32>
    %693 = math.exp %692 : vector<1x48xf32>
    %cst_196 = arith.constant 1.000000e+00 : f32
    %694 = vector.broadcast %cst_196 : f32 to vector<1x48xf32>
    %695 = arith.addf %694, %693 : vector<1x48xf32>
    %696 = arith.divf %694, %695 : vector<1x48xf32>
    %697 = vector.extract_strided_slice %696 {offsets = [0, 0], sizes = [1, 16], strides = [1, 1]} : vector<1x48xf32> to vector<1x16xf32>
    %698 = vector.extract_strided_slice %696 {offsets = [0, 16], sizes = [1, 16], strides = [1, 1]} : vector<1x48xf32> to vector<1x16xf32>
    %699 = vector.extract_strided_slice %696 {offsets = [0, 32], sizes = [1, 16], strides = [1, 1]} : vector<1x48xf32> to vector<1x16xf32>
    %700 = vector.extract_strided_slice %690 {offsets = [0, 48], sizes = [1, 16], strides = [1, 1]} : vector<1x64xf32> to vector<1x16xf32>
    %701 = math.tanh %700 : vector<1x16xf32>
    %702 = arith.mulf %698, %681 : vector<1x16xf32>
    %703 = arith.mulf %697, %701 : vector<1x16xf32>
    %704 = arith.addf %702, %703 : vector<1x16xf32>
    %705 = math.tanh %704 : vector<1x16xf32>
    %706 = arith.mulf %699, %705 : vector<1x16xf32>
    %707 = arith.index_cast %686 : i32 to index
    %c16_197 = arith.constant 16 : index
    %708 = vector.load %arg5[%707, %c16_197] : memref<8x32xf32, #tpu.memory_space<vmem>>, vector<1x16xf32>
    tpu.vector_store %arg5[%707, %c16_197], %706 {strides = array<i32>} : memref<8x32xf32, #tpu.memory_space<vmem>>, vector<1x16xf32>,
    %c3_i32_198 = arith.constant 3 : i32
    %c7_i32_199 = arith.constant 7 : i32
    %709 = arith.subi %c7_i32_199, %c3_i32_198 : i32
    %710 = arith.index_cast %709 : i32 to index
    %c0_200 = arith.constant 0 : index
    %711 = vector.load %arg4[%710, %c0_200] : memref<8x64xf32, #tpu.memory_space<vmem>>, vector<1x64xf32>
    %cst_201 = arith.constant dense<0.000000e+00> : vector<1x64xf32>
    %712 = tpu.matmul %706, %631, %cst_201 {dimension_numbers = #tpu.dot_dimension_numbers<[1], [0], [0], [1], [0, 0, 1, 1], [], []>} : vector<1x16xf32>, vector<16x64xf32>, vector<1x64xf32> -> vector<1x64xf32>
    %713 = arith.addf %711, %712 : vector<1x64xf32>
    %714 = vector.extract_strided_slice %713 {offsets = [0, 0], sizes = [1, 48], strides = [1, 1]} : vector<1x64xf32> to vector<1x48xf32>
    %715 = arith.negf %714 : vector<1x48xf32>
    %716 = math.exp %715 : vector<1x48xf32>
    %cst_202 = arith.constant 1.000000e+00 : f32
    %717 = vector.broadcast %cst_202 : f32 to vector<1x48xf32>
    %718 = arith.addf %717, %716 : vector<1x48xf32>
    %719 = arith.divf %717, %718 : vector<1x48xf32>
    %720 = vector.extract_strided_slice %719 {offsets = [0, 0], sizes = [1, 16], strides = [1, 1]} : vector<1x48xf32> to vector<1x16xf32>
    %721 = vector.extract_strided_slice %719 {offsets = [0, 16], sizes = [1, 16], strides = [1, 1]} : vector<1x48xf32> to vector<1x16xf32>
    %722 = vector.extract_strided_slice %719 {offsets = [0, 32], sizes = [1, 16], strides = [1, 1]} : vector<1x48xf32> to vector<1x16xf32>
    %723 = vector.extract_strided_slice %713 {offsets = [0, 48], sizes = [1, 16], strides = [1, 1]} : vector<1x64xf32> to vector<1x16xf32>
    %724 = math.tanh %723 : vector<1x16xf32>
    %725 = arith.mulf %721, %704 : vector<1x16xf32>
    %726 = arith.mulf %720, %724 : vector<1x16xf32>
    %727 = arith.addf %725, %726 : vector<1x16xf32>
    %728 = math.tanh %727 : vector<1x16xf32>
    %729 = arith.mulf %722, %728 : vector<1x16xf32>
    %730 = arith.index_cast %709 : i32 to index
    %c16_203 = arith.constant 16 : index
    %731 = vector.load %arg5[%730, %c16_203] : memref<8x32xf32, #tpu.memory_space<vmem>>, vector<1x16xf32>
    tpu.vector_store %arg5[%730, %c16_203], %729 {strides = array<i32>} : memref<8x32xf32, #tpu.memory_space<vmem>>, vector<1x16xf32>,
    %c4_i32_204 = arith.constant 4 : i32
    %c7_i32_205 = arith.constant 7 : i32
    %732 = arith.subi %c7_i32_205, %c4_i32_204 : i32
    %733 = arith.index_cast %732 : i32 to index
    %c0_206 = arith.constant 0 : index
    %734 = vector.load %arg4[%733, %c0_206] : memref<8x64xf32, #tpu.memory_space<vmem>>, vector<1x64xf32>
    %cst_207 = arith.constant dense<0.000000e+00> : vector<1x64xf32>
    %735 = tpu.matmul %729, %631, %cst_207 {dimension_numbers = #tpu.dot_dimension_numbers<[1], [0], [0], [1], [0, 0, 1, 1], [], []>} : vector<1x16xf32>, vector<16x64xf32>, vector<1x64xf32> -> vector<1x64xf32>
    %736 = arith.addf %734, %735 : vector<1x64xf32>
    %737 = vector.extract_strided_slice %736 {offsets = [0, 0], sizes = [1, 48], strides = [1, 1]} : vector<1x64xf32> to vector<1x48xf32>
    %738 = arith.negf %737 : vector<1x48xf32>
    %739 = math.exp %738 : vector<1x48xf32>
    %cst_208 = arith.constant 1.000000e+00 : f32
    %740 = vector.broadcast %cst_208 : f32 to vector<1x48xf32>
    %741 = arith.addf %740, %739 : vector<1x48xf32>
    %742 = arith.divf %740, %741 : vector<1x48xf32>
    %743 = vector.extract_strided_slice %742 {offsets = [0, 0], sizes = [1, 16], strides = [1, 1]} : vector<1x48xf32> to vector<1x16xf32>
    %744 = vector.extract_strided_slice %742 {offsets = [0, 16], sizes = [1, 16], strides = [1, 1]} : vector<1x48xf32> to vector<1x16xf32>
    %745 = vector.extract_strided_slice %742 {offsets = [0, 32], sizes = [1, 16], strides = [1, 1]} : vector<1x48xf32> to vector<1x16xf32>
    %746 = vector.extract_strided_slice %736 {offsets = [0, 48], sizes = [1, 16], strides = [1, 1]} : vector<1x64xf32> to vector<1x16xf32>
    %747 = math.tanh %746 : vector<1x16xf32>
    %748 = arith.mulf %744, %727 : vector<1x16xf32>
    %749 = arith.mulf %743, %747 : vector<1x16xf32>
    %750 = arith.addf %748, %749 : vector<1x16xf32>
    %751 = math.tanh %750 : vector<1x16xf32>
    %752 = arith.mulf %745, %751 : vector<1x16xf32>
    %753 = arith.index_cast %732 : i32 to index
    %c16_209 = arith.constant 16 : index
    %754 = vector.load %arg5[%753, %c16_209] : memref<8x32xf32, #tpu.memory_space<vmem>>, vector<1x16xf32>
    tpu.vector_store %arg5[%753, %c16_209], %752 {strides = array<i32>} : memref<8x32xf32, #tpu.memory_space<vmem>>, vector<1x16xf32>,
    %c5_i32_210 = arith.constant 5 : i32
    %c7_i32_211 = arith.constant 7 : i32
    %755 = arith.subi %c7_i32_211, %c5_i32_210 : i32
    %756 = arith.index_cast %755 : i32 to index
    %c0_212 = arith.constant 0 : index
    %757 = vector.load %arg4[%756, %c0_212] : memref<8x64xf32, #tpu.memory_space<vmem>>, vector<1x64xf32>
    %cst_213 = arith.constant dense<0.000000e+00> : vector<1x64xf32>
    %758 = tpu.matmul %752, %631, %cst_213 {dimension_numbers = #tpu.dot_dimension_numbers<[1], [0], [0], [1], [0, 0, 1, 1], [], []>} : vector<1x16xf32>, vector<16x64xf32>, vector<1x64xf32> -> vector<1x64xf32>
    %759 = arith.addf %757, %758 : vector<1x64xf32>
    %760 = vector.extract_strided_slice %759 {offsets = [0, 0], sizes = [1, 48], strides = [1, 1]} : vector<1x64xf32> to vector<1x48xf32>
    %761 = arith.negf %760 : vector<1x48xf32>
    %762 = math.exp %761 : vector<1x48xf32>
    %cst_214 = arith.constant 1.000000e+00 : f32
    %763 = vector.broadcast %cst_214 : f32 to vector<1x48xf32>
    %764 = arith.addf %763, %762 : vector<1x48xf32>
    %765 = arith.divf %763, %764 : vector<1x48xf32>
    %766 = vector.extract_strided_slice %765 {offsets = [0, 0], sizes = [1, 16], strides = [1, 1]} : vector<1x48xf32> to vector<1x16xf32>
    %767 = vector.extract_strided_slice %765 {offsets = [0, 16], sizes = [1, 16], strides = [1, 1]} : vector<1x48xf32> to vector<1x16xf32>
    %768 = vector.extract_strided_slice %765 {offsets = [0, 32], sizes = [1, 16], strides = [1, 1]} : vector<1x48xf32> to vector<1x16xf32>
    %769 = vector.extract_strided_slice %759 {offsets = [0, 48], sizes = [1, 16], strides = [1, 1]} : vector<1x64xf32> to vector<1x16xf32>
    %770 = math.tanh %769 : vector<1x16xf32>
    %771 = arith.mulf %767, %750 : vector<1x16xf32>
    %772 = arith.mulf %766, %770 : vector<1x16xf32>
    %773 = arith.addf %771, %772 : vector<1x16xf32>
    %774 = math.tanh %773 : vector<1x16xf32>
    %775 = arith.mulf %768, %774 : vector<1x16xf32>
    %776 = arith.index_cast %755 : i32 to index
    %c16_215 = arith.constant 16 : index
    %777 = vector.load %arg5[%776, %c16_215] : memref<8x32xf32, #tpu.memory_space<vmem>>, vector<1x16xf32>
    tpu.vector_store %arg5[%776, %c16_215], %775 {strides = array<i32>} : memref<8x32xf32, #tpu.memory_space<vmem>>, vector<1x16xf32>,
    %c6_i32_216 = arith.constant 6 : i32
    %c7_i32_217 = arith.constant 7 : i32
    %778 = arith.subi %c7_i32_217, %c6_i32_216 : i32
    %779 = arith.index_cast %778 : i32 to index
    %c0_218 = arith.constant 0 : index
    %780 = vector.load %arg4[%779, %c0_218] : memref<8x64xf32, #tpu.memory_space<vmem>>, vector<1x64xf32>
    %cst_219 = arith.constant dense<0.000000e+00> : vector<1x64xf32>
    %781 = tpu.matmul %775, %631, %cst_219 {dimension_numbers = #tpu.dot_dimension_numbers<[1], [0], [0], [1], [0, 0, 1, 1], [], []>} : vector<1x16xf32>, vector<16x64xf32>, vector<1x64xf32> -> vector<1x64xf32>
    %782 = arith.addf %780, %781 : vector<1x64xf32>
    %783 = vector.extract_strided_slice %782 {offsets = [0, 0], sizes = [1, 48], strides = [1, 1]} : vector<1x64xf32> to vector<1x48xf32>
    %784 = arith.negf %783 : vector<1x48xf32>
    %785 = math.exp %784 : vector<1x48xf32>
    %cst_220 = arith.constant 1.000000e+00 : f32
    %786 = vector.broadcast %cst_220 : f32 to vector<1x48xf32>
    %787 = arith.addf %786, %785 : vector<1x48xf32>
    %788 = arith.divf %786, %787 : vector<1x48xf32>
    %789 = vector.extract_strided_slice %788 {offsets = [0, 0], sizes = [1, 16], strides = [1, 1]} : vector<1x48xf32> to vector<1x16xf32>
    %790 = vector.extract_strided_slice %788 {offsets = [0, 16], sizes = [1, 16], strides = [1, 1]} : vector<1x48xf32> to vector<1x16xf32>
    %791 = vector.extract_strided_slice %788 {offsets = [0, 32], sizes = [1, 16], strides = [1, 1]} : vector<1x48xf32> to vector<1x16xf32>
    %792 = vector.extract_strided_slice %782 {offsets = [0, 48], sizes = [1, 16], strides = [1, 1]} : vector<1x64xf32> to vector<1x16xf32>
    %793 = math.tanh %792 : vector<1x16xf32>
    %794 = arith.mulf %790, %773 : vector<1x16xf32>
    %795 = arith.mulf %789, %793 : vector<1x16xf32>
    %796 = arith.addf %794, %795 : vector<1x16xf32>
    %797 = math.tanh %796 : vector<1x16xf32>
    %798 = arith.mulf %791, %797 : vector<1x16xf32>
    %799 = arith.index_cast %778 : i32 to index
    %c16_221 = arith.constant 16 : index
    %800 = vector.load %arg5[%799, %c16_221] : memref<8x32xf32, #tpu.memory_space<vmem>>, vector<1x16xf32>
    tpu.vector_store %arg5[%799, %c16_221], %798 {strides = array<i32>} : memref<8x32xf32, #tpu.memory_space<vmem>>, vector<1x16xf32>,
    %c7_i32_222 = arith.constant 7 : i32
    %c7_i32_223 = arith.constant 7 : i32
    %801 = arith.subi %c7_i32_223, %c7_i32_222 : i32
    %802 = arith.index_cast %801 : i32 to index
    %c0_224 = arith.constant 0 : index
    %803 = vector.load %arg4[%802, %c0_224] : memref<8x64xf32, #tpu.memory_space<vmem>>, vector<1x64xf32>
    %cst_225 = arith.constant dense<0.000000e+00> : vector<1x64xf32>
    %804 = tpu.matmul %798, %631, %cst_225 {dimension_numbers = #tpu.dot_dimension_numbers<[1], [0], [0], [1], [0, 0, 1, 1], [], []>} : vector<1x16xf32>, vector<16x64xf32>, vector<1x64xf32> -> vector<1x64xf32>
    %805 = arith.addf %803, %804 : vector<1x64xf32>
    %806 = vector.extract_strided_slice %805 {offsets = [0, 0], sizes = [1, 48], strides = [1, 1]} : vector<1x64xf32> to vector<1x48xf32>
    %807 = arith.negf %806 : vector<1x48xf32>
    %808 = math.exp %807 : vector<1x48xf32>
    %cst_226 = arith.constant 1.000000e+00 : f32
    %809 = vector.broadcast %cst_226 : f32 to vector<1x48xf32>
    %810 = arith.addf %809, %808 : vector<1x48xf32>
    %811 = arith.divf %809, %810 : vector<1x48xf32>
    %812 = vector.extract_strided_slice %811 {offsets = [0, 0], sizes = [1, 16], strides = [1, 1]} : vector<1x48xf32> to vector<1x16xf32>
    %813 = vector.extract_strided_slice %811 {offsets = [0, 16], sizes = [1, 16], strides = [1, 1]} : vector<1x48xf32> to vector<1x16xf32>
    %814 = vector.extract_strided_slice %811 {offsets = [0, 32], sizes = [1, 16], strides = [1, 1]} : vector<1x48xf32> to vector<1x16xf32>
    %815 = vector.extract_strided_slice %805 {offsets = [0, 48], sizes = [1, 16], strides = [1, 1]} : vector<1x64xf32> to vector<1x16xf32>
    %816 = math.tanh %815 : vector<1x16xf32>
    %817 = arith.mulf %813, %796 : vector<1x16xf32>
    %818 = arith.mulf %812, %816 : vector<1x16xf32>
    %819 = arith.addf %817, %818 : vector<1x16xf32>
    %820 = math.tanh %819 : vector<1x16xf32>
    %821 = arith.mulf %814, %820 : vector<1x16xf32>
    %822 = arith.index_cast %801 : i32 to index
    %c16_227 = arith.constant 16 : index
    %823 = vector.load %arg5[%822, %c16_227] : memref<8x32xf32, #tpu.memory_space<vmem>>, vector<1x16xf32>
    tpu.vector_store %arg5[%822, %c16_227], %821 {strides = array<i32>} : memref<8x32xf32, #tpu.memory_space<vmem>>, vector<1x16xf32>,
    %c8_i32_228 = arith.constant 8 : i32
    %c0_229 = arith.constant 0 : index
    %c0_230 = arith.constant 0 : index
    %824 = vector.load %arg5[%c0_229, %c0_230] : memref<8x32xf32, #tpu.memory_space<vmem>>, vector<8x32xf32>
    %c520 = arith.constant 520 : index
    %c0_231 = arith.constant 0 : index
    %825 = vector.load %arg2[%c520, %c0_231] : memref<728x128xf32, #tpu.memory_space<vmem>>, vector<32x16xf32>
    %cst_232 = arith.constant dense<0.000000e+00> : vector<8x16xf32>
    %826 = tpu.matmul %824, %825, %cst_232 {dimension_numbers = #tpu.dot_dimension_numbers<[1], [0], [0], [1], [0, 0, 1, 1], [], []>} : vector<8x32xf32>, vector<32x16xf32>, vector<8x16xf32> -> vector<8x16xf32>
    %c552 = arith.constant 552 : index
    %c0_233 = arith.constant 0 : index
    %827 = vector.load %arg2[%c552, %c0_233] : memref<728x128xf32, #tpu.memory_space<vmem>>, vector<1x16xf32>
    %828 = vector.broadcast %827 : vector<1x16xf32> to vector<8x16xf32>
    %829 = arith.addf %826, %828 : vector<8x16xf32>
    %830 = tpu.transpose %829, [1, 0] : vector<8x16xf32> -> vector<16x8xf32>
    %831 = arith.addf %830, %65 : vector<16x8xf32>
    %c560 = arith.constant 560 : index
    %c0_234 = arith.constant 0 : index
    %832 = vector.load %arg2[%c560, %c0_234] : memref<728x128xf32, #tpu.memory_space<vmem>>, vector<32x48xf32>
    %833 = vector.extract_strided_slice %831 {offsets = [0, 0], sizes = [16, 6], strides = [1, 1]} : vector<16x8xf32> to vector<16x6xf32>
    %834 = vector.extract_strided_slice %831 {offsets = [0, 1], sizes = [16, 6], strides = [1, 1]} : vector<16x8xf32> to vector<16x6xf32>
    %835 = vector.extract_strided_slice %831 {offsets = [0, 2], sizes = [16, 6], strides = [1, 1]} : vector<16x8xf32> to vector<16x6xf32>
    %836 = tpu.concatenate %833, %834, %835 in 0 : vector<16x6xf32>, vector<16x6xf32>, vector<16x6xf32> -> vector<48x6xf32>
    %cst_235 = arith.constant dense<0.000000e+00> : vector<32x6xf32>
    %837 = tpu.matmul %832, %836, %cst_235 {dimension_numbers = #tpu.dot_dimension_numbers<[1], [0], [0], [1], [0, 0, 1, 1], [], []>} : vector<32x48xf32>, vector<48x6xf32>, vector<32x6xf32> -> vector<32x6xf32>
    %c592 = arith.constant 592 : index
    %c0_236 = arith.constant 0 : index
    %838 = vector.load %arg2[%c592, %c0_236] : memref<728x128xf32, #tpu.memory_space<vmem>>, vector<32x1xf32>
    %839 = vector.broadcast %838 : vector<32x1xf32> to vector<32x6xf32>
    %840 = arith.addf %837, %839 : vector<32x6xf32>
    %841 = vector.extract_strided_slice %840 {offsets = [0, 0], sizes = [16, 6], strides = [1, 1]} : vector<32x6xf32> to vector<16x6xf32>
    %842 = vector.extract_strided_slice %840 {offsets = [16, 0], sizes = [16, 6], strides = [1, 1]} : vector<32x6xf32> to vector<16x6xf32>
    %843 = arith.negf %842 : vector<16x6xf32>
    %844 = math.exp %843 : vector<16x6xf32>
    %cst_237 = arith.constant 1.000000e+00 : f32
    %845 = vector.broadcast %cst_237 : f32 to vector<16x6xf32>
    %846 = arith.addf %845, %844 : vector<16x6xf32>
    %847 = arith.divf %845, %846 : vector<16x6xf32>
    %848 = arith.mulf %841, %847 : vector<16x6xf32>
    %c624 = arith.constant 624 : index
    %c0_238 = arith.constant 0 : index
    %849 = vector.load %arg2[%c624, %c0_238] : memref<728x128xf32, #tpu.memory_space<vmem>>, vector<6x35xf32>
    %cst_239 = arith.constant dense<0.000000e+00> : vector<16x35xf32>
    %850 = tpu.matmul %848, %849, %cst_239 {dimension_numbers = #tpu.dot_dimension_numbers<[1], [0], [0], [1], [0, 0, 1, 1], [], []>} : vector<16x6xf32>, vector<6x35xf32>, vector<16x35xf32> -> vector<16x35xf32>
    %c632 = arith.constant 632 : index
    %c0_240 = arith.constant 0 : index
    %851 = vector.load %arg2[%c632, %c0_240] : memref<728x128xf32, #tpu.memory_space<vmem>>, vector<8x128xf32>
    %852 = vector.extract_strided_slice %850 {offsets = [0, 0], sizes = [16, 28], strides = [1, 1]} : vector<16x35xf32> to vector<16x28xf32>
    %853 = vector.extract_strided_slice %850 {offsets = [0, 1], sizes = [16, 28], strides = [1, 1]} : vector<16x35xf32> to vector<16x28xf32>
    %854 = vector.extract_strided_slice %850 {offsets = [0, 2], sizes = [16, 28], strides = [1, 1]} : vector<16x35xf32> to vector<16x28xf32>
    %855 = vector.extract_strided_slice %850 {offsets = [0, 3], sizes = [16, 28], strides = [1, 1]} : vector<16x35xf32> to vector<16x28xf32>
    %856 = vector.extract_strided_slice %850 {offsets = [0, 4], sizes = [16, 28], strides = [1, 1]} : vector<16x35xf32> to vector<16x28xf32>
    %857 = vector.extract_strided_slice %850 {offsets = [0, 5], sizes = [16, 28], strides = [1, 1]} : vector<16x35xf32> to vector<16x28xf32>
    %858 = vector.extract_strided_slice %850 {offsets = [0, 6], sizes = [16, 28], strides = [1, 1]} : vector<16x35xf32> to vector<16x28xf32>
    %859 = vector.extract_strided_slice %850 {offsets = [0, 7], sizes = [16, 28], strides = [1, 1]} : vector<16x35xf32> to vector<16x28xf32>
    %860 = tpu.concatenate %852, %853, %854, %855, %856, %857, %858, %859 in 0 : vector<16x28xf32>, vector<16x28xf32>, vector<16x28xf32>, vector<16x28xf32>, vector<16x28xf32>, vector<16x28xf32>, vector<16x28xf32>, vector<16x28xf32> -> vector<128x28xf32>
    %cst_241 = arith.constant dense<0.000000e+00> : vector<8x28xf32>
    %861 = tpu.matmul %851, %860, %cst_241 {dimension_numbers = #tpu.dot_dimension_numbers<[1], [0], [0], [1], [0, 0, 1, 1], [], []>} : vector<8x128xf32>, vector<128x28xf32>, vector<8x28xf32> -> vector<8x28xf32>
    %c640 = arith.constant 640 : index
    %c0_242 = arith.constant 0 : index
    %862 = vector.load %arg2[%c640, %c0_242] : memref<728x128xf32, #tpu.memory_space<vmem>>, vector<8x1xf32>
    %863 = vector.broadcast %862 : vector<8x1xf32> to vector<8x28xf32>
    %864 = arith.addf %861, %863 : vector<8x28xf32>
    %cst_243 = arith.constant 0.000000e+00 : f32
    %865 = vector.broadcast %cst_243 : f32 to vector<8x28xf32>
    %866 = arith.maximumf %864, %865 : vector<8x28xf32>
    %867 = vector.extract_strided_slice %34 {offsets = [0, 4], sizes = [8, 28], strides = [1, 1]} : vector<8x36xf32> to vector<8x28xf32>
    %868 = arith.addf %866, %867 : vector<8x28xf32>
    %c648 = arith.constant 648 : index
    %c0_244 = arith.constant 0 : index
    %869 = vector.load %arg2[%c648, %c0_244] : memref<728x128xf32, #tpu.memory_space<vmem>>, vector<16x24xf32>
    %870 = vector.extract_strided_slice %868 {offsets = [0, 0], sizes = [8, 26], strides = [1, 1]} : vector<8x28xf32> to vector<8x26xf32>
    %871 = vector.extract_strided_slice %868 {offsets = [0, 1], sizes = [8, 26], strides = [1, 1]} : vector<8x28xf32> to vector<8x26xf32>
    %872 = vector.extract_strided_slice %868 {offsets = [0, 2], sizes = [8, 26], strides = [1, 1]} : vector<8x28xf32> to vector<8x26xf32>
    %873 = tpu.concatenate %870, %871, %872 in 0 : vector<8x26xf32>, vector<8x26xf32>, vector<8x26xf32> -> vector<24x26xf32>
    %cst_245 = arith.constant dense<0.000000e+00> : vector<16x26xf32>
    %874 = tpu.matmul %869, %873, %cst_245 {dimension_numbers = #tpu.dot_dimension_numbers<[1], [0], [0], [1], [0, 0, 1, 1], [], []>} : vector<16x24xf32>, vector<24x26xf32>, vector<16x26xf32> -> vector<16x26xf32>
    %c664 = arith.constant 664 : index
    %c0_246 = arith.constant 0 : index
    %875 = vector.load %arg2[%c664, %c0_246] : memref<728x128xf32, #tpu.memory_space<vmem>>, vector<16x1xf32>
    %876 = vector.broadcast %875 : vector<16x1xf32> to vector<16x26xf32>
    %877 = arith.addf %874, %876 : vector<16x26xf32>
    %878 = vector.extract_strided_slice %877 {offsets = [0, 0], sizes = [8, 26], strides = [1, 1]} : vector<16x26xf32> to vector<8x26xf32>
    %879 = vector.extract_strided_slice %877 {offsets = [8, 0], sizes = [8, 26], strides = [1, 1]} : vector<16x26xf32> to vector<8x26xf32>
    %880 = arith.negf %879 : vector<8x26xf32>
    %881 = math.exp %880 : vector<8x26xf32>
    %cst_247 = arith.constant 1.000000e+00 : f32
    %882 = vector.broadcast %cst_247 : f32 to vector<8x26xf32>
    %883 = arith.addf %882, %881 : vector<8x26xf32>
    %884 = arith.divf %882, %883 : vector<8x26xf32>
    %885 = arith.mulf %878, %884 : vector<8x26xf32>
    %c680 = arith.constant 680 : index
    %c0_248 = arith.constant 0 : index
    %886 = vector.load %arg2[%c680, %c0_248] : memref<728x128xf32, #tpu.memory_space<vmem>>, vector<26x115xf32>
    %cst_249 = arith.constant dense<0.000000e+00> : vector<8x115xf32>
    %887 = tpu.matmul %885, %886, %cst_249 {dimension_numbers = #tpu.dot_dimension_numbers<[1], [0], [0], [1], [0, 0, 1, 1], [], []>} : vector<8x26xf32>, vector<26x115xf32>, vector<8x115xf32> -> vector<8x115xf32>
    %c712 = arith.constant 712 : index
    %c0_250 = arith.constant 0 : index
    %888 = vector.load %arg2[%c712, %c0_250] : memref<728x128xf32, #tpu.memory_space<vmem>>, vector<4x64xf32>
    %889 = vector.extract_strided_slice %887 {offsets = [0, 0], sizes = [8, 108], strides = [1, 1]} : vector<8x115xf32> to vector<8x108xf32>
    %890 = vector.extract_strided_slice %887 {offsets = [0, 1], sizes = [8, 108], strides = [1, 1]} : vector<8x115xf32> to vector<8x108xf32>
    %891 = vector.extract_strided_slice %887 {offsets = [0, 2], sizes = [8, 108], strides = [1, 1]} : vector<8x115xf32> to vector<8x108xf32>
    %892 = vector.extract_strided_slice %887 {offsets = [0, 3], sizes = [8, 108], strides = [1, 1]} : vector<8x115xf32> to vector<8x108xf32>
    %893 = vector.extract_strided_slice %887 {offsets = [0, 4], sizes = [8, 108], strides = [1, 1]} : vector<8x115xf32> to vector<8x108xf32>
    %894 = vector.extract_strided_slice %887 {offsets = [0, 5], sizes = [8, 108], strides = [1, 1]} : vector<8x115xf32> to vector<8x108xf32>
    %895 = vector.extract_strided_slice %887 {offsets = [0, 6], sizes = [8, 108], strides = [1, 1]} : vector<8x115xf32> to vector<8x108xf32>
    %896 = vector.extract_strided_slice %887 {offsets = [0, 7], sizes = [8, 108], strides = [1, 1]} : vector<8x115xf32> to vector<8x108xf32>
    %897 = tpu.concatenate %889, %890, %891, %892, %893, %894, %895, %896 in 0 : vector<8x108xf32>, vector<8x108xf32>, vector<8x108xf32>, vector<8x108xf32>, vector<8x108xf32>, vector<8x108xf32>, vector<8x108xf32>, vector<8x108xf32> -> vector<64x108xf32>
    %cst_251 = arith.constant dense<0.000000e+00> : vector<4x108xf32>
    %898 = tpu.matmul %888, %897, %cst_251 {dimension_numbers = #tpu.dot_dimension_numbers<[1], [0], [0], [1], [0, 0, 1, 1], [], []>} : vector<4x64xf32>, vector<64x108xf32>, vector<4x108xf32> -> vector<4x108xf32>
    %c720 = arith.constant 720 : index
    %c0_252 = arith.constant 0 : index
    %899 = vector.load %arg2[%c720, %c0_252] : memref<728x128xf32, #tpu.memory_space<vmem>>, vector<4x1xf32>
    %900 = vector.broadcast %899 : vector<4x1xf32> to vector<4x108xf32>
    %901 = arith.addf %898, %900 : vector<4x108xf32>
    %cst_253 = arith.constant 0.000000e+00 : f32
    %902 = vector.broadcast %cst_253 : f32 to vector<4x20xf32>
    %903 = tpu.concatenate %901, %902 in 1 : vector<4x108xf32>, vector<4x20xf32> -> vector<4x128xf32>
    %c0_254 = arith.constant 0 : index
    %c0_255 = arith.constant 0 : index
    %c0_256 = arith.constant 0 : index
    %904 = vector.load %arg3[%c0_254, %c0_255, %c0_256] : memref<1x4x128xf32, #tpu.memory_space<vmem>>, vector<1x4x128xf32>
    %905 = vector.shape_cast %904 : vector<1x4x128xf32> to vector<4x128xf32>
    %906 = vector.shape_cast %903 : vector<4x128xf32> to vector<1x4x128xf32>
    tpu.vector_store %arg3[%c0_254, %c0_255, %c0_256], %906 {strides = array<i32>} : memref<1x4x128xf32, #tpu.memory_space<vmem>>, vector<1x4x128xf32>,
    return
  }
  func.func @transform_0(%arg0: i32) -> (i32, i32, i32) {
    %c0_i32 = arith.constant 0 : i32
    %c0_i32_0 = arith.constant 0 : i32
    %c0_i32_1 = arith.constant 0 : i32
    return %arg0, %c0_i32, %c0_i32_0 : i32, i32, i32
  }
  func.func @transform_1(%arg0: i32) -> (i32, i32) {
    %c0_i32 = arith.constant 0 : i32
    %c0_i32_0 = arith.constant 0 : i32
    %c0_i32_1 = arith.constant 0 : i32
    return %c0_i32, %c0_i32_0 : i32, i32
  }
  func.func @transform_2(%arg0: i32) -> (i32, i32, i32) {
    %c0_i32 = arith.constant 0 : i32
    %c0_i32_0 = arith.constant 0 : i32
    %c0_i32_1 = arith.constant 0 : i32
    return %arg0, %c0_i32, %c0_i32_0 : i32, i32, i32
  }
}

</mosaic_0001>

<llo_original>
// kernel: demucs_wrapper_forward.1
$region0: #{demucs_wrapper_forward.1}
  #allocation0 [shape = 'u32[]', space=smem, size = 0x4, offset = 0x4, fixed_abs, tag = 'smem constant byte address 0x4 - core index']
  #allocation1 [shape = 'u32[144,128]{1,0:T(1,128)}', space=vmem, size = 0x12000, scoped, tag = 'internal scratch']
  #allocation2 [shape = 'f32[8,64]{1,0:T(8,128)}', space=vmem, size = 0x1000, scoped, tag = 'scratch operand']
  #allocation3 [shape = 'f32[8,32]{1,0:T(8,128)}', space=vmem, size = 0x1000, scoped, tag = 'scratch operand']
  %s0 = inlined_call_operand.vmem [shape: f32[2,4,148], index: 0, kind: input, shape index: {}]
  %s1 = inlined_call_operand.hbm [shape: f32[728,128], index: 1, kind: input, shape index: {}]
  %s2 = inlined_call_operand.hbm [shape: f32[2,4,128], index: 2, kind: output, shape index: {}]
  %s3 = sld [smem:[#allocation0]]
  $region45: #{demucs_wrapper_forward.1} parent=0
    _
  %s5 = ssub.s32 1, %s3
  %s6 = scalar_select 0, %s5, %s3
  $region1: #{demucs_wrapper_forward.1} parent=0
    #allocation4 [shape = 'u8[372736]{0}', space=vmem, size = 0x5b000, scoped, tag = 'input window, operand 1, single buffered']
    #allocation5 [shape = 's32[2]{0}', space=sflag, size = 0x8, scoped, tag = 'scoped memory for demucs_wrapper_forward.1']
    #allocation6 [shape = 's32[2]{0}', space=sflag, size = 0x8, scoped, tag = 'scoped memory for demucs_wrapper_forward.1']
    #allocation7 [shape = 'u8[4096]{0}', space=vmem, size = 0x1000, scoped, tag = 'output window, operand 0']
    %7 = vsyncpa [#allocation5], 0
    %8 = vsyncpa [#allocation6], 0
    %s9 = scalar_lea.sflag [#allocation6], 1
    %10 = vsyncpa %s9, 0
    loop: start=0, step=1, limit=4
    $region2: #{demucs_wrapper_forward.1} parent=1 // loop_pre_header
      _
    $region3: #{demucs_wrapper_forward.1} parent=1 // loop_header
      %s12 = sphi 0, %s16
      %p13 = scmp.ge.s32.totalorder %s12, 4
      %s22 = sphi 0, %s24
      %s25 = sphi 0, %s22
      %s26 = sphi 0, %s25
      %s42 = sphi 0, %s26
      %s46 = sphi 0, %s46
      %s48 = sphi 0, %s46
      %s49 = sphi 0, %s48
      %s63 = sphi 0, %s49
      %s69 = sphi 0, %s71
      %s72 = sphi 0, %s69
      %s73 = sphi 0, %s72
      %s89 = sphi 0, %s73
    $region4: #{demucs_wrapper_forward.1} parent=1 // loop_header_branch
      %15 = sbr.rel (%p13) target = $region8
    $region5: #{demucs_wrapper_forward.1} parent=1 // loop_body
      %s17 = ssub.s32 %s12, 1
      %s18 = ssub.s32 %s12, 2
      %s19 = sadd.s32 %s12, 1
      %s20 = ssub.s32 %s12, %s19
      %p21 = scmp.eq.s32.totalorder %s20, 0
      %s23 = sadd.s32 %s22, 1
      %s24 = scalar_select %p21, %s22, %s23
      %p27 = pneg %p21
      %p28 = scmp.eq.s32.totalorder %s12, 1
      %p29 = por %p27, %p28
      %p30 = scmp.ne.s32.totalorder %s22, %s25
      %p31 = scmp.eq.s32.totalorder %s12, 0
      %p32 = por %p30, %p31
      %p33 = scmp.ne.s32.totalorder %s22, %s25
      %p34 = scmp.eq.s32.totalorder %s17, 1
      %p35 = por %p33, %p34
      %p36 = scmp.ne.s32.totalorder %s25, %s26
      %p37 = scmp.eq.s32.totalorder %s17, 0
      %p38 = por %p36, %p37
      %p39 = scmp.ne.s32.totalorder %s25, %s26
      %p40 = scmp.eq.s32.totalorder %s18, 1
      %p41 = por %p39, %p40
      %p43 = scmp.ne.s32.totalorder %s26, %s42
      %p44 = scmp.eq.s32.totalorder %s18, 0
      %p45 = por %p43, %p44
      %s47 = sadd.s32 %s46, 1
      %p50 = scmp.eq.s32.totalorder %s12, 1
      %p51 = scmp.ne.s32.totalorder %s46, %s48
      %p52 = scmp.eq.s32.totalorder %s12, 0
      %p53 = por %p51, %p52
      %p54 = scmp.ne.s32.totalorder %s46, %s48
      %p55 = scmp.eq.s32.totalorder %s17, 1
      %p56 = por %p54, %p55
      %p57 = scmp.ne.s32.totalorder %s48, %s49
      %p58 = scmp.eq.s32.totalorder %s17, 0
      %p59 = por %p57, %p58
      %p60 = scmp.ne.s32.totalorder %s48, %s49
      %p61 = scmp.eq.s32.totalorder %s18, 1
      %p62 = por %p60, %p61
      %p64 = scmp.ne.s32.totalorder %s49, %s63
      %p65 = scmp.eq.s32.totalorder %s18, 0
      %p66 = por %p64, %p65
      %s67 = ssub.s32 %s12, %s19
      %p68 = scmp.eq.s32.totalorder %s67, 0
      %s70 = sadd.s32 %s69, 1
      %s71 = scalar_select %p68, %s69, %s70
      %p74 = pneg %p68
      %p75 = scmp.eq.s32.totalorder %s12, 1
      %p76 = por %p74, %p75
      %p77 = scmp.ne.s32.totalorder %s69, %s72
      %p78 = scmp.eq.s32.totalorder %s12, 0
      %p79 = por %p77, %p78
      %p80 = scmp.ne.s32.totalorder %s69, %s72
      %p81 = scmp.eq.s32.totalorder %s17, 1
      %p82 = por %p80, %p81
      %p83 = scmp.ne.s32.totalorder %s72, %s73
      %p84 = scmp.eq.s32.totalorder %s17, 0
      %p85 = por %p83, %p84
      %p86 = scmp.ne.s32.totalorder %s72, %s73
      %p87 = scmp.eq.s32.totalorder %s18, 1
      %p88 = por %p86, %p87
      %p90 = scmp.ne.s32.totalorder %s73, %s89
      %p91 = scmp.eq.s32.totalorder %s18, 0
      %p92 = por %p90, %p91
      %p93 = scmp.le.s32.totalorder 1, %s12
      %p94 = scmp.lt.s32.totalorder %s12, 3
      %p95 = pnand %p93, %p94
      %p96 = pneg %p95
      // Predicated region
      $region9: #{demucs_wrapper_forward.1} parent=5 // pred_check
        _
      $region10: #{demucs_wrapper_forward.1} parent=5 // pred_check_branch
        %98 = sbr.rel (%p95) target = $region12
      $region11: #{demucs_wrapper_forward.1} parent=5 // pred_region
        %s99 = ssub.s32 %s12, 1
        // Predicated region
        $region13: #{demucs_wrapper_forward.1} parent=11 // pred_check
          %p100 = pneg %p59
        $region14: #{demucs_wrapper_forward.1} parent=11 // pred_check_branch
          %102 = sbr.rel (%p100) target = $region16
        $region15: #{demucs_wrapper_forward.1} parent=11 // pred_region
          %s104 = ssub.s32 11648, 11648
          %105 = vsyncadd [#allocation5], %s104
          %s106 = sshll.u32 [#allocation4], 4
          %s107 = int_to_ptr.vmem [resolvable:$true] %s106
          %112 = dma.hbm_to_vmem [thread:$0]  %s1, 11648, %s107, [#allocation5], 128, 128, 8
        $region16: #{demucs_wrapper_forward.1} parent=11 // pred_fallthru
          _
      $region12: #{demucs_wrapper_forward.1} parent=5 // pred_fallthru
        _
      %p113 = scmp.lt.s32.totalorder %s12, 2
      // Predicated region
      $region17: #{demucs_wrapper_forward.1} parent=5 // pred_check
        %p114 = pneg %p113
      $region18: #{demucs_wrapper_forward.1} parent=5 // pred_check_branch
        %116 = sbr.rel (%p114) target = $region20
      $region19: #{demucs_wrapper_forward.1} parent=5 // pred_region
        // Predicated region
        $region21: #{demucs_wrapper_forward.1} parent=19 // pred_check
          %p117 = pneg %p32
        $region22: #{demucs_wrapper_forward.1} parent=19 // pred_check_branch
          %119 = sbr.rel (%p117) target = $region24
        $region23: #{demucs_wrapper_forward.1} parent=19 // pred_region
          %p120 = scmp.lt.s32.totalorder %s12, 1
          %s121 = scalar_select %p120, %s12, 1
          %s122 = smul.addr %s121, 2
          %s123 = smul.addr %s122, 4
          %s124 = scalar_lea.vmem %s0, %s123
        $region24: #{demucs_wrapper_forward.1} parent=19 // pred_fallthru
          _
      $region20: #{demucs_wrapper_forward.1} parent=5 // pred_fallthru
        _
      %p125 = scmp.le.s32.totalorder 1, %s12
      %p126 = scmp.lt.s32.totalorder %s12, 3
      %p127 = pnand %p125, %p126
      %p128 = pneg %p127
      // Predicated region
      $region25: #{demucs_wrapper_forward.1} parent=5 // pred_check
        _
      $region26: #{demucs_wrapper_forward.1} parent=5 // pred_check_branch
        %130 = sbr.rel (%p127) target = $region28
      $region27: #{demucs_wrapper_forward.1} parent=5 // pred_region
        %s131 = ssub.s32 %s12, 1
        // Predicated region
        $region29: #{demucs_wrapper_forward.1} parent=27 // pred_check
          %p132 = pneg %p59
        $region30: #{demucs_wrapper_forward.1} parent=27 // pred_check_branch
          %134 = sbr.rel (%p132) target = $region32
        $region31: #{demucs_wrapper_forward.1} parent=27 // pred_region
          %135 = dma.done [#allocation5], 11648
        $region32: #{demucs_wrapper_forward.1} parent=27 // pred_fallthru
          _
        %p136 = scmp.lt.s32.totalorder %s17, 1
        %s137 = scalar_select %p136, %s17, 1
        %s138 = smul.addr %s137, 2
        %s139 = smul.addr %s138, 4
        %s140 = scalar_lea.vmem %s0, %s139
        %p141 = pneg %p38
        %p142 = pneg %p35
        %p143 = pneg %p59
        %p144 = pneg %p56
        %p145 = pneg %p85
        %p146 = pneg %p82
        %s147 = sand.u32 %s72, 1
        %s148 = scalar_lea.sflag [#allocation6], %s147
        %s149 = sand.u32 %s72, 1
        %s150 = smul.addr %s149, 4
        %s151 = scalar_lea.vmem [#allocation7], %s150
        %p152 = scmp.lt.s32.totalorder %s17, 1
        %s153 = scalar_select %p152, %s17, 1
        %s154 = smul.addr %s153, 2
        %s155 = smul.addr %s154, 4
        %s156 = scalar_lea.vmem %s0, %s155
        %v157 = vld [vmem:[#allocation4] sm:$0xff]
        %v158 = vld [vmem:[%s156] sm:$0xff]
        %v160 = vcombine.high %v158, %v158
        %vm161 = vcmask 31744
        %v163 = vsel %vm161, %v157, 0
        %vm165 = vcmask 1043456
        %v166 = vsel %vm165, %v158, 0
        %v168 = vsel %vm165, %v160, 0
        %170 = vmatprep.subr.mxu0 0.0
        %171 = vmatpush1.msra.mxu0 0.0
        %172 = vmatprep.subr.mxu0 0.0
        %173 = vmatpush1.msra.mxu0 0.0
        %174 = vmatprep.subr.mxu0 0.0
        %175 = vmatpush1.msra.mxu0 0.0
        %176 = vmatprep.subr.mxu0 0.0
        %177 = vmatpush1.msra.mxu0 0.0
        %178 = vmatprep.subr.mxu0 0.0
        %179 = vmatpush1.msra.mxu0 0.0
        %180 = vmatprep.subr.mxu0 0.0
        %181 = vmatpush1.msra.mxu0 0.0
        %182 = vmatprep.subr.mxu0 0.0
        %183 = vmatpush1.msra.mxu0 0.0
        %184 = vmatprep.subr.mxu0 0.0
        %185 = vmatpush1.msra.mxu0 0.0
        %186 = vmatprep.subr.mxu0 0.0
        %187 = vmatpush1.msra.mxu0 0.0
        %188 = vmatprep.subr.mxu0 0.0
        %189 = vmatpush1.msra.mxu0 0.0
        %190 = vmatprep.subr.mxu0 0.0
        %191 = vmatpush1.msra.mxu0 0.0
        %192 = vmatprep.subr.mxu0 0.0
        %193 = vmatpush1.msra.mxu0 0.0
        %194 = vmatprep.subr.mxu0 0.0
        %195 = vmatpush1.msra.mxu0 0.0
        %196 = vmatprep.subr.mxu0 0.0
        %197 = vmatpush1.msra.mxu0 0.0
        %198 = vmatprep.subr.mxu0 0.0
        %199 = vmatpush1.msra.mxu0 0.0
        %200 = vmatprep.subr.mxu0 %v168
        %201 = vmatpush1.msra.mxu0 %v166
        %202 = vmatprep.subr.mxu0 0.0
        %203 = vmatpush2.msra.mxu0 0.0
        %204 = vmatprep.subr.mxu0 0.0
        %205 = vmatpush2.msra.mxu0 0.0
        %206 = vmatprep.subr.mxu0 0.0
        %207 = vmatpush2.msra.mxu0 0.0
        %208 = vmatprep.subr.mxu0 0.0
        %209 = vmatpush2.msra.mxu0 0.0
        %210 = vmatprep.subr.mxu0 0.0
        %211 = vmatpush2.msra.mxu0 0.0
        %212 = vmatprep.subr.mxu0 0.0
        %213 = vmatpush2.msra.mxu0 0.0
        %214 = vmatprep.subr.mxu0 0.0
        %215 = vmatpush2.msra.mxu0 0.0
        %216 = vmatprep.subr.mxu0 0.0
        %217 = vmatpush2.msra.mxu0 0.0
        %218 = vmatprep.subr.mxu0 0.0
        %219 = vmatpush2.msra.mxu0 0.0
        %220 = vmatprep.subr.mxu0 0.0
        %221 = vmatpush2.msra.mxu0 0.0
        %222 = vmatprep.subr.mxu0 0.0
        %223 = vmatpush2.msra.mxu0 0.0
        %224 = vmatprep.subr.mxu0 0.0
        %225 = vmatpush2.msra.mxu0 0.0
        %226 = vmatprep.subr.mxu0 0.0
        %227 = vmatpush2.msra.mxu0 0.0
        %228 = vmatprep.subr.mxu0 0.0
        %229 = vmatpush2.msra.mxu0 0.0
        %230 = vmatprep.subr.mxu0 0.0
        %231 = vmatpush2.msra.mxu0 0.0
        %232 = vmatprep.subr.mxu0 0.0
        %233 = vmatpush2.msra.mxu0 0.0
        %234 = vmatprep.mubr.f32.mxu0 0.0
        %235 = vmatmul.mubr.f32.gmra.mxu0 %v163
        %v236 = vpop.f32.mrf.mxu0
        %v237 = vadd.f32 0.0, %v236
        %v238 = vpop.f32.mrf.mxu0
        %v239 = vadd.f32 0.0, %v238
        %240 = vdwg.mxu0
        %v241 = vld [vmem:[#allocation4 + $0x8] sm:$0xff]
        %244 = vrot.lane.b32.xlu0 %v237, 127
        %v245 = vpop.permute.xlu0 %244
        %246 = vrot.lane.b32.xlu0 %v239, 127
        %v247 = vpop.permute.xlu0 %246
        %vm248 = vcmask 1039360
        %v249 = vsel %vm248, %v245, %v247
        %252 = vrot.lane.b32.xlu0 %v237, 126
        %v253 = vpop.permute.xlu0 %252
        %254 = vrot.lane.b32.xlu0 %v239, 126
        %v255 = vpop.permute.xlu0 %254
        %vm256 = vcmask 1031168
        %v257 = vsel %vm256, %v253, %v255
        %260 = vrot.lane.b32.xlu0 %v237, 125
        %v261 = vpop.permute.xlu0 %260
        %262 = vrot.lane.b32.xlu0 %v239, 125
        %v263 = vpop.permute.xlu0 %262
        %vm264 = vcmask 1022976
        %v265 = vsel %vm264, %v261, %v263
        %268 = vrot.lane.b32.xlu0 %v237, 124
        %v269 = vpop.permute.xlu0 %268
        %270 = vrot.lane.b32.xlu0 %v239, 124
        %v271 = vpop.permute.xlu0 %270
        %vm272 = vcmask 1014784
        %v273 = vsel %vm272, %v269, %v271
        %276 = vrot.lane.b32.xlu0 %v237, 123
        %v277 = vpop.permute.xlu0 %276
        %278 = vrot.lane.b32.xlu0 %v239, 123
        %v279 = vpop.permute.xlu0 %278
        %vm280 = vcmask 1006592
        %v281 = vsel %vm280, %v277, %v279
        %284 = vrot.lane.b32.xlu0 %v237, 122
        %v285 = vpop.permute.xlu0 %284
        %286 = vrot.lane.b32.xlu0 %v239, 122
        %v287 = vpop.permute.xlu0 %286
        %vm288 = vcmask 998400
        %v289 = vsel %vm288, %v285, %v287
        %292 = vrot.lane.b32.xlu0 %v237, 121
        %v293 = vpop.permute.xlu0 %292
        %294 = vrot.lane.b32.xlu0 %v239, 121
        %v295 = vpop.permute.xlu0 %294
        %vm296 = vcmask 990208
        %v297 = vsel %vm296, %v293, %v295
        %vm300 = vcmask 523264
        %v302 = vsel %vm300, %v241, 0
        %304 = vmatprep.subr.mxu0 0.0
        %305 = vmatpush1.msra.mxu0 0.0
        %306 = vmatprep.subr.mxu0 0.0
        %307 = vmatpush1.msra.mxu0 0.0
        %308 = vmatprep.subr.mxu0 0.0
        %309 = vmatpush1.msra.mxu0 0.0
        %310 = vmatprep.subr.mxu0 0.0
        %311 = vmatpush1.msra.mxu0 0.0
        %312 = vmatprep.subr.mxu0 0.0
        %313 = vmatpush1.msra.mxu0 0.0
        %314 = vmatprep.subr.mxu0 0.0
        %315 = vmatpush1.msra.mxu0 0.0
        %316 = vmatprep.subr.mxu0 0.0
        %317 = vmatpush1.msra.mxu0 0.0
        %318 = vmatprep.subr.mxu0 0.0
        %319 = vmatpush1.msra.mxu0 0.0
        %320 = vmatprep.subr.mxu0 %v295
        %321 = vmatpush1.msra.mxu0 %v297
        %322 = vmatprep.subr.mxu0 %v287
        %323 = vmatpush1.msra.mxu0 %v289
        %324 = vmatprep.subr.mxu0 %v279
        %325 = vmatpush1.msra.mxu0 %v281
        %326 = vmatprep.subr.mxu0 %v271
        %327 = vmatpush1.msra.mxu0 %v273
        %328 = vmatprep.subr.mxu0 %v263
        %329 = vmatpush1.msra.mxu0 %v265
        %330 = vmatprep.subr.mxu0 %v255
        %331 = vmatpush1.msra.mxu0 %v257
        %332 = vmatprep.subr.mxu0 %v247
        %333 = vmatpush1.msra.mxu0 %v249
        %334 = vmatprep.subr.mxu0 %v239
        %335 = vmatpush1.msra.mxu0 %v237
        %336 = vmatprep.subr.mxu0 0.0
        %337 = vmatpush2.msra.mxu0 0.0
        %338 = vmatprep.subr.mxu0 0.0
        %339 = vmatpush2.msra.mxu0 0.0
        %340 = vmatprep.subr.mxu0 0.0
        %341 = vmatpush2.msra.mxu0 0.0
        %342 = vmatprep.subr.mxu0 0.0
        %343 = vmatpush2.msra.mxu0 0.0
        %344 = vmatprep.subr.mxu0 0.0
        %345 = vmatpush2.msra.mxu0 0.0
        %346 = vmatprep.subr.mxu0 0.0
        %347 = vmatpush2.msra.mxu0 0.0
        %348 = vmatprep.subr.mxu0 0.0
        %349 = vmatpush2.msra.mxu0 0.0
        %350 = vmatprep.subr.mxu0 0.0
        %351 = vmatpush2.msra.mxu0 0.0
        %352 = vmatprep.subr.mxu0 0.0
        %353 = vmatpush2.msra.mxu0 0.0
        %354 = vmatprep.subr.mxu0 0.0
        %355 = vmatpush2.msra.mxu0 0.0
        %356 = vmatprep.subr.mxu0 0.0
        %357 = vmatpush2.msra.mxu0 0.0
        %358 = vmatprep.subr.mxu0 0.0
        %359 = vmatpush2.msra.mxu0 0.0
        %360 = vmatprep.subr.mxu0 0.0
        %361 = vmatpush2.msra.mxu0 0.0
        %362 = vmatprep.subr.mxu0 0.0
        %363 = vmatpush2.msra.mxu0 0.0
        %364 = vmatprep.subr.mxu0 0.0
        %365 = vmatpush2.msra.mxu0 0.0
        %366 = vmatprep.subr.mxu0 0.0
        %367 = vmatpush2.msra.mxu0 0.0
        %368 = vmatprep.mubr.f32.mxu0 0.0
        %369 = vmatmul.mubr.f32.gmra.mxu0 %v302
        %v370 = vpop.f32.mrf.mxu0
        %v371 = vadd.f32 0.0, %v370
        %v372 = vpop.f32.mrf.mxu0
        %v373 = vadd.f32 0.0, %v372
        %374 = vdwg.mxu0
        %v375 = vld [vmem:[#allocation4 + $0x18] sm:$0xff]
        %v376 = vld [vmem:[#allocation4 + $0x20] sm:$0xff]
        %v377 = vld [vmem:[#allocation4 + $0x28] sm:$0xff]
        %v378 = vld [vmem:[#allocation4 + $0x30] sm:$0xff]
        %v379 = vld [vmem:[#allocation4 + $0x38] sm:$0xff]
        %v380 = vld [vmem:[#allocation4 + $0x40] sm:$0xff]
        %v381 = vld [vmem:[#allocation4 + $0x48] sm:$0xff]
        %v382 = vld [vmem:[#allocation4 + $0x50] sm:$0xff]
        %v383 = vld [vmem:[#allocation4 + $0x58] sm:$0xff]
        %v384 = vld [vmem:[#allocation4 + $0x60] sm:$0xff]
        %v385 = vld [vmem:[#allocation4 + $0x68] sm:$0xff]
        %v386 = vld [vmem:[#allocation4 + $0x70] sm:$0xff]
        %v387 = vld [vmem:[#allocation4 + $0x78] sm:$0xff]
        %v388 = vld [vmem:[#allocation4 + $0x80] sm:$0xff]
        %v389 = vld [vmem:[#allocation4 + $0x88] sm:$0xff]
        %v390 = vld [vmem:[#allocation4 + $0x90] sm:$0xff]
        %v391 = vld [vmem:[#allocation4 + $0x98] sm:$0xff]
        %v392 = vld [vmem:[#allocation4 + $0xa0] sm:$0x1f]
        %v393 = vld [vmem:[#allocation4 + $0x10] sm:$0xff]
        %395 = vset.pattern.permute.xlu0 0
        %396 = vperm.xlu0 %395, %v393
        %v397 = vpop.permute.xlu0 %396
        %vm399 = vcmask 105472
        %v401 = vsel %vm399, %v373, 0
        %vm403 = vcmask 1044480
        %v405 = vsel %vm403, %v392, 0
        %407 = vmatprep.subr.mxu0 0.0
        %408 = vmatpush1.msra.mxu0 %v390
        %409 = vmatprep.subr.mxu0 0.0
        %410 = vmatpush1.msra.mxu0 %v389
        %411 = vmatprep.subr.mxu0 0.0
        %412 = vmatpush1.msra.mxu0 %v388
        %413 = vmatprep.subr.mxu0 0.0
        %414 = vmatpush1.msra.mxu0 %v387
        %415 = vmatprep.subr.mxu0 0.0
        %416 = vmatpush1.msra.mxu0 %v386
        %417 = vmatprep.subr.mxu0 0.0
        %418 = vmatpush1.msra.mxu0 %v385
        %419 = vmatprep.subr.mxu0 0.0
        %420 = vmatpush1.msra.mxu0 %v384
        %421 = vmatprep.subr.mxu0 0.0
        %422 = vmatpush1.msra.mxu0 %v383
        %423 = vmatprep.subr.mxu0 0.0
        %424 = vmatpush1.msra.mxu0 %v382
        %425 = vmatprep.subr.mxu0 0.0
        %426 = vmatpush1.msra.mxu0 %v381
        %427 = vmatprep.subr.mxu0 0.0
        %428 = vmatpush1.msra.mxu0 %v380
        %429 = vmatprep.subr.mxu0 0.0
        %430 = vmatpush1.msra.mxu0 %v379
        %431 = vmatprep.subr.mxu0 0.0
        %432 = vmatpush1.msra.mxu0 %v378
        %433 = vmatprep.subr.mxu0 0.0
        %434 = vmatpush1.msra.mxu0 %v377
        %435 = vmatprep.subr.mxu0 0.0
        %436 = vmatpush1.msra.mxu0 %v376
        %437 = vmatprep.subr.mxu0 0.0
        %438 = vmatpush1.msra.mxu0 %v375
        %439 = vmatprep.subr.mxu0 0.0
        %440 = vmatpush2.msra.mxu0 0.0
        %441 = vmatprep.subr.mxu0 0.0
        %442 = vmatpush2.msra.mxu0 0.0
        %443 = vmatprep.subr.mxu0 0.0
        %444 = vmatpush2.msra.mxu0 0.0
        %445 = vmatprep.subr.mxu0 0.0
        %446 = vmatpush2.msra.mxu0 0.0
        %447 = vmatprep.subr.mxu0 0.0
        %448 = vmatpush2.msra.mxu0 0.0
        %449 = vmatprep.subr.mxu0 0.0
        %450 = vmatpush2.msra.mxu0 0.0
        %451 = vmatprep.subr.mxu0 0.0
        %452 = vmatpush2.msra.mxu0 0.0
        %453 = vmatprep.subr.mxu0 0.0
        %454 = vmatpush2.msra.mxu0 0.0
        %455 = vmatprep.subr.mxu0 0.0
        %456 = vmatpush2.msra.mxu0 0.0
        %457 = vmatprep.subr.mxu0 0.0
        %458 = vmatpush2.msra.mxu0 0.0
        %459 = vmatprep.subr.mxu0 0.0
        %460 = vmatpush2.msra.mxu0 0.0
        %461 = vmatprep.subr.mxu0 0.0
        %462 = vmatpush2.msra.mxu0 0.0
        %463 = vmatprep.subr.mxu0 0.0
        %464 = vmatpush2.msra.mxu0 0.0
        %465 = vmatprep.subr.mxu0 0.0
        %466 = vmatpush2.msra.mxu0 0.0
        %467 = vmatprep.subr.mxu0 0.0
        %468 = vmatpush2.msra.mxu0 %v405
        %469 = vmatprep.subr.mxu0 0.0
        %470 = vmatpush2.msra.mxu0 %v391
        %471 = vmatprep.mubr.f32.mxu0 %v401
        %472 = vmatmul.mubr.f32.gmra.mxu0 %v371
        %v473 = vpop.f32.mrf.mxu0
        %v474 = vadd.f32 %v397, %v473
        %v475 = vpop.f32.mrf.mxu0
        %476 = vdwg.mxu0
        %v477 = vmax.f32 %v474, 0.0
        %v478 = vld [vmem:[#allocation4 + $0xa8] sm:$0xff]
        %v479 = vld [vmem:[#allocation4 + $0xb0] sm:$0xff]
        %v480 = vld [vmem:[#allocation4 + $0xb8] sm:$0xff]
        %v481 = vld [vmem:[#allocation4 + $0xc0] sm:$0xff]
        %483 = vset.pattern.permute.xlu0 0
        %484 = vperm.xlu0 %483, %v480
        %v485 = vpop.permute.xlu0 %484
        %488 = vset.pattern.permute.xlu0 0
        %489 = vperm.xlu0 %488, %v481
        %v490 = vpop.permute.xlu0 %489
        %vm492 = vcmask 64512
        %v494 = vsel %vm492, %v478, 0
        %v497 = vsel %vm492, %v479, 0
        %499 = vmatprep.subr.mxu0 0.0
        %500 = vmatpush1.msra.mxu0 0.0
        %501 = vmatprep.subr.mxu0 0.0
        %502 = vmatpush1.msra.mxu0 0.0
        %503 = vmatprep.subr.mxu0 0.0
        %504 = vmatpush1.msra.mxu0 0.0
        %505 = vmatprep.subr.mxu0 0.0
        %506 = vmatpush1.msra.mxu0 0.0
        %507 = vmatprep.subr.mxu0 0.0
        %508 = vmatpush1.msra.mxu0 0.0
        %509 = vmatprep.subr.mxu0 0.0
        %510 = vmatpush1.msra.mxu0 0.0
        %511 = vmatprep.subr.mxu0 0.0
        %512 = vmatpush1.msra.mxu0 0.0
        %513 = vmatprep.subr.mxu0 0.0
        %514 = vmatpush1.msra.mxu0 0.0
        %515 = vmatprep.subr.mxu0 0.0
        %516 = vmatpush1.msra.mxu0 0.0
        %517 = vmatprep.subr.mxu0 0.0
        %518 = vmatpush1.msra.mxu0 0.0
        %519 = vmatprep.subr.mxu0 0.0
        %520 = vmatpush1.msra.mxu0 0.0
        %521 = vmatprep.subr.mxu0 0.0
        %522 = vmatpush1.msra.mxu0 0.0
        %523 = vmatprep.subr.mxu0 0.0
        %524 = vmatpush1.msra.mxu0 0.0
        %525 = vmatprep.subr.mxu0 0.0
        %526 = vmatpush1.msra.mxu0 0.0
        %527 = vmatprep.subr.mxu0 0.0
        %528 = vmatpush1.msra.mxu0 0.0
        %529 = vmatprep.subr.mxu0 0.0
        %530 = vmatpush1.msra.mxu0 %v477
        %531 = vmatprep.subr.mxu0 0.0
        %532 = vmatpush2.msra.mxu0 0.0
        %533 = vmatprep.subr.mxu0 0.0
        %534 = vmatpush2.msra.mxu0 0.0
        %535 = vmatprep.subr.mxu0 0.0
        %536 = vmatpush2.msra.mxu0 0.0
        %537 = vmatprep.subr.mxu0 0.0
        %538 = vmatpush2.msra.mxu0 0.0
        %539 = vmatprep.subr.mxu0 0.0
        %540 = vmatpush2.msra.mxu0 0.0
        %541 = vmatprep.subr.mxu0 0.0
        %542 = vmatpush2.msra.mxu0 0.0
        %543 = vmatprep.subr.mxu0 0.0
        %544 = vmatpush2.msra.mxu0 0.0
        %545 = vmatprep.subr.mxu0 0.0
        %546 = vmatpush2.msra.mxu0 0.0
        %547 = vmatprep.subr.mxu0 0.0
        %548 = vmatpush2.msra.mxu0 0.0
        %549 = vmatprep.subr.mxu0 0.0
        %550 = vmatpush2.msra.mxu0 0.0
        %551 = vmatprep.subr.mxu0 0.0
        %552 = vmatpush2.msra.mxu0 0.0
        %553 = vmatprep.subr.mxu0 0.0
        %554 = vmatpush2.msra.mxu0 0.0
        %555 = vmatprep.subr.mxu0 0.0
        %556 = vmatpush2.msra.mxu0 0.0
        %557 = vmatprep.subr.mxu0 0.0
        %558 = vmatpush2.msra.mxu0 0.0
        %559 = vmatprep.subr.mxu0 0.0
        %560 = vmatpush2.msra.mxu0 0.0
        %561 = vmatprep.subr.mxu0 0.0
        %562 = vmatpush2.msra.mxu0 0.0
        %563 = vmatprep.mubr.f32.mxu0 0.0
        %564 = vmatmul.mubr.f32.gmra.mxu0 %v494
        %v565 = vpop.f32.mrf.mxu0
        %v566 = vadd.f32 %v485, %v565
        %v567 = vpop.f32.mrf.mxu0
        %568 = vmatprep.mubr.f32.mxu0 0.0
        %569 = vmatmul.mubr.f32.gmra.mxu0 %v497
        %v570 = vpop.f32.mrf.mxu0
        %v571 = vadd.f32 %v490, %v570
        %v572 = vpop.f32.mrf.mxu0
        %573 = vdwg.mxu0
        %v574 = vxor.u32 %v571, 2147483648
        %v575 = vmul.f32 %v574, 1.442695
        %v576 = vpow.pop %v575
        %v577 = vadd.f32 %v576, 1.0
        %v578 = vrcp.pop %v577
        %v579 = vmul.f32 1.0, %v578
        %v580 = vmul.f32 %v566, %v579
        %v581 = vld [vmem:[#allocation4 + $0xc8] sm:$0xff]
        %v582 = vld [vmem:[#allocation4 + $0xd0] sm:$0xff]
        %584 = vrot.lane.b32.xlu0 %v580, 127
        %v585 = vpop.permute.xlu0 %584
        %587 = vrot.lane.b32.xlu0 %v580, 126
        %v588 = vpop.permute.xlu0 %587
        %590 = vrot.lane.b32.xlu0 %v580, 125
        %v591 = vpop.permute.xlu0 %590
        %593 = vrot.lane.b32.xlu0 %v580, 124
        %v594 = vpop.permute.xlu0 %593
        %596 = vrot.lane.b32.xlu0 %v580, 123
        %v597 = vpop.permute.xlu0 %596
        %599 = vrot.lane.b32.xlu0 %v580, 122
        %v600 = vpop.permute.xlu0 %599
        %602 = vrot.lane.b32.xlu0 %v580, 121
        %v603 = vpop.permute.xlu0 %602
        %v606 = vsel %vm300, %v581, 0
        %v609 = vsel %vm300, %v582, 0
        %611 = vmatprep.subr.mxu0 0.0
        %612 = vmatpush1.msra.mxu0 0.0
        %613 = vmatprep.subr.mxu0 0.0
        %614 = vmatpush1.msra.mxu0 0.0
        %615 = vmatprep.subr.mxu0 0.0
        %616 = vmatpush1.msra.mxu0 0.0
        %617 = vmatprep.subr.mxu0 0.0
        %618 = vmatpush1.msra.mxu0 0.0
        %619 = vmatprep.subr.mxu0 0.0
        %620 = vmatpush1.msra.mxu0 0.0
        %621 = vmatprep.subr.mxu0 0.0
        %622 = vmatpush1.msra.mxu0 0.0
        %623 = vmatprep.subr.mxu0 0.0
        %624 = vmatpush1.msra.mxu0 0.0
        %625 = vmatprep.subr.mxu0 0.0
        %626 = vmatpush1.msra.mxu0 0.0
        %627 = vmatprep.subr.mxu0 0.0
        %628 = vmatpush1.msra.mxu0 %v603
        %629 = vmatprep.subr.mxu0 0.0
        %630 = vmatpush1.msra.mxu0 %v600
        %631 = vmatprep.subr.mxu0 0.0
        %632 = vmatpush1.msra.mxu0 %v597
        %633 = vmatprep.subr.mxu0 0.0
        %634 = vmatpush1.msra.mxu0 %v594
        %635 = vmatprep.subr.mxu0 0.0
        %636 = vmatpush1.msra.mxu0 %v591
        %637 = vmatprep.subr.mxu0 0.0
        %638 = vmatpush1.msra.mxu0 %v588
        %639 = vmatprep.subr.mxu0 0.0
        %640 = vmatpush1.msra.mxu0 %v585
        %641 = vmatprep.subr.mxu0 0.0
        %642 = vmatpush1.msra.mxu0 %v580
        %643 = vmatprep.subr.mxu0 0.0
        %644 = vmatpush2.msra.mxu0 0.0
        %645 = vmatprep.subr.mxu0 0.0
        %646 = vmatpush2.msra.mxu0 0.0
        %647 = vmatprep.subr.mxu0 0.0
        %648 = vmatpush2.msra.mxu0 0.0
        %649 = vmatprep.subr.mxu0 0.0
        %650 = vmatpush2.msra.mxu0 0.0
        %651 = vmatprep.subr.mxu0 0.0
        %652 = vmatpush2.msra.mxu0 0.0
        %653 = vmatprep.subr.mxu0 0.0
        %654 = vmatpush2.msra.mxu0 0.0
        %655 = vmatprep.subr.mxu0 0.0
        %656 = vmatpush2.msra.mxu0 0.0
        %657 = vmatprep.subr.mxu0 0.0
        %658 = vmatpush2.msra.mxu0 0.0
        %659 = vmatprep.subr.mxu0 0.0
        %660 = vmatpush2.msra.mxu0 0.0
        %661 = vmatprep.subr.mxu0 0.0
        %662 = vmatpush2.msra.mxu0 0.0
        %663 = vmatprep.subr.mxu0 0.0
        %664 = vmatpush2.msra.mxu0 0.0
        %665 = vmatprep.subr.mxu0 0.0
        %666 = vmatpush2.msra.mxu0 0.0
        %667 = vmatprep.subr.mxu0 0.0
        %668 = vmatpush2.msra.mxu0 0.0
        %669 = vmatprep.subr.mxu0 0.0
        %670 = vmatpush2.msra.mxu0 0.0
        %671 = vmatprep.subr.mxu0 0.0
        %672 = vmatpush2.msra.mxu0 0.0
        %673 = vmatprep.subr.mxu0 0.0
        %674 = vmatpush2.msra.mxu0 0.0
        %675 = vmatprep.mubr.f32.mxu0 0.0
        %676 = vmatmul.mubr.f32.gmra.mxu0 %v606
        %v677 = vpop.f32.mrf.mxu0
        %v678 = vadd.f32 0.0, %v677
        %v679 = vpop.f32.mrf.mxu0
        %680 = vmatprep.mubr.f32.mxu0 0.0
        %681 = vmatmul.mubr.f32.gmra.mxu0 %v609
        %v682 = vpop.f32.mrf.mxu0
        %v683 = vadd.f32 0.0, %v682
        %v684 = vpop.f32.mrf.mxu0
        %685 = vdwg.mxu0
        %v686 = vld [vmem:[#allocation4 + $0xe8] sm:$0xff]
        %v687 = vld [vmem:[#allocation4 + $0xf0] sm:$0xff]
        %v688 = vld [vmem:[#allocation4 + $0xf8] sm:$0xff]
        %v689 = vld [vmem:[#allocation4 + $0x100] sm:$0x1f]
        %v690 = vld [vmem:[#allocation4 + $0xd8] sm:$0xff]
        %v691 = vld [vmem:[#allocation4 + $0xe0] sm:$0xff]
        %693 = vset.pattern.permute.xlu0 0
        %694 = vperm.xlu0 %693, %v690
        %v695 = vpop.permute.xlu0 %694
        %698 = vset.pattern.permute.xlu0 0
        %699 = vperm.xlu0 %698, %v691
        %v700 = vpop.permute.xlu0 %699
        %vm702 = vcmask 236544
        %v704 = vsel %vm702, %v678, 0
        %v707 = vsel %vm702, %v683, 0
        %v710 = vsel %vm403, %v689, 0
        %712 = vmatprep.subr.mxu0 0.0
        %713 = vmatpush1.msra.mxu0 0.0
        %714 = vmatprep.subr.mxu0 0.0
        %715 = vmatpush1.msra.mxu0 0.0
        %716 = vmatprep.subr.mxu0 0.0
        %717 = vmatpush1.msra.mxu0 0.0
        %718 = vmatprep.subr.mxu0 0.0
        %719 = vmatpush1.msra.mxu0 0.0
        %720 = vmatprep.subr.mxu0 0.0
        %721 = vmatpush1.msra.mxu0 0.0
        %722 = vmatprep.subr.mxu0 0.0
        %723 = vmatpush1.msra.mxu0 0.0
        %724 = vmatprep.subr.mxu0 0.0
        %725 = vmatpush1.msra.mxu0 0.0
        %726 = vmatprep.subr.mxu0 0.0
        %727 = vmatpush1.msra.mxu0 0.0
        %728 = vmatprep.subr.mxu0 0.0
        %729 = vmatpush1.msra.mxu0 0.0
        %730 = vmatprep.subr.mxu0 0.0
        %731 = vmatpush1.msra.mxu0 0.0
        %732 = vmatprep.subr.mxu0 0.0
        %733 = vmatpush1.msra.mxu0 0.0
        %734 = vmatprep.subr.mxu0 0.0
        %735 = vmatpush1.msra.mxu0 0.0
        %736 = vmatprep.subr.mxu0 0.0
        %737 = vmatpush1.msra.mxu0 %v710
        %738 = vmatprep.subr.mxu0 0.0
        %739 = vmatpush1.msra.mxu0 %v688
        %740 = vmatprep.subr.mxu0 0.0
        %741 = vmatpush1.msra.mxu0 %v687
        %742 = vmatprep.subr.mxu0 0.0
        %743 = vmatpush1.msra.mxu0 %v686
        %744 = vmatprep.subr.mxu0 0.0
        %745 = vmatpush2.msra.mxu0 0.0
        %746 = vmatprep.subr.mxu0 0.0
        %747 = vmatpush2.msra.mxu0 0.0
        %748 = vmatprep.subr.mxu0 0.0
        %749 = vmatpush2.msra.mxu0 0.0
        %750 = vmatprep.subr.mxu0 0.0
        %751 = vmatpush2.msra.mxu0 0.0
        %752 = vmatprep.subr.mxu0 0.0
        %753 = vmatpush2.msra.mxu0 0.0
        %754 = vmatprep.subr.mxu0 0.0
        %755 = vmatpush2.msra.mxu0 0.0
        %756 = vmatprep.subr.mxu0 0.0
        %757 = vmatpush2.msra.mxu0 0.0
        %758 = vmatprep.subr.mxu0 0.0
        %759 = vmatpush2.msra.mxu0 0.0
        %760 = vmatprep.subr.mxu0 0.0
        %761 = vmatpush2.msra.mxu0 0.0
        %762 = vmatprep.subr.mxu0 0.0
        %763 = vmatpush2.msra.mxu0 0.0
        %764 = vmatprep.subr.mxu0 0.0
        %765 = vmatpush2.msra.mxu0 0.0
        %766 = vmatprep.subr.mxu0 0.0
        %767 = vmatpush2.msra.mxu0 0.0
        %768 = vmatprep.subr.mxu0 0.0
        %769 = vmatpush2.msra.mxu0 0.0
        %770 = vmatprep.subr.mxu0 0.0
        %771 = vmatpush2.msra.mxu0 0.0
        %772 = vmatprep.subr.mxu0 0.0
        %773 = vmatpush2.msra.mxu0 0.0
        %774 = vmatprep.subr.mxu0 0.0
        %775 = vmatpush2.msra.mxu0 0.0
        %776 = vmatprep.mubr.f32.mxu0 0.0
        %777 = vmatmul.mubr.f32.gmra.mxu0 %v704
        %v778 = vpop.f32.mrf.mxu0
        %v779 = vadd.f32 %v695, %v778
        %v780 = vpop.f32.mrf.mxu0
        %781 = vmatprep.mubr.f32.mxu0 0.0
        %782 = vmatmul.mubr.f32.gmra.mxu0 %v707
        %v783 = vpop.f32.mrf.mxu0
        %v784 = vadd.f32 %v700, %v783
        %v785 = vpop.f32.mrf.mxu0
        %786 = vdwg.mxu0
        %v787 = vmax.f32 %v779, 0.0
        %v788 = vmax.f32 %v784, 0.0
        %v789 = vld [vmem:[#allocation4 + $0x108] sm:$0xff]
        %v790 = vld [vmem:[#allocation4 + $0x110] sm:$0xff]
        %v791 = vld [vmem:[#allocation4 + $0x118] sm:$0xff]
        %v792 = vld [vmem:[#allocation4 + $0x120] sm:$0xff]
        %v793 = vld [vmem:[#allocation4 + $0x128] sm:$0xff]
        %v794 = vld [vmem:[#allocation4 + $0x130] sm:$0xff]
        %v795 = vld [vmem:[#allocation4 + $0x138] sm:$0xff]
        %v796 = vld [vmem:[#allocation4 + $0x140] sm:$0xff]
        %798 = vset.pattern.permute.xlu0 0
        %799 = vperm.xlu0 %798, %v793
        %v800 = vpop.permute.xlu0 %799
        %803 = vset.pattern.permute.xlu0 0
        %804 = vperm.xlu0 %803, %v794
        %v805 = vpop.permute.xlu0 %804
        %808 = vset.pattern.permute.xlu0 0
        %809 = vperm.xlu0 %808, %v795
        %v810 = vpop.permute.xlu0 %809
        %813 = vset.pattern.permute.xlu0 0
        %814 = vperm.xlu0 %813, %v796
        %v815 = vpop.permute.xlu0 %814
        %vm817 = vcmask 130048
        %v819 = vsel %vm817, %v789, 0
        %v822 = vsel %vm817, %v790, 0
        %v825 = vsel %vm817, %v791, 0
        %v828 = vsel %vm817, %v792, 0
        %830 = vmatprep.subr.mxu0 0.0
        %831 = vmatpush1.msra.mxu0 0.0
        %832 = vmatprep.subr.mxu0 0.0
        %833 = vmatpush1.msra.mxu0 0.0
        %834 = vmatprep.subr.mxu0 0.0
        %835 = vmatpush1.msra.mxu0 0.0
        %836 = vmatprep.subr.mxu0 0.0
        %837 = vmatpush1.msra.mxu0 0.0
        %838 = vmatprep.subr.mxu0 0.0
        %839 = vmatpush1.msra.mxu0 0.0
        %840 = vmatprep.subr.mxu0 0.0
        %841 = vmatpush1.msra.mxu0 0.0
        %842 = vmatprep.subr.mxu0 0.0
        %843 = vmatpush1.msra.mxu0 0.0
        %844 = vmatprep.subr.mxu0 0.0
        %845 = vmatpush1.msra.mxu0 0.0
        %846 = vmatprep.subr.mxu0 0.0
        %847 = vmatpush1.msra.mxu0 0.0
        %848 = vmatprep.subr.mxu0 0.0
        %849 = vmatpush1.msra.mxu0 0.0
        %850 = vmatprep.subr.mxu0 0.0
        %851 = vmatpush1.msra.mxu0 0.0
        %852 = vmatprep.subr.mxu0 0.0
        %853 = vmatpush1.msra.mxu0 0.0
        %854 = vmatprep.subr.mxu0 0.0
        %855 = vmatpush1.msra.mxu0 0.0
        %856 = vmatprep.subr.mxu0 0.0
        %857 = vmatpush1.msra.mxu0 0.0
        %858 = vmatprep.subr.mxu0 0.0
        %859 = vmatpush1.msra.mxu0 %v788
        %860 = vmatprep.subr.mxu0 0.0
        %861 = vmatpush1.msra.mxu0 %v787
        %862 = vmatprep.subr.mxu0 0.0
        %863 = vmatpush2.msra.mxu0 0.0
        %864 = vmatprep.subr.mxu0 0.0
        %865 = vmatpush2.msra.mxu0 0.0
        %866 = vmatprep.subr.mxu0 0.0
        %867 = vmatpush2.msra.mxu0 0.0
        %868 = vmatprep.subr.mxu0 0.0
        %869 = vmatpush2.msra.mxu0 0.0
        %870 = vmatprep.subr.mxu0 0.0
        %871 = vmatpush2.msra.mxu0 0.0
        %872 = vmatprep.subr.mxu0 0.0
        %873 = vmatpush2.msra.mxu0 0.0
        %874 = vmatprep.subr.mxu0 0.0
        %875 = vmatpush2.msra.mxu0 0.0
        %876 = vmatprep.subr.mxu0 0.0
        %877 = vmatpush2.msra.mxu0 0.0
        %878 = vmatprep.subr.mxu0 0.0
        %879 = vmatpush2.msra.mxu0 0.0
        %880 = vmatprep.subr.mxu0 0.0
        %881 = vmatpush2.msra.mxu0 0.0
        %882 = vmatprep.subr.mxu0 0.0
        %883 = vmatpush2.msra.mxu0 0.0
        %884 = vmatprep.subr.mxu0 0.0
        %885 = vmatpush2.msra.mxu0 0.0
        %886 = vmatprep.subr.mxu0 0.0
        %887 = vmatpush2.msra.mxu0 0.0
        %888 = vmatprep.subr.mxu0 0.0
        %889 = vmatpush2.msra.mxu0 0.0
        %890 = vmatprep.subr.mxu0 0.0
        %891 = vmatpush2.msra.mxu0 0.0
        %892 = vmatprep.subr.mxu0 0.0
        %893 = vmatpush2.msra.mxu0 0.0
        %894 = vmatprep.mubr.f32.mxu0 0.0
        %895 = vmatmul.mubr.f32.gmra.mxu0 %v819
        %v896 = vpop.f32.mrf.mxu0
        %v897 = vadd.f32 %v800, %v896
        %v898 = vpop.f32.mrf.mxu0
        %899 = vmatprep.mubr.f32.mxu0 0.0
        %900 = vmatmul.mubr.f32.gmra.mxu0 %v822
        %v901 = vpop.f32.mrf.mxu0
        %v902 = vadd.f32 %v805, %v901
        %v903 = vpop.f32.mrf.mxu0
        %904 = vmatprep.mubr.f32.mxu0 0.0
        %905 = vmatmul.mubr.f32.gmra.mxu0 %v825
        %v906 = vpop.f32.mrf.mxu0
        %v907 = vadd.f32 %v810, %v906
        %v908 = vpop.f32.mrf.mxu0
        %909 = vmatprep.mubr.f32.mxu0 0.0
        %910 = vmatmul.mubr.f32.gmra.mxu0 %v828
        %v911 = vpop.f32.mrf.mxu0
        %v912 = vadd.f32 %v815, %v911
        %v913 = vpop.f32.mrf.mxu0
        %914 = vdwg.mxu0
        %v915 = vxor.u32 %v907, 2147483648
        %v916 = vxor.u32 %v912, 2147483648
        %v917 = vmul.f32 %v915, 1.442695
        %v918 = vpow.pop %v917
        %v919 = vmul.f32 %v916, 1.442695
        %v920 = vpow.pop %v919
        %v921 = vadd.f32 %v918, 1.0
        %v922 = vadd.f32 %v920, 1.0
        %v923 = vrcp.pop %v921
        %v924 = vmul.f32 1.0, %v923
        %v925 = vrcp.pop %v922
        %v926 = vmul.f32 1.0, %v925
        %v927 = vmul.f32 %v897, %v924
        %v928 = vmul.f32 %v902, %v926
        %929 = vxpose.xlu0.b32.start [1/16] %v927, 128
        %930 = vxpose.xlu0.b32.cont [2/16] %v928, 128
        %931 = vxpose.xlu0.b32.cont [3/16] 0.0, 128
        %932 = vxpose.xlu0.b32.cont [4/16] 0.0, 128
        %933 = vxpose.xlu0.b32.cont [5/16] 0.0, 128
        %934 = vxpose.xlu0.b32.cont [6/16] 0.0, 128
        %935 = vxpose.xlu0.b32.cont [7/16] 0.0, 128
        %936 = vxpose.xlu0.b32.cont [8/16] 0.0, 128
        %937 = vxpose.xlu0.b32.cont [9/16] 0.0, 128
        %938 = vxpose.xlu0.b32.cont [10/16] 0.0, 128
        %939 = vxpose.xlu0.b32.cont [11/16] 0.0, 128
        %940 = vxpose.xlu0.b32.cont [12/16] 0.0, 128
        %941 = vxpose.xlu0.b32.cont [13/16] 0.0, 128
        %942 = vxpose.xlu0.b32.cont [14/16] 0.0, 128
        %943 = vxpose.xlu0.b32.cont [15/16] 0.0, 128
        %944 = vxpose.xlu0.b32.end [16/16] 0.0, 128
        %v945 = vpop.trf.xlu0
        %v946 = vpop.trf.xlu0
        %v947 = vpop.trf.xlu0
        %v948 = vpop.trf.xlu0
        %v949 = vpop.trf.xlu0
        %v950 = vpop.trf.xlu0
        %v951 = vpop.trf.xlu0
        %v952 = vpop.trf.xlu0
        %v953 = vpop.trf.xlu0
        %v954 = vpop.trf.xlu0
        %v955 = vpop.trf.xlu0
        %v956 = vpop.trf.xlu0
        %v957 = vpop.trf.xlu0
        %v958 = vpop.trf.xlu0
        %v959 = vpop.trf.xlu0
        %v960 = vpop.trf.xlu0
        %v961 = vld [vmem:[#allocation4 + $0x158] sm:$0xff]
        %v962 = vld [vmem:[#allocation4 + $0x160] sm:$0xff]
        %v963 = vld [vmem:[#allocation4 + $0x148] sm:$0xff]
        %v964 = vld [vmem:[#allocation4 + $0x150] sm:$0xff]
        %v965 = vld [vmem:[#allocation4 + $0x168] sm:$0x1]
        %v966 = vlaneseq
        %v967 = vshrl.u32 %v966, 7
        %v968 = vsub.s32 0, %v967
        %v969 = vrot.slane %v965, %v968
        %v971 = vsel %vm817, %v945, 0
        %973 = vmatprep.subr.mxu0 0.0
        %974 = vmatpush1.msra.mxu0 0.0
        %975 = vmatprep.subr.mxu0 0.0
        %976 = vmatpush1.msra.mxu0 0.0
        %977 = vmatprep.subr.mxu0 0.0
        %978 = vmatpush1.msra.mxu0 0.0
        %979 = vmatprep.subr.mxu0 0.0
        %980 = vmatpush1.msra.mxu0 0.0
        %981 = vmatprep.subr.mxu0 0.0
        %982 = vmatpush1.msra.mxu0 0.0
        %983 = vmatprep.subr.mxu0 0.0
        %984 = vmatpush1.msra.mxu0 0.0
        %985 = vmatprep.subr.mxu0 0.0
        %986 = vmatpush1.msra.mxu0 0.0
        %987 = vmatprep.subr.mxu0 0.0
        %988 = vmatpush1.msra.mxu0 0.0
        %989 = vmatprep.subr.mxu0 0.0
        %990 = vmatpush1.msra.mxu0 0.0
        %991 = vmatprep.subr.mxu0 0.0
        %992 = vmatpush1.msra.mxu0 0.0
        %993 = vmatprep.subr.mxu0 0.0
        %994 = vmatpush1.msra.mxu0 0.0
        %995 = vmatprep.subr.mxu0 0.0
        %996 = vmatpush1.msra.mxu0 0.0
        %997 = vmatprep.subr.mxu0 0.0
        %998 = vmatpush1.msra.mxu0 0.0
        %999 = vmatprep.subr.mxu0 0.0
        %1000 = vmatpush1.msra.mxu0 0.0
        %1001 = vmatprep.subr.mxu0 0.0
        %1002 = vmatpush1.msra.mxu0 %v964
        %1003 = vmatprep.subr.mxu0 0.0
        %1004 = vmatpush1.msra.mxu0 %v963
        %1005 = vmatprep.subr.mxu0 0.0
        %1006 = vmatpush2.msra.mxu0 0.0
        %1007 = vmatprep.subr.mxu0 0.0
        %1008 = vmatpush2.msra.mxu0 0.0
        %1009 = vmatprep.subr.mxu0 0.0
        %1010 = vmatpush2.msra.mxu0 0.0
        %1011 = vmatprep.subr.mxu0 0.0
        %1012 = vmatpush2.msra.mxu0 0.0
        %1013 = vmatprep.subr.mxu0 0.0
        %1014 = vmatpush2.msra.mxu0 0.0
        %1015 = vmatprep.subr.mxu0 0.0
        %1016 = vmatpush2.msra.mxu0 0.0
        %1017 = vmatprep.subr.mxu0 0.0
        %1018 = vmatpush2.msra.mxu0 0.0
        %1019 = vmatprep.subr.mxu0 0.0
        %1020 = vmatpush2.msra.mxu0 0.0
        %1021 = vmatprep.subr.mxu0 0.0
        %1022 = vmatpush2.msra.mxu0 0.0
        %1023 = vmatprep.subr.mxu0 0.0
        %1024 = vmatpush2.msra.mxu0 0.0
        %1025 = vmatprep.subr.mxu0 0.0
        %1026 = vmatpush2.msra.mxu0 0.0
        %1027 = vmatprep.subr.mxu0 0.0
        %1028 = vmatpush2.msra.mxu0 0.0
        %1029 = vmatprep.subr.mxu0 0.0
        %1030 = vmatpush2.msra.mxu0 0.0
        %1031 = vmatprep.subr.mxu0 0.0
        %1032 = vmatpush2.msra.mxu0 0.0
        %1033 = vmatprep.subr.mxu0 0.0
        %1034 = vmatpush2.msra.mxu0 0.0
        %1035 = vmatprep.subr.mxu0 0.0
        %1036 = vmatpush2.msra.mxu0 0.0
        %1037 = vmatprep.mubr.f32.mxu0 0.0
        %1038 = vmatmul.mubr.f32.gmra.mxu0 %v971
        %v1039 = vpop.f32.mrf.mxu0
        %v1040 = vadd.f32 %v969, %v1039
        %v1041 = vpop.f32.mrf.mxu0
        %1042 = vdwg.mxu0
        %1043 = vst.msk [vmem:[#allocation2] sm:$0xff] %vm300, %v1040
        %v1044 = vld [vmem:[#allocation2] sm:$0x1]
        %v1046 = vsel %vm817, 0.0, 0
        %1048 = vmatprep.subr.mxu0 0.0
        %1049 = vmatpush1.msra.mxu0 0.0
        %1050 = vmatprep.subr.mxu0 0.0
        %1051 = vmatpush1.msra.mxu0 0.0
        %1052 = vmatprep.subr.mxu0 0.0
        %1053 = vmatpush1.msra.mxu0 0.0
        %1054 = vmatprep.subr.mxu0 0.0
        %1055 = vmatpush1.msra.mxu0 0.0
        %1056 = vmatprep.subr.mxu0 0.0
        %1057 = vmatpush1.msra.mxu0 0.0
        %1058 = vmatprep.subr.mxu0 0.0
        %1059 = vmatpush1.msra.mxu0 0.0
        %1060 = vmatprep.subr.mxu0 0.0
        %1061 = vmatpush1.msra.mxu0 0.0
        %1062 = vmatprep.subr.mxu0 0.0
        %1063 = vmatpush1.msra.mxu0 0.0
        %1064 = vmatprep.subr.mxu0 0.0
        %1065 = vmatpush1.msra.mxu0 0.0
        %1066 = vmatprep.subr.mxu0 0.0
        %1067 = vmatpush1.msra.mxu0 0.0
        %1068 = vmatprep.subr.mxu0 0.0
        %1069 = vmatpush1.msra.mxu0 0.0
        %1070 = vmatprep.subr.mxu0 0.0
        %1071 = vmatpush1.msra.mxu0 0.0
        %1072 = vmatprep.subr.mxu0 0.0
        %1073 = vmatpush1.msra.mxu0 0.0
        %1074 = vmatprep.subr.mxu0 0.0
        %1075 = vmatpush1.msra.mxu0 0.0
        %1076 = vmatprep.subr.mxu0 0.0
        %1077 = vmatpush1.msra.mxu0 %v962
        %1078 = vmatprep.subr.mxu0 0.0
        %1079 = vmatpush1.msra.mxu0 %v961
        %1080 = vmatprep.subr.mxu0 0.0
        %1081 = vmatpush2.msra.mxu0 0.0
        %1082 = vmatprep.subr.mxu0 0.0
        %1083 = vmatpush2.msra.mxu0 0.0
        %1084 = vmatprep.subr.mxu0 0.0
        %1085 = vmatpush2.msra.mxu0 0.0
        %1086 = vmatprep.subr.mxu0 0.0
        %1087 = vmatpush2.msra.mxu0 0.0
        %1088 = vmatprep.subr.mxu0 0.0
        %1089 = vmatpush2.msra.mxu0 0.0
        %1090 = vmatprep.subr.mxu0 0.0
        %1091 = vmatpush2.msra.mxu0 0.0
        %1092 = vmatprep.subr.mxu0 0.0
        %1093 = vmatpush2.msra.mxu0 0.0
        %1094 = vmatprep.subr.mxu0 0.0
        %1095 = vmatpush2.msra.mxu0 0.0
        %1096 = vmatprep.subr.mxu0 0.0
        %1097 = vmatpush2.msra.mxu0 0.0
        %1098 = vmatprep.subr.mxu0 0.0
        %1099 = vmatpush2.msra.mxu0 0.0
        %1100 = vmatprep.subr.mxu0 0.0
        %1101 = vmatpush2.msra.mxu0 0.0
        %1102 = vmatprep.subr.mxu0 0.0
        %1103 = vmatpush2.msra.mxu0 0.0
        %1104 = vmatprep.subr.mxu0 0.0
        %1105 = vmatpush2.msra.mxu0 0.0
        %1106 = vmatprep.subr.mxu0 0.0
        %1107 = vmatpush2.msra.mxu0 0.0
        %1108 = vmatprep.subr.mxu0 0.0
        %1109 = vmatpush2.msra.mxu0 0.0
        %1110 = vmatprep.subr.mxu0 0.0
        %1111 = vmatpush2.msra.mxu0 0.0
        %1112 = vmatprep.mubr.f32.mxu0 0.0
        %1113 = vmatmul.mubr.f32.gmra.mxu0 %v1046
        %v1114 = vpop.f32.mrf.mxu0
        %v1115 = vadd.f32 0.0, %v1114
        %v1116 = vpop.f32.mrf.mxu0
        %1117 = vdwg.mxu0
        %v1118 = vadd.f32 %v1044, %v1115
        %v1119 = vxor.u32 %v1118, 2147483648
        %v1120 = vmul.f32 %v1119, 1.442695
        %v1121 = vpow.pop %v1120
        %v1122 = vadd.f32 %v1121, 1.0
        %v1123 = vrcp.pop %v1122
        %v1124 = vmul.f32 1.0, %v1123
        %v1125 = vtanh.pop %v1118
        %v1126 = vmul.f32 %v1124, 0.0
        %1128 = vrot.lane.b32.xlu0 %v1125, 80
        %v1129 = vpop.permute.xlu0 %1128
        %v1131 = vmul.f32 %v1124, %v1129
        %1133 = vrot.lane.b32.xlu0 %v1131, 16
        %v1134 = vpop.permute.xlu0 %1133
        %v1136 = vadd.f32 %v1126, %v1134
        %v1137 = vtanh.pop %v1136
        %1139 = vrot.lane.b32.xlu0 %v1137, 16
        %v1140 = vpop.permute.xlu0 %1139
        %v1142 = vmul.f32 %v1124, %v1140
        %1144 = vrot.lane.b32.xlu0 %v1142, 96
        %v1145 = vpop.permute.xlu0 %1144
        %vm1147 = vcmask 122880
        %1148 = vst.msk [vmem:[#allocation3] sm:$0x1] %vm1147, %v1145
        %v1149 = vld [vmem:[#allocation2 + $0x1] sm:$0x1]
        %v1150 = vsel %vm817, %v1145, 0
        %1152 = vmatprep.subr.mxu0 0.0
        %1153 = vmatpush1.msra.mxu0 0.0
        %1154 = vmatprep.subr.mxu0 0.0
        %1155 = vmatpush1.msra.mxu0 0.0
        %1156 = vmatprep.subr.mxu0 0.0
        %1157 = vmatpush1.msra.mxu0 0.0
        %1158 = vmatprep.subr.mxu0 0.0
        %1159 = vmatpush1.msra.mxu0 0.0
        %1160 = vmatprep.subr.mxu0 0.0
        %1161 = vmatpush1.msra.mxu0 0.0
        %1162 = vmatprep.subr.mxu0 0.0
        %1163 = vmatpush1.msra.mxu0 0.0
        %1164 = vmatprep.subr.mxu0 0.0
        %1165 = vmatpush1.msra.mxu0 0.0
        %1166 = vmatprep.subr.mxu0 0.0
        %1167 = vmatpush1.msra.mxu0 0.0
        %1168 = vmatprep.subr.mxu0 0.0
        %1169 = vmatpush1.msra.mxu0 0.0
        %1170 = vmatprep.subr.mxu0 0.0
        %1171 = vmatpush1.msra.mxu0 0.0
        %1172 = vmatprep.subr.mxu0 0.0
        %1173 = vmatpush1.msra.mxu0 0.0
        %1174 = vmatprep.subr.mxu0 0.0
        %1175 = vmatpush1.msra.mxu0 0.0
        %1176 = vmatprep.subr.mxu0 0.0
        %1177 = vmatpush1.msra.mxu0 0.0
        %1178 = vmatprep.subr.mxu0 0.0
        %1179 = vmatpush1.msra.mxu0 0.0
        %1180 = vmatprep.subr.mxu0 0.0
        %1181 = vmatpush1.msra.mxu0 %v962
        %1182 = vmatprep.subr.mxu0 0.0
        %1183 = vmatpush1.msra.mxu0 %v961
        %1184 = vmatprep.subr.mxu0 0.0
        %1185 = vmatpush2.msra.mxu0 0.0
        %1186 = vmatprep.subr.mxu0 0.0
        %1187 = vmatpush2.msra.mxu0 0.0
        %1188 = vmatprep.subr.mxu0 0.0
        %1189 = vmatpush2.msra.mxu0 0.0
        %1190 = vmatprep.subr.mxu0 0.0
        %1191 = vmatpush2.msra.mxu0 0.0
        %1192 = vmatprep.subr.mxu0 0.0
        %1193 = vmatpush2.msra.mxu0 0.0
        %1194 = vmatprep.subr.mxu0 0.0
        %1195 = vmatpush2.msra.mxu0 0.0
        %1196 = vmatprep.subr.mxu0 0.0
        %1197 = vmatpush2.msra.mxu0 0.0
        %1198 = vmatprep.subr.mxu0 0.0
        %1199 = vmatpush2.msra.mxu0 0.0
        %1200 = vmatprep.subr.mxu0 0.0
        %1201 = vmatpush2.msra.mxu0 0.0
        %1202 = vmatprep.subr.mxu0 0.0
        %1203 = vmatpush2.msra.mxu0 0.0
        %1204 = vmatprep.subr.mxu0 0.0
        %1205 = vmatpush2.msra.mxu0 0.0
        %1206 = vmatprep.subr.mxu0 0.0
        %1207 = vmatpush2.msra.mxu0 0.0
        %1208 = vmatprep.subr.mxu0 0.0
        %1209 = vmatpush2.msra.mxu0 0.0
        %1210 = vmatprep.subr.mxu0 0.0
        %1211 = vmatpush2.msra.mxu0 0.0
        %1212 = vmatprep.subr.mxu0 0.0
        %1213 = vmatpush2.msra.mxu0 0.0
        %1214 = vmatprep.subr.mxu0 0.0
        %1215 = vmatpush2.msra.mxu0 0.0
        %1216 = vmatprep.mubr.f32.mxu0 0.0
        %1217 = vmatmul.mubr.f32.gmra.mxu0 %v1150
        %v1218 = vpop.f32.mrf.mxu0
        %v1219 = vadd.f32 0.0, %v1218
        %v1220 = vpop.f32.mrf.mxu0
        %1221 = vdwg.mxu0
        %v1222 = vadd.f32 %v1149, %v1219
        %v1223 = vxor.u32 %v1222, 2147483648
        %v1224 = vmul.f32 %v1223, 1.442695
        %v1225 = vpow.pop %v1224
        %v1226 = vadd.f32 %v1225, 1.0
        %v1227 = vrcp.pop %v1226
        %v1228 = vmul.f32 1.0, %v1227
        %v1229 = vtanh.pop %v1222
        %v1230 = vmul.f32 %v1228, %v1136
        %1232 = vrot.lane.b32.xlu0 %v1229, 80
        %v1233 = vpop.permute.xlu0 %1232
        %v1235 = vmul.f32 %v1228, %v1233
        %1237 = vrot.lane.b32.xlu0 %v1235, 16
        %v1238 = vpop.permute.xlu0 %1237
        %v1240 = vadd.f32 %v1230, %v1238
        %v1241 = vtanh.pop %v1240
        %1243 = vrot.lane.b32.xlu0 %v1241, 16
        %v1244 = vpop.permute.xlu0 %1243
        %v1246 = vmul.f32 %v1228, %v1244
        %1248 = vrot.lane.b32.xlu0 %v1246, 96
        %v1249 = vpop.permute.xlu0 %1248
        %1251 = vst.msk [vmem:[#allocation3 + $0x1] sm:$0x1] %vm1147, %v1249
        %v1252 = vld [vmem:[#allocation2 + $0x2] sm:$0x1]
        %v1253 = vsel %vm817, %v1249, 0
        %1255 = vmatprep.subr.mxu0 0.0
        %1256 = vmatpush1.msra.mxu0 0.0
        %1257 = vmatprep.subr.mxu0 0.0
        %1258 = vmatpush1.msra.mxu0 0.0
        %1259 = vmatprep.subr.mxu0 0.0
        %1260 = vmatpush1.msra.mxu0 0.0
        %1261 = vmatprep.subr.mxu0 0.0
        %1262 = vmatpush1.msra.mxu0 0.0
        %1263 = vmatprep.subr.mxu0 0.0
        %1264 = vmatpush1.msra.mxu0 0.0
        %1265 = vmatprep.subr.mxu0 0.0
        %1266 = vmatpush1.msra.mxu0 0.0
        %1267 = vmatprep.subr.mxu0 0.0
        %1268 = vmatpush1.msra.mxu0 0.0
        %1269 = vmatprep.subr.mxu0 0.0
        %1270 = vmatpush1.msra.mxu0 0.0
        %1271 = vmatprep.subr.mxu0 0.0
        %1272 = vmatpush1.msra.mxu0 0.0
        %1273 = vmatprep.subr.mxu0 0.0
        %1274 = vmatpush1.msra.mxu0 0.0
        %1275 = vmatprep.subr.mxu0 0.0
        %1276 = vmatpush1.msra.mxu0 0.0
        %1277 = vmatprep.subr.mxu0 0.0
        %1278 = vmatpush1.msra.mxu0 0.0
        %1279 = vmatprep.subr.mxu0 0.0
        %1280 = vmatpush1.msra.mxu0 0.0
        %1281 = vmatprep.subr.mxu0 0.0
        %1282 = vmatpush1.msra.mxu0 0.0
        %1283 = vmatprep.subr.mxu0 0.0
        %1284 = vmatpush1.msra.mxu0 %v962
        %1285 = vmatprep.subr.mxu0 0.0
        %1286 = vmatpush1.msra.mxu0 %v961
        %1287 = vmatprep.subr.mxu0 0.0
        %1288 = vmatpush2.msra.mxu0 0.0
        %1289 = vmatprep.subr.mxu0 0.0
        %1290 = vmatpush2.msra.mxu0 0.0
        %1291 = vmatprep.subr.mxu0 0.0
        %1292 = vmatpush2.msra.mxu0 0.0
        %1293 = vmatprep.subr.mxu0 0.0
        %1294 = vmatpush2.msra.mxu0 0.0
        %1295 = vmatprep.subr.mxu0 0.0
        %1296 = vmatpush2.msra.mxu0 0.0
        %1297 = vmatprep.subr.mxu0 0.0
        %1298 = vmatpush2.msra.mxu0 0.0
        %1299 = vmatprep.subr.mxu0 0.0
        %1300 = vmatpush2.msra.mxu0 0.0
        %1301 = vmatprep.subr.mxu0 0.0
        %1302 = vmatpush2.msra.mxu0 0.0
        %1303 = vmatprep.subr.mxu0 0.0
        %1304 = vmatpush2.msra.mxu0 0.0
        %1305 = vmatprep.subr.mxu0 0.0
        %1306 = vmatpush2.msra.mxu0 0.0
        %1307 = vmatprep.subr.mxu0 0.0
        %1308 = vmatpush2.msra.mxu0 0.0
        %1309 = vmatprep.subr.mxu0 0.0
        %1310 = vmatpush2.msra.mxu0 0.0
        %1311 = vmatprep.subr.mxu0 0.0
        %1312 = vmatpush2.msra.mxu0 0.0
        %1313 = vmatprep.subr.mxu0 0.0
        %1314 = vmatpush2.msra.mxu0 0.0
        %1315 = vmatprep.subr.mxu0 0.0
        %1316 = vmatpush2.msra.mxu0 0.0
        %1317 = vmatprep.subr.mxu0 0.0
        %1318 = vmatpush2.msra.mxu0 0.0
        %1319 = vmatprep.mubr.f32.mxu0 0.0
        %1320 = vmatmul.mubr.f32.gmra.mxu0 %v1253
        %v1321 = vpop.f32.mrf.mxu0
        %v1322 = vadd.f32 0.0, %v1321
        %v1323 = vpop.f32.mrf.mxu0
        %1324 = vdwg.mxu0
        %v1325 = vadd.f32 %v1252, %v1322
        %v1326 = vxor.u32 %v1325, 2147483648
        %v1327 = vmul.f32 %v1326, 1.442695
        %v1328 = vpow.pop %v1327
        %v1329 = vadd.f32 %v1328, 1.0
        %v1330 = vrcp.pop %v1329
        %v1331 = vmul.f32 1.0, %v1330
        %v1332 = vtanh.pop %v1325
        %v1333 = vmul.f32 %v1331, %v1240
        %1335 = vrot.lane.b32.xlu0 %v1332, 80
        %v1336 = vpop.permute.xlu0 %1335
        %v1338 = vmul.f32 %v1331, %v1336
        %1340 = vrot.lane.b32.xlu0 %v1338, 16
        %v1341 = vpop.permute.xlu0 %1340
        %v1343 = vadd.f32 %v1333, %v1341
        %v1344 = vtanh.pop %v1343
        %1346 = vrot.lane.b32.xlu0 %v1344, 16
        %v1347 = vpop.permute.xlu0 %1346
        %v1349 = vmul.f32 %v1331, %v1347
        %1351 = vrot.lane.b32.xlu0 %v1349, 96
        %v1352 = vpop.permute.xlu0 %1351
        %1354 = vst.msk [vmem:[#allocation3 + $0x2] sm:$0x1] %vm1147, %v1352
        %v1355 = vld [vmem:[#allocation2 + $0x3] sm:$0x1]
        %v1356 = vsel %vm817, %v1352, 0
        %1358 = vmatprep.subr.mxu0 0.0
        %1359 = vmatpush1.msra.mxu0 0.0
        %1360 = vmatprep.subr.mxu0 0.0
        %1361 = vmatpush1.msra.mxu0 0.0
        %1362 = vmatprep.subr.mxu0 0.0
        %1363 = vmatpush1.msra.mxu0 0.0
        %1364 = vmatprep.subr.mxu0 0.0
        %1365 = vmatpush1.msra.mxu0 0.0
        %1366 = vmatprep.subr.mxu0 0.0
        %1367 = vmatpush1.msra.mxu0 0.0
        %1368 = vmatprep.subr.mxu0 0.0
        %1369 = vmatpush1.msra.mxu0 0.0
        %1370 = vmatprep.subr.mxu0 0.0
        %1371 = vmatpush1.msra.mxu0 0.0
        %1372 = vmatprep.subr.mxu0 0.0
        %1373 = vmatpush1.msra.mxu0 0.0
        %1374 = vmatprep.subr.mxu0 0.0
        %1375 = vmatpush1.msra.mxu0 0.0
        %1376 = vmatprep.subr.mxu0 0.0
        %1377 = vmatpush1.msra.mxu0 0.0
        %1378 = vmatprep.subr.mxu0 0.0
        %1379 = vmatpush1.msra.mxu0 0.0
        %1380 = vmatprep.subr.mxu0 0.0
        %1381 = vmatpush1.msra.mxu0 0.0
        %1382 = vmatprep.subr.mxu0 0.0
        %1383 = vmatpush1.msra.mxu0 0.0
        %1384 = vmatprep.subr.mxu0 0.0
        %1385 = vmatpush1.msra.mxu0 0.0
        %1386 = vmatprep.subr.mxu0 0.0
        %1387 = vmatpush1.msra.mxu0 %v962
        %1388 = vmatprep.subr.mxu0 0.0
        %1389 = vmatpush1.msra.mxu0 %v961
        %1390 = vmatprep.subr.mxu0 0.0
        %1391 = vmatpush2.msra.mxu0 0.0
        %1392 = vmatprep.subr.mxu0 0.0
        %1393 = vmatpush2.msra.mxu0 0.0
        %1394 = vmatprep.subr.mxu0 0.0
        %1395 = vmatpush2.msra.mxu0 0.0
        %1396 = vmatprep.subr.mxu0 0.0
        %1397 = vmatpush2.msra.mxu0 0.0
        %1398 = vmatprep.subr.mxu0 0.0
        %1399 = vmatpush2.msra.mxu0 0.0
        %1400 = vmatprep.subr.mxu0 0.0
        %1401 = vmatpush2.msra.mxu0 0.0
        %1402 = vmatprep.subr.mxu0 0.0
        %1403 = vmatpush2.msra.mxu0 0.0
        %1404 = vmatprep.subr.mxu0 0.0
        %1405 = vmatpush2.msra.mxu0 0.0
        %1406 = vmatprep.subr.mxu0 0.0
        %1407 = vmatpush2.msra.mxu0 0.0
        %1408 = vmatprep.subr.mxu0 0.0
        %1409 = vmatpush2.msra.mxu0 0.0
        %1410 = vmatprep.subr.mxu0 0.0
        %1411 = vmatpush2.msra.mxu0 0.0
        %1412 = vmatprep.subr.mxu0 0.0
        %1413 = vmatpush2.msra.mxu0 0.0
        %1414 = vmatprep.subr.mxu0 0.0
        %1415 = vmatpush2.msra.mxu0 0.0
        %1416 = vmatprep.subr.mxu0 0.0
        %1417 = vmatpush2.msra.mxu0 0.0
        %1418 = vmatprep.subr.mxu0 0.0
        %1419 = vmatpush2.msra.mxu0 0.0
        %1420 = vmatprep.subr.mxu0 0.0
        %1421 = vmatpush2.msra.mxu0 0.0
        %1422 = vmatprep.mubr.f32.mxu0 0.0
        %1423 = vmatmul.mubr.f32.gmra.mxu0 %v1356
        %v1424 = vpop.f32.mrf.mxu0
        %v1425 = vadd.f32 0.0, %v1424
        %v1426 = vpop.f32.mrf.mxu0
        %1427 = vdwg.mxu0
        %v1428 = vadd.f32 %v1355, %v1425
        %v1429 = vxor.u32 %v1428, 2147483648
        %v1430 = vmul.f32 %v1429, 1.442695
        %v1431 = vpow.pop %v1430
        %v1432 = vadd.f32 %v1431, 1.0
        %v1433 = vrcp.pop %v1432
        %v1434 = vmul.f32 1.0, %v1433
        %v1435 = vtanh.pop %v1428
        %v1436 = vmul.f32 %v1434, %v1343
        %1438 = vrot.lane.b32.xlu0 %v1435, 80
        %v1439 = vpop.permute.xlu0 %1438
        %v1441 = vmul.f32 %v1434, %v1439
        %1443 = vrot.lane.b32.xlu0 %v1441, 16
        %v1444 = vpop.permute.xlu0 %1443
        %v1446 = vadd.f32 %v1436, %v1444
        %v1447 = vtanh.pop %v1446
        %1449 = vrot.lane.b32.xlu0 %v1447, 16
        %v1450 = vpop.permute.xlu0 %1449
        %v1452 = vmul.f32 %v1434, %v1450
        %1454 = vrot.lane.b32.xlu0 %v1452, 96
        %v1455 = vpop.permute.xlu0 %1454
        %1457 = vst.msk [vmem:[#allocation3 + $0x3] sm:$0x1] %vm1147, %v1455
        %v1458 = vld [vmem:[#allocation2 + $0x4] sm:$0x1]
        %v1459 = vsel %vm817, %v1455, 0
        %1461 = vmatprep.subr.mxu0 0.0
        %1462 = vmatpush1.msra.mxu0 0.0
        %1463 = vmatprep.subr.mxu0 0.0
        %1464 = vmatpush1.msra.mxu0 0.0
        %1465 = vmatprep.subr.mxu0 0.0
        %1466 = vmatpush1.msra.mxu0 0.0
        %1467 = vmatprep.subr.mxu0 0.0
        %1468 = vmatpush1.msra.mxu0 0.0
        %1469 = vmatprep.subr.mxu0 0.0
        %1470 = vmatpush1.msra.mxu0 0.0
        %1471 = vmatprep.subr.mxu0 0.0
        %1472 = vmatpush1.msra.mxu0 0.0
        %1473 = vmatprep.subr.mxu0 0.0
        %1474 = vmatpush1.msra.mxu0 0.0
        %1475 = vmatprep.subr.mxu0 0.0
        %1476 = vmatpush1.msra.mxu0 0.0
        %1477 = vmatprep.subr.mxu0 0.0
        %1478 = vmatpush1.msra.mxu0 0.0
        %1479 = vmatprep.subr.mxu0 0.0
        %1480 = vmatpush1.msra.mxu0 0.0
        %1481 = vmatprep.subr.mxu0 0.0
        %1482 = vmatpush1.msra.mxu0 0.0
        %1483 = vmatprep.subr.mxu0 0.0
        %1484 = vmatpush1.msra.mxu0 0.0
        %1485 = vmatprep.subr.mxu0 0.0
        %1486 = vmatpush1.msra.mxu0 0.0
        %1487 = vmatprep.subr.mxu0 0.0
        %1488 = vmatpush1.msra.mxu0 0.0
        %1489 = vmatprep.subr.mxu0 0.0
        %1490 = vmatpush1.msra.mxu0 %v962
        %1491 = vmatprep.subr.mxu0 0.0
        %1492 = vmatpush1.msra.mxu0 %v961
        %1493 = vmatprep.subr.mxu0 0.0
        %1494 = vmatpush2.msra.mxu0 0.0
        %1495 = vmatprep.subr.mxu0 0.0
        %1496 = vmatpush2.msra.mxu0 0.0
        %1497 = vmatprep.subr.mxu0 0.0
        %1498 = vmatpush2.msra.mxu0 0.0
        %1499 = vmatprep.subr.mxu0 0.0
        %1500 = vmatpush2.msra.mxu0 0.0
        %1501 = vmatprep.subr.mxu0 0.0
        %1502 = vmatpush2.msra.mxu0 0.0
        %1503 = vmatprep.subr.mxu0 0.0
        %1504 = vmatpush2.msra.mxu0 0.0
        %1505 = vmatprep.subr.mxu0 0.0
        %1506 = vmatpush2.msra.mxu0 0.0
        %1507 = vmatprep.subr.mxu0 0.0
        %1508 = vmatpush2.msra.mxu0 0.0
        %1509 = vmatprep.subr.mxu0 0.0
        %1510 = vmatpush2.msra.mxu0 0.0
        %1511 = vmatprep.subr.mxu0 0.0
        %1512 = vmatpush2.msra.mxu0 0.0
        %1513 = vmatprep.subr.mxu0 0.0
        %1514 = vmatpush2.msra.mxu0 0.0
        %1515 = vmatprep.subr.mxu0 0.0
        %1516 = vmatpush2.msra.mxu0 0.0
        %1517 = vmatprep.subr.mxu0 0.0
        %1518 = vmatpush2.msra.mxu0 0.0
        %1519 = vmatprep.subr.mxu0 0.0
        %1520 = vmatpush2.msra.mxu0 0.0
        %1521 = vmatprep.subr.mxu0 0.0
        %1522 = vmatpush2.msra.mxu0 0.0
        %1523 = vmatprep.subr.mxu0 0.0
        %1524 = vmatpush2.msra.mxu0 0.0
        %1525 = vmatprep.mubr.f32.mxu0 0.0
        %1526 = vmatmul.mubr.f32.gmra.mxu0 %v1459
        %v1527 = vpop.f32.mrf.mxu0
        %v1528 = vadd.f32 0.0, %v1527
        %v1529 = vpop.f32.mrf.mxu0
        %1530 = vdwg.mxu0
        %v1531 = vadd.f32 %v1458, %v1528
        %v1532 = vxor.u32 %v1531, 2147483648
        %v1533 = vmul.f32 %v1532, 1.442695
        %v1534 = vpow.pop %v1533
        %v1535 = vadd.f32 %v1534, 1.0
        %v1536 = vrcp.pop %v1535
        %v1537 = vmul.f32 1.0, %v1536
        %v1538 = vtanh.pop %v1531
        %v1539 = vmul.f32 %v1537, %v1446
        %1541 = vrot.lane.b32.xlu0 %v1538, 80
        %v1542 = vpop.permute.xlu0 %1541
        %v1544 = vmul.f32 %v1537, %v1542
        %1546 = vrot.lane.b32.xlu0 %v1544, 16
        %v1547 = vpop.permute.xlu0 %1546
        %v1549 = vadd.f32 %v1539, %v1547
        %v1550 = vtanh.pop %v1549
        %1552 = vrot.lane.b32.xlu0 %v1550, 16
        %v1553 = vpop.permute.xlu0 %1552
        %v1555 = vmul.f32 %v1537, %v1553
        %1557 = vrot.lane.b32.xlu0 %v1555, 96
        %v1558 = vpop.permute.xlu0 %1557
        %1560 = vst.msk [vmem:[#allocation3 + $0x4] sm:$0x1] %vm1147, %v1558
        %v1561 = vld [vmem:[#allocation2 + $0x5] sm:$0x1]
        %v1562 = vsel %vm817, %v1558, 0
        %1564 = vmatprep.subr.mxu0 0.0
        %1565 = vmatpush1.msra.mxu0 0.0
        %1566 = vmatprep.subr.mxu0 0.0
        %1567 = vmatpush1.msra.mxu0 0.0
        %1568 = vmatprep.subr.mxu0 0.0
        %1569 = vmatpush1.msra.mxu0 0.0
        %1570 = vmatprep.subr.mxu0 0.0
        %1571 = vmatpush1.msra.mxu0 0.0
        %1572 = vmatprep.subr.mxu0 0.0
        %1573 = vmatpush1.msra.mxu0 0.0
        %1574 = vmatprep.subr.mxu0 0.0
        %1575 = vmatpush1.msra.mxu0 0.0
        %1576 = vmatprep.subr.mxu0 0.0
        %1577 = vmatpush1.msra.mxu0 0.0
        %1578 = vmatprep.subr.mxu0 0.0
        %1579 = vmatpush1.msra.mxu0 0.0
        %1580 = vmatprep.subr.mxu0 0.0
        %1581 = vmatpush1.msra.mxu0 0.0
        %1582 = vmatprep.subr.mxu0 0.0
        %1583 = vmatpush1.msra.mxu0 0.0
        %1584 = vmatprep.subr.mxu0 0.0
        %1585 = vmatpush1.msra.mxu0 0.0
        %1586 = vmatprep.subr.mxu0 0.0
        %1587 = vmatpush1.msra.mxu0 0.0
        %1588 = vmatprep.subr.mxu0 0.0
        %1589 = vmatpush1.msra.mxu0 0.0
        %1590 = vmatprep.subr.mxu0 0.0
        %1591 = vmatpush1.msra.mxu0 0.0
        %1592 = vmatprep.subr.mxu0 0.0
        %1593 = vmatpush1.msra.mxu0 %v962
        %1594 = vmatprep.subr.mxu0 0.0
        %1595 = vmatpush1.msra.mxu0 %v961
        %1596 = vmatprep.subr.mxu0 0.0
        %1597 = vmatpush2.msra.mxu0 0.0
        %1598 = vmatprep.subr.mxu0 0.0
        %1599 = vmatpush2.msra.mxu0 0.0
        %1600 = vmatprep.subr.mxu0 0.0
        %1601 = vmatpush2.msra.mxu0 0.0
        %1602 = vmatprep.subr.mxu0 0.0
        %1603 = vmatpush2.msra.mxu0 0.0
        %1604 = vmatprep.subr.mxu0 0.0
        %1605 = vmatpush2.msra.mxu0 0.0
        %1606 = vmatprep.subr.mxu0 0.0
        %1607 = vmatpush2.msra.mxu0 0.0
        %1608 = vmatprep.subr.mxu0 0.0
        %1609 = vmatpush2.msra.mxu0 0.0
        %1610 = vmatprep.subr.mxu0 0.0
        %1611 = vmatpush2.msra.mxu0 0.0
        %1612 = vmatprep.subr.mxu0 0.0
        %1613 = vmatpush2.msra.mxu0 0.0
        %1614 = vmatprep.subr.mxu0 0.0
        %1615 = vmatpush2.msra.mxu0 0.0
        %1616 = vmatprep.subr.mxu0 0.0
        %1617 = vmatpush2.msra.mxu0 0.0
        %1618 = vmatprep.subr.mxu0 0.0
        %1619 = vmatpush2.msra.mxu0 0.0
        %1620 = vmatprep.subr.mxu0 0.0
        %1621 = vmatpush2.msra.mxu0 0.0
        %1622 = vmatprep.subr.mxu0 0.0
        %1623 = vmatpush2.msra.mxu0 0.0
        %1624 = vmatprep.subr.mxu0 0.0
        %1625 = vmatpush2.msra.mxu0 0.0
        %1626 = vmatprep.subr.mxu0 0.0
        %1627 = vmatpush2.msra.mxu0 0.0
        %1628 = vmatprep.mubr.f32.mxu0 0.0
        %1629 = vmatmul.mubr.f32.gmra.mxu0 %v1562
        %v1630 = vpop.f32.mrf.mxu0
        %v1631 = vadd.f32 0.0, %v1630
        %v1632 = vpop.f32.mrf.mxu0
        %1633 = vdwg.mxu0
        %v1634 = vadd.f32 %v1561, %v1631
        %v1635 = vxor.u32 %v1634, 2147483648
        %v1636 = vmul.f32 %v1635, 1.442695
        %v1637 = vpow.pop %v1636
        %v1638 = vadd.f32 %v1637, 1.0
        %v1639 = vrcp.pop %v1638
        %v1640 = vmul.f32 1.0, %v1639
        %v1641 = vtanh.pop %v1634
        %v1642 = vmul.f32 %v1640, %v1549
        %1644 = vrot.lane.b32.xlu0 %v1641, 80
        %v1645 = vpop.permute.xlu0 %1644
        %v1647 = vmul.f32 %v1640, %v1645
        %1649 = vrot.lane.b32.xlu0 %v1647, 16
        %v1650 = vpop.permute.xlu0 %1649
        %v1652 = vadd.f32 %v1642, %v1650
        %v1653 = vtanh.pop %v1652
        %1655 = vrot.lane.b32.xlu0 %v1653, 16
        %v1656 = vpop.permute.xlu0 %1655
        %v1658 = vmul.f32 %v1640, %v1656
        %1660 = vrot.lane.b32.xlu0 %v1658, 96
        %v1661 = vpop.permute.xlu0 %1660
        %1663 = vst.msk [vmem:[#allocation3 + $0x5] sm:$0x1] %vm1147, %v1661
        %v1664 = vld [vmem:[#allocation2 + $0x6] sm:$0x1]
        %v1665 = vsel %vm817, %v1661, 0
        %1667 = vmatprep.subr.mxu0 0.0
        %1668 = vmatpush1.msra.mxu0 0.0
        %1669 = vmatprep.subr.mxu0 0.0
        %1670 = vmatpush1.msra.mxu0 0.0
        %1671 = vmatprep.subr.mxu0 0.0
        %1672 = vmatpush1.msra.mxu0 0.0
        %1673 = vmatprep.subr.mxu0 0.0
        %1674 = vmatpush1.msra.mxu0 0.0
        %1675 = vmatprep.subr.mxu0 0.0
        %1676 = vmatpush1.msra.mxu0 0.0
        %1677 = vmatprep.subr.mxu0 0.0
        %1678 = vmatpush1.msra.mxu0 0.0
        %1679 = vmatprep.subr.mxu0 0.0
        %1680 = vmatpush1.msra.mxu0 0.0
        %1681 = vmatprep.subr.mxu0 0.0
        %1682 = vmatpush1.msra.mxu0 0.0
        %1683 = vmatprep.subr.mxu0 0.0
        %1684 = vmatpush1.msra.mxu0 0.0
        %1685 = vmatprep.subr.mxu0 0.0
        %1686 = vmatpush1.msra.mxu0 0.0
        %1687 = vmatprep.subr.mxu0 0.0
        %1688 = vmatpush1.msra.mxu0 0.0
        %1689 = vmatprep.subr.mxu0 0.0
        %1690 = vmatpush1.msra.mxu0 0.0
        %1691 = vmatprep.subr.mxu0 0.0
        %1692 = vmatpush1.msra.mxu0 0.0
        %1693 = vmatprep.subr.mxu0 0.0
        %1694 = vmatpush1.msra.mxu0 0.0
        %1695 = vmatprep.subr.mxu0 0.0
        %1696 = vmatpush1.msra.mxu0 %v962
        %1697 = vmatprep.subr.mxu0 0.0
        %1698 = vmatpush1.msra.mxu0 %v961
        %1699 = vmatprep.subr.mxu0 0.0
        %1700 = vmatpush2.msra.mxu0 0.0
        %1701 = vmatprep.subr.mxu0 0.0
        %1702 = vmatpush2.msra.mxu0 0.0
        %1703 = vmatprep.subr.mxu0 0.0
        %1704 = vmatpush2.msra.mxu0 0.0
        %1705 = vmatprep.subr.mxu0 0.0
        %1706 = vmatpush2.msra.mxu0 0.0
        %1707 = vmatprep.subr.mxu0 0.0
        %1708 = vmatpush2.msra.mxu0 0.0
        %1709 = vmatprep.subr.mxu0 0.0
        %1710 = vmatpush2.msra.mxu0 0.0
        %1711 = vmatprep.subr.mxu0 0.0
        %1712 = vmatpush2.msra.mxu0 0.0
        %1713 = vmatprep.subr.mxu0 0.0
        %1714 = vmatpush2.msra.mxu0 0.0
        %1715 = vmatprep.subr.mxu0 0.0
        %1716 = vmatpush2.msra.mxu0 0.0
        %1717 = vmatprep.subr.mxu0 0.0
        %1718 = vmatpush2.msra.mxu0 0.0
        %1719 = vmatprep.subr.mxu0 0.0
        %1720 = vmatpush2.msra.mxu0 0.0
        %1721 = vmatprep.subr.mxu0 0.0
        %1722 = vmatpush2.msra.mxu0 0.0
        %1723 = vmatprep.subr.mxu0 0.0
        %1724 = vmatpush2.msra.mxu0 0.0
        %1725 = vmatprep.subr.mxu0 0.0
        %1726 = vmatpush2.msra.mxu0 0.0
        %1727 = vmatprep.subr.mxu0 0.0
        %1728 = vmatpush2.msra.mxu0 0.0
        %1729 = vmatprep.subr.mxu0 0.0
        %1730 = vmatpush2.msra.mxu0 0.0
        %1731 = vmatprep.mubr.f32.mxu0 0.0
        %1732 = vmatmul.mubr.f32.gmra.mxu0 %v1665
        %v1733 = vpop.f32.mrf.mxu0
        %v1734 = vadd.f32 0.0, %v1733
        %v1735 = vpop.f32.mrf.mxu0
        %1736 = vdwg.mxu0
        %v1737 = vadd.f32 %v1664, %v1734
        %v1738 = vxor.u32 %v1737, 2147483648
        %v1739 = vmul.f32 %v1738, 1.442695
        %v1740 = vpow.pop %v1739
        %v1741 = vadd.f32 %v1740, 1.0
        %v1742 = vrcp.pop %v1741
        %v1743 = vmul.f32 1.0, %v1742
        %v1744 = vtanh.pop %v1737
        %v1745 = vmul.f32 %v1743, %v1652
        %1747 = vrot.lane.b32.xlu0 %v1744, 80
        %v1748 = vpop.permute.xlu0 %1747
        %v1750 = vmul.f32 %v1743, %v1748
        %1752 = vrot.lane.b32.xlu0 %v1750, 16
        %v1753 = vpop.permute.xlu0 %1752
        %v1755 = vadd.f32 %v1745, %v1753
        %v1756 = vtanh.pop %v1755
        %1758 = vrot.lane.b32.xlu0 %v1756, 16
        %v1759 = vpop.permute.xlu0 %1758
        %v1761 = vmul.f32 %v1743, %v1759
        %1763 = vrot.lane.b32.xlu0 %v1761, 96
        %v1764 = vpop.permute.xlu0 %1763
        %1766 = vst.msk [vmem:[#allocation3 + $0x6] sm:$0x1] %vm1147, %v1764
        %v1767 = vld [vmem:[#allocation2 + $0x7] sm:$0x1]
        %v1768 = vsel %vm817, %v1764, 0
        %1770 = vmatprep.subr.mxu0 0.0
        %1771 = vmatpush1.msra.mxu0 0.0
        %1772 = vmatprep.subr.mxu0 0.0
        %1773 = vmatpush1.msra.mxu0 0.0
        %1774 = vmatprep.subr.mxu0 0.0
        %1775 = vmatpush1.msra.mxu0 0.0
        %1776 = vmatprep.subr.mxu0 0.0
        %1777 = vmatpush1.msra.mxu0 0.0
        %1778 = vmatprep.subr.mxu0 0.0
        %1779 = vmatpush1.msra.mxu0 0.0
        %1780 = vmatprep.subr.mxu0 0.0
        %1781 = vmatpush1.msra.mxu0 0.0
        %1782 = vmatprep.subr.mxu0 0.0
        %1783 = vmatpush1.msra.mxu0 0.0
        %1784 = vmatprep.subr.mxu0 0.0
        %1785 = vmatpush1.msra.mxu0 0.0
        %1786 = vmatprep.subr.mxu0 0.0
        %1787 = vmatpush1.msra.mxu0 0.0
        %1788 = vmatprep.subr.mxu0 0.0
        %1789 = vmatpush1.msra.mxu0 0.0
        %1790 = vmatprep.subr.mxu0 0.0
        %1791 = vmatpush1.msra.mxu0 0.0
        %1792 = vmatprep.subr.mxu0 0.0
        %1793 = vmatpush1.msra.mxu0 0.0
        %1794 = vmatprep.subr.mxu0 0.0
        %1795 = vmatpush1.msra.mxu0 0.0
        %1796 = vmatprep.subr.mxu0 0.0
        %1797 = vmatpush1.msra.mxu0 0.0
        %1798 = vmatprep.subr.mxu0 0.0
        %1799 = vmatpush1.msra.mxu0 %v962
        %1800 = vmatprep.subr.mxu0 0.0
        %1801 = vmatpush1.msra.mxu0 %v961
        %1802 = vmatprep.subr.mxu0 0.0
        %1803 = vmatpush2.msra.mxu0 0.0
        %1804 = vmatprep.subr.mxu0 0.0
        %1805 = vmatpush2.msra.mxu0 0.0
        %1806 = vmatprep.subr.mxu0 0.0
        %1807 = vmatpush2.msra.mxu0 0.0
        %1808 = vmatprep.subr.mxu0 0.0
        %1809 = vmatpush2.msra.mxu0 0.0
        %1810 = vmatprep.subr.mxu0 0.0
        %1811 = vmatpush2.msra.mxu0 0.0
        %1812 = vmatprep.subr.mxu0 0.0
        %1813 = vmatpush2.msra.mxu0 0.0
        %1814 = vmatprep.subr.mxu0 0.0
        %1815 = vmatpush2.msra.mxu0 0.0
        %1816 = vmatprep.subr.mxu0 0.0
        %1817 = vmatpush2.msra.mxu0 0.0
        %1818 = vmatprep.subr.mxu0 0.0
        %1819 = vmatpush2.msra.mxu0 0.0
        %1820 = vmatprep.subr.mxu0 0.0
        %1821 = vmatpush2.msra.mxu0 0.0
        %1822 = vmatprep.subr.mxu0 0.0
        %1823 = vmatpush2.msra.mxu0 0.0
        %1824 = vmatprep.subr.mxu0 0.0
        %1825 = vmatpush2.msra.mxu0 0.0
        %1826 = vmatprep.subr.mxu0 0.0
        %1827 = vmatpush2.msra.mxu0 0.0
        %1828 = vmatprep.subr.mxu0 0.0
        %1829 = vmatpush2.msra.mxu0 0.0
        %1830 = vmatprep.subr.mxu0 0.0
        %1831 = vmatpush2.msra.mxu0 0.0
        %1832 = vmatprep.subr.mxu0 0.0
        %1833 = vmatpush2.msra.mxu0 0.0
        %1834 = vmatprep.mubr.f32.mxu0 0.0
        %1835 = vmatmul.mubr.f32.gmra.mxu0 %v1768
        %v1836 = vpop.f32.mrf.mxu0
        %v1837 = vadd.f32 0.0, %v1836
        %v1838 = vpop.f32.mrf.mxu0
        %1839 = vdwg.mxu0
        %v1840 = vadd.f32 %v1767, %v1837
        %v1841 = vxor.u32 %v1840, 2147483648
        %v1842 = vmul.f32 %v1841, 1.442695
        %v1843 = vpow.pop %v1842
        %v1844 = vadd.f32 %v1843, 1.0
        %v1845 = vrcp.pop %v1844
        %v1846 = vmul.f32 1.0, %v1845
        %v1847 = vtanh.pop %v1840
        %v1848 = vmul.f32 %v1846, %v1755
        %1850 = vrot.lane.b32.xlu0 %v1847, 80
        %v1851 = vpop.permute.xlu0 %1850
        %v1853 = vmul.f32 %v1846, %v1851
        %1855 = vrot.lane.b32.xlu0 %v1853, 16
        %v1856 = vpop.permute.xlu0 %1855
        %v1858 = vadd.f32 %v1848, %v1856
        %v1859 = vtanh.pop %v1858
        %1861 = vrot.lane.b32.xlu0 %v1859, 16
        %v1862 = vpop.permute.xlu0 %1861
        %v1864 = vmul.f32 %v1846, %v1862
        %1866 = vrot.lane.b32.xlu0 %v1864, 96
        %v1867 = vpop.permute.xlu0 %1866
        %1869 = vst.msk [vmem:[#allocation3 + $0x7] sm:$0x1] %vm1147, %v1867
        %v1870 = vld [vmem:[#allocation4 + $0x180] sm:$0xff]
        %v1871 = vld [vmem:[#allocation4 + $0x188] sm:$0xff]
        %v1872 = vld [vmem:[#allocation4 + $0x170] sm:$0xff]
        %v1873 = vld [vmem:[#allocation4 + $0x178] sm:$0xff]
        %v1874 = vld [vmem:[#allocation4 + $0x190] sm:$0x1]
        %v1875 = vlaneseq
        %v1876 = vshrl.u32 %v1875, 7
        %v1877 = vsub.s32 0, %v1876
        %v1878 = vrot.slane %v1874, %v1877
        %1879 = vmatprep.subr.mxu0 0.0
        %1880 = vmatpush1.msra.mxu0 0.0
        %1881 = vmatprep.subr.mxu0 0.0
        %1882 = vmatpush1.msra.mxu0 0.0
        %1883 = vmatprep.subr.mxu0 0.0
        %1884 = vmatpush1.msra.mxu0 0.0
        %1885 = vmatprep.subr.mxu0 0.0
        %1886 = vmatpush1.msra.mxu0 0.0
        %1887 = vmatprep.subr.mxu0 0.0
        %1888 = vmatpush1.msra.mxu0 0.0
        %1889 = vmatprep.subr.mxu0 0.0
        %1890 = vmatpush1.msra.mxu0 0.0
        %1891 = vmatprep.subr.mxu0 0.0
        %1892 = vmatpush1.msra.mxu0 0.0
        %1893 = vmatprep.subr.mxu0 0.0
        %1894 = vmatpush1.msra.mxu0 0.0
        %1895 = vmatprep.subr.mxu0 0.0
        %1896 = vmatpush1.msra.mxu0 0.0
        %1897 = vmatprep.subr.mxu0 0.0
        %1898 = vmatpush1.msra.mxu0 0.0
        %1899 = vmatprep.subr.mxu0 0.0
        %1900 = vmatpush1.msra.mxu0 0.0
        %1901 = vmatprep.subr.mxu0 0.0
        %1902 = vmatpush1.msra.mxu0 0.0
        %1903 = vmatprep.subr.mxu0 0.0
        %1904 = vmatpush1.msra.mxu0 0.0
        %1905 = vmatprep.subr.mxu0 0.0
        %1906 = vmatpush1.msra.mxu0 0.0
        %1907 = vmatprep.subr.mxu0 0.0
        %1908 = vmatpush1.msra.mxu0 %v1873
        %1909 = vmatprep.subr.mxu0 0.0
        %1910 = vmatpush1.msra.mxu0 %v1872
        %1911 = vmatprep.subr.mxu0 0.0
        %1912 = vmatpush2.msra.mxu0 0.0
        %1913 = vmatprep.subr.mxu0 0.0
        %1914 = vmatpush2.msra.mxu0 0.0
        %1915 = vmatprep.subr.mxu0 0.0
        %1916 = vmatpush2.msra.mxu0 0.0
        %1917 = vmatprep.subr.mxu0 0.0
        %1918 = vmatpush2.msra.mxu0 0.0
        %1919 = vmatprep.subr.mxu0 0.0
        %1920 = vmatpush2.msra.mxu0 0.0
        %1921 = vmatprep.subr.mxu0 0.0
        %1922 = vmatpush2.msra.mxu0 0.0
        %1923 = vmatprep.subr.mxu0 0.0
        %1924 = vmatpush2.msra.mxu0 0.0
        %1925 = vmatprep.subr.mxu0 0.0
        %1926 = vmatpush2.msra.mxu0 0.0
        %1927 = vmatprep.subr.mxu0 0.0
        %1928 = vmatpush2.msra.mxu0 0.0
        %1929 = vmatprep.subr.mxu0 0.0
        %1930 = vmatpush2.msra.mxu0 0.0
        %1931 = vmatprep.subr.mxu0 0.0
        %1932 = vmatpush2.msra.mxu0 0.0
        %1933 = vmatprep.subr.mxu0 0.0
        %1934 = vmatpush2.msra.mxu0 0.0
        %1935 = vmatprep.subr.mxu0 0.0
        %1936 = vmatpush2.msra.mxu0 0.0
        %1937 = vmatprep.subr.mxu0 0.0
        %1938 = vmatpush2.msra.mxu0 0.0
        %1939 = vmatprep.subr.mxu0 0.0
        %1940 = vmatpush2.msra.mxu0 0.0
        %1941 = vmatprep.subr.mxu0 0.0
        %1942 = vmatpush2.msra.mxu0 0.0
        %1943 = vmatprep.mubr.f32.mxu0 0.0
        %1944 = vmatmul.mubr.f32.gmra.mxu0 %v971
        %v1945 = vpop.f32.mrf.mxu0
        %v1946 = vadd.f32 %v1878, %v1945
        %v1947 = vpop.f32.mrf.mxu0
        %1948 = vdwg.mxu0
        %1949 = vst.msk [vmem:[#allocation2] sm:$0xff] %vm300, %v1946
        %v1950 = vld [vmem:[#allocation2 + $0x7] sm:$0x1]
        %1951 = vmatprep.subr.mxu0 0.0
        %1952 = vmatpush1.msra.mxu0 0.0
        %1953 = vmatprep.subr.mxu0 0.0
        %1954 = vmatpush1.msra.mxu0 0.0
        %1955 = vmatprep.subr.mxu0 0.0
        %1956 = vmatpush1.msra.mxu0 0.0
        %1957 = vmatprep.subr.mxu0 0.0
        %1958 = vmatpush1.msra.mxu0 0.0
        %1959 = vmatprep.subr.mxu0 0.0
        %1960 = vmatpush1.msra.mxu0 0.0
        %1961 = vmatprep.subr.mxu0 0.0
        %1962 = vmatpush1.msra.mxu0 0.0
        %1963 = vmatprep.subr.mxu0 0.0
        %1964 = vmatpush1.msra.mxu0 0.0
        %1965 = vmatprep.subr.mxu0 0.0
        %1966 = vmatpush1.msra.mxu0 0.0
        %1967 = vmatprep.subr.mxu0 0.0
        %1968 = vmatpush1.msra.mxu0 0.0
        %1969 = vmatprep.subr.mxu0 0.0
        %1970 = vmatpush1.msra.mxu0 0.0
        %1971 = vmatprep.subr.mxu0 0.0
        %1972 = vmatpush1.msra.mxu0 0.0
        %1973 = vmatprep.subr.mxu0 0.0
        %1974 = vmatpush1.msra.mxu0 0.0
        %1975 = vmatprep.subr.mxu0 0.0
        %1976 = vmatpush1.msra.mxu0 0.0
        %1977 = vmatprep.subr.mxu0 0.0
        %1978 = vmatpush1.msra.mxu0 0.0
        %1979 = vmatprep.subr.mxu0 0.0
        %1980 = vmatpush1.msra.mxu0 %v1871
        %1981 = vmatprep.subr.mxu0 0.0
        %1982 = vmatpush1.msra.mxu0 %v1870
        %1983 = vmatprep.subr.mxu0 0.0
        %1984 = vmatpush2.msra.mxu0 0.0
        %1985 = vmatprep.subr.mxu0 0.0
        %1986 = vmatpush2.msra.mxu0 0.0
        %1987 = vmatprep.subr.mxu0 0.0
        %1988 = vmatpush2.msra.mxu0 0.0
        %1989 = vmatprep.subr.mxu0 0.0
        %1990 = vmatpush2.msra.mxu0 0.0
        %1991 = vmatprep.subr.mxu0 0.0
        %1992 = vmatpush2.msra.mxu0 0.0
        %1993 = vmatprep.subr.mxu0 0.0
        %1994 = vmatpush2.msra.mxu0 0.0
        %1995 = vmatprep.subr.mxu0 0.0
        %1996 = vmatpush2.msra.mxu0 0.0
        %1997 = vmatprep.subr.mxu0 0.0
        %1998 = vmatpush2.msra.mxu0 0.0
        %1999 = vmatprep.subr.mxu0 0.0
        %2000 = vmatpush2.msra.mxu0 0.0
        %2001 = vmatprep.subr.mxu0 0.0
        %2002 = vmatpush2.msra.mxu0 0.0
        %2003 = vmatprep.subr.mxu0 0.0
        %2004 = vmatpush2.msra.mxu0 0.0
        %2005 = vmatprep.subr.mxu0 0.0
        %2006 = vmatpush2.msra.mxu0 0.0
        %2007 = vmatprep.subr.mxu0 0.0
        %2008 = vmatpush2.msra.mxu0 0.0
        %2009 = vmatprep.subr.mxu0 0.0
        %2010 = vmatpush2.msra.mxu0 0.0
        %2011 = vmatprep.subr.mxu0 0.0
        %2012 = vmatpush2.msra.mxu0 0.0
        %2013 = vmatprep.subr.mxu0 0.0
        %2014 = vmatpush2.msra.mxu0 0.0
        %2015 = vmatprep.mubr.f32.mxu0 0.0
        %2016 = vmatmul.mubr.f32.gmra.mxu0 %v1046
        %v2017 = vpop.f32.mrf.mxu0
        %v2018 = vadd.f32 0.0, %v2017
        %v2019 = vpop.f32.mrf.mxu0
        %2020 = vdwg.mxu0
        %v2021 = vadd.f32 %v1950, %v2018
        %v2022 = vxor.u32 %v2021, 2147483648
        %v2023 = vmul.f32 %v2022, 1.442695
        %v2024 = vpow.pop %v2023
        %v2025 = vadd.f32 %v2024, 1.0
        %v2026 = vrcp.pop %v2025
        %v2027 = vmul.f32 1.0, %v2026
        %v2028 = vtanh.pop %v2021
        %v2029 = vmul.f32 %v2027, 0.0
        %2031 = vrot.lane.b32.xlu0 %v2028, 80
        %v2032 = vpop.permute.xlu0 %2031
        %v2034 = vmul.f32 %v2027, %v2032
        %2036 = vrot.lane.b32.xlu0 %v2034, 16
        %v2037 = vpop.permute.xlu0 %2036
        %v2039 = vadd.f32 %v2029, %v2037
        %v2040 = vtanh.pop %v2039
        %2042 = vrot.lane.b32.xlu0 %v2040, 16
        %v2043 = vpop.permute.xlu0 %2042
        %v2045 = vmul.f32 %v2027, %v2043
        %2047 = vrot.lane.b32.xlu0 %v2045, 112
        %v2048 = vpop.permute.xlu0 %2047
        %vm2050 = vcmask 254080
        %2051 = vst.msk [vmem:[#allocation3 + $0x7] sm:$0x1] %vm2050, %v2048
        %v2052 = vld [vmem:[#allocation2 + $0x6] sm:$0x1]
        %2053 = vrot.lane.b32.xlu0 %v2045, 96
        %v2054 = vpop.permute.xlu0 %2053
        %v2055 = vsel %vm817, %v2054, 0
        %2057 = vmatprep.subr.mxu0 0.0
        %2058 = vmatpush1.msra.mxu0 0.0
        %2059 = vmatprep.subr.mxu0 0.0
        %2060 = vmatpush1.msra.mxu0 0.0
        %2061 = vmatprep.subr.mxu0 0.0
        %2062 = vmatpush1.msra.mxu0 0.0
        %2063 = vmatprep.subr.mxu0 0.0
        %2064 = vmatpush1.msra.mxu0 0.0
        %2065 = vmatprep.subr.mxu0 0.0
        %2066 = vmatpush1.msra.mxu0 0.0
        %2067 = vmatprep.subr.mxu0 0.0
        %2068 = vmatpush1.msra.mxu0 0.0
        %2069 = vmatprep.subr.mxu0 0.0
        %2070 = vmatpush1.msra.mxu0 0.0
        %2071 = vmatprep.subr.mxu0 0.0
        %2072 = vmatpush1.msra.mxu0 0.0
        %2073 = vmatprep.subr.mxu0 0.0
        %2074 = vmatpush1.msra.mxu0 0.0
        %2075 = vmatprep.subr.mxu0 0.0
        %2076 = vmatpush1.msra.mxu0 0.0
        %2077 = vmatprep.subr.mxu0 0.0
        %2078 = vmatpush1.msra.mxu0 0.0
        %2079 = vmatprep.subr.mxu0 0.0
        %2080 = vmatpush1.msra.mxu0 0.0
        %2081 = vmatprep.subr.mxu0 0.0
        %2082 = vmatpush1.msra.mxu0 0.0
        %2083 = vmatprep.subr.mxu0 0.0
        %2084 = vmatpush1.msra.mxu0 0.0
        %2085 = vmatprep.subr.mxu0 0.0
        %2086 = vmatpush1.msra.mxu0 %v1871
        %2087 = vmatprep.subr.mxu0 0.0
        %2088 = vmatpush1.msra.mxu0 %v1870
        %2089 = vmatprep.subr.mxu0 0.0
        %2090 = vmatpush2.msra.mxu0 0.0
        %2091 = vmatprep.subr.mxu0 0.0
        %2092 = vmatpush2.msra.mxu0 0.0
        %2093 = vmatprep.subr.mxu0 0.0
        %2094 = vmatpush2.msra.mxu0 0.0
        %2095 = vmatprep.subr.mxu0 0.0
        %2096 = vmatpush2.msra.mxu0 0.0
        %2097 = vmatprep.subr.mxu0 0.0
        %2098 = vmatpush2.msra.mxu0 0.0
        %2099 = vmatprep.subr.mxu0 0.0
        %2100 = vmatpush2.msra.mxu0 0.0
        %2101 = vmatprep.subr.mxu0 0.0
        %2102 = vmatpush2.msra.mxu0 0.0
        %2103 = vmatprep.subr.mxu0 0.0
        %2104 = vmatpush2.msra.mxu0 0.0
        %2105 = vmatprep.subr.mxu0 0.0
        %2106 = vmatpush2.msra.mxu0 0.0
        %2107 = vmatprep.subr.mxu0 0.0
        %2108 = vmatpush2.msra.mxu0 0.0
        %2109 = vmatprep.subr.mxu0 0.0
        %2110 = vmatpush2.msra.mxu0 0.0
        %2111 = vmatprep.subr.mxu0 0.0
        %2112 = vmatpush2.msra.mxu0 0.0
        %2113 = vmatprep.subr.mxu0 0.0
        %2114 = vmatpush2.msra.mxu0 0.0
        %2115 = vmatprep.subr.mxu0 0.0
        %2116 = vmatpush2.msra.mxu0 0.0
        %2117 = vmatprep.subr.mxu0 0.0
        %2118 = vmatpush2.msra.mxu0 0.0
        %2119 = vmatprep.subr.mxu0 0.0
        %2120 = vmatpush2.msra.mxu0 0.0
        %2121 = vmatprep.mubr.f32.mxu0 0.0
        %2122 = vmatmul.mubr.f32.gmra.mxu0 %v2055
        %v2123 = vpop.f32.mrf.mxu0
        %v2124 = vadd.f32 0.0, %v2123
        %v2125 = vpop.f32.mrf.mxu0
        %2126 = vdwg.mxu0
        %v2127 = vadd.f32 %v2052, %v2124
        %v2128 = vxor.u32 %v2127, 2147483648
        %v2129 = vmul.f32 %v2128, 1.442695
        %v2130 = vpow.pop %v2129
        %v2131 = vadd.f32 %v2130, 1.0
        %v2132 = vrcp.pop %v2131
        %v2133 = vmul.f32 1.0, %v2132
        %v2134 = vtanh.pop %v2127
        %v2135 = vmul.f32 %v2133, %v2039
        %2137 = vrot.lane.b32.xlu0 %v2134, 80
        %v2138 = vpop.permute.xlu0 %2137
        %v2140 = vmul.f32 %v2133, %v2138
        %2142 = vrot.lane.b32.xlu0 %v2140, 16
        %v2143 = vpop.permute.xlu0 %2142
        %v2145 = vadd.f32 %v2135, %v2143
        %v2146 = vtanh.pop %v2145
        %2148 = vrot.lane.b32.xlu0 %v2146, 16
        %v2149 = vpop.permute.xlu0 %2148
        %v2151 = vmul.f32 %v2133, %v2149
        %2153 = vrot.lane.b32.xlu0 %v2151, 112
        %v2154 = vpop.permute.xlu0 %2153
        %2156 = vst.msk [vmem:[#allocation3 + $0x6] sm:$0x1] %vm2050, %v2154
        %v2157 = vld [vmem:[#allocation2 + $0x5] sm:$0x1]
        %2158 = vrot.lane.b32.xlu0 %v2151, 96
        %v2159 = vpop.permute.xlu0 %2158
        %v2160 = vsel %vm817, %v2159, 0
        %2162 = vmatprep.subr.mxu0 0.0
        %2163 = vmatpush1.msra.mxu0 0.0
        %2164 = vmatprep.subr.mxu0 0.0
        %2165 = vmatpush1.msra.mxu0 0.0
        %2166 = vmatprep.subr.mxu0 0.0
        %2167 = vmatpush1.msra.mxu0 0.0
        %2168 = vmatprep.subr.mxu0 0.0
        %2169 = vmatpush1.msra.mxu0 0.0
        %2170 = vmatprep.subr.mxu0 0.0
        %2171 = vmatpush1.msra.mxu0 0.0
        %2172 = vmatprep.subr.mxu0 0.0
        %2173 = vmatpush1.msra.mxu0 0.0
        %2174 = vmatprep.subr.mxu0 0.0
        %2175 = vmatpush1.msra.mxu0 0.0
        %2176 = vmatprep.subr.mxu0 0.0
        %2177 = vmatpush1.msra.mxu0 0.0
        %2178 = vmatprep.subr.mxu0 0.0
        %2179 = vmatpush1.msra.mxu0 0.0
        %2180 = vmatprep.subr.mxu0 0.0
        %2181 = vmatpush1.msra.mxu0 0.0
        %2182 = vmatprep.subr.mxu0 0.0
        %2183 = vmatpush1.msra.mxu0 0.0
        %2184 = vmatprep.subr.mxu0 0.0
        %2185 = vmatpush1.msra.mxu0 0.0
        %2186 = vmatprep.subr.mxu0 0.0
        %2187 = vmatpush1.msra.mxu0 0.0
        %2188 = vmatprep.subr.mxu0 0.0
        %2189 = vmatpush1.msra.mxu0 0.0
        %2190 = vmatprep.subr.mxu0 0.0
        %2191 = vmatpush1.msra.mxu0 %v1871
        %2192 = vmatprep.subr.mxu0 0.0
        %2193 = vmatpush1.msra.mxu0 %v1870
        %2194 = vmatprep.subr.mxu0 0.0
        %2195 = vmatpush2.msra.mxu0 0.0
        %2196 = vmatprep.subr.mxu0 0.0
        %2197 = vmatpush2.msra.mxu0 0.0
        %2198 = vmatprep.subr.mxu0 0.0
        %2199 = vmatpush2.msra.mxu0 0.0
        %2200 = vmatprep.subr.mxu0 0.0
        %2201 = vmatpush2.msra.mxu0 0.0
        %2202 = vmatprep.subr.mxu0 0.0
        %2203 = vmatpush2.msra.mxu0 0.0
        %2204 = vmatprep.subr.mxu0 0.0
        %2205 = vmatpush2.msra.mxu0 0.0
        %2206 = vmatprep.subr.mxu0 0.0
        %2207 = vmatpush2.msra.mxu0 0.0
        %2208 = vmatprep.subr.mxu0 0.0
        %2209 = vmatpush2.msra.mxu0 0.0
        %2210 = vmatprep.subr.mxu0 0.0
        %2211 = vmatpush2.msra.mxu0 0.0
        %2212 = vmatprep.subr.mxu0 0.0
        %2213 = vmatpush2.msra.mxu0 0.0
        %2214 = vmatprep.subr.mxu0 0.0
        %2215 = vmatpush2.msra.mxu0 0.0
        %2216 = vmatprep.subr.mxu0 0.0
        %2217 = vmatpush2.msra.mxu0 0.0
        %2218 = vmatprep.subr.mxu0 0.0
        %2219 = vmatpush2.msra.mxu0 0.0
        %2220 = vmatprep.subr.mxu0 0.0
        %2221 = vmatpush2.msra.mxu0 0.0
        %2222 = vmatprep.subr.mxu0 0.0
        %2223 = vmatpush2.msra.mxu0 0.0
        %2224 = vmatprep.subr.mxu0 0.0
        %2225 = vmatpush2.msra.mxu0 0.0
        %2226 = vmatprep.mubr.f32.mxu0 0.0
        %2227 = vmatmul.mubr.f32.gmra.mxu0 %v2160
        %v2228 = vpop.f32.mrf.mxu0
        %v2229 = vadd.f32 0.0, %v2228
        %v2230 = vpop.f32.mrf.mxu0
        %2231 = vdwg.mxu0
        %v2232 = vadd.f32 %v2157, %v2229
        %v2233 = vxor.u32 %v2232, 2147483648
        %v2234 = vmul.f32 %v2233, 1.442695
        %v2235 = vpow.pop %v2234
        %v2236 = vadd.f32 %v2235, 1.0
        %v2237 = vrcp.pop %v2236
        %v2238 = vmul.f32 1.0, %v2237
        %v2239 = vtanh.pop %v2232
        %v2240 = vmul.f32 %v2238, %v2145
        %2242 = vrot.lane.b32.xlu0 %v2239, 80
        %v2243 = vpop.permute.xlu0 %2242
        %v2245 = vmul.f32 %v2238, %v2243
        %2247 = vrot.lane.b32.xlu0 %v2245, 16
        %v2248 = vpop.permute.xlu0 %2247
        %v2250 = vadd.f32 %v2240, %v2248
        %v2251 = vtanh.pop %v2250
        %2253 = vrot.lane.b32.xlu0 %v2251, 16
        %v2254 = vpop.permute.xlu0 %2253
        %v2256 = vmul.f32 %v2238, %v2254
        %2258 = vrot.lane.b32.xlu0 %v2256, 112
        %v2259 = vpop.permute.xlu0 %2258
        %2261 = vst.msk [vmem:[#allocation3 + $0x5] sm:$0x1] %vm2050, %v2259
        %v2262 = vld [vmem:[#allocation2 + $0x4] sm:$0x1]
        %2263 = vrot.lane.b32.xlu0 %v2256, 96
        %v2264 = vpop.permute.xlu0 %2263
        %v2265 = vsel %vm817, %v2264, 0
        %2267 = vmatprep.subr.mxu0 0.0
        %2268 = vmatpush1.msra.mxu0 0.0
        %2269 = vmatprep.subr.mxu0 0.0
        %2270 = vmatpush1.msra.mxu0 0.0
        %2271 = vmatprep.subr.mxu0 0.0
        %2272 = vmatpush1.msra.mxu0 0.0
        %2273 = vmatprep.subr.mxu0 0.0
        %2274 = vmatpush1.msra.mxu0 0.0
        %2275 = vmatprep.subr.mxu0 0.0
        %2276 = vmatpush1.msra.mxu0 0.0
        %2277 = vmatprep.subr.mxu0 0.0
        %2278 = vmatpush1.msra.mxu0 0.0
        %2279 = vmatprep.subr.mxu0 0.0
        %2280 = vmatpush1.msra.mxu0 0.0
        %2281 = vmatprep.subr.mxu0 0.0
        %2282 = vmatpush1.msra.mxu0 0.0
        %2283 = vmatprep.subr.mxu0 0.0
        %2284 = vmatpush1.msra.mxu0 0.0
        %2285 = vmatprep.subr.mxu0 0.0
        %2286 = vmatpush1.msra.mxu0 0.0
        %2287 = vmatprep.subr.mxu0 0.0
        %2288 = vmatpush1.msra.mxu0 0.0
        %2289 = vmatprep.subr.mxu0 0.0
        %2290 = vmatpush1.msra.mxu0 0.0
        %2291 = vmatprep.subr.mxu0 0.0
        %2292 = vmatpush1.msra.mxu0 0.0
        %2293 = vmatprep.subr.mxu0 0.0
        %2294 = vmatpush1.msra.mxu0 0.0
        %2295 = vmatprep.subr.mxu0 0.0
        %2296 = vmatpush1.msra.mxu0 %v1871
        %2297 = vmatprep.subr.mxu0 0.0
        %2298 = vmatpush1.msra.mxu0 %v1870
        %2299 = vmatprep.subr.mxu0 0.0
        %2300 = vmatpush2.msra.mxu0 0.0
        %2301 = vmatprep.subr.mxu0 0.0
        %2302 = vmatpush2.msra.mxu0 0.0
        %2303 = vmatprep.subr.mxu0 0.0
        %2304 = vmatpush2.msra.mxu0 0.0
        %2305 = vmatprep.subr.mxu0 0.0
        %2306 = vmatpush2.msra.mxu0 0.0
        %2307 = vmatprep.subr.mxu0 0.0
        %2308 = vmatpush2.msra.mxu0 0.0
        %2309 = vmatprep.subr.mxu0 0.0
        %2310 = vmatpush2.msra.mxu0 0.0
        %2311 = vmatprep.subr.mxu0 0.0
        %2312 = vmatpush2.msra.mxu0 0.0
        %2313 = vmatprep.subr.mxu0 0.0
        %2314 = vmatpush2.msra.mxu0 0.0
        %2315 = vmatprep.subr.mxu0 0.0
        %2316 = vmatpush2.msra.mxu0 0.0
        %2317 = vmatprep.subr.mxu0 0.0
        %2318 = vmatpush2.msra.mxu0 0.0
        %2319 = vmatprep.subr.mxu0 0.0
        %2320 = vmatpush2.msra.mxu0 0.0
        %2321 = vmatprep.subr.mxu0 0.0
        %2322 = vmatpush2.msra.mxu0 0.0
        %2323 = vmatprep.subr.mxu0 0.0
        %2324 = vmatpush2.msra.mxu0 0.0
        %2325 = vmatprep.subr.mxu0 0.0
        %2326 = vmatpush2.msra.mxu0 0.0
        %2327 = vmatprep.subr.mxu0 0.0
        %2328 = vmatpush2.msra.mxu0 0.0
        %2329 = vmatprep.subr.mxu0 0.0
        %2330 = vmatpush2.msra.mxu0 0.0
        %2331 = vmatprep.mubr.f32.mxu0 0.0
        %2332 = vmatmul.mubr.f32.gmra.mxu0 %v2265
        %v2333 = vpop.f32.mrf.mxu0
        %v2334 = vadd.f32 0.0, %v2333
        %v2335 = vpop.f32.mrf.mxu0
        %2336 = vdwg.mxu0
        %v2337 = vadd.f32 %v2262, %v2334
        %v2338 = vxor.u32 %v2337, 2147483648
        %v2339 = vmul.f32 %v2338, 1.442695
        %v2340 = vpow.pop %v2339
        %v2341 = vadd.f32 %v2340, 1.0
        %v2342 = vrcp.pop %v2341
        %v2343 = vmul.f32 1.0, %v2342
        %v2344 = vtanh.pop %v2337
        %v2345 = vmul.f32 %v2343, %v2250
        %2347 = vrot.lane.b32.xlu0 %v2344, 80
        %v2348 = vpop.permute.xlu0 %2347
        %v2350 = vmul.f32 %v2343, %v2348
        %2352 = vrot.lane.b32.xlu0 %v2350, 16
        %v2353 = vpop.permute.xlu0 %2352
        %v2355 = vadd.f32 %v2345, %v2353
        %v2356 = vtanh.pop %v2355
        %2358 = vrot.lane.b32.xlu0 %v2356, 16
        %v2359 = vpop.permute.xlu0 %2358
        %v2361 = vmul.f32 %v2343, %v2359
        %2363 = vrot.lane.b32.xlu0 %v2361, 112
        %v2364 = vpop.permute.xlu0 %2363
        %2366 = vst.msk [vmem:[#allocation3 + $0x4] sm:$0x1] %vm2050, %v2364
        %v2367 = vld [vmem:[#allocation2 + $0x3] sm:$0x1]
        %2368 = vrot.lane.b32.xlu0 %v2361, 96
        %v2369 = vpop.permute.xlu0 %2368
        %v2370 = vsel %vm817, %v2369, 0
        %2372 = vmatprep.subr.mxu0 0.0
        %2373 = vmatpush1.msra.mxu0 0.0
        %2374 = vmatprep.subr.mxu0 0.0
        %2375 = vmatpush1.msra.mxu0 0.0
        %2376 = vmatprep.subr.mxu0 0.0
        %2377 = vmatpush1.msra.mxu0 0.0
        %2378 = vmatprep.subr.mxu0 0.0
        %2379 = vmatpush1.msra.mxu0 0.0
        %2380 = vmatprep.subr.mxu0 0.0
        %2381 = vmatpush1.msra.mxu0 0.0
        %2382 = vmatprep.subr.mxu0 0.0
        %2383 = vmatpush1.msra.mxu0 0.0
        %2384 = vmatprep.subr.mxu0 0.0
        %2385 = vmatpush1.msra.mxu0 0.0
        %2386 = vmatprep.subr.mxu0 0.0
        %2387 = vmatpush1.msra.mxu0 0.0
        %2388 = vmatprep.subr.mxu0 0.0
        %2389 = vmatpush1.msra.mxu0 0.0
        %2390 = vmatprep.subr.mxu0 0.0
        %2391 = vmatpush1.msra.mxu0 0.0
        %2392 = vmatprep.subr.mxu0 0.0
        %2393 = vmatpush1.msra.mxu0 0.0
        %2394 = vmatprep.subr.mxu0 0.0
        %2395 = vmatpush1.msra.mxu0 0.0
        %2396 = vmatprep.subr.mxu0 0.0
        %2397 = vmatpush1.msra.mxu0 0.0
        %2398 = vmatprep.subr.mxu0 0.0
        %2399 = vmatpush1.msra.mxu0 0.0
        %2400 = vmatprep.subr.mxu0 0.0
        %2401 = vmatpush1.msra.mxu0 %v1871
        %2402 = vmatprep.subr.mxu0 0.0
        %2403 = vmatpush1.msra.mxu0 %v1870
        %2404 = vmatprep.subr.mxu0 0.0
        %2405 = vmatpush2.msra.mxu0 0.0
        %2406 = vmatprep.subr.mxu0 0.0
        %2407 = vmatpush2.msra.mxu0 0.0
        %2408 = vmatprep.subr.mxu0 0.0
        %2409 = vmatpush2.msra.mxu0 0.0
        %2410 = vmatprep.subr.mxu0 0.0
        %2411 = vmatpush2.msra.mxu0 0.0
        %2412 = vmatprep.subr.mxu0 0.0
        %2413 = vmatpush2.msra.mxu0 0.0
        %2414 = vmatprep.subr.mxu0 0.0
        %2415 = vmatpush2.msra.mxu0 0.0
        %2416 = vmatprep.subr.mxu0 0.0
        %2417 = vmatpush2.msra.mxu0 0.0
        %2418 = vmatprep.subr.mxu0 0.0
        %2419 = vmatpush2.msra.mxu0 0.0
        %2420 = vmatprep.subr.mxu0 0.0
        %2421 = vmatpush2.msra.mxu0 0.0
        %2422 = vmatprep.subr.mxu0 0.0
        %2423 = vmatpush2.msra.mxu0 0.0
        %2424 = vmatprep.subr.mxu0 0.0
        %2425 = vmatpush2.msra.mxu0 0.0
        %2426 = vmatprep.subr.mxu0 0.0
        %2427 = vmatpush2.msra.mxu0 0.0
        %2428 = vmatprep.subr.mxu0 0.0
        %2429 = vmatpush2.msra.mxu0 0.0
        %2430 = vmatprep.subr.mxu0 0.0
        %2431 = vmatpush2.msra.mxu0 0.0
        %2432 = vmatprep.subr.mxu0 0.0
        %2433 = vmatpush2.msra.mxu0 0.0
        %2434 = vmatprep.subr.mxu0 0.0
        %2435 = vmatpush2.msra.mxu0 0.0
        %2436 = vmatprep.mubr.f32.mxu0 0.0
        %2437 = vmatmul.mubr.f32.gmra.mxu0 %v2370
        %v2438 = vpop.f32.mrf.mxu0
        %v2439 = vadd.f32 0.0, %v2438
        %v2440 = vpop.f32.mrf.mxu0
        %2441 = vdwg.mxu0
        %v2442 = vadd.f32 %v2367, %v2439
        %v2443 = vxor.u32 %v2442, 2147483648
        %v2444 = vmul.f32 %v2443, 1.442695
        %v2445 = vpow.pop %v2444
        %v2446 = vadd.f32 %v2445, 1.0
        %v2447 = vrcp.pop %v2446
        %v2448 = vmul.f32 1.0, %v2447
        %v2449 = vtanh.pop %v2442
        %v2450 = vmul.f32 %v2448, %v2355
        %2452 = vrot.lane.b32.xlu0 %v2449, 80
        %v2453 = vpop.permute.xlu0 %2452
        %v2455 = vmul.f32 %v2448, %v2453
        %2457 = vrot.lane.b32.xlu0 %v2455, 16
        %v2458 = vpop.permute.xlu0 %2457
        %v2460 = vadd.f32 %v2450, %v2458
        %v2461 = vtanh.pop %v2460
        %2463 = vrot.lane.b32.xlu0 %v2461, 16
        %v2464 = vpop.permute.xlu0 %2463
        %v2466 = vmul.f32 %v2448, %v2464
        %2468 = vrot.lane.b32.xlu0 %v2466, 112
        %v2469 = vpop.permute.xlu0 %2468
        %2471 = vst.msk [vmem:[#allocation3 + $0x3] sm:$0x1] %vm2050, %v2469
        %v2472 = vld [vmem:[#allocation2 + $0x2] sm:$0x1]
        %2473 = vrot.lane.b32.xlu0 %v2466, 96
        %v2474 = vpop.permute.xlu0 %2473
        %v2475 = vsel %vm817, %v2474, 0
        %2477 = vmatprep.subr.mxu0 0.0
        %2478 = vmatpush1.msra.mxu0 0.0
        %2479 = vmatprep.subr.mxu0 0.0
        %2480 = vmatpush1.msra.mxu0 0.0
        %2481 = vmatprep.subr.mxu0 0.0
        %2482 = vmatpush1.msra.mxu0 0.0
        %2483 = vmatprep.subr.mxu0 0.0
        %2484 = vmatpush1.msra.mxu0 0.0
        %2485 = vmatprep.subr.mxu0 0.0
        %2486 = vmatpush1.msra.mxu0 0.0
        %2487 = vmatprep.subr.mxu0 0.0
        %2488 = vmatpush1.msra.mxu0 0.0
        %2489 = vmatprep.subr.mxu0 0.0
        %2490 = vmatpush1.msra.mxu0 0.0
        %2491 = vmatprep.subr.mxu0 0.0
        %2492 = vmatpush1.msra.mxu0 0.0
        %2493 = vmatprep.subr.mxu0 0.0
        %2494 = vmatpush1.msra.mxu0 0.0
        %2495 = vmatprep.subr.mxu0 0.0
        %2496 = vmatpush1.msra.mxu0 0.0
        %2497 = vmatprep.subr.mxu0 0.0
        %2498 = vmatpush1.msra.mxu0 0.0
        %2499 = vmatprep.subr.mxu0 0.0
        %2500 = vmatpush1.msra.mxu0 0.0
        %2501 = vmatprep.subr.mxu0 0.0
        %2502 = vmatpush1.msra.mxu0 0.0
        %2503 = vmatprep.subr.mxu0 0.0
        %2504 = vmatpush1.msra.mxu0 0.0
        %2505 = vmatprep.subr.mxu0 0.0
        %2506 = vmatpush1.msra.mxu0 %v1871
        %2507 = vmatprep.subr.mxu0 0.0
        %2508 = vmatpush1.msra.mxu0 %v1870
        %2509 = vmatprep.subr.mxu0 0.0
        %2510 = vmatpush2.msra.mxu0 0.0
        %2511 = vmatprep.subr.mxu0 0.0
        %2512 = vmatpush2.msra.mxu0 0.0
        %2513 = vmatprep.subr.mxu0 0.0
        %2514 = vmatpush2.msra.mxu0 0.0
        %2515 = vmatprep.subr.mxu0 0.0
        %2516 = vmatpush2.msra.mxu0 0.0
        %2517 = vmatprep.subr.mxu0 0.0
        %2518 = vmatpush2.msra.mxu0 0.0
        %2519 = vmatprep.subr.mxu0 0.0
        %2520 = vmatpush2.msra.mxu0 0.0
        %2521 = vmatprep.subr.mxu0 0.0
        %2522 = vmatpush2.msra.mxu0 0.0
        %2523 = vmatprep.subr.mxu0 0.0
        %2524 = vmatpush2.msra.mxu0 0.0
        %2525 = vmatprep.subr.mxu0 0.0
        %2526 = vmatpush2.msra.mxu0 0.0
        %2527 = vmatprep.subr.mxu0 0.0
        %2528 = vmatpush2.msra.mxu0 0.0
        %2529 = vmatprep.subr.mxu0 0.0
        %2530 = vmatpush2.msra.mxu0 0.0
        %2531 = vmatprep.subr.mxu0 0.0
        %2532 = vmatpush2.msra.mxu0 0.0
        %2533 = vmatprep.subr.mxu0 0.0
        %2534 = vmatpush2.msra.mxu0 0.0
        %2535 = vmatprep.subr.mxu0 0.0
        %2536 = vmatpush2.msra.mxu0 0.0
        %2537 = vmatprep.subr.mxu0 0.0
        %2538 = vmatpush2.msra.mxu0 0.0
        %2539 = vmatprep.subr.mxu0 0.0
        %2540 = vmatpush2.msra.mxu0 0.0
        %2541 = vmatprep.mubr.f32.mxu0 0.0
        %2542 = vmatmul.mubr.f32.gmra.mxu0 %v2475
        %v2543 = vpop.f32.mrf.mxu0
        %v2544 = vadd.f32 0.0, %v2543
        %v2545 = vpop.f32.mrf.mxu0
        %2546 = vdwg.mxu0
        %v2547 = vadd.f32 %v2472, %v2544
        %v2548 = vxor.u32 %v2547, 2147483648
        %v2549 = vmul.f32 %v2548, 1.442695
        %v2550 = vpow.pop %v2549
        %v2551 = vadd.f32 %v2550, 1.0
        %v2552 = vrcp.pop %v2551
        %v2553 = vmul.f32 1.0, %v2552
        %v2554 = vtanh.pop %v2547
        %v2555 = vmul.f32 %v2553, %v2460
        %2557 = vrot.lane.b32.xlu0 %v2554, 80
        %v2558 = vpop.permute.xlu0 %2557
        %v2560 = vmul.f32 %v2553, %v2558
        %2562 = vrot.lane.b32.xlu0 %v2560, 16
        %v2563 = vpop.permute.xlu0 %2562
        %v2565 = vadd.f32 %v2555, %v2563
        %v2566 = vtanh.pop %v2565
        %2568 = vrot.lane.b32.xlu0 %v2566, 16
        %v2569 = vpop.permute.xlu0 %2568
        %v2571 = vmul.f32 %v2553, %v2569
        %2573 = vrot.lane.b32.xlu0 %v2571, 112
        %v2574 = vpop.permute.xlu0 %2573
        %2576 = vst.msk [vmem:[#allocation3 + $0x2] sm:$0x1] %vm2050, %v2574
        %v2577 = vld [vmem:[#allocation2 + $0x1] sm:$0x1]
        %2578 = vrot.lane.b32.xlu0 %v2571, 96
        %v2579 = vpop.permute.xlu0 %2578
        %v2580 = vsel %vm817, %v2579, 0
        %2582 = vmatprep.subr.mxu0 0.0
        %2583 = vmatpush1.msra.mxu0 0.0
        %2584 = vmatprep.subr.mxu0 0.0
        %2585 = vmatpush1.msra.mxu0 0.0
        %2586 = vmatprep.subr.mxu0 0.0
        %2587 = vmatpush1.msra.mxu0 0.0
        %2588 = vmatprep.subr.mxu0 0.0
        %2589 = vmatpush1.msra.mxu0 0.0
        %2590 = vmatprep.subr.mxu0 0.0
        %2591 = vmatpush1.msra.mxu0 0.0
        %2592 = vmatprep.subr.mxu0 0.0
        %2593 = vmatpush1.msra.mxu0 0.0
        %2594 = vmatprep.subr.mxu0 0.0
        %2595 = vmatpush1.msra.mxu0 0.0
        %2596 = vmatprep.subr.mxu0 0.0
        %2597 = vmatpush1.msra.mxu0 0.0
        %2598 = vmatprep.subr.mxu0 0.0
        %2599 = vmatpush1.msra.mxu0 0.0
        %2600 = vmatprep.subr.mxu0 0.0
        %2601 = vmatpush1.msra.mxu0 0.0
        %2602 = vmatprep.subr.mxu0 0.0
        %2603 = vmatpush1.msra.mxu0 0.0
        %2604 = vmatprep.subr.mxu0 0.0
        %2605 = vmatpush1.msra.mxu0 0.0
        %2606 = vmatprep.subr.mxu0 0.0
        %2607 = vmatpush1.msra.mxu0 0.0
        %2608 = vmatprep.subr.mxu0 0.0
        %2609 = vmatpush1.msra.mxu0 0.0
        %2610 = vmatprep.subr.mxu0 0.0
        %2611 = vmatpush1.msra.mxu0 %v1871
        %2612 = vmatprep.subr.mxu0 0.0
        %2613 = vmatpush1.msra.mxu0 %v1870
        %2614 = vmatprep.subr.mxu0 0.0
        %2615 = vmatpush2.msra.mxu0 0.0
        %2616 = vmatprep.subr.mxu0 0.0
        %2617 = vmatpush2.msra.mxu0 0.0
        %2618 = vmatprep.subr.mxu0 0.0
        %2619 = vmatpush2.msra.mxu0 0.0
        %2620 = vmatprep.subr.mxu0 0.0
        %2621 = vmatpush2.msra.mxu0 0.0
        %2622 = vmatprep.subr.mxu0 0.0
        %2623 = vmatpush2.msra.mxu0 0.0
        %2624 = vmatprep.subr.mxu0 0.0
        %2625 = vmatpush2.msra.mxu0 0.0
        %2626 = vmatprep.subr.mxu0 0.0
        %2627 = vmatpush2.msra.mxu0 0.0
        %2628 = vmatprep.subr.mxu0 0.0
        %2629 = vmatpush2.msra.mxu0 0.0
        %2630 = vmatprep.subr.mxu0 0.0
        %2631 = vmatpush2.msra.mxu0 0.0
        %2632 = vmatprep.subr.mxu0 0.0
        %2633 = vmatpush2.msra.mxu0 0.0
        %2634 = vmatprep.subr.mxu0 0.0
        %2635 = vmatpush2.msra.mxu0 0.0
        %2636 = vmatprep.subr.mxu0 0.0
        %2637 = vmatpush2.msra.mxu0 0.0
        %2638 = vmatprep.subr.mxu0 0.0
        %2639 = vmatpush2.msra.mxu0 0.0
        %2640 = vmatprep.subr.mxu0 0.0
        %2641 = vmatpush2.msra.mxu0 0.0
        %2642 = vmatprep.subr.mxu0 0.0
        %2643 = vmatpush2.msra.mxu0 0.0
        %2644 = vmatprep.subr.mxu0 0.0
        %2645 = vmatpush2.msra.mxu0 0.0
        %2646 = vmatprep.mubr.f32.mxu0 0.0
        %2647 = vmatmul.mubr.f32.gmra.mxu0 %v2580
        %v2648 = vpop.f32.mrf.mxu0
        %v2649 = vadd.f32 0.0, %v2648
        %v2650 = vpop.f32.mrf.mxu0
        %2651 = vdwg.mxu0
        %v2652 = vadd.f32 %v2577, %v2649
        %v2653 = vxor.u32 %v2652, 2147483648
        %v2654 = vmul.f32 %v2653, 1.442695
        %v2655 = vpow.pop %v2654
        %v2656 = vadd.f32 %v2655, 1.0
        %v2657 = vrcp.pop %v2656
        %v2658 = vmul.f32 1.0, %v2657
        %v2659 = vtanh.pop %v2652
        %v2660 = vmul.f32 %v2658, %v2565
        %2662 = vrot.lane.b32.xlu0 %v2659, 80
        %v2663 = vpop.permute.xlu0 %2662
        %v2665 = vmul.f32 %v2658, %v2663
        %2667 = vrot.lane.b32.xlu0 %v2665, 16
        %v2668 = vpop.permute.xlu0 %2667
        %v2670 = vadd.f32 %v2660, %v2668
        %v2671 = vtanh.pop %v2670
        %2673 = vrot.lane.b32.xlu0 %v2671, 16
        %v2674 = vpop.permute.xlu0 %2673
        %v2676 = vmul.f32 %v2658, %v2674
        %2678 = vrot.lane.b32.xlu0 %v2676, 112
        %v2679 = vpop.permute.xlu0 %2678
        %2681 = vst.msk [vmem:[#allocation3 + $0x1] sm:$0x1] %vm2050, %v2679
        %v2682 = vld [vmem:[#allocation2] sm:$0x1]
        %2683 = vrot.lane.b32.xlu0 %v2676, 96
        %v2684 = vpop.permute.xlu0 %2683
        %v2685 = vsel %vm817, %v2684, 0
        %2687 = vmatprep.subr.mxu0 0.0
        %2688 = vmatpush1.msra.mxu0 0.0
        %2689 = vmatprep.subr.mxu0 0.0
        %2690 = vmatpush1.msra.mxu0 0.0
        %2691 = vmatprep.subr.mxu0 0.0
        %2692 = vmatpush1.msra.mxu0 0.0
        %2693 = vmatprep.subr.mxu0 0.0
        %2694 = vmatpush1.msra.mxu0 0.0
        %2695 = vmatprep.subr.mxu0 0.0
        %2696 = vmatpush1.msra.mxu0 0.0
        %2697 = vmatprep.subr.mxu0 0.0
        %2698 = vmatpush1.msra.mxu0 0.0
        %2699 = vmatprep.subr.mxu0 0.0
        %2700 = vmatpush1.msra.mxu0 0.0
        %2701 = vmatprep.subr.mxu0 0.0
        %2702 = vmatpush1.msra.mxu0 0.0
        %2703 = vmatprep.subr.mxu0 0.0
        %2704 = vmatpush1.msra.mxu0 0.0
        %2705 = vmatprep.subr.mxu0 0.0
        %2706 = vmatpush1.msra.mxu0 0.0
        %2707 = vmatprep.subr.mxu0 0.0
        %2708 = vmatpush1.msra.mxu0 0.0
        %2709 = vmatprep.subr.mxu0 0.0
        %2710 = vmatpush1.msra.mxu0 0.0
        %2711 = vmatprep.subr.mxu0 0.0
        %2712 = vmatpush1.msra.mxu0 0.0
        %2713 = vmatprep.subr.mxu0 0.0
        %2714 = vmatpush1.msra.mxu0 0.0
        %2715 = vmatprep.subr.mxu0 0.0
        %2716 = vmatpush1.msra.mxu0 %v1871
        %2717 = vmatprep.subr.mxu0 0.0
        %2718 = vmatpush1.msra.mxu0 %v1870
        %2719 = vmatprep.subr.mxu0 0.0
        %2720 = vmatpush2.msra.mxu0 0.0
        %2721 = vmatprep.subr.mxu0 0.0
        %2722 = vmatpush2.msra.mxu0 0.0
        %2723 = vmatprep.subr.mxu0 0.0
        %2724 = vmatpush2.msra.mxu0 0.0
        %2725 = vmatprep.subr.mxu0 0.0
        %2726 = vmatpush2.msra.mxu0 0.0
        %2727 = vmatprep.subr.mxu0 0.0
        %2728 = vmatpush2.msra.mxu0 0.0
        %2729 = vmatprep.subr.mxu0 0.0
        %2730 = vmatpush2.msra.mxu0 0.0
        %2731 = vmatprep.subr.mxu0 0.0
        %2732 = vmatpush2.msra.mxu0 0.0
        %2733 = vmatprep.subr.mxu0 0.0
        %2734 = vmatpush2.msra.mxu0 0.0
        %2735 = vmatprep.subr.mxu0 0.0
        %2736 = vmatpush2.msra.mxu0 0.0
        %2737 = vmatprep.subr.mxu0 0.0
        %2738 = vmatpush2.msra.mxu0 0.0
        %2739 = vmatprep.subr.mxu0 0.0
        %2740 = vmatpush2.msra.mxu0 0.0
        %2741 = vmatprep.subr.mxu0 0.0
        %2742 = vmatpush2.msra.mxu0 0.0
        %2743 = vmatprep.subr.mxu0 0.0
        %2744 = vmatpush2.msra.mxu0 0.0
        %2745 = vmatprep.subr.mxu0 0.0
        %2746 = vmatpush2.msra.mxu0 0.0
        %2747 = vmatprep.subr.mxu0 0.0
        %2748 = vmatpush2.msra.mxu0 0.0
        %2749 = vmatprep.subr.mxu0 0.0
        %2750 = vmatpush2.msra.mxu0 0.0
        %2751 = vmatprep.mubr.f32.mxu0 0.0
        %2752 = vmatmul.mubr.f32.gmra.mxu0 %v2685
        %v2753 = vpop.f32.mrf.mxu0
        %v2754 = vadd.f32 0.0, %v2753
        %v2755 = vpop.f32.mrf.mxu0
        %2756 = vdwg.mxu0
        %v2757 = vadd.f32 %v2682, %v2754
        %v2758 = vxor.u32 %v2757, 2147483648
        %v2759 = vmul.f32 %v2758, 1.442695
        %v2760 = vpow.pop %v2759
        %v2761 = vadd.f32 %v2760, 1.0
        %v2762 = vrcp.pop %v2761
        %v2763 = vmul.f32 1.0, %v2762
        %v2764 = vtanh.pop %v2757
        %v2765 = vmul.f32 %v2763, %v2670
        %2767 = vrot.lane.b32.xlu0 %v2764, 80
        %v2768 = vpop.permute.xlu0 %2767
        %v2770 = vmul.f32 %v2763, %v2768
        %2772 = vrot.lane.b32.xlu0 %v2770, 16
        %v2773 = vpop.permute.xlu0 %2772
        %v2775 = vadd.f32 %v2765, %v2773
        %v2776 = vtanh.pop %v2775
        %2778 = vrot.lane.b32.xlu0 %v2776, 16
        %v2779 = vpop.permute.xlu0 %2778
        %v2781 = vmul.f32 %v2763, %v2779
        %2783 = vrot.lane.b32.xlu0 %v2781, 112
        %v2784 = vpop.permute.xlu0 %2783
        %2786 = vst.msk [vmem:[#allocation3] sm:$0x1] %vm2050, %v2784
        %v2787 = vld [vmem:[#allocation3] sm:$0xff]
        %v2788 = vld [vmem:[#allocation4 + $0x1b8] sm:$0xff]
        %v2789 = vld [vmem:[#allocation4 + $0x1c0] sm:$0xff]
        %v2790 = vld [vmem:[#allocation4 + $0x198] sm:$0xff]
        %v2791 = vld [vmem:[#allocation4 + $0x1a0] sm:$0xff]
        %v2792 = vld [vmem:[#allocation4 + $0x1a8] sm:$0xff]
        %v2793 = vld [vmem:[#allocation4 + $0x1b0] sm:$0xff]
        %v2794 = vld [vmem:[#allocation4 + $0x1c8] sm:$0x1]
        %v2795 = vlaneseq
        %v2796 = vshrl.u32 %v2795, 7
        %v2797 = vsub.s32 0, %v2796
        %v2798 = vrot.slane %v2794, %v2797
        %vm2799 = vcmask 261120
        %v2801 = vsel %vm2799, %v2787, 0
        %2803 = vmatprep.subr.mxu0 0.0
        %2804 = vmatpush1.msra.mxu0 0.0
        %2805 = vmatprep.subr.mxu0 0.0
        %2806 = vmatpush1.msra.mxu0 0.0
        %2807 = vmatprep.subr.mxu0 0.0
        %2808 = vmatpush1.msra.mxu0 0.0
        %2809 = vmatprep.subr.mxu0 0.0
        %2810 = vmatpush1.msra.mxu0 0.0
        %2811 = vmatprep.subr.mxu0 0.0
        %2812 = vmatpush1.msra.mxu0 0.0
        %2813 = vmatprep.subr.mxu0 0.0
        %2814 = vmatpush1.msra.mxu0 0.0
        %2815 = vmatprep.subr.mxu0 0.0
        %2816 = vmatpush1.msra.mxu0 0.0
        %2817 = vmatprep.subr.mxu0 0.0
        %2818 = vmatpush1.msra.mxu0 0.0
        %2819 = vmatprep.subr.mxu0 0.0
        %2820 = vmatpush1.msra.mxu0 0.0
        %2821 = vmatprep.subr.mxu0 0.0
        %2822 = vmatpush1.msra.mxu0 0.0
        %2823 = vmatprep.subr.mxu0 0.0
        %2824 = vmatpush1.msra.mxu0 0.0
        %2825 = vmatprep.subr.mxu0 0.0
        %2826 = vmatpush1.msra.mxu0 0.0
        %2827 = vmatprep.subr.mxu0 0.0
        %2828 = vmatpush1.msra.mxu0 %v2793
        %2829 = vmatprep.subr.mxu0 0.0
        %2830 = vmatpush1.msra.mxu0 %v2792
        %2831 = vmatprep.subr.mxu0 0.0
        %2832 = vmatpush1.msra.mxu0 %v2791
        %2833 = vmatprep.subr.mxu0 0.0
        %2834 = vmatpush1.msra.mxu0 %v2790
        %2835 = vmatprep.subr.mxu0 0.0
        %2836 = vmatpush2.msra.mxu0 0.0
        %2837 = vmatprep.subr.mxu0 0.0
        %2838 = vmatpush2.msra.mxu0 0.0
        %2839 = vmatprep.subr.mxu0 0.0
        %2840 = vmatpush2.msra.mxu0 0.0
        %2841 = vmatprep.subr.mxu0 0.0
        %2842 = vmatpush2.msra.mxu0 0.0
        %2843 = vmatprep.subr.mxu0 0.0
        %2844 = vmatpush2.msra.mxu0 0.0
        %2845 = vmatprep.subr.mxu0 0.0
        %2846 = vmatpush2.msra.mxu0 0.0
        %2847 = vmatprep.subr.mxu0 0.0
        %2848 = vmatpush2.msra.mxu0 0.0
        %2849 = vmatprep.subr.mxu0 0.0
        %2850 = vmatpush2.msra.mxu0 0.0
        %2851 = vmatprep.subr.mxu0 0.0
        %2852 = vmatpush2.msra.mxu0 0.0
        %2853 = vmatprep.subr.mxu0 0.0
        %2854 = vmatpush2.msra.mxu0 0.0
        %2855 = vmatprep.subr.mxu0 0.0
        %2856 = vmatpush2.msra.mxu0 0.0
        %2857 = vmatprep.subr.mxu0 0.0
        %2858 = vmatpush2.msra.mxu0 0.0
        %2859 = vmatprep.subr.mxu0 0.0
        %2860 = vmatpush2.msra.mxu0 0.0
        %2861 = vmatprep.subr.mxu0 0.0
        %2862 = vmatpush2.msra.mxu0 0.0
        %2863 = vmatprep.subr.mxu0 0.0
        %2864 = vmatpush2.msra.mxu0 0.0
        %2865 = vmatprep.subr.mxu0 0.0
        %2866 = vmatpush2.msra.mxu0 0.0
        %2867 = vmatprep.mubr.f32.mxu0 0.0
        %2868 = vmatmul.mubr.f32.gmra.mxu0 %v2801
        %v2869 = vpop.f32.mrf.mxu0
        %v2870 = vadd.f32 %v2798, %v2869
        %v2871 = vpop.f32.mrf.mxu0
        %2872 = vdwg.mxu0
        %2873 = vst.msk [vmem:[#allocation2] sm:$0xff] %vm300, %v2870
        %v2874 = vld [vmem:[#allocation2] sm:$0x1]
        %2875 = vmatprep.subr.mxu0 0.0
        %2876 = vmatpush1.msra.mxu0 0.0
        %2877 = vmatprep.subr.mxu0 0.0
        %2878 = vmatpush1.msra.mxu0 0.0
        %2879 = vmatprep.subr.mxu0 0.0
        %2880 = vmatpush1.msra.mxu0 0.0
        %2881 = vmatprep.subr.mxu0 0.0
        %2882 = vmatpush1.msra.mxu0 0.0
        %2883 = vmatprep.subr.mxu0 0.0
        %2884 = vmatpush1.msra.mxu0 0.0
        %2885 = vmatprep.subr.mxu0 0.0
        %2886 = vmatpush1.msra.mxu0 0.0
        %2887 = vmatprep.subr.mxu0 0.0
        %2888 = vmatpush1.msra.mxu0 0.0
        %2889 = vmatprep.subr.mxu0 0.0
        %2890 = vmatpush1.msra.mxu0 0.0
        %2891 = vmatprep.subr.mxu0 0.0
        %2892 = vmatpush1.msra.mxu0 0.0
        %2893 = vmatprep.subr.mxu0 0.0
        %2894 = vmatpush1.msra.mxu0 0.0
        %2895 = vmatprep.subr.mxu0 0.0
        %2896 = vmatpush1.msra.mxu0 0.0
        %2897 = vmatprep.subr.mxu0 0.0
        %2898 = vmatpush1.msra.mxu0 0.0
        %2899 = vmatprep.subr.mxu0 0.0
        %2900 = vmatpush1.msra.mxu0 0.0
        %2901 = vmatprep.subr.mxu0 0.0
        %2902 = vmatpush1.msra.mxu0 0.0
        %2903 = vmatprep.subr.mxu0 0.0
        %2904 = vmatpush1.msra.mxu0 %v2789
        %2905 = vmatprep.subr.mxu0 0.0
        %2906 = vmatpush1.msra.mxu0 %v2788
        %2907 = vmatprep.subr.mxu0 0.0
        %2908 = vmatpush2.msra.mxu0 0.0
        %2909 = vmatprep.subr.mxu0 0.0
        %2910 = vmatpush2.msra.mxu0 0.0
        %2911 = vmatprep.subr.mxu0 0.0
        %2912 = vmatpush2.msra.mxu0 0.0
        %2913 = vmatprep.subr.mxu0 0.0
        %2914 = vmatpush2.msra.mxu0 0.0
        %2915 = vmatprep.subr.mxu0 0.0
        %2916 = vmatpush2.msra.mxu0 0.0
        %2917 = vmatprep.subr.mxu0 0.0
        %2918 = vmatpush2.msra.mxu0 0.0
        %2919 = vmatprep.subr.mxu0 0.0
        %2920 = vmatpush2.msra.mxu0 0.0
        %2921 = vmatprep.subr.mxu0 0.0
        %2922 = vmatpush2.msra.mxu0 0.0
        %2923 = vmatprep.subr.mxu0 0.0
        %2924 = vmatpush2.msra.mxu0 0.0
        %2925 = vmatprep.subr.mxu0 0.0
        %2926 = vmatpush2.msra.mxu0 0.0
        %2927 = vmatprep.subr.mxu0 0.0
        %2928 = vmatpush2.msra.mxu0 0.0
        %2929 = vmatprep.subr.mxu0 0.0
        %2930 = vmatpush2.msra.mxu0 0.0
        %2931 = vmatprep.subr.mxu0 0.0
        %2932 = vmatpush2.msra.mxu0 0.0
        %2933 = vmatprep.subr.mxu0 0.0
        %2934 = vmatpush2.msra.mxu0 0.0
        %2935 = vmatprep.subr.mxu0 0.0
        %2936 = vmatpush2.msra.mxu0 0.0
        %2937 = vmatprep.subr.mxu0 0.0
        %2938 = vmatpush2.msra.mxu0 0.0
        %2939 = vmatprep.mubr.f32.mxu0 0.0
        %2940 = vmatmul.mubr.f32.gmra.mxu0 %v1046
        %v2941 = vpop.f32.mrf.mxu0
        %v2942 = vadd.f32 0.0, %v2941
        %v2943 = vpop.f32.mrf.mxu0
        %2944 = vdwg.mxu0
        %v2945 = vadd.f32 %v2874, %v2942
        %v2946 = vxor.u32 %v2945, 2147483648
        %v2947 = vmul.f32 %v2946, 1.442695
        %v2948 = vpow.pop %v2947
        %v2949 = vadd.f32 %v2948, 1.0
        %v2950 = vrcp.pop %v2949
        %v2951 = vmul.f32 1.0, %v2950
        %v2952 = vtanh.pop %v2945
        %v2953 = vmul.f32 %v2951, 0.0
        %2955 = vrot.lane.b32.xlu0 %v2952, 80
        %v2956 = vpop.permute.xlu0 %2955
        %v2958 = vmul.f32 %v2951, %v2956
        %2960 = vrot.lane.b32.xlu0 %v2958, 16
        %v2961 = vpop.permute.xlu0 %2960
        %v2963 = vadd.f32 %v2953, %v2961
        %v2964 = vtanh.pop %v2963
        %2966 = vrot.lane.b32.xlu0 %v2964, 16
        %v2967 = vpop.permute.xlu0 %2966
        %v2969 = vmul.f32 %v2951, %v2967
        %2971 = vrot.lane.b32.xlu0 %v2969, 96
        %v2972 = vpop.permute.xlu0 %2971
        %2974 = vst.msk [vmem:[#allocation3] sm:$0x1] %vm1147, %v2972
        %v2975 = vld [vmem:[#allocation2 + $0x1] sm:$0x1]
        %v2976 = vsel %vm817, %v2972, 0
        %2978 = vmatprep.subr.mxu0 0.0
        %2979 = vmatpush1.msra.mxu0 0.0
        %2980 = vmatprep.subr.mxu0 0.0
        %2981 = vmatpush1.msra.mxu0 0.0
        %2982 = vmatprep.subr.mxu0 0.0
        %2983 = vmatpush1.msra.mxu0 0.0
        %2984 = vmatprep.subr.mxu0 0.0
        %2985 = vmatpush1.msra.mxu0 0.0
        %2986 = vmatprep.subr.mxu0 0.0
        %2987 = vmatpush1.msra.mxu0 0.0
        %2988 = vmatprep.subr.mxu0 0.0
        %2989 = vmatpush1.msra.mxu0 0.0
        %2990 = vmatprep.subr.mxu0 0.0
        %2991 = vmatpush1.msra.mxu0 0.0
        %2992 = vmatprep.subr.mxu0 0.0
        %2993 = vmatpush1.msra.mxu0 0.0
        %2994 = vmatprep.subr.mxu0 0.0
        %2995 = vmatpush1.msra.mxu0 0.0
        %2996 = vmatprep.subr.mxu0 0.0
        %2997 = vmatpush1.msra.mxu0 0.0
        %2998 = vmatprep.subr.mxu0 0.0
        %2999 = vmatpush1.msra.mxu0 0.0
        %3000 = vmatprep.subr.mxu0 0.0
        %3001 = vmatpush1.msra.mxu0 0.0
        %3002 = vmatprep.subr.mxu0 0.0
        %3003 = vmatpush1.msra.mxu0 0.0
        %3004 = vmatprep.subr.mxu0 0.0
        %3005 = vmatpush1.msra.mxu0 0.0
        %3006 = vmatprep.subr.mxu0 0.0
        %3007 = vmatpush1.msra.mxu0 %v2789
        %3008 = vmatprep.subr.mxu0 0.0
        %3009 = vmatpush1.msra.mxu0 %v2788
        %3010 = vmatprep.subr.mxu0 0.0
        %3011 = vmatpush2.msra.mxu0 0.0
        %3012 = vmatprep.subr.mxu0 0.0
        %3013 = vmatpush2.msra.mxu0 0.0
        %3014 = vmatprep.subr.mxu0 0.0
        %3015 = vmatpush2.msra.mxu0 0.0
        %3016 = vmatprep.subr.mxu0 0.0
        %3017 = vmatpush2.msra.mxu0 0.0
        %3018 = vmatprep.subr.mxu0 0.0
        %3019 = vmatpush2.msra.mxu0 0.0
        %3020 = vmatprep.subr.mxu0 0.0
        %3021 = vmatpush2.msra.mxu0 0.0
        %3022 = vmatprep.subr.mxu0 0.0
        %3023 = vmatpush2.msra.mxu0 0.0
        %3024 = vmatprep.subr.mxu0 0.0
        %3025 = vmatpush2.msra.mxu0 0.0
        %3026 = vmatprep.subr.mxu0 0.0
        %3027 = vmatpush2.msra.mxu0 0.0
        %3028 = vmatprep.subr.mxu0 0.0
        %3029 = vmatpush2.msra.mxu0 0.0
        %3030 = vmatprep.subr.mxu0 0.0
        %3031 = vmatpush2.msra.mxu0 0.0
        %3032 = vmatprep.subr.mxu0 0.0
        %3033 = vmatpush2.msra.mxu0 0.0
        %3034 = vmatprep.subr.mxu0 0.0
        %3035 = vmatpush2.msra.mxu0 0.0
        %3036 = vmatprep.subr.mxu0 0.0
        %3037 = vmatpush2.msra.mxu0 0.0
        %3038 = vmatprep.subr.mxu0 0.0
        %3039 = vmatpush2.msra.mxu0 0.0
        %3040 = vmatprep.subr.mxu0 0.0
        %3041 = vmatpush2.msra.mxu0 0.0
        %3042 = vmatprep.mubr.f32.mxu0 0.0
        %3043 = vmatmul.mubr.f32.gmra.mxu0 %v2976
        %v3044 = vpop.f32.mrf.mxu0
        %v3045 = vadd.f32 0.0, %v3044
        %v3046 = vpop.f32.mrf.mxu0
        %3047 = vdwg.mxu0
        %v3048 = vadd.f32 %v2975, %v3045
        %v3049 = vxor.u32 %v3048, 2147483648
        %v3050 = vmul.f32 %v3049, 1.442695
        %v3051 = vpow.pop %v3050
        %v3052 = vadd.f32 %v3051, 1.0
        %v3053 = vrcp.pop %v3052
        %v3054 = vmul.f32 1.0, %v3053
        %v3055 = vtanh.pop %v3048
        %v3056 = vmul.f32 %v3054, %v2963
        %3058 = vrot.lane.b32.xlu0 %v3055, 80
        %v3059 = vpop.permute.xlu0 %3058
        %v3061 = vmul.f32 %v3054, %v3059
        %3063 = vrot.lane.b32.xlu0 %v3061, 16
        %v3064 = vpop.permute.xlu0 %3063
        %v3066 = vadd.f32 %v3056, %v3064
        %v3067 = vtanh.pop %v3066
        %3069 = vrot.lane.b32.xlu0 %v3067, 16
        %v3070 = vpop.permute.xlu0 %3069
        %v3072 = vmul.f32 %v3054, %v3070
        %3074 = vrot.lane.b32.xlu0 %v3072, 96
        %v3075 = vpop.permute.xlu0 %3074
        %3077 = vst.msk [vmem:[#allocation3 + $0x1] sm:$0x1] %vm1147, %v3075
        %v3078 = vld [vmem:[#allocation2 + $0x2] sm:$0x1]
        %v3079 = vsel %vm817, %v3075, 0
        %3081 = vmatprep.subr.mxu0 0.0
        %3082 = vmatpush1.msra.mxu0 0.0
        %3083 = vmatprep.subr.mxu0 0.0
        %3084 = vmatpush1.msra.mxu0 0.0
        %3085 = vmatprep.subr.mxu0 0.0
        %3086 = vmatpush1.msra.mxu0 0.0
        %3087 = vmatprep.subr.mxu0 0.0
        %3088 = vmatpush1.msra.mxu0 0.0
        %3089 = vmatprep.subr.mxu0 0.0
        %3090 = vmatpush1.msra.mxu0 0.0
        %3091 = vmatprep.subr.mxu0 0.0
        %3092 = vmatpush1.msra.mxu0 0.0
        %3093 = vmatprep.subr.mxu0 0.0
        %3094 = vmatpush1.msra.mxu0 0.0
        %3095 = vmatprep.subr.mxu0 0.0
        %3096 = vmatpush1.msra.mxu0 0.0
        %3097 = vmatprep.subr.mxu0 0.0
        %3098 = vmatpush1.msra.mxu0 0.0
        %3099 = vmatprep.subr.mxu0 0.0
        %3100 = vmatpush1.msra.mxu0 0.0
        %3101 = vmatprep.subr.mxu0 0.0
        %3102 = vmatpush1.msra.mxu0 0.0
        %3103 = vmatprep.subr.mxu0 0.0
        %3104 = vmatpush1.msra.mxu0 0.0
        %3105 = vmatprep.subr.mxu0 0.0
        %3106 = vmatpush1.msra.mxu0 0.0
        %3107 = vmatprep.subr.mxu0 0.0
        %3108 = vmatpush1.msra.mxu0 0.0
        %3109 = vmatprep.subr.mxu0 0.0
        %3110 = vmatpush1.msra.mxu0 %v2789
        %3111 = vmatprep.subr.mxu0 0.0
        %3112 = vmatpush1.msra.mxu0 %v2788
        %3113 = vmatprep.subr.mxu0 0.0
        %3114 = vmatpush2.msra.mxu0 0.0
        %3115 = vmatprep.subr.mxu0 0.0
        %3116 = vmatpush2.msra.mxu0 0.0
        %3117 = vmatprep.subr.mxu0 0.0
        %3118 = vmatpush2.msra.mxu0 0.0
        %3119 = vmatprep.subr.mxu0 0.0
        %3120 = vmatpush2.msra.mxu0 0.0
        %3121 = vmatprep.subr.mxu0 0.0
        %3122 = vmatpush2.msra.mxu0 0.0
        %3123 = vmatprep.subr.mxu0 0.0
        %3124 = vmatpush2.msra.mxu0 0.0
        %3125 = vmatprep.subr.mxu0 0.0
        %3126 = vmatpush2.msra.mxu0 0.0
        %3127 = vmatprep.subr.mxu0 0.0
        %3128 = vmatpush2.msra.mxu0 0.0
        %3129 = vmatprep.subr.mxu0 0.0
        %3130 = vmatpush2.msra.mxu0 0.0
        %3131 = vmatprep.subr.mxu0 0.0
        %3132 = vmatpush2.msra.mxu0 0.0
        %3133 = vmatprep.subr.mxu0 0.0
        %3134 = vmatpush2.msra.mxu0 0.0
        %3135 = vmatprep.subr.mxu0 0.0
        %3136 = vmatpush2.msra.mxu0 0.0
        %3137 = vmatprep.subr.mxu0 0.0
        %3138 = vmatpush2.msra.mxu0 0.0
        %3139 = vmatprep.subr.mxu0 0.0
        %3140 = vmatpush2.msra.mxu0 0.0
        %3141 = vmatprep.subr.mxu0 0.0
        %3142 = vmatpush2.msra.mxu0 0.0
        %3143 = vmatprep.subr.mxu0 0.0
        %3144 = vmatpush2.msra.mxu0 0.0
        %3145 = vmatprep.mubr.f32.mxu0 0.0
        %3146 = vmatmul.mubr.f32.gmra.mxu0 %v3079
        %v3147 = vpop.f32.mrf.mxu0
        %v3148 = vadd.f32 0.0, %v3147
        %v3149 = vpop.f32.mrf.mxu0
        %3150 = vdwg.mxu0
        %v3151 = vadd.f32 %v3078, %v3148
        %v3152 = vxor.u32 %v3151, 2147483648
        %v3153 = vmul.f32 %v3152, 1.442695
        %v3154 = vpow.pop %v3153
        %v3155 = vadd.f32 %v3154, 1.0
        %v3156 = vrcp.pop %v3155
        %v3157 = vmul.f32 1.0, %v3156
        %v3158 = vtanh.pop %v3151
        %v3159 = vmul.f32 %v3157, %v3066
        %3161 = vrot.lane.b32.xlu0 %v3158, 80
        %v3162 = vpop.permute.xlu0 %3161
        %v3164 = vmul.f32 %v3157, %v3162
        %3166 = vrot.lane.b32.xlu0 %v3164, 16
        %v3167 = vpop.permute.xlu0 %3166
        %v3169 = vadd.f32 %v3159, %v3167
        %v3170 = vtanh.pop %v3169
        %3172 = vrot.lane.b32.xlu0 %v3170, 16
        %v3173 = vpop.permute.xlu0 %3172
        %v3175 = vmul.f32 %v3157, %v3173
        %3177 = vrot.lane.b32.xlu0 %v3175, 96
        %v3178 = vpop.permute.xlu0 %3177
        %3180 = vst.msk [vmem:[#allocation3 + $0x2] sm:$0x1] %vm1147, %v3178
        %v3181 = vld [vmem:[#allocation2 + $0x3] sm:$0x1]
        %v3182 = vsel %vm817, %v3178, 0
        %3184 = vmatprep.subr.mxu0 0.0
        %3185 = vmatpush1.msra.mxu0 0.0
        %3186 = vmatprep.subr.mxu0 0.0
        %3187 = vmatpush1.msra.mxu0 0.0
        %3188 = vmatprep.subr.mxu0 0.0
        %3189 = vmatpush1.msra.mxu0 0.0
        %3190 = vmatprep.subr.mxu0 0.0
        %3191 = vmatpush1.msra.mxu0 0.0
        %3192 = vmatprep.subr.mxu0 0.0
        %3193 = vmatpush1.msra.mxu0 0.0
        %3194 = vmatprep.subr.mxu0 0.0
        %3195 = vmatpush1.msra.mxu0 0.0
        %3196 = vmatprep.subr.mxu0 0.0
        %3197 = vmatpush1.msra.mxu0 0.0
        %3198 = vmatprep.subr.mxu0 0.0
        %3199 = vmatpush1.msra.mxu0 0.0
        %3200 = vmatprep.subr.mxu0 0.0
        %3201 = vmatpush1.msra.mxu0 0.0
        %3202 = vmatprep.subr.mxu0 0.0
        %3203 = vmatpush1.msra.mxu0 0.0
        %3204 = vmatprep.subr.mxu0 0.0
        %3205 = vmatpush1.msra.mxu0 0.0
        %3206 = vmatprep.subr.mxu0 0.0
        %3207 = vmatpush1.msra.mxu0 0.0
        %3208 = vmatprep.subr.mxu0 0.0
        %3209 = vmatpush1.msra.mxu0 0.0
        %3210 = vmatprep.subr.mxu0 0.0
        %3211 = vmatpush1.msra.mxu0 0.0
        %3212 = vmatprep.subr.mxu0 0.0
        %3213 = vmatpush1.msra.mxu0 %v2789
        %3214 = vmatprep.subr.mxu0 0.0
        %3215 = vmatpush1.msra.mxu0 %v2788
        %3216 = vmatprep.subr.mxu0 0.0
        %3217 = vmatpush2.msra.mxu0 0.0
        %3218 = vmatprep.subr.mxu0 0.0
        %3219 = vmatpush2.msra.mxu0 0.0
        %3220 = vmatprep.subr.mxu0 0.0
        %3221 = vmatpush2.msra.mxu0 0.0
        %3222 = vmatprep.subr.mxu0 0.0
        %3223 = vmatpush2.msra.mxu0 0.0
        %3224 = vmatprep.subr.mxu0 0.0
        %3225 = vmatpush2.msra.mxu0 0.0
        %3226 = vmatprep.subr.mxu0 0.0
        %3227 = vmatpush2.msra.mxu0 0.0
        %3228 = vmatprep.subr.mxu0 0.0
        %3229 = vmatpush2.msra.mxu0 0.0
        %3230 = vmatprep.subr.mxu0 0.0
        %3231 = vmatpush2.msra.mxu0 0.0
        %3232 = vmatprep.subr.mxu0 0.0
        %3233 = vmatpush2.msra.mxu0 0.0
        %3234 = vmatprep.subr.mxu0 0.0
        %3235 = vmatpush2.msra.mxu0 0.0
        %3236 = vmatprep.subr.mxu0 0.0
        %3237 = vmatpush2.msra.mxu0 0.0
        %3238 = vmatprep.subr.mxu0 0.0
        %3239 = vmatpush2.msra.mxu0 0.0
        %3240 = vmatprep.subr.mxu0 0.0
        %3241 = vmatpush2.msra.mxu0 0.0
        %3242 = vmatprep.subr.mxu0 0.0
        %3243 = vmatpush2.msra.mxu0 0.0
        %3244 = vmatprep.subr.mxu0 0.0
        %3245 = vmatpush2.msra.mxu0 0.0
        %3246 = vmatprep.subr.mxu0 0.0
        %3247 = vmatpush2.msra.mxu0 0.0
        %3248 = vmatprep.mubr.f32.mxu0 0.0
        %3249 = vmatmul.mubr.f32.gmra.mxu0 %v3182
        %v3250 = vpop.f32.mrf.mxu0
        %v3251 = vadd.f32 0.0, %v3250
        %v3252 = vpop.f32.mrf.mxu0
        %3253 = vdwg.mxu0
        %v3254 = vadd.f32 %v3181, %v3251
        %v3255 = vxor.u32 %v3254, 2147483648
        %v3256 = vmul.f32 %v3255, 1.442695
        %v3257 = vpow.pop %v3256
        %v3258 = vadd.f32 %v3257, 1.0
        %v3259 = vrcp.pop %v3258
        %v3260 = vmul.f32 1.0, %v3259
        %v3261 = vtanh.pop %v3254
        %v3262 = vmul.f32 %v3260, %v3169
        %3264 = vrot.lane.b32.xlu0 %v3261, 80
        %v3265 = vpop.permute.xlu0 %3264
        %v3267 = vmul.f32 %v3260, %v3265
        %3269 = vrot.lane.b32.xlu0 %v3267, 16
        %v3270 = vpop.permute.xlu0 %3269
        %v3272 = vadd.f32 %v3262, %v3270
        %v3273 = vtanh.pop %v3272
        %3275 = vrot.lane.b32.xlu0 %v3273, 16
        %v3276 = vpop.permute.xlu0 %3275
        %v3278 = vmul.f32 %v3260, %v3276
        %3280 = vrot.lane.b32.xlu0 %v3278, 96
        %v3281 = vpop.permute.xlu0 %3280
        %3283 = vst.msk [vmem:[#allocation3 + $0x3] sm:$0x1] %vm1147, %v3281
        %v3284 = vld [vmem:[#allocation2 + $0x4] sm:$0x1]
        %v3285 = vsel %vm817, %v3281, 0
        %3287 = vmatprep.subr.mxu0 0.0
        %3288 = vmatpush1.msra.mxu0 0.0
        %3289 = vmatprep.subr.mxu0 0.0
        %3290 = vmatpush1.msra.mxu0 0.0
        %3291 = vmatprep.subr.mxu0 0.0
        %3292 = vmatpush1.msra.mxu0 0.0
        %3293 = vmatprep.subr.mxu0 0.0
        %3294 = vmatpush1.msra.mxu0 0.0
        %3295 = vmatprep.subr.mxu0 0.0
        %3296 = vmatpush1.msra.mxu0 0.0
        %3297 = vmatprep.subr.mxu0 0.0
        %3298 = vmatpush1.msra.mxu0 0.0
        %3299 = vmatprep.subr.mxu0 0.0
        %3300 = vmatpush1.msra.mxu0 0.0
        %3301 = vmatprep.subr.mxu0 0.0
        %3302 = vmatpush1.msra.mxu0 0.0
        %3303 = vmatprep.subr.mxu0 0.0
        %3304 = vmatpush1.msra.mxu0 0.0
        %3305 = vmatprep.subr.mxu0 0.0
        %3306 = vmatpush1.msra.mxu0 0.0
        %3307 = vmatprep.subr.mxu0 0.0
        %3308 = vmatpush1.msra.mxu0 0.0
        %3309 = vmatprep.subr.mxu0 0.0
        %3310 = vmatpush1.msra.mxu0 0.0
        %3311 = vmatprep.subr.mxu0 0.0
        %3312 = vmatpush1.msra.mxu0 0.0
        %3313 = vmatprep.subr.mxu0 0.0
        %3314 = vmatpush1.msra.mxu0 0.0
        %3315 = vmatprep.subr.mxu0 0.0
        %3316 = vmatpush1.msra.mxu0 %v2789
        %3317 = vmatprep.subr.mxu0 0.0
        %3318 = vmatpush1.msra.mxu0 %v2788
        %3319 = vmatprep.subr.mxu0 0.0
        %3320 = vmatpush2.msra.mxu0 0.0
        %3321 = vmatprep.subr.mxu0 0.0
        %3322 = vmatpush2.msra.mxu0 0.0
        %3323 = vmatprep.subr.mxu0 0.0
        %3324 = vmatpush2.msra.mxu0 0.0
        %3325 = vmatprep.subr.mxu0 0.0
        %3326 = vmatpush2.msra.mxu0 0.0
        %3327 = vmatprep.subr.mxu0 0.0
        %3328 = vmatpush2.msra.mxu0 0.0
        %3329 = vmatprep.subr.mxu0 0.0
        %3330 = vmatpush2.msra.mxu0 0.0
        %3331 = vmatprep.subr.mxu0 0.0
        %3332 = vmatpush2.msra.mxu0 0.0
        %3333 = vmatprep.subr.mxu0 0.0
        %3334 = vmatpush2.msra.mxu0 0.0
        %3335 = vmatprep.subr.mxu0 0.0
        %3336 = vmatpush2.msra.mxu0 0.0
        %3337 = vmatprep.subr.mxu0 0.0
        %3338 = vmatpush2.msra.mxu0 0.0
        %3339 = vmatprep.subr.mxu0 0.0
        %3340 = vmatpush2.msra.mxu0 0.0
        %3341 = vmatprep.subr.mxu0 0.0
        %3342 = vmatpush2.msra.mxu0 0.0
        %3343 = vmatprep.subr.mxu0 0.0
        %3344 = vmatpush2.msra.mxu0 0.0
        %3345 = vmatprep.subr.mxu0 0.0
        %3346 = vmatpush2.msra.mxu0 0.0
        %3347 = vmatprep.subr.mxu0 0.0
        %3348 = vmatpush2.msra.mxu0 0.0
        %3349 = vmatprep.subr.mxu0 0.0
        %3350 = vmatpush2.msra.mxu0 0.0
        %3351 = vmatprep.mubr.f32.mxu0 0.0
        %3352 = vmatmul.mubr.f32.gmra.mxu0 %v3285
        %v3353 = vpop.f32.mrf.mxu0
        %v3354 = vadd.f32 0.0, %v3353
        %v3355 = vpop.f32.mrf.mxu0
        %3356 = vdwg.mxu0
        %v3357 = vadd.f32 %v3284, %v3354
        %v3358 = vxor.u32 %v3357, 2147483648
        %v3359 = vmul.f32 %v3358, 1.442695
        %v3360 = vpow.pop %v3359
        %v3361 = vadd.f32 %v3360, 1.0
        %v3362 = vrcp.pop %v3361
        %v3363 = vmul.f32 1.0, %v3362
        %v3364 = vtanh.pop %v3357
        %v3365 = vmul.f32 %v3363, %v3272
        %3367 = vrot.lane.b32.xlu0 %v3364, 80
        %v3368 = vpop.permute.xlu0 %3367
        %v3370 = vmul.f32 %v3363, %v3368
        %3372 = vrot.lane.b32.xlu0 %v3370, 16
        %v3373 = vpop.permute.xlu0 %3372
        %v3375 = vadd.f32 %v3365, %v3373
        %v3376 = vtanh.pop %v3375
        %3378 = vrot.lane.b32.xlu0 %v3376, 16
        %v3379 = vpop.permute.xlu0 %3378
        %v3381 = vmul.f32 %v3363, %v3379
        %3383 = vrot.lane.b32.xlu0 %v3381, 96
        %v3384 = vpop.permute.xlu0 %3383
        %3386 = vst.msk [vmem:[#allocation3 + $0x4] sm:$0x1] %vm1147, %v3384
        %v3387 = vld [vmem:[#allocation2 + $0x5] sm:$0x1]
        %v3388 = vsel %vm817, %v3384, 0
        %3390 = vmatprep.subr.mxu0 0.0
        %3391 = vmatpush1.msra.mxu0 0.0
        %3392 = vmatprep.subr.mxu0 0.0
        %3393 = vmatpush1.msra.mxu0 0.0
        %3394 = vmatprep.subr.mxu0 0.0
        %3395 = vmatpush1.msra.mxu0 0.0
        %3396 = vmatprep.subr.mxu0 0.0
        %3397 = vmatpush1.msra.mxu0 0.0
        %3398 = vmatprep.subr.mxu0 0.0
        %3399 = vmatpush1.msra.mxu0 0.0
        %3400 = vmatprep.subr.mxu0 0.0
        %3401 = vmatpush1.msra.mxu0 0.0
        %3402 = vmatprep.subr.mxu0 0.0
        %3403 = vmatpush1.msra.mxu0 0.0
        %3404 = vmatprep.subr.mxu0 0.0
        %3405 = vmatpush1.msra.mxu0 0.0
        %3406 = vmatprep.subr.mxu0 0.0
        %3407 = vmatpush1.msra.mxu0 0.0
        %3408 = vmatprep.subr.mxu0 0.0
        %3409 = vmatpush1.msra.mxu0 0.0
        %3410 = vmatprep.subr.mxu0 0.0
        %3411 = vmatpush1.msra.mxu0 0.0
        %3412 = vmatprep.subr.mxu0 0.0
        %3413 = vmatpush1.msra.mxu0 0.0
        %3414 = vmatprep.subr.mxu0 0.0
        %3415 = vmatpush1.msra.mxu0 0.0
        %3416 = vmatprep.subr.mxu0 0.0
        %3417 = vmatpush1.msra.mxu0 0.0
        %3418 = vmatprep.subr.mxu0 0.0
        %3419 = vmatpush1.msra.mxu0 %v2789
        %3420 = vmatprep.subr.mxu0 0.0
        %3421 = vmatpush1.msra.mxu0 %v2788
        %3422 = vmatprep.subr.mxu0 0.0
        %3423 = vmatpush2.msra.mxu0 0.0
        %3424 = vmatprep.subr.mxu0 0.0
        %3425 = vmatpush2.msra.mxu0 0.0
        %3426 = vmatprep.subr.mxu0 0.0
        %3427 = vmatpush2.msra.mxu0 0.0
        %3428 = vmatprep.subr.mxu0 0.0
        %3429 = vmatpush2.msra.mxu0 0.0
        %3430 = vmatprep.subr.mxu0 0.0
        %3431 = vmatpush2.msra.mxu0 0.0
        %3432 = vmatprep.subr.mxu0 0.0
        %3433 = vmatpush2.msra.mxu0 0.0
        %3434 = vmatprep.subr.mxu0 0.0
        %3435 = vmatpush2.msra.mxu0 0.0
        %3436 = vmatprep.subr.mxu0 0.0
        %3437 = vmatpush2.msra.mxu0 0.0
        %3438 = vmatprep.subr.mxu0 0.0
        %3439 = vmatpush2.msra.mxu0 0.0
        %3440 = vmatprep.subr.mxu0 0.0
        %3441 = vmatpush2.msra.mxu0 0.0
        %3442 = vmatprep.subr.mxu0 0.0
        %3443 = vmatpush2.msra.mxu0 0.0
        %3444 = vmatprep.subr.mxu0 0.0
        %3445 = vmatpush2.msra.mxu0 0.0
        %3446 = vmatprep.subr.mxu0 0.0
        %3447 = vmatpush2.msra.mxu0 0.0
        %3448 = vmatprep.subr.mxu0 0.0
        %3449 = vmatpush2.msra.mxu0 0.0
        %3450 = vmatprep.subr.mxu0 0.0
        %3451 = vmatpush2.msra.mxu0 0.0
        %3452 = vmatprep.subr.mxu0 0.0
        %3453 = vmatpush2.msra.mxu0 0.0
        %3454 = vmatprep.mubr.f32.mxu0 0.0
        %3455 = vmatmul.mubr.f32.gmra.mxu0 %v3388
        %v3456 = vpop.f32.mrf.mxu0
        %v3457 = vadd.f32 0.0, %v3456
        %v3458 = vpop.f32.mrf.mxu0
        %3459 = vdwg.mxu0
        %v3460 = vadd.f32 %v3387, %v3457
        %v3461 = vxor.u32 %v3460, 2147483648
        %v3462 = vmul.f32 %v3461, 1.442695
        %v3463 = vpow.pop %v3462
        %v3464 = vadd.f32 %v3463, 1.0
        %v3465 = vrcp.pop %v3464
        %v3466 = vmul.f32 1.0, %v3465
        %v3467 = vtanh.pop %v3460
        %v3468 = vmul.f32 %v3466, %v3375
        %3470 = vrot.lane.b32.xlu0 %v3467, 80
        %v3471 = vpop.permute.xlu0 %3470
        %v3473 = vmul.f32 %v3466, %v3471
        %3475 = vrot.lane.b32.xlu0 %v3473, 16
        %v3476 = vpop.permute.xlu0 %3475
        %v3478 = vadd.f32 %v3468, %v3476
        %v3479 = vtanh.pop %v3478
        %3481 = vrot.lane.b32.xlu0 %v3479, 16
        %v3482 = vpop.permute.xlu0 %3481
        %v3484 = vmul.f32 %v3466, %v3482
        %3486 = vrot.lane.b32.xlu0 %v3484, 96
        %v3487 = vpop.permute.xlu0 %3486
        %3489 = vst.msk [vmem:[#allocation3 + $0x5] sm:$0x1] %vm1147, %v3487
        %v3490 = vld [vmem:[#allocation2 + $0x6] sm:$0x1]
        %v3491 = vsel %vm817, %v3487, 0
        %3493 = vmatprep.subr.mxu0 0.0
        %3494 = vmatpush1.msra.mxu0 0.0
        %3495 = vmatprep.subr.mxu0 0.0
        %3496 = vmatpush1.msra.mxu0 0.0
        %3497 = vmatprep.subr.mxu0 0.0
        %3498 = vmatpush1.msra.mxu0 0.0
        %3499 = vmatprep.subr.mxu0 0.0
        %3500 = vmatpush1.msra.mxu0 0.0
        %3501 = vmatprep.subr.mxu0 0.0
        %3502 = vmatpush1.msra.mxu0 0.0
        %3503 = vmatprep.subr.mxu0 0.0
        %3504 = vmatpush1.msra.mxu0 0.0
        %3505 = vmatprep.subr.mxu0 0.0
        %3506 = vmatpush1.msra.mxu0 0.0
        %3507 = vmatprep.subr.mxu0 0.0
        %3508 = vmatpush1.msra.mxu0 0.0
        %3509 = vmatprep.subr.mxu0 0.0
        %3510 = vmatpush1.msra.mxu0 0.0
        %3511 = vmatprep.subr.mxu0 0.0
        %3512 = vmatpush1.msra.mxu0 0.0
        %3513 = vmatprep.subr.mxu0 0.0
        %3514 = vmatpush1.msra.mxu0 0.0
        %3515 = vmatprep.subr.mxu0 0.0
        %3516 = vmatpush1.msra.mxu0 0.0
        %3517 = vmatprep.subr.mxu0 0.0
        %3518 = vmatpush1.msra.mxu0 0.0
        %3519 = vmatprep.subr.mxu0 0.0
        %3520 = vmatpush1.msra.mxu0 0.0
        %3521 = vmatprep.subr.mxu0 0.0
        %3522 = vmatpush1.msra.mxu0 %v2789
        %3523 = vmatprep.subr.mxu0 0.0
        %3524 = vmatpush1.msra.mxu0 %v2788
        %3525 = vmatprep.subr.mxu0 0.0
        %3526 = vmatpush2.msra.mxu0 0.0
        %3527 = vmatprep.subr.mxu0 0.0
        %3528 = vmatpush2.msra.mxu0 0.0
        %3529 = vmatprep.subr.mxu0 0.0
        %3530 = vmatpush2.msra.mxu0 0.0
        %3531 = vmatprep.subr.mxu0 0.0
        %3532 = vmatpush2.msra.mxu0 0.0
        %3533 = vmatprep.subr.mxu0 0.0
        %3534 = vmatpush2.msra.mxu0 0.0
        %3535 = vmatprep.subr.mxu0 0.0
        %3536 = vmatpush2.msra.mxu0 0.0
        %3537 = vmatprep.subr.mxu0 0.0
        %3538 = vmatpush2.msra.mxu0 0.0
        %3539 = vmatprep.subr.mxu0 0.0
        %3540 = vmatpush2.msra.mxu0 0.0
        %3541 = vmatprep.subr.mxu0 0.0
        %3542 = vmatpush2.msra.mxu0 0.0
        %3543 = vmatprep.subr.mxu0 0.0
        %3544 = vmatpush2.msra.mxu0 0.0
        %3545 = vmatprep.subr.mxu0 0.0
        %3546 = vmatpush2.msra.mxu0 0.0
        %3547 = vmatprep.subr.mxu0 0.0
        %3548 = vmatpush2.msra.mxu0 0.0
        %3549 = vmatprep.subr.mxu0 0.0
        %3550 = vmatpush2.msra.mxu0 0.0
        %3551 = vmatprep.subr.mxu0 0.0
        %3552 = vmatpush2.msra.mxu0 0.0
        %3553 = vmatprep.subr.mxu0 0.0
        %3554 = vmatpush2.msra.mxu0 0.0
        %3555 = vmatprep.subr.mxu0 0.0
        %3556 = vmatpush2.msra.mxu0 0.0
        %3557 = vmatprep.mubr.f32.mxu0 0.0
        %3558 = vmatmul.mubr.f32.gmra.mxu0 %v3491
        %v3559 = vpop.f32.mrf.mxu0
        %v3560 = vadd.f32 0.0, %v3559
        %v3561 = vpop.f32.mrf.mxu0
        %3562 = vdwg.mxu0
        %v3563 = vadd.f32 %v3490, %v3560
        %v3564 = vxor.u32 %v3563, 2147483648
        %v3565 = vmul.f32 %v3564, 1.442695
        %v3566 = vpow.pop %v3565
        %v3567 = vadd.f32 %v3566, 1.0
        %v3568 = vrcp.pop %v3567
        %v3569 = vmul.f32 1.0, %v3568
        %v3570 = vtanh.pop %v3563
        %v3571 = vmul.f32 %v3569, %v3478
        %3573 = vrot.lane.b32.xlu0 %v3570, 80
        %v3574 = vpop.permute.xlu0 %3573
        %v3576 = vmul.f32 %v3569, %v3574
        %3578 = vrot.lane.b32.xlu0 %v3576, 16
        %v3579 = vpop.permute.xlu0 %3578
        %v3581 = vadd.f32 %v3571, %v3579
        %v3582 = vtanh.pop %v3581
        %3584 = vrot.lane.b32.xlu0 %v3582, 16
        %v3585 = vpop.permute.xlu0 %3584
        %v3587 = vmul.f32 %v3569, %v3585
        %3589 = vrot.lane.b32.xlu0 %v3587, 96
        %v3590 = vpop.permute.xlu0 %3589
        %3592 = vst.msk [vmem:[#allocation3 + $0x6] sm:$0x1] %vm1147, %v3590
        %v3593 = vld [vmem:[#allocation2 + $0x7] sm:$0x1]
        %v3594 = vsel %vm817, %v3590, 0
        %3596 = vmatprep.subr.mxu0 0.0
        %3597 = vmatpush1.msra.mxu0 0.0
        %3598 = vmatprep.subr.mxu0 0.0
        %3599 = vmatpush1.msra.mxu0 0.0
        %3600 = vmatprep.subr.mxu0 0.0
        %3601 = vmatpush1.msra.mxu0 0.0
        %3602 = vmatprep.subr.mxu0 0.0
        %3603 = vmatpush1.msra.mxu0 0.0
        %3604 = vmatprep.subr.mxu0 0.0
        %3605 = vmatpush1.msra.mxu0 0.0
        %3606 = vmatprep.subr.mxu0 0.0
        %3607 = vmatpush1.msra.mxu0 0.0
        %3608 = vmatprep.subr.mxu0 0.0
        %3609 = vmatpush1.msra.mxu0 0.0
        %3610 = vmatprep.subr.mxu0 0.0
        %3611 = vmatpush1.msra.mxu0 0.0
        %3612 = vmatprep.subr.mxu0 0.0
        %3613 = vmatpush1.msra.mxu0 0.0
        %3614 = vmatprep.subr.mxu0 0.0
        %3615 = vmatpush1.msra.mxu0 0.0
        %3616 = vmatprep.subr.mxu0 0.0
        %3617 = vmatpush1.msra.mxu0 0.0
        %3618 = vmatprep.subr.mxu0 0.0
        %3619 = vmatpush1.msra.mxu0 0.0
        %3620 = vmatprep.subr.mxu0 0.0
        %3621 = vmatpush1.msra.mxu0 0.0
        %3622 = vmatprep.subr.mxu0 0.0
        %3623 = vmatpush1.msra.mxu0 0.0
        %3624 = vmatprep.subr.mxu0 0.0
        %3625 = vmatpush1.msra.mxu0 %v2789
        %3626 = vmatprep.subr.mxu0 0.0
        %3627 = vmatpush1.msra.mxu0 %v2788
        %3628 = vmatprep.subr.mxu0 0.0
        %3629 = vmatpush2.msra.mxu0 0.0
        %3630 = vmatprep.subr.mxu0 0.0
        %3631 = vmatpush2.msra.mxu0 0.0
        %3632 = vmatprep.subr.mxu0 0.0
        %3633 = vmatpush2.msra.mxu0 0.0
        %3634 = vmatprep.subr.mxu0 0.0
        %3635 = vmatpush2.msra.mxu0 0.0
        %3636 = vmatprep.subr.mxu0 0.0
        %3637 = vmatpush2.msra.mxu0 0.0
        %3638 = vmatprep.subr.mxu0 0.0
        %3639 = vmatpush2.msra.mxu0 0.0
        %3640 = vmatprep.subr.mxu0 0.0
        %3641 = vmatpush2.msra.mxu0 0.0
        %3642 = vmatprep.subr.mxu0 0.0
        %3643 = vmatpush2.msra.mxu0 0.0
        %3644 = vmatprep.subr.mxu0 0.0
        %3645 = vmatpush2.msra.mxu0 0.0
        %3646 = vmatprep.subr.mxu0 0.0
        %3647 = vmatpush2.msra.mxu0 0.0
        %3648 = vmatprep.subr.mxu0 0.0
        %3649 = vmatpush2.msra.mxu0 0.0
        %3650 = vmatprep.subr.mxu0 0.0
        %3651 = vmatpush2.msra.mxu0 0.0
        %3652 = vmatprep.subr.mxu0 0.0
        %3653 = vmatpush2.msra.mxu0 0.0
        %3654 = vmatprep.subr.mxu0 0.0
        %3655 = vmatpush2.msra.mxu0 0.0
        %3656 = vmatprep.subr.mxu0 0.0
        %3657 = vmatpush2.msra.mxu0 0.0
        %3658 = vmatprep.subr.mxu0 0.0
        %3659 = vmatpush2.msra.mxu0 0.0
        %3660 = vmatprep.mubr.f32.mxu0 0.0
        %3661 = vmatmul.mubr.f32.gmra.mxu0 %v3594
        %v3662 = vpop.f32.mrf.mxu0
        %v3663 = vadd.f32 0.0, %v3662
        %v3664 = vpop.f32.mrf.mxu0
        %3665 = vdwg.mxu0
        %v3666 = vadd.f32 %v3593, %v3663
        %v3667 = vxor.u32 %v3666, 2147483648
        %v3668 = vmul.f32 %v3667, 1.442695
        %v3669 = vpow.pop %v3668
        %v3670 = vadd.f32 %v3669, 1.0
        %v3671 = vrcp.pop %v3670
        %v3672 = vmul.f32 1.0, %v3671
        %v3673 = vtanh.pop %v3666
        %v3674 = vmul.f32 %v3672, %v3581
        %3676 = vrot.lane.b32.xlu0 %v3673, 80
        %v3677 = vpop.permute.xlu0 %3676
        %v3679 = vmul.f32 %v3672, %v3677
        %3681 = vrot.lane.b32.xlu0 %v3679, 16
        %v3682 = vpop.permute.xlu0 %3681
        %v3684 = vadd.f32 %v3674, %v3682
        %v3685 = vtanh.pop %v3684
        %3687 = vrot.lane.b32.xlu0 %v3685, 16
        %v3688 = vpop.permute.xlu0 %3687
        %v3690 = vmul.f32 %v3672, %v3688
        %3692 = vrot.lane.b32.xlu0 %v3690, 96
        %v3693 = vpop.permute.xlu0 %3692
        %3695 = vst.msk [vmem:[#allocation3 + $0x7] sm:$0x1] %vm1147, %v3693
        %v3696 = vld [vmem:[#allocation4 + $0x1f0] sm:$0xff]
        %v3697 = vld [vmem:[#allocation4 + $0x1f8] sm:$0xff]
        %v3698 = vld [vmem:[#allocation4 + $0x1d0] sm:$0xff]
        %v3699 = vld [vmem:[#allocation4 + $0x1d8] sm:$0xff]
        %v3700 = vld [vmem:[#allocation4 + $0x1e0] sm:$0xff]
        %v3701 = vld [vmem:[#allocation4 + $0x1e8] sm:$0xff]
        %v3702 = vld [vmem:[#allocation4 + $0x200] sm:$0x1]
        %v3703 = vlaneseq
        %v3704 = vshrl.u32 %v3703, 7
        %v3705 = vsub.s32 0, %v3704
        %v3706 = vrot.slane %v3702, %v3705
        %3707 = vmatprep.subr.mxu0 0.0
        %3708 = vmatpush1.msra.mxu0 0.0
        %3709 = vmatprep.subr.mxu0 0.0
        %3710 = vmatpush1.msra.mxu0 0.0
        %3711 = vmatprep.subr.mxu0 0.0
        %3712 = vmatpush1.msra.mxu0 0.0
        %3713 = vmatprep.subr.mxu0 0.0
        %3714 = vmatpush1.msra.mxu0 0.0
        %3715 = vmatprep.subr.mxu0 0.0
        %3716 = vmatpush1.msra.mxu0 0.0
        %3717 = vmatprep.subr.mxu0 0.0
        %3718 = vmatpush1.msra.mxu0 0.0
        %3719 = vmatprep.subr.mxu0 0.0
        %3720 = vmatpush1.msra.mxu0 0.0
        %3721 = vmatprep.subr.mxu0 0.0
        %3722 = vmatpush1.msra.mxu0 0.0
        %3723 = vmatprep.subr.mxu0 0.0
        %3724 = vmatpush1.msra.mxu0 0.0
        %3725 = vmatprep.subr.mxu0 0.0
        %3726 = vmatpush1.msra.mxu0 0.0
        %3727 = vmatprep.subr.mxu0 0.0
        %3728 = vmatpush1.msra.mxu0 0.0
        %3729 = vmatprep.subr.mxu0 0.0
        %3730 = vmatpush1.msra.mxu0 0.0
        %3731 = vmatprep.subr.mxu0 0.0
        %3732 = vmatpush1.msra.mxu0 %v3701
        %3733 = vmatprep.subr.mxu0 0.0
        %3734 = vmatpush1.msra.mxu0 %v3700
        %3735 = vmatprep.subr.mxu0 0.0
        %3736 = vmatpush1.msra.mxu0 %v3699
        %3737 = vmatprep.subr.mxu0 0.0
        %3738 = vmatpush1.msra.mxu0 %v3698
        %3739 = vmatprep.subr.mxu0 0.0
        %3740 = vmatpush2.msra.mxu0 0.0
        %3741 = vmatprep.subr.mxu0 0.0
        %3742 = vmatpush2.msra.mxu0 0.0
        %3743 = vmatprep.subr.mxu0 0.0
        %3744 = vmatpush2.msra.mxu0 0.0
        %3745 = vmatprep.subr.mxu0 0.0
        %3746 = vmatpush2.msra.mxu0 0.0
        %3747 = vmatprep.subr.mxu0 0.0
        %3748 = vmatpush2.msra.mxu0 0.0
        %3749 = vmatprep.subr.mxu0 0.0
        %3750 = vmatpush2.msra.mxu0 0.0
        %3751 = vmatprep.subr.mxu0 0.0
        %3752 = vmatpush2.msra.mxu0 0.0
        %3753 = vmatprep.subr.mxu0 0.0
        %3754 = vmatpush2.msra.mxu0 0.0
        %3755 = vmatprep.subr.mxu0 0.0
        %3756 = vmatpush2.msra.mxu0 0.0
        %3757 = vmatprep.subr.mxu0 0.0
        %3758 = vmatpush2.msra.mxu0 0.0
        %3759 = vmatprep.subr.mxu0 0.0
        %3760 = vmatpush2.msra.mxu0 0.0
        %3761 = vmatprep.subr.mxu0 0.0
        %3762 = vmatpush2.msra.mxu0 0.0
        %3763 = vmatprep.subr.mxu0 0.0
        %3764 = vmatpush2.msra.mxu0 0.0
        %3765 = vmatprep.subr.mxu0 0.0
        %3766 = vmatpush2.msra.mxu0 0.0
        %3767 = vmatprep.subr.mxu0 0.0
        %3768 = vmatpush2.msra.mxu0 0.0
        %3769 = vmatprep.subr.mxu0 0.0
        %3770 = vmatpush2.msra.mxu0 0.0
        %3771 = vmatprep.mubr.f32.mxu0 0.0
        %3772 = vmatmul.mubr.f32.gmra.mxu0 %v2801
        %v3773 = vpop.f32.mrf.mxu0
        %v3774 = vadd.f32 %v3706, %v3773
        %v3775 = vpop.f32.mrf.mxu0
        %3776 = vdwg.mxu0
        %3777 = vst.msk [vmem:[#allocation2] sm:$0xff] %vm300, %v3774
        %v3778 = vld [vmem:[#allocation2 + $0x7] sm:$0x1]
        %3779 = vmatprep.subr.mxu0 0.0
        %3780 = vmatpush1.msra.mxu0 0.0
        %3781 = vmatprep.subr.mxu0 0.0
        %3782 = vmatpush1.msra.mxu0 0.0
        %3783 = vmatprep.subr.mxu0 0.0
        %3784 = vmatpush1.msra.mxu0 0.0
        %3785 = vmatprep.subr.mxu0 0.0
        %3786 = vmatpush1.msra.mxu0 0.0
        %3787 = vmatprep.subr.mxu0 0.0
        %3788 = vmatpush1.msra.mxu0 0.0
        %3789 = vmatprep.subr.mxu0 0.0
        %3790 = vmatpush1.msra.mxu0 0.0
        %3791 = vmatprep.subr.mxu0 0.0
        %3792 = vmatpush1.msra.mxu0 0.0
        %3793 = vmatprep.subr.mxu0 0.0
        %3794 = vmatpush1.msra.mxu0 0.0
        %3795 = vmatprep.subr.mxu0 0.0
        %3796 = vmatpush1.msra.mxu0 0.0
        %3797 = vmatprep.subr.mxu0 0.0
        %3798 = vmatpush1.msra.mxu0 0.0
        %3799 = vmatprep.subr.mxu0 0.0
        %3800 = vmatpush1.msra.mxu0 0.0
        %3801 = vmatprep.subr.mxu0 0.0
        %3802 = vmatpush1.msra.mxu0 0.0
        %3803 = vmatprep.subr.mxu0 0.0
        %3804 = vmatpush1.msra.mxu0 0.0
        %3805 = vmatprep.subr.mxu0 0.0
        %3806 = vmatpush1.msra.mxu0 0.0
        %3807 = vmatprep.subr.mxu0 0.0
        %3808 = vmatpush1.msra.mxu0 %v3697
        %3809 = vmatprep.subr.mxu0 0.0
        %3810 = vmatpush1.msra.mxu0 %v3696
        %3811 = vmatprep.subr.mxu0 0.0
        %3812 = vmatpush2.msra.mxu0 0.0
        %3813 = vmatprep.subr.mxu0 0.0
        %3814 = vmatpush2.msra.mxu0 0.0
        %3815 = vmatprep.subr.mxu0 0.0
        %3816 = vmatpush2.msra.mxu0 0.0
        %3817 = vmatprep.subr.mxu0 0.0
        %3818 = vmatpush2.msra.mxu0 0.0
        %3819 = vmatprep.subr.mxu0 0.0
        %3820 = vmatpush2.msra.mxu0 0.0
        %3821 = vmatprep.subr.mxu0 0.0
        %3822 = vmatpush2.msra.mxu0 0.0
        %3823 = vmatprep.subr.mxu0 0.0
        %3824 = vmatpush2.msra.mxu0 0.0
        %3825 = vmatprep.subr.mxu0 0.0
        %3826 = vmatpush2.msra.mxu0 0.0
        %3827 = vmatprep.subr.mxu0 0.0
        %3828 = vmatpush2.msra.mxu0 0.0
        %3829 = vmatprep.subr.mxu0 0.0
        %3830 = vmatpush2.msra.mxu0 0.0
        %3831 = vmatprep.subr.mxu0 0.0
        %3832 = vmatpush2.msra.mxu0 0.0
        %3833 = vmatprep.subr.mxu0 0.0
        %3834 = vmatpush2.msra.mxu0 0.0
        %3835 = vmatprep.subr.mxu0 0.0
        %3836 = vmatpush2.msra.mxu0 0.0
        %3837 = vmatprep.subr.mxu0 0.0
        %3838 = vmatpush2.msra.mxu0 0.0
        %3839 = vmatprep.subr.mxu0 0.0
        %3840 = vmatpush2.msra.mxu0 0.0
        %3841 = vmatprep.subr.mxu0 0.0
        %3842 = vmatpush2.msra.mxu0 0.0
        %3843 = vmatprep.mubr.f32.mxu0 0.0
        %3844 = vmatmul.mubr.f32.gmra.mxu0 %v1046
        %v3845 = vpop.f32.mrf.mxu0
        %v3846 = vadd.f32 0.0, %v3845
        %v3847 = vpop.f32.mrf.mxu0
        %3848 = vdwg.mxu0
        %v3849 = vadd.f32 %v3778, %v3846
        %v3850 = vxor.u32 %v3849, 2147483648
        %v3851 = vmul.f32 %v3850, 1.442695
        %v3852 = vpow.pop %v3851
        %v3853 = vadd.f32 %v3852, 1.0
        %v3854 = vrcp.pop %v3853
        %v3855 = vmul.f32 1.0, %v3854
        %v3856 = vtanh.pop %v3849
        %v3857 = vmul.f32 %v3855, 0.0
        %3859 = vrot.lane.b32.xlu0 %v3856, 80
        %v3860 = vpop.permute.xlu0 %3859
        %v3862 = vmul.f32 %v3855, %v3860
        %3864 = vrot.lane.b32.xlu0 %v3862, 16
        %v3865 = vpop.permute.xlu0 %3864
        %v3867 = vadd.f32 %v3857, %v3865
        %v3868 = vtanh.pop %v3867
        %3870 = vrot.lane.b32.xlu0 %v3868, 16
        %v3871 = vpop.permute.xlu0 %3870
        %v3873 = vmul.f32 %v3855, %v3871
        %3875 = vrot.lane.b32.xlu0 %v3873, 112
        %v3876 = vpop.permute.xlu0 %3875
        %3878 = vst.msk [vmem:[#allocation3 + $0x7] sm:$0x1] %vm2050, %v3876
        %v3879 = vld [vmem:[#allocation2 + $0x6] sm:$0x1]
        %3880 = vrot.lane.b32.xlu0 %v3873, 96
        %v3881 = vpop.permute.xlu0 %3880
        %v3882 = vsel %vm817, %v3881, 0
        %3884 = vmatprep.subr.mxu0 0.0
        %3885 = vmatpush1.msra.mxu0 0.0
        %3886 = vmatprep.subr.mxu0 0.0
        %3887 = vmatpush1.msra.mxu0 0.0
        %3888 = vmatprep.subr.mxu0 0.0
        %3889 = vmatpush1.msra.mxu0 0.0
        %3890 = vmatprep.subr.mxu0 0.0
        %3891 = vmatpush1.msra.mxu0 0.0
        %3892 = vmatprep.subr.mxu0 0.0
        %3893 = vmatpush1.msra.mxu0 0.0
        %3894 = vmatprep.subr.mxu0 0.0
        %3895 = vmatpush1.msra.mxu0 0.0
        %3896 = vmatprep.subr.mxu0 0.0
        %3897 = vmatpush1.msra.mxu0 0.0
        %3898 = vmatprep.subr.mxu0 0.0
        %3899 = vmatpush1.msra.mxu0 0.0
        %3900 = vmatprep.subr.mxu0 0.0
        %3901 = vmatpush1.msra.mxu0 0.0
        %3902 = vmatprep.subr.mxu0 0.0
        %3903 = vmatpush1.msra.mxu0 0.0
        %3904 = vmatprep.subr.mxu0 0.0
        %3905 = vmatpush1.msra.mxu0 0.0
        %3906 = vmatprep.subr.mxu0 0.0
        %3907 = vmatpush1.msra.mxu0 0.0
        %3908 = vmatprep.subr.mxu0 0.0
        %3909 = vmatpush1.msra.mxu0 0.0
        %3910 = vmatprep.subr.mxu0 0.0
        %3911 = vmatpush1.msra.mxu0 0.0
        %3912 = vmatprep.subr.mxu0 0.0
        %3913 = vmatpush1.msra.mxu0 %v3697
        %3914 = vmatprep.subr.mxu0 0.0
        %3915 = vmatpush1.msra.mxu0 %v3696
        %3916 = vmatprep.subr.mxu0 0.0
        %3917 = vmatpush2.msra.mxu0 0.0
        %3918 = vmatprep.subr.mxu0 0.0
        %3919 = vmatpush2.msra.mxu0 0.0
        %3920 = vmatprep.subr.mxu0 0.0
        %3921 = vmatpush2.msra.mxu0 0.0
        %3922 = vmatprep.subr.mxu0 0.0
        %3923 = vmatpush2.msra.mxu0 0.0
        %3924 = vmatprep.subr.mxu0 0.0
        %3925 = vmatpush2.msra.mxu0 0.0
        %3926 = vmatprep.subr.mxu0 0.0
        %3927 = vmatpush2.msra.mxu0 0.0
        %3928 = vmatprep.subr.mxu0 0.0
        %3929 = vmatpush2.msra.mxu0 0.0
        %3930 = vmatprep.subr.mxu0 0.0
        %3931 = vmatpush2.msra.mxu0 0.0
        %3932 = vmatprep.subr.mxu0 0.0
        %3933 = vmatpush2.msra.mxu0 0.0
        %3934 = vmatprep.subr.mxu0 0.0
        %3935 = vmatpush2.msra.mxu0 0.0
        %3936 = vmatprep.subr.mxu0 0.0
        %3937 = vmatpush2.msra.mxu0 0.0
        %3938 = vmatprep.subr.mxu0 0.0
        %3939 = vmatpush2.msra.mxu0 0.0
        %3940 = vmatprep.subr.mxu0 0.0
        %3941 = vmatpush2.msra.mxu0 0.0
        %3942 = vmatprep.subr.mxu0 0.0
        %3943 = vmatpush2.msra.mxu0 0.0
        %3944 = vmatprep.subr.mxu0 0.0
        %3945 = vmatpush2.msra.mxu0 0.0
        %3946 = vmatprep.subr.mxu0 0.0
        %3947 = vmatpush2.msra.mxu0 0.0
        %3948 = vmatprep.mubr.f32.mxu0 0.0
        %3949 = vmatmul.mubr.f32.gmra.mxu0 %v3882
        %v3950 = vpop.f32.mrf.mxu0
        %v3951 = vadd.f32 0.0, %v3950
        %v3952 = vpop.f32.mrf.mxu0
        %3953 = vdwg.mxu0
        %v3954 = vadd.f32 %v3879, %v3951
        %v3955 = vxor.u32 %v3954, 2147483648
        %v3956 = vmul.f32 %v3955, 1.442695
        %v3957 = vpow.pop %v3956
        %v3958 = vadd.f32 %v3957, 1.0
        %v3959 = vrcp.pop %v3958
        %v3960 = vmul.f32 1.0, %v3959
        %v3961 = vtanh.pop %v3954
        %v3962 = vmul.f32 %v3960, %v3867
        %3964 = vrot.lane.b32.xlu0 %v3961, 80
        %v3965 = vpop.permute.xlu0 %3964
        %v3967 = vmul.f32 %v3960, %v3965
        %3969 = vrot.lane.b32.xlu0 %v3967, 16
        %v3970 = vpop.permute.xlu0 %3969
        %v3972 = vadd.f32 %v3962, %v3970
        %v3973 = vtanh.pop %v3972
        %3975 = vrot.lane.b32.xlu0 %v3973, 16
        %v3976 = vpop.permute.xlu0 %3975
        %v3978 = vmul.f32 %v3960, %v3976
        %3980 = vrot.lane.b32.xlu0 %v3978, 112
        %v3981 = vpop.permute.xlu0 %3980
        %3983 = vst.msk [vmem:[#allocation3 + $0x6] sm:$0x1] %vm2050, %v3981
        %v3984 = vld [vmem:[#allocation2 + $0x5] sm:$0x1]
        %3985 = vrot.lane.b32.xlu0 %v3978, 96
        %v3986 = vpop.permute.xlu0 %3985
        %v3987 = vsel %vm817, %v3986, 0
        %3989 = vmatprep.subr.mxu0 0.0
        %3990 = vmatpush1.msra.mxu0 0.0
        %3991 = vmatprep.subr.mxu0 0.0
        %3992 = vmatpush1.msra.mxu0 0.0
        %3993 = vmatprep.subr.mxu0 0.0
        %3994 = vmatpush1.msra.mxu0 0.0
        %3995 = vmatprep.subr.mxu0 0.0
        %3996 = vmatpush1.msra.mxu0 0.0
        %3997 = vmatprep.subr.mxu0 0.0
        %3998 = vmatpush1.msra.mxu0 0.0
        %3999 = vmatprep.subr.mxu0 0.0
        %4000 = vmatpush1.msra.mxu0 0.0
        %4001 = vmatprep.subr.mxu0 0.0
        %4002 = vmatpush1.msra.mxu0 0.0
        %4003 = vmatprep.subr.mxu0 0.0
        %4004 = vmatpush1.msra.mxu0 0.0
        %4005 = vmatprep.subr.mxu0 0.0
        %4006 = vmatpush1.msra.mxu0 0.0
        %4007 = vmatprep.subr.mxu0 0.0
        %4008 = vmatpush1.msra.mxu0 0.0
        %4009 = vmatprep.subr.mxu0 0.0
        %4010 = vmatpush1.msra.mxu0 0.0
        %4011 = vmatprep.subr.mxu0 0.0
        %4012 = vmatpush1.msra.mxu0 0.0
        %4013 = vmatprep.subr.mxu0 0.0
        %4014 = vmatpush1.msra.mxu0 0.0
        %4015 = vmatprep.subr.mxu0 0.0
        %4016 = vmatpush1.msra.mxu0 0.0
        %4017 = vmatprep.subr.mxu0 0.0
        %4018 = vmatpush1.msra.mxu0 %v3697
        %4019 = vmatprep.subr.mxu0 0.0
        %4020 = vmatpush1.msra.mxu0 %v3696
        %4021 = vmatprep.subr.mxu0 0.0
        %4022 = vmatpush2.msra.mxu0 0.0
        %4023 = vmatprep.subr.mxu0 0.0
        %4024 = vmatpush2.msra.mxu0 0.0
        %4025 = vmatprep.subr.mxu0 0.0
        %4026 = vmatpush2.msra.mxu0 0.0
        %4027 = vmatprep.subr.mxu0 0.0
        %4028 = vmatpush2.msra.mxu0 0.0
        %4029 = vmatprep.subr.mxu0 0.0
        %4030 = vmatpush2.msra.mxu0 0.0
        %4031 = vmatprep.subr.mxu0 0.0
        %4032 = vmatpush2.msra.mxu0 0.0
        %4033 = vmatprep.subr.mxu0 0.0
        %4034 = vmatpush2.msra.mxu0 0.0
        %4035 = vmatprep.subr.mxu0 0.0
        %4036 = vmatpush2.msra.mxu0 0.0
        %4037 = vmatprep.subr.mxu0 0.0
        %4038 = vmatpush2.msra.mxu0 0.0
        %4039 = vmatprep.subr.mxu0 0.0
        %4040 = vmatpush2.msra.mxu0 0.0
        %4041 = vmatprep.subr.mxu0 0.0
        %4042 = vmatpush2.msra.mxu0 0.0
        %4043 = vmatprep.subr.mxu0 0.0
        %4044 = vmatpush2.msra.mxu0 0.0
        %4045 = vmatprep.subr.mxu0 0.0
        %4046 = vmatpush2.msra.mxu0 0.0
        %4047 = vmatprep.subr.mxu0 0.0
        %4048 = vmatpush2.msra.mxu0 0.0
        %4049 = vmatprep.subr.mxu0 0.0
        %4050 = vmatpush2.msra.mxu0 0.0
        %4051 = vmatprep.subr.mxu0 0.0
        %4052 = vmatpush2.msra.mxu0 0.0
        %4053 = vmatprep.mubr.f32.mxu0 0.0
        %4054 = vmatmul.mubr.f32.gmra.mxu0 %v3987
        %v4055 = vpop.f32.mrf.mxu0
        %v4056 = vadd.f32 0.0, %v4055
        %v4057 = vpop.f32.mrf.mxu0
        %4058 = vdwg.mxu0
        %v4059 = vadd.f32 %v3984, %v4056
        %v4060 = vxor.u32 %v4059, 2147483648
        %v4061 = vmul.f32 %v4060, 1.442695
        %v4062 = vpow.pop %v4061
        %v4063 = vadd.f32 %v4062, 1.0
        %v4064 = vrcp.pop %v4063
        %v4065 = vmul.f32 1.0, %v4064
        %v4066 = vtanh.pop %v4059
        %v4067 = vmul.f32 %v4065, %v3972
        %4069 = vrot.lane.b32.xlu0 %v4066, 80
        %v4070 = vpop.permute.xlu0 %4069
        %v4072 = vmul.f32 %v4065, %v4070
        %4074 = vrot.lane.b32.xlu0 %v4072, 16
        %v4075 = vpop.permute.xlu0 %4074
        %v4077 = vadd.f32 %v4067, %v4075
        %v4078 = vtanh.pop %v4077
        %4080 = vrot.lane.b32.xlu0 %v4078, 16
        %v4081 = vpop.permute.xlu0 %4080
        %v4083 = vmul.f32 %v4065, %v4081
        %4085 = vrot.lane.b32.xlu0 %v4083, 112
        %v4086 = vpop.permute.xlu0 %4085
        %4088 = vst.msk [vmem:[#allocation3 + $0x5] sm:$0x1] %vm2050, %v4086
        %v4089 = vld [vmem:[#allocation2 + $0x4] sm:$0x1]
        %4090 = vrot.lane.b32.xlu0 %v4083, 96
        %v4091 = vpop.permute.xlu0 %4090
        %v4092 = vsel %vm817, %v4091, 0
        %4094 = vmatprep.subr.mxu0 0.0
        %4095 = vmatpush1.msra.mxu0 0.0
        %4096 = vmatprep.subr.mxu0 0.0
        %4097 = vmatpush1.msra.mxu0 0.0
        %4098 = vmatprep.subr.mxu0 0.0
        %4099 = vmatpush1.msra.mxu0 0.0
        %4100 = vmatprep.subr.mxu0 0.0
        %4101 = vmatpush1.msra.mxu0 0.0
        %4102 = vmatprep.subr.mxu0 0.0
        %4103 = vmatpush1.msra.mxu0 0.0
        %4104 = vmatprep.subr.mxu0 0.0
        %4105 = vmatpush1.msra.mxu0 0.0
        %4106 = vmatprep.subr.mxu0 0.0
        %4107 = vmatpush1.msra.mxu0 0.0
        %4108 = vmatprep.subr.mxu0 0.0
        %4109 = vmatpush1.msra.mxu0 0.0
        %4110 = vmatprep.subr.mxu0 0.0
        %4111 = vmatpush1.msra.mxu0 0.0
        %4112 = vmatprep.subr.mxu0 0.0
        %4113 = vmatpush1.msra.mxu0 0.0
        %4114 = vmatprep.subr.mxu0 0.0
        %4115 = vmatpush1.msra.mxu0 0.0
        %4116 = vmatprep.subr.mxu0 0.0
        %4117 = vmatpush1.msra.mxu0 0.0
        %4118 = vmatprep.subr.mxu0 0.0
        %4119 = vmatpush1.msra.mxu0 0.0
        %4120 = vmatprep.subr.mxu0 0.0
        %4121 = vmatpush1.msra.mxu0 0.0
        %4122 = vmatprep.subr.mxu0 0.0
        %4123 = vmatpush1.msra.mxu0 %v3697
        %4124 = vmatprep.subr.mxu0 0.0
        %4125 = vmatpush1.msra.mxu0 %v3696
        %4126 = vmatprep.subr.mxu0 0.0
        %4127 = vmatpush2.msra.mxu0 0.0
        %4128 = vmatprep.subr.mxu0 0.0
        %4129 = vmatpush2.msra.mxu0 0.0
        %4130 = vmatprep.subr.mxu0 0.0
        %4131 = vmatpush2.msra.mxu0 0.0
        %4132 = vmatprep.subr.mxu0 0.0
        %4133 = vmatpush2.msra.mxu0 0.0
        %4134 = vmatprep.subr.mxu0 0.0
        %4135 = vmatpush2.msra.mxu0 0.0
        %4136 = vmatprep.subr.mxu0 0.0
        %4137 = vmatpush2.msra.mxu0 0.0
        %4138 = vmatprep.subr.mxu0 0.0
        %4139 = vmatpush2.msra.mxu0 0.0
        %4140 = vmatprep.subr.mxu0 0.0
        %4141 = vmatpush2.msra.mxu0 0.0
        %4142 = vmatprep.subr.mxu0 0.0
        %4143 = vmatpush2.msra.mxu0 0.0
        %4144 = vmatprep.subr.mxu0 0.0
        %4145 = vmatpush2.msra.mxu0 0.0
        %4146 = vmatprep.subr.mxu0 0.0
        %4147 = vmatpush2.msra.mxu0 0.0
        %4148 = vmatprep.subr.mxu0 0.0
        %4149 = vmatpush2.msra.mxu0 0.0
        %4150 = vmatprep.subr.mxu0 0.0
        %4151 = vmatpush2.msra.mxu0 0.0
        %4152 = vmatprep.subr.mxu0 0.0
        %4153 = vmatpush2.msra.mxu0 0.0
        %4154 = vmatprep.subr.mxu0 0.0
        %4155 = vmatpush2.msra.mxu0 0.0
        %4156 = vmatprep.subr.mxu0 0.0
        %4157 = vmatpush2.msra.mxu0 0.0
        %4158 = vmatprep.mubr.f32.mxu0 0.0
        %4159 = vmatmul.mubr.f32.gmra.mxu0 %v4092
        %v4160 = vpop.f32.mrf.mxu0
        %v4161 = vadd.f32 0.0, %v4160
        %v4162 = vpop.f32.mrf.mxu0
        %4163 = vdwg.mxu0
        %v4164 = vadd.f32 %v4089, %v4161
        %v4165 = vxor.u32 %v4164, 2147483648
        %v4166 = vmul.f32 %v4165, 1.442695
        %v4167 = vpow.pop %v4166
        %v4168 = vadd.f32 %v4167, 1.0
        %v4169 = vrcp.pop %v4168
        %v4170 = vmul.f32 1.0, %v4169
        %v4171 = vtanh.pop %v4164
        %v4172 = vmul.f32 %v4170, %v4077
        %4174 = vrot.lane.b32.xlu0 %v4171, 80
        %v4175 = vpop.permute.xlu0 %4174
        %v4177 = vmul.f32 %v4170, %v4175
        %4179 = vrot.lane.b32.xlu0 %v4177, 16
        %v4180 = vpop.permute.xlu0 %4179
        %v4182 = vadd.f32 %v4172, %v4180
        %v4183 = vtanh.pop %v4182
        %4185 = vrot.lane.b32.xlu0 %v4183, 16
        %v4186 = vpop.permute.xlu0 %4185
        %v4188 = vmul.f32 %v4170, %v4186
        %4190 = vrot.lane.b32.xlu0 %v4188, 112
        %v4191 = vpop.permute.xlu0 %4190
        %4193 = vst.msk [vmem:[#allocation3 + $0x4] sm:$0x1] %vm2050, %v4191
        %v4194 = vld [vmem:[#allocation2 + $0x3] sm:$0x1]
        %4195 = vrot.lane.b32.xlu0 %v4188, 96
        %v4196 = vpop.permute.xlu0 %4195
        %v4197 = vsel %vm817, %v4196, 0
        %4199 = vmatprep.subr.mxu0 0.0
        %4200 = vmatpush1.msra.mxu0 0.0
        %4201 = vmatprep.subr.mxu0 0.0
        %4202 = vmatpush1.msra.mxu0 0.0
        %4203 = vmatprep.subr.mxu0 0.0
        %4204 = vmatpush1.msra.mxu0 0.0
        %4205 = vmatprep.subr.mxu0 0.0
        %4206 = vmatpush1.msra.mxu0 0.0
        %4207 = vmatprep.subr.mxu0 0.0
        %4208 = vmatpush1.msra.mxu0 0.0
        %4209 = vmatprep.subr.mxu0 0.0
        %4210 = vmatpush1.msra.mxu0 0.0
        %4211 = vmatprep.subr.mxu0 0.0
        %4212 = vmatpush1.msra.mxu0 0.0
        %4213 = vmatprep.subr.mxu0 0.0
        %4214 = vmatpush1.msra.mxu0 0.0
        %4215 = vmatprep.subr.mxu0 0.0
        %4216 = vmatpush1.msra.mxu0 0.0
        %4217 = vmatprep.subr.mxu0 0.0
        %4218 = vmatpush1.msra.mxu0 0.0
        %4219 = vmatprep.subr.mxu0 0.0
        %4220 = vmatpush1.msra.mxu0 0.0
        %4221 = vmatprep.subr.mxu0 0.0
        %4222 = vmatpush1.msra.mxu0 0.0
        %4223 = vmatprep.subr.mxu0 0.0
        %4224 = vmatpush1.msra.mxu0 0.0
        %4225 = vmatprep.subr.mxu0 0.0
        %4226 = vmatpush1.msra.mxu0 0.0
        %4227 = vmatprep.subr.mxu0 0.0
        %4228 = vmatpush1.msra.mxu0 %v3697
        %4229 = vmatprep.subr.mxu0 0.0
        %4230 = vmatpush1.msra.mxu0 %v3696
        %4231 = vmatprep.subr.mxu0 0.0
        %4232 = vmatpush2.msra.mxu0 0.0
        %4233 = vmatprep.subr.mxu0 0.0
        %4234 = vmatpush2.msra.mxu0 0.0
        %4235 = vmatprep.subr.mxu0 0.0
        %4236 = vmatpush2.msra.mxu0 0.0
        %4237 = vmatprep.subr.mxu0 0.0
        %4238 = vmatpush2.msra.mxu0 0.0
        %4239 = vmatprep.subr.mxu0 0.0
        %4240 = vmatpush2.msra.mxu0 0.0
        %4241 = vmatprep.subr.mxu0 0.0
        %4242 = vmatpush2.msra.mxu0 0.0
        %4243 = vmatprep.subr.mxu0 0.0
        %4244 = vmatpush2.msra.mxu0 0.0
        %4245 = vmatprep.subr.mxu0 0.0
        %4246 = vmatpush2.msra.mxu0 0.0
        %4247 = vmatprep.subr.mxu0 0.0
        %4248 = vmatpush2.msra.mxu0 0.0
        %4249 = vmatprep.subr.mxu0 0.0
        %4250 = vmatpush2.msra.mxu0 0.0
        %4251 = vmatprep.subr.mxu0 0.0
        %4252 = vmatpush2.msra.mxu0 0.0
        %4253 = vmatprep.subr.mxu0 0.0
        %4254 = vmatpush2.msra.mxu0 0.0
        %4255 = vmatprep.subr.mxu0 0.0
        %4256 = vmatpush2.msra.mxu0 0.0
        %4257 = vmatprep.subr.mxu0 0.0
        %4258 = vmatpush2.msra.mxu0 0.0
        %4259 = vmatprep.subr.mxu0 0.0
        %4260 = vmatpush2.msra.mxu0 0.0
        %4261 = vmatprep.subr.mxu0 0.0
        %4262 = vmatpush2.msra.mxu0 0.0
        %4263 = vmatprep.mubr.f32.mxu0 0.0
        %4264 = vmatmul.mubr.f32.gmra.mxu0 %v4197
        %v4265 = vpop.f32.mrf.mxu0
        %v4266 = vadd.f32 0.0, %v4265
        %v4267 = vpop.f32.mrf.mxu0
        %4268 = vdwg.mxu0
        %v4269 = vadd.f32 %v4194, %v4266
        %v4270 = vxor.u32 %v4269, 2147483648
        %v4271 = vmul.f32 %v4270, 1.442695
        %v4272 = vpow.pop %v4271
        %v4273 = vadd.f32 %v4272, 1.0
        %v4274 = vrcp.pop %v4273
        %v4275 = vmul.f32 1.0, %v4274
        %v4276 = vtanh.pop %v4269
        %v4277 = vmul.f32 %v4275, %v4182
        %4279 = vrot.lane.b32.xlu0 %v4276, 80
        %v4280 = vpop.permute.xlu0 %4279
        %v4282 = vmul.f32 %v4275, %v4280
        %4284 = vrot.lane.b32.xlu0 %v4282, 16
        %v4285 = vpop.permute.xlu0 %4284
        %v4287 = vadd.f32 %v4277, %v4285
        %v4288 = vtanh.pop %v4287
        %4290 = vrot.lane.b32.xlu0 %v4288, 16
        %v4291 = vpop.permute.xlu0 %4290
        %v4293 = vmul.f32 %v4275, %v4291
        %4295 = vrot.lane.b32.xlu0 %v4293, 112
        %v4296 = vpop.permute.xlu0 %4295
        %4298 = vst.msk [vmem:[#allocation3 + $0x3] sm:$0x1] %vm2050, %v4296
        %v4299 = vld [vmem:[#allocation2 + $0x2] sm:$0x1]
        %4300 = vrot.lane.b32.xlu0 %v4293, 96
        %v4301 = vpop.permute.xlu0 %4300
        %v4302 = vsel %vm817, %v4301, 0
        %4304 = vmatprep.subr.mxu0 0.0
        %4305 = vmatpush1.msra.mxu0 0.0
        %4306 = vmatprep.subr.mxu0 0.0
        %4307 = vmatpush1.msra.mxu0 0.0
        %4308 = vmatprep.subr.mxu0 0.0
        %4309 = vmatpush1.msra.mxu0 0.0
        %4310 = vmatprep.subr.mxu0 0.0
        %4311 = vmatpush1.msra.mxu0 0.0
        %4312 = vmatprep.subr.mxu0 0.0
        %4313 = vmatpush1.msra.mxu0 0.0
        %4314 = vmatprep.subr.mxu0 0.0
        %4315 = vmatpush1.msra.mxu0 0.0
        %4316 = vmatprep.subr.mxu0 0.0
        %4317 = vmatpush1.msra.mxu0 0.0
        %4318 = vmatprep.subr.mxu0 0.0
        %4319 = vmatpush1.msra.mxu0 0.0
        %4320 = vmatprep.subr.mxu0 0.0
        %4321 = vmatpush1.msra.mxu0 0.0
        %4322 = vmatprep.subr.mxu0 0.0
        %4323 = vmatpush1.msra.mxu0 0.0
        %4324 = vmatprep.subr.mxu0 0.0
        %4325 = vmatpush1.msra.mxu0 0.0
        %4326 = vmatprep.subr.mxu0 0.0
        %4327 = vmatpush1.msra.mxu0 0.0
        %4328 = vmatprep.subr.mxu0 0.0
        %4329 = vmatpush1.msra.mxu0 0.0
        %4330 = vmatprep.subr.mxu0 0.0
        %4331 = vmatpush1.msra.mxu0 0.0
        %4332 = vmatprep.subr.mxu0 0.0
        %4333 = vmatpush1.msra.mxu0 %v3697
        %4334 = vmatprep.subr.mxu0 0.0
        %4335 = vmatpush1.msra.mxu0 %v3696
        %4336 = vmatprep.subr.mxu0 0.0
        %4337 = vmatpush2.msra.mxu0 0.0
        %4338 = vmatprep.subr.mxu0 0.0
        %4339 = vmatpush2.msra.mxu0 0.0
        %4340 = vmatprep.subr.mxu0 0.0
        %4341 = vmatpush2.msra.mxu0 0.0
        %4342 = vmatprep.subr.mxu0 0.0
        %4343 = vmatpush2.msra.mxu0 0.0
        %4344 = vmatprep.subr.mxu0 0.0
        %4345 = vmatpush2.msra.mxu0 0.0
        %4346 = vmatprep.subr.mxu0 0.0
        %4347 = vmatpush2.msra.mxu0 0.0
        %4348 = vmatprep.subr.mxu0 0.0
        %4349 = vmatpush2.msra.mxu0 0.0
        %4350 = vmatprep.subr.mxu0 0.0
        %4351 = vmatpush2.msra.mxu0 0.0
        %4352 = vmatprep.subr.mxu0 0.0
        %4353 = vmatpush2.msra.mxu0 0.0
        %4354 = vmatprep.subr.mxu0 0.0
        %4355 = vmatpush2.msra.mxu0 0.0
        %4356 = vmatprep.subr.mxu0 0.0
        %4357 = vmatpush2.msra.mxu0 0.0
        %4358 = vmatprep.subr.mxu0 0.0
        %4359 = vmatpush2.msra.mxu0 0.0
        %4360 = vmatprep.subr.mxu0 0.0
        %4361 = vmatpush2.msra.mxu0 0.0
        %4362 = vmatprep.subr.mxu0 0.0
        %4363 = vmatpush2.msra.mxu0 0.0
        %4364 = vmatprep.subr.mxu0 0.0
        %4365 = vmatpush2.msra.mxu0 0.0
        %4366 = vmatprep.subr.mxu0 0.0
        %4367 = vmatpush2.msra.mxu0 0.0
        %4368 = vmatprep.mubr.f32.mxu0 0.0
        %4369 = vmatmul.mubr.f32.gmra.mxu0 %v4302
        %v4370 = vpop.f32.mrf.mxu0
        %v4371 = vadd.f32 0.0, %v4370
        %v4372 = vpop.f32.mrf.mxu0
        %4373 = vdwg.mxu0
        %v4374 = vadd.f32 %v4299, %v4371
        %v4375 = vxor.u32 %v4374, 2147483648
        %v4376 = vmul.f32 %v4375, 1.442695
        %v4377 = vpow.pop %v4376
        %v4378 = vadd.f32 %v4377, 1.0
        %v4379 = vrcp.pop %v4378
        %v4380 = vmul.f32 1.0, %v4379
        %v4381 = vtanh.pop %v4374
        %v4382 = vmul.f32 %v4380, %v4287
        %4384 = vrot.lane.b32.xlu0 %v4381, 80
        %v4385 = vpop.permute.xlu0 %4384
        %v4387 = vmul.f32 %v4380, %v4385
        %4389 = vrot.lane.b32.xlu0 %v4387, 16
        %v4390 = vpop.permute.xlu0 %4389
        %v4392 = vadd.f32 %v4382, %v4390
        %v4393 = vtanh.pop %v4392
        %4395 = vrot.lane.b32.xlu0 %v4393, 16
        %v4396 = vpop.permute.xlu0 %4395
        %v4398 = vmul.f32 %v4380, %v4396
        %4400 = vrot.lane.b32.xlu0 %v4398, 112
        %v4401 = vpop.permute.xlu0 %4400
        %4403 = vst.msk [vmem:[#allocation3 + $0x2] sm:$0x1] %vm2050, %v4401
        %v4404 = vld [vmem:[#allocation2 + $0x1] sm:$0x1]
        %4405 = vrot.lane.b32.xlu0 %v4398, 96
        %v4406 = vpop.permute.xlu0 %4405
        %v4407 = vsel %vm817, %v4406, 0
        %4409 = vmatprep.subr.mxu0 0.0
        %4410 = vmatpush1.msra.mxu0 0.0
        %4411 = vmatprep.subr.mxu0 0.0
        %4412 = vmatpush1.msra.mxu0 0.0
        %4413 = vmatprep.subr.mxu0 0.0
        %4414 = vmatpush1.msra.mxu0 0.0
        %4415 = vmatprep.subr.mxu0 0.0
        %4416 = vmatpush1.msra.mxu0 0.0
        %4417 = vmatprep.subr.mxu0 0.0
        %4418 = vmatpush1.msra.mxu0 0.0
        %4419 = vmatprep.subr.mxu0 0.0
        %4420 = vmatpush1.msra.mxu0 0.0
        %4421 = vmatprep.subr.mxu0 0.0
        %4422 = vmatpush1.msra.mxu0 0.0
        %4423 = vmatprep.subr.mxu0 0.0
        %4424 = vmatpush1.msra.mxu0 0.0
        %4425 = vmatprep.subr.mxu0 0.0
        %4426 = vmatpush1.msra.mxu0 0.0
        %4427 = vmatprep.subr.mxu0 0.0
        %4428 = vmatpush1.msra.mxu0 0.0
        %4429 = vmatprep.subr.mxu0 0.0
        %4430 = vmatpush1.msra.mxu0 0.0
        %4431 = vmatprep.subr.mxu0 0.0
        %4432 = vmatpush1.msra.mxu0 0.0
        %4433 = vmatprep.subr.mxu0 0.0
        %4434 = vmatpush1.msra.mxu0 0.0
        %4435 = vmatprep.subr.mxu0 0.0
        %4436 = vmatpush1.msra.mxu0 0.0
        %4437 = vmatprep.subr.mxu0 0.0
        %4438 = vmatpush1.msra.mxu0 %v3697
        %4439 = vmatprep.subr.mxu0 0.0
        %4440 = vmatpush1.msra.mxu0 %v3696
        %4441 = vmatprep.subr.mxu0 0.0
        %4442 = vmatpush2.msra.mxu0 0.0
        %4443 = vmatprep.subr.mxu0 0.0
        %4444 = vmatpush2.msra.mxu0 0.0
        %4445 = vmatprep.subr.mxu0 0.0
        %4446 = vmatpush2.msra.mxu0 0.0
        %4447 = vmatprep.subr.mxu0 0.0
        %4448 = vmatpush2.msra.mxu0 0.0
        %4449 = vmatprep.subr.mxu0 0.0
        %4450 = vmatpush2.msra.mxu0 0.0
        %4451 = vmatprep.subr.mxu0 0.0
        %4452 = vmatpush2.msra.mxu0 0.0
        %4453 = vmatprep.subr.mxu0 0.0
        %4454 = vmatpush2.msra.mxu0 0.0
        %4455 = vmatprep.subr.mxu0 0.0
        %4456 = vmatpush2.msra.mxu0 0.0
        %4457 = vmatprep.subr.mxu0 0.0
        %4458 = vmatpush2.msra.mxu0 0.0
        %4459 = vmatprep.subr.mxu0 0.0
        %4460 = vmatpush2.msra.mxu0 0.0
        %4461 = vmatprep.subr.mxu0 0.0
        %4462 = vmatpush2.msra.mxu0 0.0
        %4463 = vmatprep.subr.mxu0 0.0
        %4464 = vmatpush2.msra.mxu0 0.0
        %4465 = vmatprep.subr.mxu0 0.0
        %4466 = vmatpush2.msra.mxu0 0.0
        %4467 = vmatprep.subr.mxu0 0.0
        %4468 = vmatpush2.msra.mxu0 0.0
        %4469 = vmatprep.subr.mxu0 0.0
        %4470 = vmatpush2.msra.mxu0 0.0
        %4471 = vmatprep.subr.mxu0 0.0
        %4472 = vmatpush2.msra.mxu0 0.0
        %4473 = vmatprep.mubr.f32.mxu0 0.0
        %4474 = vmatmul.mubr.f32.gmra.mxu0 %v4407
        %v4475 = vpop.f32.mrf.mxu0
        %v4476 = vadd.f32 0.0, %v4475
        %v4477 = vpop.f32.mrf.mxu0
        %4478 = vdwg.mxu0
        %v4479 = vadd.f32 %v4404, %v4476
        %v4480 = vxor.u32 %v4479, 2147483648
        %v4481 = vmul.f32 %v4480, 1.442695
        %v4482 = vpow.pop %v4481
        %v4483 = vadd.f32 %v4482, 1.0
        %v4484 = vrcp.pop %v4483
        %v4485 = vmul.f32 1.0, %v4484
        %v4486 = vtanh.pop %v4479
        %v4487 = vmul.f32 %v4485, %v4392
        %4489 = vrot.lane.b32.xlu0 %v4486, 80
        %v4490 = vpop.permute.xlu0 %4489
        %v4492 = vmul.f32 %v4485, %v4490
        %4494 = vrot.lane.b32.xlu0 %v4492, 16
        %v4495 = vpop.permute.xlu0 %4494
        %v4497 = vadd.f32 %v4487, %v4495
        %v4498 = vtanh.pop %v4497
        %4500 = vrot.lane.b32.xlu0 %v4498, 16
        %v4501 = vpop.permute.xlu0 %4500
        %v4503 = vmul.f32 %v4485, %v4501
        %4505 = vrot.lane.b32.xlu0 %v4503, 112
        %v4506 = vpop.permute.xlu0 %4505
        %4508 = vst.msk [vmem:[#allocation3 + $0x1] sm:$0x1] %vm2050, %v4506
        %v4509 = vld [vmem:[#allocation2] sm:$0x1]
        %4510 = vrot.lane.b32.xlu0 %v4503, 96
        %v4511 = vpop.permute.xlu0 %4510
        %v4512 = vsel %vm817, %v4511, 0
        %4514 = vmatprep.subr.mxu0 0.0
        %4515 = vmatpush1.msra.mxu0 0.0
        %4516 = vmatprep.subr.mxu0 0.0
        %4517 = vmatpush1.msra.mxu0 0.0
        %4518 = vmatprep.subr.mxu0 0.0
        %4519 = vmatpush1.msra.mxu0 0.0
        %4520 = vmatprep.subr.mxu0 0.0
        %4521 = vmatpush1.msra.mxu0 0.0
        %4522 = vmatprep.subr.mxu0 0.0
        %4523 = vmatpush1.msra.mxu0 0.0
        %4524 = vmatprep.subr.mxu0 0.0
        %4525 = vmatpush1.msra.mxu0 0.0
        %4526 = vmatprep.subr.mxu0 0.0
        %4527 = vmatpush1.msra.mxu0 0.0
        %4528 = vmatprep.subr.mxu0 0.0
        %4529 = vmatpush1.msra.mxu0 0.0
        %4530 = vmatprep.subr.mxu0 0.0
        %4531 = vmatpush1.msra.mxu0 0.0
        %4532 = vmatprep.subr.mxu0 0.0
        %4533 = vmatpush1.msra.mxu0 0.0
        %4534 = vmatprep.subr.mxu0 0.0
        %4535 = vmatpush1.msra.mxu0 0.0
        %4536 = vmatprep.subr.mxu0 0.0
        %4537 = vmatpush1.msra.mxu0 0.0
        %4538 = vmatprep.subr.mxu0 0.0
        %4539 = vmatpush1.msra.mxu0 0.0
        %4540 = vmatprep.subr.mxu0 0.0
        %4541 = vmatpush1.msra.mxu0 0.0
        %4542 = vmatprep.subr.mxu0 0.0
        %4543 = vmatpush1.msra.mxu0 %v3697
        %4544 = vmatprep.subr.mxu0 0.0
        %4545 = vmatpush1.msra.mxu0 %v3696
        %4546 = vmatprep.subr.mxu0 0.0
        %4547 = vmatpush2.msra.mxu0 0.0
        %4548 = vmatprep.subr.mxu0 0.0
        %4549 = vmatpush2.msra.mxu0 0.0
        %4550 = vmatprep.subr.mxu0 0.0
        %4551 = vmatpush2.msra.mxu0 0.0
        %4552 = vmatprep.subr.mxu0 0.0
        %4553 = vmatpush2.msra.mxu0 0.0
        %4554 = vmatprep.subr.mxu0 0.0
        %4555 = vmatpush2.msra.mxu0 0.0
        %4556 = vmatprep.subr.mxu0 0.0
        %4557 = vmatpush2.msra.mxu0 0.0
        %4558 = vmatprep.subr.mxu0 0.0
        %4559 = vmatpush2.msra.mxu0 0.0
        %4560 = vmatprep.subr.mxu0 0.0
        %4561 = vmatpush2.msra.mxu0 0.0
        %4562 = vmatprep.subr.mxu0 0.0
        %4563 = vmatpush2.msra.mxu0 0.0
        %4564 = vmatprep.subr.mxu0 0.0
        %4565 = vmatpush2.msra.mxu0 0.0
        %4566 = vmatprep.subr.mxu0 0.0
        %4567 = vmatpush2.msra.mxu0 0.0
        %4568 = vmatprep.subr.mxu0 0.0
        %4569 = vmatpush2.msra.mxu0 0.0
        %4570 = vmatprep.subr.mxu0 0.0
        %4571 = vmatpush2.msra.mxu0 0.0
        %4572 = vmatprep.subr.mxu0 0.0
        %4573 = vmatpush2.msra.mxu0 0.0
        %4574 = vmatprep.subr.mxu0 0.0
        %4575 = vmatpush2.msra.mxu0 0.0
        %4576 = vmatprep.subr.mxu0 0.0
        %4577 = vmatpush2.msra.mxu0 0.0
        %4578 = vmatprep.mubr.f32.mxu0 0.0
        %4579 = vmatmul.mubr.f32.gmra.mxu0 %v4512
        %v4580 = vpop.f32.mrf.mxu0
        %v4581 = vadd.f32 0.0, %v4580
        %v4582 = vpop.f32.mrf.mxu0
        %4583 = vdwg.mxu0
        %v4584 = vadd.f32 %v4509, %v4581
        %v4585 = vxor.u32 %v4584, 2147483648
        %v4586 = vmul.f32 %v4585, 1.442695
        %v4587 = vpow.pop %v4586
        %v4588 = vadd.f32 %v4587, 1.0
        %v4589 = vrcp.pop %v4588
        %v4590 = vmul.f32 1.0, %v4589
        %v4591 = vtanh.pop %v4584
        %v4592 = vmul.f32 %v4590, %v4497
        %4594 = vrot.lane.b32.xlu0 %v4591, 80
        %v4595 = vpop.permute.xlu0 %4594
        %v4597 = vmul.f32 %v4590, %v4595
        %4599 = vrot.lane.b32.xlu0 %v4597, 16
        %v4600 = vpop.permute.xlu0 %4599
        %v4602 = vadd.f32 %v4592, %v4600
        %v4603 = vtanh.pop %v4602
        %4605 = vrot.lane.b32.xlu0 %v4603, 16
        %v4606 = vpop.permute.xlu0 %4605
        %v4608 = vmul.f32 %v4590, %v4606
        %4610 = vrot.lane.b32.xlu0 %v4608, 112
        %v4611 = vpop.permute.xlu0 %4610
        %4613 = vst.msk [vmem:[#allocation3] sm:$0x1] %vm2050, %v4611
        %v4614 = vld [vmem:[#allocation3] sm:$0xff]
        %v4615 = vld [vmem:[#allocation4 + $0x208] sm:$0xff]
        %v4616 = vld [vmem:[#allocation4 + $0x210] sm:$0xff]
        %v4617 = vld [vmem:[#allocation4 + $0x218] sm:$0xff]
        %v4618 = vld [vmem:[#allocation4 + $0x220] sm:$0xff]
        %v4619 = vld [vmem:[#allocation4 + $0x228] sm:$0x1]
        %v4620 = vlaneseq
        %v4621 = vshrl.u32 %v4620, 7
        %v4622 = vsub.s32 0, %v4621
        %v4623 = vrot.slane %v4619, %v4622
        %v4625 = vsel %vm2799, %v4614, 0
        %4627 = vmatprep.subr.mxu0 0.0
        %4628 = vmatpush1.msra.mxu0 0.0
        %4629 = vmatprep.subr.mxu0 0.0
        %4630 = vmatpush1.msra.mxu0 0.0
        %4631 = vmatprep.subr.mxu0 0.0
        %4632 = vmatpush1.msra.mxu0 0.0
        %4633 = vmatprep.subr.mxu0 0.0
        %4634 = vmatpush1.msra.mxu0 0.0
        %4635 = vmatprep.subr.mxu0 0.0
        %4636 = vmatpush1.msra.mxu0 0.0
        %4637 = vmatprep.subr.mxu0 0.0
        %4638 = vmatpush1.msra.mxu0 0.0
        %4639 = vmatprep.subr.mxu0 0.0
        %4640 = vmatpush1.msra.mxu0 0.0
        %4641 = vmatprep.subr.mxu0 0.0
        %4642 = vmatpush1.msra.mxu0 0.0
        %4643 = vmatprep.subr.mxu0 0.0
        %4644 = vmatpush1.msra.mxu0 0.0
        %4645 = vmatprep.subr.mxu0 0.0
        %4646 = vmatpush1.msra.mxu0 0.0
        %4647 = vmatprep.subr.mxu0 0.0
        %4648 = vmatpush1.msra.mxu0 0.0
        %4649 = vmatprep.subr.mxu0 0.0
        %4650 = vmatpush1.msra.mxu0 0.0
        %4651 = vmatprep.subr.mxu0 0.0
        %4652 = vmatpush1.msra.mxu0 %v4618
        %4653 = vmatprep.subr.mxu0 0.0
        %4654 = vmatpush1.msra.mxu0 %v4617
        %4655 = vmatprep.subr.mxu0 0.0
        %4656 = vmatpush1.msra.mxu0 %v4616
        %4657 = vmatprep.subr.mxu0 0.0
        %4658 = vmatpush1.msra.mxu0 %v4615
        %4659 = vmatprep.subr.mxu0 0.0
        %4660 = vmatpush2.msra.mxu0 0.0
        %4661 = vmatprep.subr.mxu0 0.0
        %4662 = vmatpush2.msra.mxu0 0.0
        %4663 = vmatprep.subr.mxu0 0.0
        %4664 = vmatpush2.msra.mxu0 0.0
        %4665 = vmatprep.subr.mxu0 0.0
        %4666 = vmatpush2.msra.mxu0 0.0
        %4667 = vmatprep.subr.mxu0 0.0
        %4668 = vmatpush2.msra.mxu0 0.0
        %4669 = vmatprep.subr.mxu0 0.0
        %4670 = vmatpush2.msra.mxu0 0.0
        %4671 = vmatprep.subr.mxu0 0.0
        %4672 = vmatpush2.msra.mxu0 0.0
        %4673 = vmatprep.subr.mxu0 0.0
        %4674 = vmatpush2.msra.mxu0 0.0
        %4675 = vmatprep.subr.mxu0 0.0
        %4676 = vmatpush2.msra.mxu0 0.0
        %4677 = vmatprep.subr.mxu0 0.0
        %4678 = vmatpush2.msra.mxu0 0.0
        %4679 = vmatprep.subr.mxu0 0.0
        %4680 = vmatpush2.msra.mxu0 0.0
        %4681 = vmatprep.subr.mxu0 0.0
        %4682 = vmatpush2.msra.mxu0 0.0
        %4683 = vmatprep.subr.mxu0 0.0
        %4684 = vmatpush2.msra.mxu0 0.0
        %4685 = vmatprep.subr.mxu0 0.0
        %4686 = vmatpush2.msra.mxu0 0.0
        %4687 = vmatprep.subr.mxu0 0.0
        %4688 = vmatpush2.msra.mxu0 0.0
        %4689 = vmatprep.subr.mxu0 0.0
        %4690 = vmatpush2.msra.mxu0 0.0
        %4691 = vmatprep.mubr.f32.mxu0 0.0
        %4692 = vmatmul.mubr.f32.gmra.mxu0 %v4625
        %v4693 = vpop.f32.mrf.mxu0
        %v4694 = vadd.f32 %v4623, %v4693
        %v4695 = vpop.f32.mrf.mxu0
        %4696 = vdwg.mxu0
        %4697 = vxpose.xlu0.b32.start [1/16] %v4694, 128
        %4698 = vxpose.xlu0.b32.cont [2/16] 0.0, 128
        %4699 = vxpose.xlu0.b32.cont [3/16] 0.0, 128
        %4700 = vxpose.xlu0.b32.cont [4/16] 0.0, 128
        %4701 = vxpose.xlu0.b32.cont [5/16] 0.0, 128
        %4702 = vxpose.xlu0.b32.cont [6/16] 0.0, 128
        %4703 = vxpose.xlu0.b32.cont [7/16] 0.0, 128
        %4704 = vxpose.xlu0.b32.cont [8/16] 0.0, 128
        %4705 = vxpose.xlu0.b32.cont [9/16] 0.0, 128
        %4706 = vxpose.xlu0.b32.cont [10/16] 0.0, 128
        %4707 = vxpose.xlu0.b32.cont [11/16] 0.0, 128
        %4708 = vxpose.xlu0.b32.cont [12/16] 0.0, 128
        %4709 = vxpose.xlu0.b32.cont [13/16] 0.0, 128
        %4710 = vxpose.xlu0.b32.cont [14/16] 0.0, 128
        %4711 = vxpose.xlu0.b32.cont [15/16] 0.0, 128
        %4712 = vxpose.xlu0.b32.end [16/16] 0.0, 128
        %v4713 = vpop.trf.xlu0
        %v4714 = vpop.trf.xlu0
        %v4715 = vpop.trf.xlu0
        %v4716 = vpop.trf.xlu0
        %v4717 = vpop.trf.xlu0
        %v4718 = vpop.trf.xlu0
        %v4719 = vpop.trf.xlu0
        %v4720 = vpop.trf.xlu0
        %v4721 = vpop.trf.xlu0
        %v4722 = vpop.trf.xlu0
        %v4723 = vpop.trf.xlu0
        %v4724 = vpop.trf.xlu0
        %v4725 = vpop.trf.xlu0
        %v4726 = vpop.trf.xlu0
        %v4727 = vpop.trf.xlu0
        %v4728 = vpop.trf.xlu0
        %v4729 = vadd.f32 %v4713, %v927
        %v4730 = vadd.f32 %v4714, %v928
        %v4731 = vld [vmem:[#allocation4 + $0x230] sm:$0xff]
        %v4732 = vld [vmem:[#allocation4 + $0x238] sm:$0xff]
        %v4733 = vld [vmem:[#allocation4 + $0x240] sm:$0xff]
        %v4734 = vld [vmem:[#allocation4 + $0x248] sm:$0xff]
        %4737 = vrot.lane.b32.xlu0 %v4729, 127
        %v4738 = vpop.permute.xlu0 %4737
        %4739 = vrot.lane.b32.xlu0 %v4730, 127
        %v4740 = vpop.permute.xlu0 %4739
        %4743 = vrot.lane.b32.xlu0 %v4729, 126
        %v4744 = vpop.permute.xlu0 %4743
        %4745 = vrot.lane.b32.xlu0 %v4730, 126
        %v4746 = vpop.permute.xlu0 %4745
        %v4749 = vld [vmem:[#allocation4 + $0x250] sm:$0xff]
        %v4750 = vld [vmem:[#allocation4 + $0x258] sm:$0xff]
        %v4751 = vld [vmem:[#allocation4 + $0x260] sm:$0xff]
        %v4752 = vld [vmem:[#allocation4 + $0x268] sm:$0xff]
        %4754 = vset.pattern.permute.xlu0 0
        %4755 = vperm.xlu0 %4754, %v4749
        %v4756 = vpop.permute.xlu0 %4755
        %4759 = vset.pattern.permute.xlu0 0
        %4760 = vperm.xlu0 %4759, %v4750
        %v4761 = vpop.permute.xlu0 %4760
        %4764 = vset.pattern.permute.xlu0 0
        %4765 = vperm.xlu0 %4764, %v4751
        %v4766 = vpop.permute.xlu0 %4765
        %4769 = vset.pattern.permute.xlu0 0
        %4770 = vperm.xlu0 %4769, %v4752
        %v4771 = vpop.permute.xlu0 %4770
        %vm4773 = vcmask 392192
        %v4775 = vsel %vm4773, %v4731, 0
        %v4778 = vsel %vm4773, %v4732, 0
        %v4781 = vsel %vm4773, %v4733, 0
        %v4784 = vsel %vm4773, %v4734, 0
        %4786 = vmatprep.subr.mxu0 0.0
        %4787 = vmatpush1.msra.mxu0 0.0
        %4788 = vmatprep.subr.mxu0 0.0
        %4789 = vmatpush1.msra.mxu0 0.0
        %4790 = vmatprep.subr.mxu0 0.0
        %4791 = vmatpush1.msra.mxu0 0.0
        %4792 = vmatprep.subr.mxu0 0.0
        %4793 = vmatpush1.msra.mxu0 0.0
        %4794 = vmatprep.subr.mxu0 0.0
        %4795 = vmatpush1.msra.mxu0 0.0
        %4796 = vmatprep.subr.mxu0 0.0
        %4797 = vmatpush1.msra.mxu0 0.0
        %4798 = vmatprep.subr.mxu0 0.0
        %4799 = vmatpush1.msra.mxu0 0.0
        %4800 = vmatprep.subr.mxu0 0.0
        %4801 = vmatpush1.msra.mxu0 0.0
        %4802 = vmatprep.subr.mxu0 0.0
        %4803 = vmatpush1.msra.mxu0 0.0
        %4804 = vmatprep.subr.mxu0 0.0
        %4805 = vmatpush1.msra.mxu0 0.0
        %4806 = vmatprep.subr.mxu0 0.0
        %4807 = vmatpush1.msra.mxu0 %v4746
        %4808 = vmatprep.subr.mxu0 0.0
        %4809 = vmatpush1.msra.mxu0 %v4744
        %4810 = vmatprep.subr.mxu0 0.0
        %4811 = vmatpush1.msra.mxu0 %v4740
        %4812 = vmatprep.subr.mxu0 0.0
        %4813 = vmatpush1.msra.mxu0 %v4738
        %4814 = vmatprep.subr.mxu0 0.0
        %4815 = vmatpush1.msra.mxu0 %v4730
        %4816 = vmatprep.subr.mxu0 0.0
        %4817 = vmatpush1.msra.mxu0 %v4729
        %4818 = vmatprep.subr.mxu0 0.0
        %4819 = vmatpush2.msra.mxu0 0.0
        %4820 = vmatprep.subr.mxu0 0.0
        %4821 = vmatpush2.msra.mxu0 0.0
        %4822 = vmatprep.subr.mxu0 0.0
        %4823 = vmatpush2.msra.mxu0 0.0
        %4824 = vmatprep.subr.mxu0 0.0
        %4825 = vmatpush2.msra.mxu0 0.0
        %4826 = vmatprep.subr.mxu0 0.0
        %4827 = vmatpush2.msra.mxu0 0.0
        %4828 = vmatprep.subr.mxu0 0.0
        %4829 = vmatpush2.msra.mxu0 0.0
        %4830 = vmatprep.subr.mxu0 0.0
        %4831 = vmatpush2.msra.mxu0 0.0
        %4832 = vmatprep.subr.mxu0 0.0
        %4833 = vmatpush2.msra.mxu0 0.0
        %4834 = vmatprep.subr.mxu0 0.0
        %4835 = vmatpush2.msra.mxu0 0.0
        %4836 = vmatprep.subr.mxu0 0.0
        %4837 = vmatpush2.msra.mxu0 0.0
        %4838 = vmatprep.subr.mxu0 0.0
        %4839 = vmatpush2.msra.mxu0 0.0
        %4840 = vmatprep.subr.mxu0 0.0
        %4841 = vmatpush2.msra.mxu0 0.0
        %4842 = vmatprep.subr.mxu0 0.0
        %4843 = vmatpush2.msra.mxu0 0.0
        %4844 = vmatprep.subr.mxu0 0.0
        %4845 = vmatpush2.msra.mxu0 0.0
        %4846 = vmatprep.subr.mxu0 0.0
        %4847 = vmatpush2.msra.mxu0 0.0
        %4848 = vmatprep.subr.mxu0 0.0
        %4849 = vmatpush2.msra.mxu0 0.0
        %4850 = vmatprep.mubr.f32.mxu0 0.0
        %4851 = vmatmul.mubr.f32.gmra.mxu0 %v4775
        %v4852 = vpop.f32.mrf.mxu0
        %v4853 = vadd.f32 %v4756, %v4852
        %v4854 = vpop.f32.mrf.mxu0
        %4855 = vmatprep.mubr.f32.mxu0 0.0
        %4856 = vmatmul.mubr.f32.gmra.mxu0 %v4778
        %v4857 = vpop.f32.mrf.mxu0
        %v4858 = vadd.f32 %v4761, %v4857
        %v4859 = vpop.f32.mrf.mxu0
        %4860 = vmatprep.mubr.f32.mxu0 0.0
        %4861 = vmatmul.mubr.f32.gmra.mxu0 %v4781
        %v4862 = vpop.f32.mrf.mxu0
        %v4863 = vadd.f32 %v4766, %v4862
        %v4864 = vpop.f32.mrf.mxu0
        %4865 = vmatprep.mubr.f32.mxu0 0.0
        %4866 = vmatmul.mubr.f32.gmra.mxu0 %v4784
        %v4867 = vpop.f32.mrf.mxu0
        %v4868 = vadd.f32 %v4771, %v4867
        %v4869 = vpop.f32.mrf.mxu0
        %4870 = vdwg.mxu0
        %v4871 = vxor.u32 %v4863, 2147483648
        %v4872 = vxor.u32 %v4868, 2147483648
        %v4873 = vmul.f32 %v4871, 1.442695
        %v4874 = vpow.pop %v4873
        %v4875 = vmul.f32 %v4872, 1.442695
        %v4876 = vpow.pop %v4875
        %v4877 = vadd.f32 %v4874, 1.0
        %v4878 = vadd.f32 %v4876, 1.0
        %v4879 = vrcp.pop %v4877
        %v4880 = vmul.f32 1.0, %v4879
        %v4881 = vrcp.pop %v4878
        %v4882 = vmul.f32 1.0, %v4881
        %v4883 = vmul.f32 %v4853, %v4880
        %v4884 = vmul.f32 %v4858, %v4882
        %v4885 = vld [vmem:[#allocation4 + $0x270] sm:$0x3f]
        %vm4886 = vcmask 48128
        %v4888 = vsel %vm4886, %v4883, 0
        %v4891 = vsel %vm4886, %v4884, 0
        %vm4893 = vcmask 1045504
        %v4895 = vsel %vm4893, %v4885, 0
        %4897 = vmatprep.subr.mxu0 0.0
        %4898 = vmatpush1.msra.mxu0 0.0
        %4899 = vmatprep.subr.mxu0 0.0
        %4900 = vmatpush1.msra.mxu0 0.0
        %4901 = vmatprep.subr.mxu0 0.0
        %4902 = vmatpush1.msra.mxu0 0.0
        %4903 = vmatprep.subr.mxu0 0.0
        %4904 = vmatpush1.msra.mxu0 0.0
        %4905 = vmatprep.subr.mxu0 0.0
        %4906 = vmatpush1.msra.mxu0 0.0
        %4907 = vmatprep.subr.mxu0 0.0
        %4908 = vmatpush1.msra.mxu0 0.0
        %4909 = vmatprep.subr.mxu0 0.0
        %4910 = vmatpush1.msra.mxu0 0.0
        %4911 = vmatprep.subr.mxu0 0.0
        %4912 = vmatpush1.msra.mxu0 0.0
        %4913 = vmatprep.subr.mxu0 0.0
        %4914 = vmatpush1.msra.mxu0 0.0
        %4915 = vmatprep.subr.mxu0 0.0
        %4916 = vmatpush1.msra.mxu0 0.0
        %4917 = vmatprep.subr.mxu0 0.0
        %4918 = vmatpush1.msra.mxu0 0.0
        %4919 = vmatprep.subr.mxu0 0.0
        %4920 = vmatpush1.msra.mxu0 0.0
        %4921 = vmatprep.subr.mxu0 0.0
        %4922 = vmatpush1.msra.mxu0 0.0
        %4923 = vmatprep.subr.mxu0 0.0
        %4924 = vmatpush1.msra.mxu0 0.0
        %4925 = vmatprep.subr.mxu0 0.0
        %4926 = vmatpush1.msra.mxu0 0.0
        %4927 = vmatprep.subr.mxu0 0.0
        %4928 = vmatpush1.msra.mxu0 %v4895
        %4929 = vmatprep.subr.mxu0 0.0
        %4930 = vmatpush2.msra.mxu0 0.0
        %4931 = vmatprep.subr.mxu0 0.0
        %4932 = vmatpush2.msra.mxu0 0.0
        %4933 = vmatprep.subr.mxu0 0.0
        %4934 = vmatpush2.msra.mxu0 0.0
        %4935 = vmatprep.subr.mxu0 0.0
        %4936 = vmatpush2.msra.mxu0 0.0
        %4937 = vmatprep.subr.mxu0 0.0
        %4938 = vmatpush2.msra.mxu0 0.0
        %4939 = vmatprep.subr.mxu0 0.0
        %4940 = vmatpush2.msra.mxu0 0.0
        %4941 = vmatprep.subr.mxu0 0.0
        %4942 = vmatpush2.msra.mxu0 0.0
        %4943 = vmatprep.subr.mxu0 0.0
        %4944 = vmatpush2.msra.mxu0 0.0
        %4945 = vmatprep.subr.mxu0 0.0
        %4946 = vmatpush2.msra.mxu0 0.0
        %4947 = vmatprep.subr.mxu0 0.0
        %4948 = vmatpush2.msra.mxu0 0.0
        %4949 = vmatprep.subr.mxu0 0.0
        %4950 = vmatpush2.msra.mxu0 0.0
        %4951 = vmatprep.subr.mxu0 0.0
        %4952 = vmatpush2.msra.mxu0 0.0
        %4953 = vmatprep.subr.mxu0 0.0
        %4954 = vmatpush2.msra.mxu0 0.0
        %4955 = vmatprep.subr.mxu0 0.0
        %4956 = vmatpush2.msra.mxu0 0.0
        %4957 = vmatprep.subr.mxu0 0.0
        %4958 = vmatpush2.msra.mxu0 0.0
        %4959 = vmatprep.subr.mxu0 0.0
        %4960 = vmatpush2.msra.mxu0 0.0
        %4961 = vmatprep.mubr.f32.mxu0 0.0
        %4962 = vmatmul.mubr.f32.gmra.mxu0 %v4888
        %v4963 = vpop.f32.mrf.mxu0
        %v4964 = vadd.f32 0.0, %v4963
        %v4965 = vpop.f32.mrf.mxu0
        %4966 = vmatprep.mubr.f32.mxu0 0.0
        %4967 = vmatmul.mubr.f32.gmra.mxu0 %v4891
        %v4968 = vpop.f32.mrf.mxu0
        %v4969 = vadd.f32 0.0, %v4968
        %v4970 = vpop.f32.mrf.mxu0
        %4971 = vdwg.mxu0
        %v4972 = vld [vmem:[#allocation4 + $0x278] sm:$0xff]
        %4975 = vrot.lane.b32.xlu0 %v4964, 127
        %v4976 = vpop.permute.xlu0 %4975
        %4977 = vrot.lane.b32.xlu0 %v4969, 127
        %v4978 = vpop.permute.xlu0 %4977
        %4981 = vrot.lane.b32.xlu0 %v4964, 126
        %v4982 = vpop.permute.xlu0 %4981
        %4983 = vrot.lane.b32.xlu0 %v4969, 126
        %v4984 = vpop.permute.xlu0 %4983
        %4987 = vrot.lane.b32.xlu0 %v4964, 125
        %v4988 = vpop.permute.xlu0 %4987
        %4989 = vrot.lane.b32.xlu0 %v4969, 125
        %v4990 = vpop.permute.xlu0 %4989
        %4993 = vrot.lane.b32.xlu0 %v4964, 124
        %v4994 = vpop.permute.xlu0 %4993
        %4995 = vrot.lane.b32.xlu0 %v4969, 124
        %v4996 = vpop.permute.xlu0 %4995
        %4999 = vrot.lane.b32.xlu0 %v4964, 123
        %v5000 = vpop.permute.xlu0 %4999
        %5001 = vrot.lane.b32.xlu0 %v4969, 123
        %v5002 = vpop.permute.xlu0 %5001
        %5005 = vrot.lane.b32.xlu0 %v4964, 122
        %v5006 = vpop.permute.xlu0 %5005
        %5007 = vrot.lane.b32.xlu0 %v4969, 122
        %v5008 = vpop.permute.xlu0 %5007
        %5011 = vrot.lane.b32.xlu0 %v4964, 121
        %v5012 = vpop.permute.xlu0 %5011
        %5013 = vrot.lane.b32.xlu0 %v4969, 121
        %v5014 = vpop.permute.xlu0 %5013
        %v5017 = vld [vmem:[#allocation4 + $0x280] sm:$0xff]
        %5019 = vset.pattern.permute.xlu0 0
        %5020 = vperm.xlu0 %5019, %v5017
        %v5021 = vpop.permute.xlu0 %5020
        %5023 = vmatprep.subr.mxu0 0.0
        %5024 = vmatpush1.msra.mxu0 %v5014
        %5025 = vmatprep.subr.mxu0 0.0
        %5026 = vmatpush1.msra.mxu0 %v5012
        %5027 = vmatprep.subr.mxu0 0.0
        %5028 = vmatpush1.msra.mxu0 %v5008
        %5029 = vmatprep.subr.mxu0 0.0
        %5030 = vmatpush1.msra.mxu0 %v5006
        %5031 = vmatprep.subr.mxu0 0.0
        %5032 = vmatpush1.msra.mxu0 %v5002
        %5033 = vmatprep.subr.mxu0 0.0
        %5034 = vmatpush1.msra.mxu0 %v5000
        %5035 = vmatprep.subr.mxu0 0.0
        %5036 = vmatpush1.msra.mxu0 %v4996
        %5037 = vmatprep.subr.mxu0 0.0
        %5038 = vmatpush1.msra.mxu0 %v4994
        %5039 = vmatprep.subr.mxu0 0.0
        %5040 = vmatpush1.msra.mxu0 %v4990
        %5041 = vmatprep.subr.mxu0 0.0
        %5042 = vmatpush1.msra.mxu0 %v4988
        %5043 = vmatprep.subr.mxu0 0.0
        %5044 = vmatpush1.msra.mxu0 %v4984
        %5045 = vmatprep.subr.mxu0 0.0
        %5046 = vmatpush1.msra.mxu0 %v4982
        %5047 = vmatprep.subr.mxu0 0.0
        %5048 = vmatpush1.msra.mxu0 %v4978
        %5049 = vmatprep.subr.mxu0 0.0
        %5050 = vmatpush1.msra.mxu0 %v4976
        %5051 = vmatprep.subr.mxu0 0.0
        %5052 = vmatpush1.msra.mxu0 %v4969
        %5053 = vmatprep.subr.mxu0 0.0
        %5054 = vmatpush1.msra.mxu0 %v4964
        %5055 = vmatprep.subr.mxu0 0.0
        %5056 = vmatpush2.msra.mxu0 0.0
        %5057 = vmatprep.subr.mxu0 0.0
        %5058 = vmatpush2.msra.mxu0 0.0
        %5059 = vmatprep.subr.mxu0 0.0
        %5060 = vmatpush2.msra.mxu0 0.0
        %5061 = vmatprep.subr.mxu0 0.0
        %5062 = vmatpush2.msra.mxu0 0.0
        %5063 = vmatprep.subr.mxu0 0.0
        %5064 = vmatpush2.msra.mxu0 0.0
        %5065 = vmatprep.subr.mxu0 0.0
        %5066 = vmatpush2.msra.mxu0 0.0
        %5067 = vmatprep.subr.mxu0 0.0
        %5068 = vmatpush2.msra.mxu0 0.0
        %5069 = vmatprep.subr.mxu0 0.0
        %5070 = vmatpush2.msra.mxu0 0.0
        %5071 = vmatprep.subr.mxu0 0.0
        %5072 = vmatpush2.msra.mxu0 0.0
        %5073 = vmatprep.subr.mxu0 0.0
        %5074 = vmatpush2.msra.mxu0 0.0
        %5075 = vmatprep.subr.mxu0 0.0
        %5076 = vmatpush2.msra.mxu0 0.0
        %5077 = vmatprep.subr.mxu0 0.0
        %5078 = vmatpush2.msra.mxu0 0.0
        %5079 = vmatprep.subr.mxu0 0.0
        %5080 = vmatpush2.msra.mxu0 0.0
        %5081 = vmatprep.subr.mxu0 0.0
        %5082 = vmatpush2.msra.mxu0 0.0
        %5083 = vmatprep.subr.mxu0 0.0
        %5084 = vmatpush2.msra.mxu0 0.0
        %5085 = vmatprep.subr.mxu0 0.0
        %5086 = vmatpush2.msra.mxu0 0.0
        %5087 = vmatprep.mubr.f32.mxu0 0.0
        %5088 = vmatmul.mubr.f32.gmra.mxu0 %v4972
        %v5089 = vpop.f32.mrf.mxu0
        %v5090 = vadd.f32 %v5021, %v5089
        %v5091 = vpop.f32.mrf.mxu0
        %5092 = vdwg.mxu0
        %v5093 = vmax.f32 %v5090, 0.0
        %v5094 = vadd.f32 %v5093, %v594
        %v5095 = vld [vmem:[#allocation4 + $0x288] sm:$0xff]
        %v5096 = vld [vmem:[#allocation4 + $0x290] sm:$0xff]
        %5098 = vrot.lane.b32.xlu0 %v5094, 127
        %v5099 = vpop.permute.xlu0 %5098
        %5101 = vrot.lane.b32.xlu0 %v5094, 126
        %v5102 = vpop.permute.xlu0 %5101
        %v5104 = vld [vmem:[#allocation4 + $0x298] sm:$0xff]
        %v5105 = vld [vmem:[#allocation4 + $0x2a0] sm:$0xff]
        %5107 = vset.pattern.permute.xlu0 0
        %5108 = vperm.xlu0 %5107, %v5104
        %v5109 = vpop.permute.xlu0 %5108
        %5112 = vset.pattern.permute.xlu0 0
        %5113 = vperm.xlu0 %5112, %v5105
        %v5114 = vpop.permute.xlu0 %5113
        %vm5116 = vcmask 195584
        %v5118 = vsel %vm5116, %v5095, 0
        %v5121 = vsel %vm5116, %v5096, 0
        %5123 = vmatprep.subr.mxu0 0.0
        %5124 = vmatpush1.msra.mxu0 0.0
        %5125 = vmatprep.subr.mxu0 0.0
        %5126 = vmatpush1.msra.mxu0 0.0
        %5127 = vmatprep.subr.mxu0 0.0
        %5128 = vmatpush1.msra.mxu0 0.0
        %5129 = vmatprep.subr.mxu0 0.0
        %5130 = vmatpush1.msra.mxu0 0.0
        %5131 = vmatprep.subr.mxu0 0.0
        %5132 = vmatpush1.msra.mxu0 0.0
        %5133 = vmatprep.subr.mxu0 0.0
        %5134 = vmatpush1.msra.mxu0 0.0
        %5135 = vmatprep.subr.mxu0 0.0
        %5136 = vmatpush1.msra.mxu0 0.0
        %5137 = vmatprep.subr.mxu0 0.0
        %5138 = vmatpush1.msra.mxu0 0.0
        %5139 = vmatprep.subr.mxu0 0.0
        %5140 = vmatpush1.msra.mxu0 0.0
        %5141 = vmatprep.subr.mxu0 0.0
        %5142 = vmatpush1.msra.mxu0 0.0
        %5143 = vmatprep.subr.mxu0 0.0
        %5144 = vmatpush1.msra.mxu0 0.0
        %5145 = vmatprep.subr.mxu0 0.0
        %5146 = vmatpush1.msra.mxu0 0.0
        %5147 = vmatprep.subr.mxu0 0.0
        %5148 = vmatpush1.msra.mxu0 0.0
        %5149 = vmatprep.subr.mxu0 0.0
        %5150 = vmatpush1.msra.mxu0 %v5102
        %5151 = vmatprep.subr.mxu0 0.0
        %5152 = vmatpush1.msra.mxu0 %v5099
        %5153 = vmatprep.subr.mxu0 0.0
        %5154 = vmatpush1.msra.mxu0 %v5094
        %5155 = vmatprep.subr.mxu0 0.0
        %5156 = vmatpush2.msra.mxu0 0.0
        %5157 = vmatprep.subr.mxu0 0.0
        %5158 = vmatpush2.msra.mxu0 0.0
        %5159 = vmatprep.subr.mxu0 0.0
        %5160 = vmatpush2.msra.mxu0 0.0
        %5161 = vmatprep.subr.mxu0 0.0
        %5162 = vmatpush2.msra.mxu0 0.0
        %5163 = vmatprep.subr.mxu0 0.0
        %5164 = vmatpush2.msra.mxu0 0.0
        %5165 = vmatprep.subr.mxu0 0.0
        %5166 = vmatpush2.msra.mxu0 0.0
        %5167 = vmatprep.subr.mxu0 0.0
        %5168 = vmatpush2.msra.mxu0 0.0
        %5169 = vmatprep.subr.mxu0 0.0
        %5170 = vmatpush2.msra.mxu0 0.0
        %5171 = vmatprep.subr.mxu0 0.0
        %5172 = vmatpush2.msra.mxu0 0.0
        %5173 = vmatprep.subr.mxu0 0.0
        %5174 = vmatpush2.msra.mxu0 0.0
        %5175 = vmatprep.subr.mxu0 0.0
        %5176 = vmatpush2.msra.mxu0 0.0
        %5177 = vmatprep.subr.mxu0 0.0
        %5178 = vmatpush2.msra.mxu0 0.0
        %5179 = vmatprep.subr.mxu0 0.0
        %5180 = vmatpush2.msra.mxu0 0.0
        %5181 = vmatprep.subr.mxu0 0.0
        %5182 = vmatpush2.msra.mxu0 0.0
        %5183 = vmatprep.subr.mxu0 0.0
        %5184 = vmatpush2.msra.mxu0 0.0
        %5185 = vmatprep.subr.mxu0 0.0
        %5186 = vmatpush2.msra.mxu0 0.0
        %5187 = vmatprep.mubr.f32.mxu0 0.0
        %5188 = vmatmul.mubr.f32.gmra.mxu0 %v5118
        %v5189 = vpop.f32.mrf.mxu0
        %v5190 = vadd.f32 %v5109, %v5189
        %v5191 = vpop.f32.mrf.mxu0
        %5192 = vmatprep.mubr.f32.mxu0 0.0
        %5193 = vmatmul.mubr.f32.gmra.mxu0 %v5121
        %v5194 = vpop.f32.mrf.mxu0
        %v5195 = vadd.f32 %v5114, %v5194
        %v5196 = vpop.f32.mrf.mxu0
        %5197 = vdwg.mxu0
        %v5198 = vxor.u32 %v5195, 2147483648
        %v5199 = vmul.f32 %v5198, 1.442695
        %v5200 = vpow.pop %v5199
        %v5201 = vadd.f32 %v5200, 1.0
        %v5202 = vrcp.pop %v5201
        %v5203 = vmul.f32 1.0, %v5202
        %v5204 = vmul.f32 %v5190, %v5203
        %v5205 = vld [vmem:[#allocation4 + $0x2a8] sm:$0xff]
        %v5206 = vld [vmem:[#allocation4 + $0x2b0] sm:$0xff]
        %v5207 = vld [vmem:[#allocation4 + $0x2b8] sm:$0xff]
        %v5208 = vld [vmem:[#allocation4 + $0x2c0] sm:$0x3]
        %vm5209 = vcmask 211968
        %v5211 = vsel %vm5209, %v5204, 0
        %vm5213 = vcmask 1041408
        %v5215 = vsel %vm5213, %v5208, 0
        %5217 = vmatprep.subr.mxu0 0.0
        %5218 = vmatpush1.msra.mxu0 0.0
        %5219 = vmatprep.subr.mxu0 0.0
        %5220 = vmatpush1.msra.mxu0 0.0
        %5221 = vmatprep.subr.mxu0 0.0
        %5222 = vmatpush1.msra.mxu0 0.0
        %5223 = vmatprep.subr.mxu0 0.0
        %5224 = vmatpush1.msra.mxu0 0.0
        %5225 = vmatprep.subr.mxu0 0.0
        %5226 = vmatpush1.msra.mxu0 0.0
        %5227 = vmatprep.subr.mxu0 0.0
        %5228 = vmatpush1.msra.mxu0 0.0
        %5229 = vmatprep.subr.mxu0 0.0
        %5230 = vmatpush1.msra.mxu0 0.0
        %5231 = vmatprep.subr.mxu0 0.0
        %5232 = vmatpush1.msra.mxu0 0.0
        %5233 = vmatprep.subr.mxu0 0.0
        %5234 = vmatpush1.msra.mxu0 0.0
        %5235 = vmatprep.subr.mxu0 0.0
        %5236 = vmatpush1.msra.mxu0 0.0
        %5237 = vmatprep.subr.mxu0 0.0
        %5238 = vmatpush1.msra.mxu0 0.0
        %5239 = vmatprep.subr.mxu0 0.0
        %5240 = vmatpush1.msra.mxu0 0.0
        %5241 = vmatprep.subr.mxu0 0.0
        %5242 = vmatpush1.msra.mxu0 %v5215
        %5243 = vmatprep.subr.mxu0 0.0
        %5244 = vmatpush1.msra.mxu0 %v5207
        %5245 = vmatprep.subr.mxu0 0.0
        %5246 = vmatpush1.msra.mxu0 %v5206
        %5247 = vmatprep.subr.mxu0 0.0
        %5248 = vmatpush1.msra.mxu0 %v5205
        %5249 = vmatprep.subr.mxu0 0.0
        %5250 = vmatpush2.msra.mxu0 0.0
        %5251 = vmatprep.subr.mxu0 0.0
        %5252 = vmatpush2.msra.mxu0 0.0
        %5253 = vmatprep.subr.mxu0 0.0
        %5254 = vmatpush2.msra.mxu0 0.0
        %5255 = vmatprep.subr.mxu0 0.0
        %5256 = vmatpush2.msra.mxu0 0.0
        %5257 = vmatprep.subr.mxu0 0.0
        %5258 = vmatpush2.msra.mxu0 0.0
        %5259 = vmatprep.subr.mxu0 0.0
        %5260 = vmatpush2.msra.mxu0 0.0
        %5261 = vmatprep.subr.mxu0 0.0
        %5262 = vmatpush2.msra.mxu0 0.0
        %5263 = vmatprep.subr.mxu0 0.0
        %5264 = vmatpush2.msra.mxu0 0.0
        %5265 = vmatprep.subr.mxu0 0.0
        %5266 = vmatpush2.msra.mxu0 0.0
        %5267 = vmatprep.subr.mxu0 0.0
        %5268 = vmatpush2.msra.mxu0 0.0
        %5269 = vmatprep.subr.mxu0 0.0
        %5270 = vmatpush2.msra.mxu0 0.0
        %5271 = vmatprep.subr.mxu0 0.0
        %5272 = vmatpush2.msra.mxu0 0.0
        %5273 = vmatprep.subr.mxu0 0.0
        %5274 = vmatpush2.msra.mxu0 0.0
        %5275 = vmatprep.subr.mxu0 0.0
        %5276 = vmatpush2.msra.mxu0 0.0
        %5277 = vmatprep.subr.mxu0 0.0
        %5278 = vmatpush2.msra.mxu0 0.0
        %5279 = vmatprep.subr.mxu0 0.0
        %5280 = vmatpush2.msra.mxu0 0.0
        %5281 = vmatprep.mubr.f32.mxu0 0.0
        %5282 = vmatmul.mubr.f32.gmra.mxu0 %v5211
        %v5283 = vpop.f32.mrf.mxu0
        %v5284 = vadd.f32 0.0, %v5283
        %v5285 = vpop.f32.mrf.mxu0
        %5286 = vdwg.mxu0
        %v5287 = vld [vmem:[#allocation4 + $0x2c8] sm:$0xf]
        %5289 = vrot.lane.b32.xlu0 %v5284, 127
        %v5290 = vpop.permute.xlu0 %5289
        %5292 = vrot.lane.b32.xlu0 %v5284, 126
        %v5293 = vpop.permute.xlu0 %5292
        %5295 = vrot.lane.b32.xlu0 %v5284, 125
        %v5296 = vpop.permute.xlu0 %5295
        %5298 = vrot.lane.b32.xlu0 %v5284, 124
        %v5299 = vpop.permute.xlu0 %5298
        %5301 = vrot.lane.b32.xlu0 %v5284, 123
        %v5302 = vpop.permute.xlu0 %5301
        %5304 = vrot.lane.b32.xlu0 %v5284, 122
        %v5305 = vpop.permute.xlu0 %5304
        %5307 = vrot.lane.b32.xlu0 %v5284, 121
        %v5308 = vpop.permute.xlu0 %5307
        %v5310 = vld [vmem:[#allocation4 + $0x2d0] sm:$0xf]
        %5312 = vset.pattern.permute.xlu0 0
        %5313 = vperm.xlu0 %5312, %v5310
        %v5314 = vpop.permute.xlu0 %5313
        %v5317 = vsel %vm300, %v5287, 0
        %5319 = vmatprep.subr.mxu0 0.0
        %5320 = vmatpush1.msra.mxu0 0.0
        %5321 = vmatprep.subr.mxu0 0.0
        %5322 = vmatpush1.msra.mxu0 0.0
        %5323 = vmatprep.subr.mxu0 0.0
        %5324 = vmatpush1.msra.mxu0 0.0
        %5325 = vmatprep.subr.mxu0 0.0
        %5326 = vmatpush1.msra.mxu0 0.0
        %5327 = vmatprep.subr.mxu0 0.0
        %5328 = vmatpush1.msra.mxu0 0.0
        %5329 = vmatprep.subr.mxu0 0.0
        %5330 = vmatpush1.msra.mxu0 0.0
        %5331 = vmatprep.subr.mxu0 0.0
        %5332 = vmatpush1.msra.mxu0 0.0
        %5333 = vmatprep.subr.mxu0 0.0
        %5334 = vmatpush1.msra.mxu0 0.0
        %5335 = vmatprep.subr.mxu0 0.0
        %5336 = vmatpush1.msra.mxu0 %v5308
        %5337 = vmatprep.subr.mxu0 0.0
        %5338 = vmatpush1.msra.mxu0 %v5305
        %5339 = vmatprep.subr.mxu0 0.0
        %5340 = vmatpush1.msra.mxu0 %v5302
        %5341 = vmatprep.subr.mxu0 0.0
        %5342 = vmatpush1.msra.mxu0 %v5299
        %5343 = vmatprep.subr.mxu0 0.0
        %5344 = vmatpush1.msra.mxu0 %v5296
        %5345 = vmatprep.subr.mxu0 0.0
        %5346 = vmatpush1.msra.mxu0 %v5293
        %5347 = vmatprep.subr.mxu0 0.0
        %5348 = vmatpush1.msra.mxu0 %v5290
        %5349 = vmatprep.subr.mxu0 0.0
        %5350 = vmatpush1.msra.mxu0 %v5284
        %5351 = vmatprep.subr.mxu0 0.0
        %5352 = vmatpush2.msra.mxu0 0.0
        %5353 = vmatprep.subr.mxu0 0.0
        %5354 = vmatpush2.msra.mxu0 0.0
        %5355 = vmatprep.subr.mxu0 0.0
        %5356 = vmatpush2.msra.mxu0 0.0
        %5357 = vmatprep.subr.mxu0 0.0
        %5358 = vmatpush2.msra.mxu0 0.0
        %5359 = vmatprep.subr.mxu0 0.0
        %5360 = vmatpush2.msra.mxu0 0.0
        %5361 = vmatprep.subr.mxu0 0.0
        %5362 = vmatpush2.msra.mxu0 0.0
        %5363 = vmatprep.subr.mxu0 0.0
        %5364 = vmatpush2.msra.mxu0 0.0
        %5365 = vmatprep.subr.mxu0 0.0
        %5366 = vmatpush2.msra.mxu0 0.0
        %5367 = vmatprep.subr.mxu0 0.0
        %5368 = vmatpush2.msra.mxu0 0.0
        %5369 = vmatprep.subr.mxu0 0.0
        %5370 = vmatpush2.msra.mxu0 0.0
        %5371 = vmatprep.subr.mxu0 0.0
        %5372 = vmatpush2.msra.mxu0 0.0
        %5373 = vmatprep.subr.mxu0 0.0
        %5374 = vmatpush2.msra.mxu0 0.0
        %5375 = vmatprep.subr.mxu0 0.0
        %5376 = vmatpush2.msra.mxu0 0.0
        %5377 = vmatprep.subr.mxu0 0.0
        %5378 = vmatpush2.msra.mxu0 0.0
        %5379 = vmatprep.subr.mxu0 0.0
        %5380 = vmatpush2.msra.mxu0 0.0
        %5381 = vmatprep.subr.mxu0 0.0
        %5382 = vmatpush2.msra.mxu0 0.0
        %5383 = vmatprep.mubr.f32.mxu0 0.0
        %5384 = vmatmul.mubr.f32.gmra.mxu0 %v5317
        %v5385 = vpop.f32.mrf.mxu0
        %v5386 = vadd.f32 %v5314, %v5385
        %v5387 = vpop.f32.mrf.mxu0
        %5388 = vdwg.mxu0
        %vm5389 = vcmask 883712
        %v5390 = vsel %vm5389, %v5386, 0.0
        %5391 = vst [vmem:[%s151] sm:$0xf] %v5390
        %s5392 = sand.u32 %s72, 1
        %s5393 = scalar_lea.sflag [#allocation6], %s5392
        %s5394 = sand.u32 %s72, 1
        %s5395 = smul.addr %s5394, 4
        %s5396 = scalar_lea.vmem [#allocation7], %s5395
        // Predicated region
        $region33: #{demucs_wrapper_forward.1} parent=27 // pred_check
          %p5397 = pneg %p82
        $region34: #{demucs_wrapper_forward.1} parent=27 // pred_check_branch
          %5399 = sbr.rel (%p5397) target = $region36
        $region35: #{demucs_wrapper_forward.1} parent=27 // pred_region
          %s5401 = ssub.s32 64, 64
          %5402 = vsyncadd %s5393, %s5401
          %s5403 = smul.addr %s17, 64
          %s5404 = scalar_lea.hbm %s2, %s5403
          %s5406 = sshll.u32 %s5396, 4
          %s5407 = int_to_ptr.vmem [resolvable:$true] %s5406
          %5409 = dma.vmem_to_hbm [thread:$0]  %s5407, 64, %s5404, %s5393
        $region36: #{demucs_wrapper_forward.1} parent=27 // pred_fallthru
          _
      $region28: #{demucs_wrapper_forward.1} parent=5 // pred_fallthru
        _
      %p5410 = scmp.le.s32.totalorder 2, %s12
      // Predicated region
      $region37: #{demucs_wrapper_forward.1} parent=5 // pred_check
        %p5411 = pneg %p5410
      $region38: #{demucs_wrapper_forward.1} parent=5 // pred_check_branch
        %5413 = sbr.rel (%p5411) target = $region40
      $region39: #{demucs_wrapper_forward.1} parent=5 // pred_region
        %s5414 = ssub.s32 %s12, 2
        // Predicated region
        $region41: #{demucs_wrapper_forward.1} parent=39 // pred_check
          %p5415 = pneg %p88
        $region42: #{demucs_wrapper_forward.1} parent=39 // pred_check_branch
          %5417 = sbr.rel (%p5415) target = $region44
        $region43: #{demucs_wrapper_forward.1} parent=39 // pred_region
          %s5418 = sand.u32 %s73, 1
          %s5419 = scalar_lea.sflag [#allocation6], %s5418
          %s5420 = sand.u32 %s73, 1
          %s5421 = smul.addr %s5420, 4
          %s5422 = scalar_lea.vmem [#allocation7], %s5421
          %5423 = dma.done %s5419, 64
        $region44: #{demucs_wrapper_forward.1} parent=39 // pred_fallthru
          _
      $region40: #{demucs_wrapper_forward.1} parent=5 // pred_fallthru
        _
    $region6: #{demucs_wrapper_forward.1} parent=1 // loop_footer
      %s16 = sadd.s32 1, %s12
    $region7: #{demucs_wrapper_forward.1} parent=1 // loop_footer_branch
      %11 = sbr.rel target = $region3
    $region8: #{demucs_wrapper_forward.1} parent=1 // loop_exit
      _
    %5424 = vsyncpa [#allocation5], 1
    %s5425 = scalar_lea.sflag [#allocation5], 1
    %5426 = vsyncpa %s5425, 1
    %5427 = vsyncpa [#allocation6], 1
    %s5428 = scalar_lea.sflag [#allocation6], 1
    %5429 = vsyncpa %s5428, 1

</llo_original>
